<compile_context>
chip_gen: v7x
topology: tpu7x:2x2x1
jax: 0.10.0
libtpu: 0.0.40
codegen_flags: <defaults>
</compile_context>

<pallas_src>
import functools

import numpy as np
import jax
import jax.numpy as jnp
from jax.experimental import pallas as pl
from jax.experimental.pallas import tpu as pltpu


def _round_up(n, m):
    return ((n + m - 1) // m) * m


# ---------------------------------------------------------------------------
# Fused kernel: whole forward pass for one batch tile.
# ---------------------------------------------------------------------------
def _ipcnn_kernel(x_ref, w1_ref, c1_ref, w2_ref, c2_ref, w3_ref, c3_ref,
                  fw1_ref, fb1_ref, fw2_ref, fb2_ref, fw3_ref, fb3_ref,
                  o_ref, *, pool):
    """All refs are 2D VMEM tiles; every intermediate stays on-chip.

    x_ref  : (Bt, L)               bf16 input tile
    wN_ref : (F_in, pool*F_out)    bf16 banded conv matrix (pool-phase-major cols)
    cN_ref : (1, F_out)            f32 per-pooled-column bias (bias commutes w/ max)
    fwN/fbN: f32 FC weights (in, out_pad) / bias (1, out_pad), lane-padded to 128
    o_ref  : (Bt, 128)             f32 (only the first n_classes cols meaningful)
    """
    def conv_relu_pool(h_bf16, w_ref, b_ref):
        # One bf16 MXU matmul covers all taps & channels; f32 accumulation.
        y = jnp.dot(h_bf16, w_ref[...], preferred_element_type=jnp.float32)
        n = y.shape[1] // pool                      # pooled width (multiple of 128)
        p = y[:, :n]                                # aligned 128-lane slices
        for r in range(1, pool):
            p = jnp.maximum(p, y[:, r * n:(r + 1) * n])
        # bias + relu after pool is valid: max is monotone, bias constant per column.
        return jnp.maximum(p + b_ref[...], 0.0)     # f32

    def dense(h, w_ref, b_ref, relu):
        y = jnp.dot(h, w_ref[...], preferred_element_type=jnp.float32) + b_ref[...]
        return jnp.maximum(y, 0.0) if relu else y

    h = conv_relu_pool(x_ref[...], w1_ref, c1_ref)              # (Bt, 16*64)
    h = conv_relu_pool(h.astype(jnp.bfloat16), w2_ref, c2_ref)  # (Bt, 32*16)
    h = conv_relu_pool(h.astype(jnp.bfloat16), w3_ref, c3_ref)  # (Bt, 64*4) == torch flatten
    h = dense(h, fw1_ref, fb1_ref, relu=True)                   # (Bt, 128) (120 + zero pad)
    h = dense(h, fw2_ref, fb2_ref, relu=True)                   # (Bt, 128) (60  + zero pad)
    o_ref[...] = dense(h, fw3_ref, fb3_ref, relu=False).astype(o_ref.dtype)


# ---------------------------------------------------------------------------
# Host-side weight preparation (one-time).
# ---------------------------------------------------------------------------
def _banded_conv_weight(w, L_in, pad, pool):
    """Conv1d (stride 1, 'same' length) as a single matrix.

    Input rows : ic*L_in + t           (channel-major flatten of stage input)
    Output cols: r*(C_out*Lp) + oc*Lp + tp,  pre-pool position s = tp*pool + r,
    so max-pool = elementwise max over the `pool` contiguous column blocks.
    Conv zero-padding is folded in (out-of-range taps simply absent).
    """
    w = np.asarray(w, dtype=np.float32)            # torch layout (C_out, C_in, K)
    C_out, C_in, K = w.shape
    L_out = L_in
    Lp = L_out // pool
    Wb = np.zeros((C_in * L_in, pool * C_out * Lp), dtype=np.float32)
    s = np.arange(L_out)
    tp, r = s // pool, s % pool
    for oc in range(C_out):
        for ic in range(C_in):
            for k in range(K):
                tau = s + k - pad
                ok = (tau >= 0) & (tau < L_in)
                rows = ic * L_in + tau[ok]
                cols = r[ok] * (C_out * Lp) + oc * Lp + tp[ok]
                Wb[rows, cols] = w[oc, ic, k]
    return Wb


def prepare_params(tp, max_length=256, pool=4):
    """Convert PyTorch-layout params to kernel-ready (banded bf16 / lane-padded) form."""
    L1, L2, L3 = max_length, max_length // pool, max_length // pool // pool

    def pooled_bias(b, L_pool):
        return jnp.asarray(np.repeat(np.asarray(b, np.float32), L_pool)[None, :])

    def pad_fc(w, b, rows_to, cols_to):
        w = np.asarray(w, np.float32).T            # (in, out)
        b = np.asarray(b, np.float32)
        wp = np.zeros((rows_to, cols_to), np.float32)
        wp[:w.shape[0], :w.shape[1]] = w
        bp = np.zeros((1, cols_to), np.float32)
        bp[0, :b.shape[0]] = b
        return jnp.asarray(wp), jnp.asarray(bp)

    flat = 64 * L3 // pool                         # flattened conv features (256)
    fw1, fb1 = pad_fc(tp["fc1_w"], tp["fc1_b"], flat, 128)
    fw2, fb2 = pad_fc(tp["fc2_w"], tp["fc2_b"], 128, 128)
    fw3, fb3 = pad_fc(tp["fc3_w"], tp["fc3_b"], 128, 128)

    bf16 = jnp.bfloat16
    return {
        "W1": jnp.asarray(_banded_conv_weight(tp["conv1_w"], L1, 4, pool), bf16),
        "c1": pooled_bias(tp["conv1_b"], L1 // pool),
        "W2": jnp.asarray(_banded_conv_weight(tp["conv2_w"], L2, 2, pool), bf16),
        "c2": pooled_bias(tp["conv2_b"], L2 // pool),
        "W3": jnp.asarray(_banded_conv_weight(tp["conv3_w"], L3, 1, pool), bf16),
        "c3": pooled_bias(tp["conv3_b"], L3 // pool),
        "fw1": fw1, "fb1": fb1,
        "fw2": fw2, "fb2": fb2,
        "fw3": fw3, "fb3": fb3,
    }


# ---------------------------------------------------------------------------
# Wrapper: single fused pallas_call, batch-tiled parallel grid.
# ---------------------------------------------------------------------------
def _const_spec(shape):
    """Constant-index weight tile: DMA'd once; request a single VMEM buffer."""
    try:
        return pl.BlockSpec(shape, lambda i: (0, 0), pipeline_mode=pl.Buffered(1))
    except (TypeError, AttributeError):            # older jax: default double-buffer
        return pl.BlockSpec(shape, lambda i: (0, 0))


def _pick_block_b(batch, requested):
    """Large batch tile (amortize per-step cost, fill MXU rows), but no bigger than
    the rounded batch, and split once so a 'single tile' batch still yields >=2
    grid steps (lets dimension_semantics='parallel' use both v7x TensorCores)."""
    bb = min(requested, _round_up(batch, 16))      # 16 = bf16 sublane pack
    if bb >= 256 and _round_up(batch, 16) <= bb:   # would otherwise be one grid step
        bb = _round_up((bb + 1) // 2, 16)
    return bb


def ipcnn_forward(x, kp, *, block_b=512, pool=4, n_classes=2):
    """x: (B, max_length) float -> (B, n_classes) float32 logits.

    Per-generation tuning: v6e (128 MiB VMEM) can push block_b to 1024-2048;
    v7x (64 MiB/TC) should stay <= ~1024.  512 is a safe cross-generation default.
    """
    B, L = x.shape
    bb = _pick_block_b(B, block_b)
    B_pad = _round_up(B, bb)
    x = x.astype(jnp.bfloat16)                     # halve input streaming DMA
    if B_pad != B:
        # TODO(synk): for very large ragged deployment batches, mask the last tile
        # instead of materializing a padded copy (here the pad is < bb rows).
        x = jnp.pad(x, ((0, B_pad - B), (0, 0)))

    weights = (kp["W1"], kp["c1"], kp["W2"], kp["c2"], kp["W3"], kp["c3"],
               kp["fw1"], kp["fb1"], kp["fw2"], kp["fb2"], kp["fw3"], kp["fb3"])
    n_out = kp["fw3"].shape[1]                     # lane-padded (128)

    out = pl.pallas_call(
        functools.partial(_ipcnn_kernel, pool=pool),
        out_shape=jax.ShapeDtypeStruct((B_pad, n_out), jnp.float32),
        grid_spec=pltpu.PrefetchScalarGridSpec(
            num_scalar_prefetch=0,
            grid=(B_pad // bb,),
            in_specs=[pl.BlockSpec((bb, L), lambda i: (i, 0))]
                     + [_const_spec(w.shape) for w in weights],
            out_specs=pl.BlockSpec((bb, n_out), lambda i: (i, 0)),
        ),
        compiler_params=pltpu.CompilerParams(
            dimension_semantics=("parallel",),     # megacore-shard the batch (v7x)
            vmem_limit_bytes=56 * 1024 * 1024,     # fits v7x 64 MiB/TC with headroom
        ),
    )(x, *weights)
    return out[:B, :n_classes]


# ---------------------------------------------------------------------------
# Pure-JAX f32 reference with PyTorch semantics (correctness check).
# ---------------------------------------------------------------------------
def reference_forward(x, tp):
    def block(h, w, b, pad, pool):
        y = jax.lax.conv_general_dilated(
            h, w, window_strides=(1,), padding=[(pad, pad)],
            dimension_numbers=("NCH", "OIH", "NCH"))
        y = jnp.maximum(y + b.reshape(1, -1, 1), 0.0)
        return jax.lax.reduce_window(y, -jnp.inf, jax.lax.max,
                                     (1, 1, pool), (1, 1, pool), "VALID")

    h = x[:, None, :]
    h = block(h, tp["conv1_w"], tp["conv1_b"], 4, 4)
    h = block(h, tp["conv2_w"], tp["conv2_b"], 2, 4)
    h = block(h, tp["conv3_w"], tp["conv3_b"], 1, 4)
    h = h.reshape(h.shape[0], -1)                  # channel-major flatten
    h = jnp.maximum(h @ tp["fc1_w"].T + tp["fc1_b"], 0.0)
    h = jnp.maximum(h @ tp["fc2_w"].T + tp["fc2_b"], 0.0)
    return h @ tp["fc3_w"].T + tp["fc3_b"]


# ---------------------------------------------------------------------------
if __name__ == "__main__":
    B = 2
    MAX_LENGTH = 256      # 256 -> 64 -> 16 -> 4 after three pool(4) stages

    key = jax.random.PRNGKey(0)
    ks = jax.random.split(key, 13)

    def init(k, shape, fan_in):
        return jax.random.normal(k, shape, jnp.float32) / jnp.sqrt(jnp.float32(fan_in))

    # PyTorch-layout parameters.
    tparams = {
        "conv1_w": init(ks[0], (16, 1, 9), 9),    "conv1_b": init(ks[1], (16,), 9),
        "conv2_w": init(ks[2], (32, 16, 5), 80),  "conv2_b": init(ks[3], (32,), 80),
        "conv3_w": init(ks[4], (64, 32, 3), 96),  "conv3_b": init(ks[5], (64,), 96),
        "fc1_w": init(ks[6], (120, 256), 256),    "fc1_b": init(ks[7], (120,), 256),
        "fc2_w": init(ks[8], (60, 120), 120),     "fc2_b": init(ks[9], (60,), 120),
        "fc3_w": init(ks[10], (2, 60), 60),       "fc3_b": init(ks[11], (2,), 60),
    }
    kparams = prepare_params(tparams, MAX_LENGTH, 4)

    x = jax.random.normal(ks[12], (B, MAX_LENGTH), jnp.float32)

    out = jax.block_until_ready(jax.jit(ipcnn_forward)(x, kparams))
    assert out.shape == (B, 2)

    ref = jax.block_until_ready(jax.jit(reference_forward)(x, tparams))
    max_err = float(jnp.max(jnp.abs(out - ref)))
    # Tolerance accounts for bf16 conv weights/activations (f32 accumulation).
    assert max_err < 6e-2, f"mismatch vs reference: {max_err}"

    print("KERNEL_OK")
</pallas_src>

<mosaic_0001>
module attributes {stable_mosaic.version = 11 : i64} {
  func.func @_ipcnn_kernel(%arg0: i32, %arg1: memref<16x256xbf16, #tpu.memory_space<vmem>>, %arg2: memref<256x4096xbf16, #tpu.memory_space<vmem>>, %arg3: memref<1x1024xf32, #tpu.memory_space<vmem>>, %arg4: memref<1024x2048xbf16, #tpu.memory_space<vmem>>, %arg5: memref<1x512xf32, #tpu.memory_space<vmem>>, %arg6: memref<512x1024xbf16, #tpu.memory_space<vmem>>, %arg7: memref<1x256xf32, #tpu.memory_space<vmem>>, %arg8: memref<256x128xf32, #tpu.memory_space<vmem>>, %arg9: memref<1x128xf32, #tpu.memory_space<vmem>>, %arg10: memref<128x128xf32, #tpu.memory_space<vmem>>, %arg11: memref<1x128xf32, #tpu.memory_space<vmem>>, %arg12: memref<128x128xf32, #tpu.memory_space<vmem>>, %arg13: memref<1x128xf32, #tpu.memory_space<vmem>>, %arg14: memref<16x128xf32, #tpu.memory_space<vmem>>) attributes {dimension_semantics = [#tpu.dimension_semantics<parallel>], iteration_bounds = array<i64: 1>, scalar_prefetch = 0 : i64, scratch_operands = 0 : i64, tpu.core_type = #tpu.core_type<tc>, window_params = [{transform_indices = @transform_0, window_bounds = array<i64: 16, 256>}, {pipeline_mode = #tpu.pipeline_mode<synchronous>, transform_indices = @transform_1, window_bounds = array<i64: 256, 4096>}, {pipeline_mode = #tpu.pipeline_mode<synchronous>, transform_indices = @transform_2, window_bounds = array<i64: 1, 1024>}, {pipeline_mode = #tpu.pipeline_mode<synchronous>, transform_indices = @transform_3, window_bounds = array<i64: 1024, 2048>}, {pipeline_mode = #tpu.pipeline_mode<synchronous>, transform_indices = @transform_4, window_bounds = array<i64: 1, 512>}, {pipeline_mode = #tpu.pipeline_mode<synchronous>, transform_indices = @transform_5, window_bounds = array<i64: 512, 1024>}, {pipeline_mode = #tpu.pipeline_mode<synchronous>, transform_indices = @transform_6, window_bounds = array<i64: 1, 256>}, {pipeline_mode = #tpu.pipeline_mode<synchronous>, transform_indices = @transform_7, window_bounds = array<i64: 256, 128>}, {pipeline_mode = #tpu.pipeline_mode<synchronous>, transform_indices = @transform_8, window_bounds = array<i64: 1, 128>}, {pipeline_mode = #tpu.pipeline_mode<synchronous>, transform_indices = @transform_9, window_bounds = array<i64: 128, 128>}, {pipeline_mode = #tpu.pipeline_mode<synchronous>, transform_indices = @transform_10, window_bounds = array<i64: 1, 128>}, {pipeline_mode = #tpu.pipeline_mode<synchronous>, transform_indices = @transform_11, window_bounds = array<i64: 128, 128>}, {pipeline_mode = #tpu.pipeline_mode<synchronous>, transform_indices = @transform_12, window_bounds = array<i64: 1, 128>}, {transform_indices = @transform_13, window_bounds = array<i64: 16, 128>}]} {
    %c0 = arith.constant 0 : index
    %c0_0 = arith.constant 0 : index
    %0 = vector.load %arg1[%c0, %c0_0] : memref<16x256xbf16, #tpu.memory_space<vmem>>, vector<16x256xbf16>
    %c0_1 = arith.constant 0 : index
    %c0_2 = arith.constant 0 : index
    %1 = vector.load %arg2[%c0_1, %c0_2] : memref<256x4096xbf16, #tpu.memory_space<vmem>>, vector<256x4096xbf16>
    %cst = arith.constant dense<0.000000e+00> : vector<16x4096xf32>
    %2 = tpu.matmul %0, %1, %cst {dimension_numbers = #tpu.dot_dimension_numbers<[1], [0], [0], [1], [0, 0, 1, 1], [], []>} : vector<16x256xbf16>, vector<256x4096xbf16>, vector<16x4096xf32> -> vector<16x4096xf32>
    %3 = vector.extract_strided_slice %2 {offsets = [0, 0], sizes = [16, 1024], strides = [1, 1]} : vector<16x4096xf32> to vector<16x1024xf32>
    %4 = vector.extract_strided_slice %2 {offsets = [0, 1024], sizes = [16, 1024], strides = [1, 1]} : vector<16x4096xf32> to vector<16x1024xf32>
    %5 = arith.maximumf %3, %4 : vector<16x1024xf32>
    %6 = vector.extract_strided_slice %2 {offsets = [0, 2048], sizes = [16, 1024], strides = [1, 1]} : vector<16x4096xf32> to vector<16x1024xf32>
    %7 = arith.maximumf %5, %6 : vector<16x1024xf32>
    %8 = vector.extract_strided_slice %2 {offsets = [0, 3072], sizes = [16, 1024], strides = [1, 1]} : vector<16x4096xf32> to vector<16x1024xf32>
    %9 = arith.maximumf %7, %8 : vector<16x1024xf32>
    %c0_3 = arith.constant 0 : index
    %c0_4 = arith.constant 0 : index
    %10 = vector.load %arg3[%c0_3, %c0_4] : memref<1x1024xf32, #tpu.memory_space<vmem>>, vector<1x1024xf32>
    %11 = vector.broadcast %10 : vector<1x1024xf32> to vector<16x1024xf32>
    %12 = arith.addf %9, %11 : vector<16x1024xf32>
    %cst_5 = arith.constant 0.000000e+00 : f32
    %13 = vector.broadcast %cst_5 : f32 to vector<16x1024xf32>
    %14 = arith.maximumf %12, %13 : vector<16x1024xf32>
    %15 = arith.truncf %14 : vector<16x1024xf32> to vector<16x1024xbf16>
    %c0_6 = arith.constant 0 : index
    %c0_7 = arith.constant 0 : index
    %16 = vector.load %arg4[%c0_6, %c0_7] : memref<1024x2048xbf16, #tpu.memory_space<vmem>>, vector<1024x2048xbf16>
    %cst_8 = arith.constant dense<0.000000e+00> : vector<16x2048xf32>
    %17 = tpu.matmul %15, %16, %cst_8 {dimension_numbers = #tpu.dot_dimension_numbers<[1], [0], [0], [1], [0, 0, 1, 1], [], []>} : vector<16x1024xbf16>, vector<1024x2048xbf16>, vector<16x2048xf32> -> vector<16x2048xf32>
    %18 = vector.extract_strided_slice %17 {offsets = [0, 0], sizes = [16, 512], strides = [1, 1]} : vector<16x2048xf32> to vector<16x512xf32>
    %19 = vector.extract_strided_slice %17 {offsets = [0, 512], sizes = [16, 512], strides = [1, 1]} : vector<16x2048xf32> to vector<16x512xf32>
    %20 = arith.maximumf %18, %19 : vector<16x512xf32>
    %21 = vector.extract_strided_slice %17 {offsets = [0, 1024], sizes = [16, 512], strides = [1, 1]} : vector<16x2048xf32> to vector<16x512xf32>
    %22 = arith.maximumf %20, %21 : vector<16x512xf32>
    %23 = vector.extract_strided_slice %17 {offsets = [0, 1536], sizes = [16, 512], strides = [1, 1]} : vector<16x2048xf32> to vector<16x512xf32>
    %24 = arith.maximumf %22, %23 : vector<16x512xf32>
    %c0_9 = arith.constant 0 : index
    %c0_10 = arith.constant 0 : index
    %25 = vector.load %arg5[%c0_9, %c0_10] : memref<1x512xf32, #tpu.memory_space<vmem>>, vector<1x512xf32>
    %26 = vector.broadcast %25 : vector<1x512xf32> to vector<16x512xf32>
    %27 = arith.addf %24, %26 : vector<16x512xf32>
    %cst_11 = arith.constant 0.000000e+00 : f32
    %28 = vector.broadcast %cst_11 : f32 to vector<16x512xf32>
    %29 = arith.maximumf %27, %28 : vector<16x512xf32>
    %30 = arith.truncf %29 : vector<16x512xf32> to vector<16x512xbf16>
    %c0_12 = arith.constant 0 : index
    %c0_13 = arith.constant 0 : index
    %31 = vector.load %arg6[%c0_12, %c0_13] : memref<512x1024xbf16, #tpu.memory_space<vmem>>, vector<512x1024xbf16>
    %cst_14 = arith.constant dense<0.000000e+00> : vector<16x1024xf32>
    %32 = tpu.matmul %30, %31, %cst_14 {dimension_numbers = #tpu.dot_dimension_numbers<[1], [0], [0], [1], [0, 0, 1, 1], [], []>} : vector<16x512xbf16>, vector<512x1024xbf16>, vector<16x1024xf32> -> vector<16x1024xf32>
    %33 = vector.extract_strided_slice %32 {offsets = [0, 0], sizes = [16, 256], strides = [1, 1]} : vector<16x1024xf32> to vector<16x256xf32>
    %34 = vector.extract_strided_slice %32 {offsets = [0, 256], sizes = [16, 256], strides = [1, 1]} : vector<16x1024xf32> to vector<16x256xf32>
    %35 = arith.maximumf %33, %34 : vector<16x256xf32>
    %36 = vector.extract_strided_slice %32 {offsets = [0, 512], sizes = [16, 256], strides = [1, 1]} : vector<16x1024xf32> to vector<16x256xf32>
    %37 = arith.maximumf %35, %36 : vector<16x256xf32>
    %38 = vector.extract_strided_slice %32 {offsets = [0, 768], sizes = [16, 256], strides = [1, 1]} : vector<16x1024xf32> to vector<16x256xf32>
    %39 = arith.maximumf %37, %38 : vector<16x256xf32>
    %c0_15 = arith.constant 0 : index
    %c0_16 = arith.constant 0 : index
    %40 = vector.load %arg7[%c0_15, %c0_16] : memref<1x256xf32, #tpu.memory_space<vmem>>, vector<1x256xf32>
    %41 = vector.broadcast %40 : vector<1x256xf32> to vector<16x256xf32>
    %42 = arith.addf %39, %41 : vector<16x256xf32>
    %cst_17 = arith.constant 0.000000e+00 : f32
    %43 = vector.broadcast %cst_17 : f32 to vector<16x256xf32>
    %44 = arith.maximumf %42, %43 : vector<16x256xf32>
    %c0_18 = arith.constant 0 : index
    %c0_19 = arith.constant 0 : index
    %45 = vector.load %arg8[%c0_18, %c0_19] : memref<256x128xf32, #tpu.memory_space<vmem>>, vector<256x128xf32>
    %cst_20 = arith.constant dense<0.000000e+00> : vector<16x128xf32>
    %46 = tpu.matmul %44, %45, %cst_20 {dimension_numbers = #tpu.dot_dimension_numbers<[1], [0], [0], [1], [0, 0, 1, 1], [], []>} : vector<16x256xf32>, vector<256x128xf32>, vector<16x128xf32> -> vector<16x128xf32>
    %c0_21 = arith.constant 0 : index
    %c0_22 = arith.constant 0 : index
    %47 = vector.load %arg9[%c0_21, %c0_22] : memref<1x128xf32, #tpu.memory_space<vmem>>, vector<1x128xf32>
    %48 = vector.broadcast %47 : vector<1x128xf32> to vector<16x128xf32>
    %49 = arith.addf %46, %48 : vector<16x128xf32>
    %cst_23 = arith.constant 0.000000e+00 : f32
    %50 = vector.broadcast %cst_23 : f32 to vector<16x128xf32>
    %51 = arith.maximumf %49, %50 : vector<16x128xf32>
    %c0_24 = arith.constant 0 : index
    %c0_25 = arith.constant 0 : index
    %52 = vector.load %arg10[%c0_24, %c0_25] : memref<128x128xf32, #tpu.memory_space<vmem>>, vector<128x128xf32>
    %cst_26 = arith.constant dense<0.000000e+00> : vector<16x128xf32>
    %53 = tpu.matmul %51, %52, %cst_26 {dimension_numbers = #tpu.dot_dimension_numbers<[1], [0], [0], [1], [0, 0, 1, 1], [], []>} : vector<16x128xf32>, vector<128x128xf32>, vector<16x128xf32> -> vector<16x128xf32>
    %c0_27 = arith.constant 0 : index
    %c0_28 = arith.constant 0 : index
    %54 = vector.load %arg11[%c0_27, %c0_28] : memref<1x128xf32, #tpu.memory_space<vmem>>, vector<1x128xf32>
    %55 = vector.broadcast %54 : vector<1x128xf32> to vector<16x128xf32>
    %56 = arith.addf %53, %55 : vector<16x128xf32>
    %cst_29 = arith.constant 0.000000e+00 : f32
    %57 = vector.broadcast %cst_29 : f32 to vector<16x128xf32>
    %58 = arith.maximumf %56, %57 : vector<16x128xf32>
    %c0_30 = arith.constant 0 : index
    %c0_31 = arith.constant 0 : index
    %59 = vector.load %arg12[%c0_30, %c0_31] : memref<128x128xf32, #tpu.memory_space<vmem>>, vector<128x128xf32>
    %cst_32 = arith.constant dense<0.000000e+00> : vector<16x128xf32>
    %60 = tpu.matmul %58, %59, %cst_32 {dimension_numbers = #tpu.dot_dimension_numbers<[1], [0], [0], [1], [0, 0, 1, 1], [], []>} : vector<16x128xf32>, vector<128x128xf32>, vector<16x128xf32> -> vector<16x128xf32>
    %c0_33 = arith.constant 0 : index
    %c0_34 = arith.constant 0 : index
    %61 = vector.load %arg13[%c0_33, %c0_34] : memref<1x128xf32, #tpu.memory_space<vmem>>, vector<1x128xf32>
    %62 = vector.broadcast %61 : vector<1x128xf32> to vector<16x128xf32>
    %63 = arith.addf %60, %62 : vector<16x128xf32>
    %c0_35 = arith.constant 0 : index
    %c0_36 = arith.constant 0 : index
    %64 = vector.load %arg14[%c0_35, %c0_36] : memref<16x128xf32, #tpu.memory_space<vmem>>, vector<16x128xf32>
    tpu.vector_store %arg14[%c0_35, %c0_36], %63 {strides = array<i32>} : memref<16x128xf32, #tpu.memory_space<vmem>>, vector<16x128xf32>,
    return
  }
  func.func @transform_0(%arg0: i32) -> (i32, i32) {
    %c0_i32 = arith.constant 0 : i32
    %c0_i32_0 = arith.constant 0 : i32
    return %arg0, %c0_i32 : i32, i32
  }
  func.func @transform_1(%arg0: i32) -> (i32, i32) {
    %c0_i32 = arith.constant 0 : i32
    %c0_i32_0 = arith.constant 0 : i32
    %c0_i32_1 = arith.constant 0 : i32
    return %c0_i32, %c0_i32_0 : i32, i32
  }
  func.func @transform_2(%arg0: i32) -> (i32, i32) {
    %c0_i32 = arith.constant 0 : i32
    %c0_i32_0 = arith.constant 0 : i32
    %c0_i32_1 = arith.constant 0 : i32
    return %c0_i32, %c0_i32_0 : i32, i32
  }
  func.func @transform_3(%arg0: i32) -> (i32, i32) {
    %c0_i32 = arith.constant 0 : i32
    %c0_i32_0 = arith.constant 0 : i32
    %c0_i32_1 = arith.constant 0 : i32
    return %c0_i32, %c0_i32_0 : i32, i32
  }
  func.func @transform_4(%arg0: i32) -> (i32, i32) {
    %c0_i32 = arith.constant 0 : i32
    %c0_i32_0 = arith.constant 0 : i32
    %c0_i32_1 = arith.constant 0 : i32
    return %c0_i32, %c0_i32_0 : i32, i32
  }
  func.func @transform_5(%arg0: i32) -> (i32, i32) {
    %c0_i32 = arith.constant 0 : i32
    %c0_i32_0 = arith.constant 0 : i32
    %c0_i32_1 = arith.constant 0 : i32
    return %c0_i32, %c0_i32_0 : i32, i32
  }
  func.func @transform_6(%arg0: i32) -> (i32, i32) {
    %c0_i32 = arith.constant 0 : i32
    %c0_i32_0 = arith.constant 0 : i32
    %c0_i32_1 = arith.constant 0 : i32
    return %c0_i32, %c0_i32_0 : i32, i32
  }
  func.func @transform_7(%arg0: i32) -> (i32, i32) {
    %c0_i32 = arith.constant 0 : i32
    %c0_i32_0 = arith.constant 0 : i32
    %c0_i32_1 = arith.constant 0 : i32
    return %c0_i32, %c0_i32_0 : i32, i32
  }
  func.func @transform_8(%arg0: i32) -> (i32, i32) {
    %c0_i32 = arith.constant 0 : i32
    %c0_i32_0 = arith.constant 0 : i32
    %c0_i32_1 = arith.constant 0 : i32
    return %c0_i32, %c0_i32_0 : i32, i32
  }
  func.func @transform_9(%arg0: i32) -> (i32, i32) {
    %c0_i32 = arith.constant 0 : i32
    %c0_i32_0 = arith.constant 0 : i32
    %c0_i32_1 = arith.constant 0 : i32
    return %c0_i32, %c0_i32_0 : i32, i32
  }
  func.func @transform_10(%arg0: i32) -> (i32, i32) {
    %c0_i32 = arith.constant 0 : i32
    %c0_i32_0 = arith.constant 0 : i32
    %c0_i32_1 = arith.constant 0 : i32
    return %c0_i32, %c0_i32_0 : i32, i32
  }
  func.func @transform_11(%arg0: i32) -> (i32, i32) {
    %c0_i32 = arith.constant 0 : i32
    %c0_i32_0 = arith.constant 0 : i32
    %c0_i32_1 = arith.constant 0 : i32
    return %c0_i32, %c0_i32_0 : i32, i32
  }
  func.func @transform_12(%arg0: i32) -> (i32, i32) {
    %c0_i32 = arith.constant 0 : i32
    %c0_i32_0 = arith.constant 0 : i32
    %c0_i32_1 = arith.constant 0 : i32
    return %c0_i32, %c0_i32_0 : i32, i32
  }
  func.func @transform_13(%arg0: i32) -> (i32, i32) {
    %c0_i32 = arith.constant 0 : i32
    %c0_i32_0 = arith.constant 0 : i32
    return %arg0, %c0_i32 : i32, i32
  }
}

</mosaic_0001>

<llo_original>
// kernel: ipcnn_forward.1
$region0: #{ipcnn_forward.1}
  #allocation0 [shape = 'u32[]', space=smem, size = 0x4, offset = 0x4, fixed_abs, tag = 'smem constant byte address 0x4 - core index']
  #allocation1 [shape = 'u32[144,128]{1,0:T(1,128)}', space=vmem, size = 0x12000, scoped, tag = 'internal scratch']
  %s0 = inlined_call_operand.vmem [shape: bf16[16,256], index: 0, kind: input, shape index: {}]
  %s1 = inlined_call_operand.hbm [shape: bf16[256,4096], index: 1, kind: input, shape index: {}]
  %s2 = inlined_call_operand.hbm [shape: f32[1,1024], index: 2, kind: input, shape index: {}]
  %s3 = inlined_call_operand.hbm [shape: bf16[1024,2048], index: 3, kind: input, shape index: {}]
  %s4 = inlined_call_operand.hbm [shape: f32[1,512], index: 4, kind: input, shape index: {}]
  %s5 = inlined_call_operand.hbm [shape: bf16[512,1024], index: 5, kind: input, shape index: {}]
  %s6 = inlined_call_operand.hbm [shape: f32[1,256], index: 6, kind: input, shape index: {}]
  %s7 = inlined_call_operand.hbm [shape: f32[256,128], index: 7, kind: input, shape index: {}]
  %s8 = inlined_call_operand.hbm [shape: f32[1,128], index: 8, kind: input, shape index: {}]
  %s9 = inlined_call_operand.hbm [shape: f32[128,128], index: 9, kind: input, shape index: {}]
  %s10 = inlined_call_operand.hbm [shape: f32[1,128], index: 10, kind: input, shape index: {}]
  %s11 = inlined_call_operand.hbm [shape: f32[128,128], index: 11, kind: input, shape index: {}]
  %s12 = inlined_call_operand.hbm [shape: f32[1,128], index: 12, kind: input, shape index: {}]
  %s13 = inlined_call_operand.vmem [shape: f32[16,128], index: 13, kind: output, shape index: {}]
  %s14 = sld [smem:[#allocation0]]
  $region110: #{ipcnn_forward.1} parent=0
    _
  %s16 = ssub.s32 1, %s14
  %s17 = scalar_select 0, %s16, %s14
  $region1: #{ipcnn_forward.1} parent=0
    #allocation2 [shape = 'u8[2097152]{0}', space=vmem, size = 0x200000, scoped, tag = 'input window, operand 1, single buffered']
    #allocation3 [shape = 's32[1]{0}', space=sflag, size = 0x4, scoped, tag = 'scoped memory for ipcnn_forward.1']
    #allocation4 [shape = 'u8[4096]{0}', space=vmem, size = 0x1000, scoped, tag = 'input window, operand 2, single buffered']
    #allocation5 [shape = 's32[1]{0}', space=sflag, size = 0x4, scoped, tag = 'scoped memory for ipcnn_forward.1']
    #allocation6 [shape = 'u8[4194304]{0}', space=vmem, size = 0x400000, scoped, tag = 'input window, operand 3, single buffered']
    #allocation7 [shape = 'u8[2048]{0}', space=vmem, size = 0x800, scoped, tag = 'input window, operand 4, single buffered']
    #allocation8 [shape = 's32[1]{0}', space=sflag, size = 0x4, scoped, tag = 'scoped memory for ipcnn_forward.1']
    #allocation9 [shape = 'u8[1048576]{0}', space=vmem, size = 0x100000, scoped, tag = 'input window, operand 5, single buffered']
    #allocation10 [shape = 'u8[1024]{0}', space=vmem, size = 0x400, scoped, tag = 'input window, operand 6, single buffered']
    #allocation11 [shape = 's32[1]{0}', space=sflag, size = 0x4, scoped, tag = 'scoped memory for ipcnn_forward.1']
    #allocation12 [shape = 'u8[131072]{0}', space=vmem, size = 0x20000, scoped, tag = 'input window, operand 7, single buffered']
    #allocation13 [shape = 'u8[512]{0}', space=vmem, size = 0x400, scoped, tag = 'input window, operand 8, single buffered']
    #allocation14 [shape = 's32[1]{0}', space=sflag, size = 0x4, scoped, tag = 'scoped memory for ipcnn_forward.1']
    #allocation15 [shape = 'u8[65536]{0}', space=vmem, size = 0x10000, scoped, tag = 'input window, operand 9, single buffered']
    #allocation16 [shape = 'u8[512]{0}', space=vmem, size = 0x400, scoped, tag = 'input window, operand 10, single buffered']
    #allocation17 [shape = 's32[1]{0}', space=sflag, size = 0x4, scoped, tag = 'scoped memory for ipcnn_forward.1']
    #allocation18 [shape = 'u8[65536]{0}', space=vmem, size = 0x10000, scoped, tag = 'input window, operand 11, single buffered']
    #allocation19 [shape = 'u8[512]{0}', space=vmem, size = 0x400, scoped, tag = 'input window, operand 12, single buffered']
    #allocation20 [shape = 's32[1]{0}', space=sflag, size = 0x4, scoped, tag = 'scoped memory for ipcnn_forward.1']
    %18 = vsyncpa [#allocation3], 0
    %19 = vsyncpa [#allocation5], 0
    %20 = vsyncpa [#allocation8], 0
    %21 = vsyncpa [#allocation11], 0
    %22 = vsyncpa [#allocation14], 0
    %23 = vsyncpa [#allocation17], 0
    %24 = vsyncpa [#allocation20], 0
    // Predicated region
    $region2: #{ipcnn_forward.1} parent=1 // pred_check
      _
    $region3: #{ipcnn_forward.1} parent=1 // pred_check_branch
      %26 = sbr.rel (0) target = $region5
    $region4: #{ipcnn_forward.1} parent=1 // pred_region
      _
    $region5: #{ipcnn_forward.1} parent=1 // pred_fallthru
      _
    // Predicated region
    $region6: #{ipcnn_forward.1} parent=1 // pred_check
      _
    $region7: #{ipcnn_forward.1} parent=1 // pred_check_branch
      %28 = sbr.rel (0) target = $region9
    $region8: #{ipcnn_forward.1} parent=1 // pred_region
      %s30 = ssub.s32 65536, 65536
      %31 = vsyncadd [#allocation3], %s30
      %s32 = sshll.u32 [#allocation2], 4
      %s33 = int_to_ptr.vmem [resolvable:$true] %s32
      %38 = dma.hbm_to_vmem [thread:$0]  %s1, 65536, %s33, [#allocation3], 2048, 2048, 128
    $region9: #{ipcnn_forward.1} parent=1 // pred_fallthru
      _
    // Predicated region
    $region10: #{ipcnn_forward.1} parent=1 // pred_check
      _
    $region11: #{ipcnn_forward.1} parent=1 // pred_check_branch
      %40 = sbr.rel (0) target = $region13
    $region12: #{ipcnn_forward.1} parent=1 // pred_region
      %s42 = ssub.s32 128, 128
      %43 = vsyncadd [#allocation5], %s42
      %s45 = sshll.u32 [#allocation4], 4
      %s46 = int_to_ptr.vmem [resolvable:$true] %s45
      %48 = dma.hbm_to_vmem [thread:$0]  %s2, 128, %s46, [#allocation5]
    $region13: #{ipcnn_forward.1} parent=1 // pred_fallthru
      _
    // Predicated region
    $region14: #{ipcnn_forward.1} parent=1 // pred_check
      _
    $region15: #{ipcnn_forward.1} parent=1 // pred_check_branch
      %50 = sbr.rel (0) target = $region17
    $region16: #{ipcnn_forward.1} parent=1 // pred_region
      %s52 = ssub.s32 131072, 131072
      %53 = vsyncadd [#allocation5], %s52
      %s54 = sshll.u32 [#allocation6], 4
      %s55 = int_to_ptr.vmem [resolvable:$true] %s54
      %60 = dma.hbm_to_vmem [thread:$0]  %s3, 131072, %s55, [#allocation5], 1024, 1024, 64
    $region17: #{ipcnn_forward.1} parent=1 // pred_fallthru
      _
    // Predicated region
    $region18: #{ipcnn_forward.1} parent=1 // pred_check
      _
    $region19: #{ipcnn_forward.1} parent=1 // pred_check_branch
      %62 = sbr.rel (0) target = $region21
    $region20: #{ipcnn_forward.1} parent=1 // pred_region
      %s64 = ssub.s32 64, 64
      %65 = vsyncadd [#allocation8], %s64
      %s67 = sshll.u32 [#allocation7], 4
      %s68 = int_to_ptr.vmem [resolvable:$true] %s67
      %70 = dma.hbm_to_vmem [thread:$0]  %s4, 64, %s68, [#allocation8]
    $region21: #{ipcnn_forward.1} parent=1 // pred_fallthru
      _
    // Predicated region
    $region22: #{ipcnn_forward.1} parent=1 // pred_check
      _
    $region23: #{ipcnn_forward.1} parent=1 // pred_check_branch
      %72 = sbr.rel (0) target = $region25
    $region24: #{ipcnn_forward.1} parent=1 // pred_region
      %s74 = ssub.s32 32768, 32768
      %75 = vsyncadd [#allocation8], %s74
      %s76 = sshll.u32 [#allocation9], 4
      %s77 = int_to_ptr.vmem [resolvable:$true] %s76
      %82 = dma.hbm_to_vmem [thread:$0]  %s5, 32768, %s77, [#allocation8], 512, 512, 32
    $region25: #{ipcnn_forward.1} parent=1 // pred_fallthru
      _
    // Predicated region
    $region26: #{ipcnn_forward.1} parent=1 // pred_check
      _
    $region27: #{ipcnn_forward.1} parent=1 // pred_check_branch
      %84 = sbr.rel (0) target = $region29
    $region28: #{ipcnn_forward.1} parent=1 // pred_region
      %s86 = ssub.s32 32, 32
      %87 = vsyncadd [#allocation11], %s86
      %s89 = sshll.u32 [#allocation10], 4
      %s90 = int_to_ptr.vmem [resolvable:$true] %s89
      %92 = dma.hbm_to_vmem [thread:$0]  %s6, 32, %s90, [#allocation11]
    $region29: #{ipcnn_forward.1} parent=1 // pred_fallthru
      _
    // Predicated region
    $region30: #{ipcnn_forward.1} parent=1 // pred_check
      _
    $region31: #{ipcnn_forward.1} parent=1 // pred_check_branch
      %94 = sbr.rel (0) target = $region33
    $region32: #{ipcnn_forward.1} parent=1 // pred_region
      %s96 = ssub.s32 4096, 4096
      %97 = vsyncadd [#allocation11], %s96
      %s98 = sshll.u32 [#allocation12], 4
      %s99 = int_to_ptr.vmem [resolvable:$true] %s98
      %104 = dma.hbm_to_vmem [thread:$0]  %s7, 4096, %s99, [#allocation11], 128, 128, 8
    $region33: #{ipcnn_forward.1} parent=1 // pred_fallthru
      _
    // Predicated region
    $region34: #{ipcnn_forward.1} parent=1 // pred_check
      _
    $region35: #{ipcnn_forward.1} parent=1 // pred_check_branch
      %106 = sbr.rel (0) target = $region37
    $region36: #{ipcnn_forward.1} parent=1 // pred_region
      %s108 = ssub.s32 16, 16
      %109 = vsyncadd [#allocation14], %s108
      %s111 = sshll.u32 [#allocation13], 4
      %s112 = int_to_ptr.vmem [resolvable:$true] %s111
      %114 = dma.hbm_to_vmem [thread:$0]  %s8, 16, %s112, [#allocation14]
    $region37: #{ipcnn_forward.1} parent=1 // pred_fallthru
      _
    // Predicated region
    $region38: #{ipcnn_forward.1} parent=1 // pred_check
      _
    $region39: #{ipcnn_forward.1} parent=1 // pred_check_branch
      %116 = sbr.rel (0) target = $region41
    $region40: #{ipcnn_forward.1} parent=1 // pred_region
      %s118 = ssub.s32 2048, 2048
      %119 = vsyncadd [#allocation14], %s118
      %s120 = sshll.u32 [#allocation15], 4
      %s121 = int_to_ptr.vmem [resolvable:$true] %s120
      %126 = dma.hbm_to_vmem [thread:$0]  %s9, 2048, %s121, [#allocation14], 128, 128, 8
    $region41: #{ipcnn_forward.1} parent=1 // pred_fallthru
      _
    // Predicated region
    $region42: #{ipcnn_forward.1} parent=1 // pred_check
      _
    $region43: #{ipcnn_forward.1} parent=1 // pred_check_branch
      %128 = sbr.rel (0) target = $region45
    $region44: #{ipcnn_forward.1} parent=1 // pred_region
      %s130 = ssub.s32 16, 16
      %131 = vsyncadd [#allocation17], %s130
      %s133 = sshll.u32 [#allocation16], 4
      %s134 = int_to_ptr.vmem [resolvable:$true] %s133
      %136 = dma.hbm_to_vmem [thread:$0]  %s10, 16, %s134, [#allocation17]
    $region45: #{ipcnn_forward.1} parent=1 // pred_fallthru
      _
    // Predicated region
    $region46: #{ipcnn_forward.1} parent=1 // pred_check
      _
    $region47: #{ipcnn_forward.1} parent=1 // pred_check_branch
      %138 = sbr.rel (0) target = $region49
    $region48: #{ipcnn_forward.1} parent=1 // pred_region
      %s140 = ssub.s32 2048, 2048
      %141 = vsyncadd [#allocation17], %s140
      %s142 = sshll.u32 [#allocation18], 4
      %s143 = int_to_ptr.vmem [resolvable:$true] %s142
      %148 = dma.hbm_to_vmem [thread:$0]  %s11, 2048, %s143, [#allocation17], 128, 128, 8
    $region49: #{ipcnn_forward.1} parent=1 // pred_fallthru
      _
    // Predicated region
    $region50: #{ipcnn_forward.1} parent=1 // pred_check
      _
    $region51: #{ipcnn_forward.1} parent=1 // pred_check_branch
      %150 = sbr.rel (0) target = $region53
    $region52: #{ipcnn_forward.1} parent=1 // pred_region
      %s152 = ssub.s32 16, 16
      %153 = vsyncadd [#allocation20], %s152
      %s155 = sshll.u32 [#allocation19], 4
      %s156 = int_to_ptr.vmem [resolvable:$true] %s155
      %158 = dma.hbm_to_vmem [thread:$0]  %s12, 16, %s156, [#allocation20]
    $region53: #{ipcnn_forward.1} parent=1 // pred_fallthru
      _
    // Predicated region
    $region54: #{ipcnn_forward.1} parent=1 // pred_check
      _
    $region55: #{ipcnn_forward.1} parent=1 // pred_check_branch
      %160 = sbr.rel (0) target = $region57
    $region56: #{ipcnn_forward.1} parent=1 // pred_region
      %161 = dma.done [#allocation3], 65536
    $region57: #{ipcnn_forward.1} parent=1 // pred_fallthru
      _
    // Predicated region
    $region58: #{ipcnn_forward.1} parent=1 // pred_check
      _
    $region59: #{ipcnn_forward.1} parent=1 // pred_check_branch
      %163 = sbr.rel (0) target = $region61
    $region60: #{ipcnn_forward.1} parent=1 // pred_region
      %164 = dma.done [#allocation5], 128
    $region61: #{ipcnn_forward.1} parent=1 // pred_fallthru
      _
    // Predicated region
    $region62: #{ipcnn_forward.1} parent=1 // pred_check
      _
    $region63: #{ipcnn_forward.1} parent=1 // pred_check_branch
      %166 = sbr.rel (0) target = $region65
    $region64: #{ipcnn_forward.1} parent=1 // pred_region
      %167 = dma.done [#allocation5], 131072
    $region65: #{ipcnn_forward.1} parent=1 // pred_fallthru
      _
    // Predicated region
    $region66: #{ipcnn_forward.1} parent=1 // pred_check
      _
    $region67: #{ipcnn_forward.1} parent=1 // pred_check_branch
      %169 = sbr.rel (0) target = $region69
    $region68: #{ipcnn_forward.1} parent=1 // pred_region
      %170 = dma.done [#allocation8], 64
    $region69: #{ipcnn_forward.1} parent=1 // pred_fallthru
      _
    // Predicated region
    $region70: #{ipcnn_forward.1} parent=1 // pred_check
      _
    $region71: #{ipcnn_forward.1} parent=1 // pred_check_branch
      %172 = sbr.rel (0) target = $region73
    $region72: #{ipcnn_forward.1} parent=1 // pred_region
      %173 = dma.done [#allocation8], 32768
    $region73: #{ipcnn_forward.1} parent=1 // pred_fallthru
      _
    // Predicated region
    $region74: #{ipcnn_forward.1} parent=1 // pred_check
      _
    $region75: #{ipcnn_forward.1} parent=1 // pred_check_branch
      %175 = sbr.rel (0) target = $region77
    $region76: #{ipcnn_forward.1} parent=1 // pred_region
      %176 = dma.done [#allocation11], 32
    $region77: #{ipcnn_forward.1} parent=1 // pred_fallthru
      _
    // Predicated region
    $region78: #{ipcnn_forward.1} parent=1 // pred_check
      _
    $region79: #{ipcnn_forward.1} parent=1 // pred_check_branch
      %178 = sbr.rel (0) target = $region81
    $region80: #{ipcnn_forward.1} parent=1 // pred_region
      %179 = dma.done [#allocation11], 4096
    $region81: #{ipcnn_forward.1} parent=1 // pred_fallthru
      _
    // Predicated region
    $region82: #{ipcnn_forward.1} parent=1 // pred_check
      _
    $region83: #{ipcnn_forward.1} parent=1 // pred_check_branch
      %181 = sbr.rel (0) target = $region85
    $region84: #{ipcnn_forward.1} parent=1 // pred_region
      %182 = dma.done [#allocation14], 16
    $region85: #{ipcnn_forward.1} parent=1 // pred_fallthru
      _
    // Predicated region
    $region86: #{ipcnn_forward.1} parent=1 // pred_check
      _
    $region87: #{ipcnn_forward.1} parent=1 // pred_check_branch
      %184 = sbr.rel (0) target = $region89
    $region88: #{ipcnn_forward.1} parent=1 // pred_region
      %185 = dma.done [#allocation14], 2048
    $region89: #{ipcnn_forward.1} parent=1 // pred_fallthru
      _
    // Predicated region
    $region90: #{ipcnn_forward.1} parent=1 // pred_check
      _
    $region91: #{ipcnn_forward.1} parent=1 // pred_check_branch
      %187 = sbr.rel (0) target = $region93
    $region92: #{ipcnn_forward.1} parent=1 // pred_region
      %188 = dma.done [#allocation17], 16
    $region93: #{ipcnn_forward.1} parent=1 // pred_fallthru
      _
    // Predicated region
    $region94: #{ipcnn_forward.1} parent=1 // pred_check
      _
    $region95: #{ipcnn_forward.1} parent=1 // pred_check_branch
      %190 = sbr.rel (0) target = $region97
    $region96: #{ipcnn_forward.1} parent=1 // pred_region
      %191 = dma.done [#allocation17], 2048
    $region97: #{ipcnn_forward.1} parent=1 // pred_fallthru
      _
    // Predicated region
    $region98: #{ipcnn_forward.1} parent=1 // pred_check
      _
    $region99: #{ipcnn_forward.1} parent=1 // pred_check_branch
      %193 = sbr.rel (0) target = $region101
    $region100: #{ipcnn_forward.1} parent=1 // pred_region
      %194 = dma.done [#allocation20], 16
    $region101: #{ipcnn_forward.1} parent=1 // pred_fallthru
      _
    %v195 = vld [vmem:[%s0] sm:$0xff]
    %v196 = vld [vmem:[%s0 + $0x8] sm:$0xff]
    %v197 = vld [vmem:[#allocation2] sm:$0xff]
    %v198 = vld [vmem:[#allocation2 + $0x8] sm:$0xff]
    %v199 = vld [vmem:[#allocation2 + $0x10] sm:$0xff]
    %v200 = vld [vmem:[#allocation2 + $0x18] sm:$0xff]
    %v201 = vld [vmem:[#allocation2 + $0x20] sm:$0xff]
    %v202 = vld [vmem:[#allocation2 + $0x28] sm:$0xff]
    %v203 = vld [vmem:[#allocation2 + $0x30] sm:$0xff]
    %v204 = vld [vmem:[#allocation2 + $0x38] sm:$0xff]
    %v205 = vld [vmem:[#allocation2 + $0x40] sm:$0xff]
    %v206 = vld [vmem:[#allocation2 + $0x48] sm:$0xff]
    %v207 = vld [vmem:[#allocation2 + $0x50] sm:$0xff]
    %v208 = vld [vmem:[#allocation2 + $0x58] sm:$0xff]
    %v209 = vld [vmem:[#allocation2 + $0x60] sm:$0xff]
    %v210 = vld [vmem:[#allocation2 + $0x68] sm:$0xff]
    %v211 = vld [vmem:[#allocation2 + $0x70] sm:$0xff]
    %v212 = vld [vmem:[#allocation2 + $0x78] sm:$0xff]
    %v213 = vld [vmem:[#allocation2 + $0x80] sm:$0xff]
    %v214 = vld [vmem:[#allocation2 + $0x88] sm:$0xff]
    %v215 = vld [vmem:[#allocation2 + $0x90] sm:$0xff]
    %v216 = vld [vmem:[#allocation2 + $0x98] sm:$0xff]
    %v217 = vld [vmem:[#allocation2 + $0xa0] sm:$0xff]
    %v218 = vld [vmem:[#allocation2 + $0xa8] sm:$0xff]
    %v219 = vld [vmem:[#allocation2 + $0xb0] sm:$0xff]
    %v220 = vld [vmem:[#allocation2 + $0xb8] sm:$0xff]
    %v221 = vld [vmem:[#allocation2 + $0xc0] sm:$0xff]
    %v222 = vld [vmem:[#allocation2 + $0xc8] sm:$0xff]
    %v223 = vld [vmem:[#allocation2 + $0xd0] sm:$0xff]
    %v224 = vld [vmem:[#allocation2 + $0xd8] sm:$0xff]
    %v225 = vld [vmem:[#allocation2 + $0xe0] sm:$0xff]
    %v226 = vld [vmem:[#allocation2 + $0xe8] sm:$0xff]
    %v227 = vld [vmem:[#allocation2 + $0xf0] sm:$0xff]
    %v228 = vld [vmem:[#allocation2 + $0xf8] sm:$0xff]
    %v229 = vld [vmem:[#allocation2 + $0x100] sm:$0xff]
    %v230 = vld [vmem:[#allocation2 + $0x108] sm:$0xff]
    %v231 = vld [vmem:[#allocation2 + $0x110] sm:$0xff]
    %v232 = vld [vmem:[#allocation2 + $0x118] sm:$0xff]
    %v233 = vld [vmem:[#allocation2 + $0x120] sm:$0xff]
    %v234 = vld [vmem:[#allocation2 + $0x128] sm:$0xff]
    %v235 = vld [vmem:[#allocation2 + $0x130] sm:$0xff]
    %v236 = vld [vmem:[#allocation2 + $0x138] sm:$0xff]
    %v237 = vld [vmem:[#allocation2 + $0x140] sm:$0xff]
    %v238 = vld [vmem:[#allocation2 + $0x148] sm:$0xff]
    %v239 = vld [vmem:[#allocation2 + $0x150] sm:$0xff]
    %v240 = vld [vmem:[#allocation2 + $0x158] sm:$0xff]
    %v241 = vld [vmem:[#allocation2 + $0x160] sm:$0xff]
    %v242 = vld [vmem:[#allocation2 + $0x168] sm:$0xff]
    %v243 = vld [vmem:[#allocation2 + $0x170] sm:$0xff]
    %v244 = vld [vmem:[#allocation2 + $0x178] sm:$0xff]
    %v245 = vld [vmem:[#allocation2 + $0x180] sm:$0xff]
    %v246 = vld [vmem:[#allocation2 + $0x188] sm:$0xff]
    %v247 = vld [vmem:[#allocation2 + $0x190] sm:$0xff]
    %v248 = vld [vmem:[#allocation2 + $0x198] sm:$0xff]
    %v249 = vld [vmem:[#allocation2 + $0x1a0] sm:$0xff]
    %v250 = vld [vmem:[#allocation2 + $0x1a8] sm:$0xff]
    %v251 = vld [vmem:[#allocation2 + $0x1b0] sm:$0xff]
    %v252 = vld [vmem:[#allocation2 + $0x1b8] sm:$0xff]
    %v253 = vld [vmem:[#allocation2 + $0x1c0] sm:$0xff]
    %v254 = vld [vmem:[#allocation2 + $0x1c8] sm:$0xff]
    %v255 = vld [vmem:[#allocation2 + $0x1d0] sm:$0xff]
    %v256 = vld [vmem:[#allocation2 + $0x1d8] sm:$0xff]
    %v257 = vld [vmem:[#allocation2 + $0x1e0] sm:$0xff]
    %v258 = vld [vmem:[#allocation2 + $0x1e8] sm:$0xff]
    %v259 = vld [vmem:[#allocation2 + $0x1f0] sm:$0xff]
    %v260 = vld [vmem:[#allocation2 + $0x1f8] sm:$0xff]
    %v261 = vld [vmem:[#allocation2 + $0x200] sm:$0xff]
    %v262 = vld [vmem:[#allocation2 + $0x208] sm:$0xff]
    %v263 = vld [vmem:[#allocation2 + $0x210] sm:$0xff]
    %v264 = vld [vmem:[#allocation2 + $0x218] sm:$0xff]
    %v265 = vld [vmem:[#allocation2 + $0x220] sm:$0xff]
    %v266 = vld [vmem:[#allocation2 + $0x228] sm:$0xff]
    %v267 = vld [vmem:[#allocation2 + $0x230] sm:$0xff]
    %v268 = vld [vmem:[#allocation2 + $0x238] sm:$0xff]
    %v269 = vld [vmem:[#allocation2 + $0x240] sm:$0xff]
    %v270 = vld [vmem:[#allocation2 + $0x248] sm:$0xff]
    %v271 = vld [vmem:[#allocation2 + $0x250] sm:$0xff]
    %v272 = vld [vmem:[#allocation2 + $0x258] sm:$0xff]
    %v273 = vld [vmem:[#allocation2 + $0x260] sm:$0xff]
    %v274 = vld [vmem:[#allocation2 + $0x268] sm:$0xff]
    %v275 = vld [vmem:[#allocation2 + $0x270] sm:$0xff]
    %v276 = vld [vmem:[#allocation2 + $0x278] sm:$0xff]
    %v277 = vld [vmem:[#allocation2 + $0x280] sm:$0xff]
    %v278 = vld [vmem:[#allocation2 + $0x288] sm:$0xff]
    %v279 = vld [vmem:[#allocation2 + $0x290] sm:$0xff]
    %v280 = vld [vmem:[#allocation2 + $0x298] sm:$0xff]
    %v281 = vld [vmem:[#allocation2 + $0x2a0] sm:$0xff]
    %v282 = vld [vmem:[#allocation2 + $0x2a8] sm:$0xff]
    %v283 = vld [vmem:[#allocation2 + $0x2b0] sm:$0xff]
    %v284 = vld [vmem:[#allocation2 + $0x2b8] sm:$0xff]
    %v285 = vld [vmem:[#allocation2 + $0x2c0] sm:$0xff]
    %v286 = vld [vmem:[#allocation2 + $0x2c8] sm:$0xff]
    %v287 = vld [vmem:[#allocation2 + $0x2d0] sm:$0xff]
    %v288 = vld [vmem:[#allocation2 + $0x2d8] sm:$0xff]
    %v289 = vld [vmem:[#allocation2 + $0x2e0] sm:$0xff]
    %v290 = vld [vmem:[#allocation2 + $0x2e8] sm:$0xff]
    %v291 = vld [vmem:[#allocation2 + $0x2f0] sm:$0xff]
    %v292 = vld [vmem:[#allocation2 + $0x2f8] sm:$0xff]
    %v293 = vld [vmem:[#allocation2 + $0x300] sm:$0xff]
    %v294 = vld [vmem:[#allocation2 + $0x308] sm:$0xff]
    %v295 = vld [vmem:[#allocation2 + $0x310] sm:$0xff]
    %v296 = vld [vmem:[#allocation2 + $0x318] sm:$0xff]
    %v297 = vld [vmem:[#allocation2 + $0x320] sm:$0xff]
    %v298 = vld [vmem:[#allocation2 + $0x328] sm:$0xff]
    %v299 = vld [vmem:[#allocation2 + $0x330] sm:$0xff]
    %v300 = vld [vmem:[#allocation2 + $0x338] sm:$0xff]
    %v301 = vld [vmem:[#allocation2 + $0x340] sm:$0xff]
    %v302 = vld [vmem:[#allocation2 + $0x348] sm:$0xff]
    %v303 = vld [vmem:[#allocation2 + $0x350] sm:$0xff]
    %v304 = vld [vmem:[#allocation2 + $0x358] sm:$0xff]
    %v305 = vld [vmem:[#allocation2 + $0x360] sm:$0xff]
    %v306 = vld [vmem:[#allocation2 + $0x368] sm:$0xff]
    %v307 = vld [vmem:[#allocation2 + $0x370] sm:$0xff]
    %v308 = vld [vmem:[#allocation2 + $0x378] sm:$0xff]
    %v309 = vld [vmem:[#allocation2 + $0x380] sm:$0xff]
    %v310 = vld [vmem:[#allocation2 + $0x388] sm:$0xff]
    %v311 = vld [vmem:[#allocation2 + $0x390] sm:$0xff]
    %v312 = vld [vmem:[#allocation2 + $0x398] sm:$0xff]
    %v313 = vld [vmem:[#allocation2 + $0x3a0] sm:$0xff]
    %v314 = vld [vmem:[#allocation2 + $0x3a8] sm:$0xff]
    %v315 = vld [vmem:[#allocation2 + $0x3b0] sm:$0xff]
    %v316 = vld [vmem:[#allocation2 + $0x3b8] sm:$0xff]
    %v317 = vld [vmem:[#allocation2 + $0x3c0] sm:$0xff]
    %v318 = vld [vmem:[#allocation2 + $0x3c8] sm:$0xff]
    %v319 = vld [vmem:[#allocation2 + $0x3d0] sm:$0xff]
    %v320 = vld [vmem:[#allocation2 + $0x3d8] sm:$0xff]
    %v321 = vld [vmem:[#allocation2 + $0x3e0] sm:$0xff]
    %v322 = vld [vmem:[#allocation2 + $0x3e8] sm:$0xff]
    %v323 = vld [vmem:[#allocation2 + $0x3f0] sm:$0xff]
    %v324 = vld [vmem:[#allocation2 + $0x3f8] sm:$0xff]
    %v325 = vld [vmem:[#allocation2 + $0x400] sm:$0xff]
    %v326 = vld [vmem:[#allocation2 + $0x408] sm:$0xff]
    %v327 = vld [vmem:[#allocation2 + $0x410] sm:$0xff]
    %v328 = vld [vmem:[#allocation2 + $0x418] sm:$0xff]
    %v329 = vld [vmem:[#allocation2 + $0x420] sm:$0xff]
    %v330 = vld [vmem:[#allocation2 + $0x428] sm:$0xff]
    %v331 = vld [vmem:[#allocation2 + $0x430] sm:$0xff]
    %v332 = vld [vmem:[#allocation2 + $0x438] sm:$0xff]
    %v333 = vld [vmem:[#allocation2 + $0x440] sm:$0xff]
    %v334 = vld [vmem:[#allocation2 + $0x448] sm:$0xff]
    %v335 = vld [vmem:[#allocation2 + $0x450] sm:$0xff]
    %v336 = vld [vmem:[#allocation2 + $0x458] sm:$0xff]
    %v337 = vld [vmem:[#allocation2 + $0x460] sm:$0xff]
    %v338 = vld [vmem:[#allocation2 + $0x468] sm:$0xff]
    %v339 = vld [vmem:[#allocation2 + $0x470] sm:$0xff]
    %v340 = vld [vmem:[#allocation2 + $0x478] sm:$0xff]
    %v341 = vld [vmem:[#allocation2 + $0x480] sm:$0xff]
    %v342 = vld [vmem:[#allocation2 + $0x488] sm:$0xff]
    %v343 = vld [vmem:[#allocation2 + $0x490] sm:$0xff]
    %v344 = vld [vmem:[#allocation2 + $0x498] sm:$0xff]
    %v345 = vld [vmem:[#allocation2 + $0x4a0] sm:$0xff]
    %v346 = vld [vmem:[#allocation2 + $0x4a8] sm:$0xff]
    %v347 = vld [vmem:[#allocation2 + $0x4b0] sm:$0xff]
    %v348 = vld [vmem:[#allocation2 + $0x4b8] sm:$0xff]
    %v349 = vld [vmem:[#allocation2 + $0x4c0] sm:$0xff]
    %v350 = vld [vmem:[#allocation2 + $0x4c8] sm:$0xff]
    %v351 = vld [vmem:[#allocation2 + $0x4d0] sm:$0xff]
    %v352 = vld [vmem:[#allocation2 + $0x4d8] sm:$0xff]
    %v353 = vld [vmem:[#allocation2 + $0x4e0] sm:$0xff]
    %v354 = vld [vmem:[#allocation2 + $0x4e8] sm:$0xff]
    %v355 = vld [vmem:[#allocation2 + $0x4f0] sm:$0xff]
    %v356 = vld [vmem:[#allocation2 + $0x4f8] sm:$0xff]
    %v357 = vld [vmem:[#allocation2 + $0x500] sm:$0xff]
    %v358 = vld [vmem:[#allocation2 + $0x508] sm:$0xff]
    %v359 = vld [vmem:[#allocation2 + $0x510] sm:$0xff]
    %v360 = vld [vmem:[#allocation2 + $0x518] sm:$0xff]
    %v361 = vld [vmem:[#allocation2 + $0x520] sm:$0xff]
    %v362 = vld [vmem:[#allocation2 + $0x528] sm:$0xff]
    %v363 = vld [vmem:[#allocation2 + $0x530] sm:$0xff]
    %v364 = vld [vmem:[#allocation2 + $0x538] sm:$0xff]
    %v365 = vld [vmem:[#allocation2 + $0x540] sm:$0xff]
    %v366 = vld [vmem:[#allocation2 + $0x548] sm:$0xff]
    %v367 = vld [vmem:[#allocation2 + $0x550] sm:$0xff]
    %v368 = vld [vmem:[#allocation2 + $0x558] sm:$0xff]
    %v369 = vld [vmem:[#allocation2 + $0x560] sm:$0xff]
    %v370 = vld [vmem:[#allocation2 + $0x568] sm:$0xff]
    %v371 = vld [vmem:[#allocation2 + $0x570] sm:$0xff]
    %v372 = vld [vmem:[#allocation2 + $0x578] sm:$0xff]
    %v373 = vld [vmem:[#allocation2 + $0x580] sm:$0xff]
    %v374 = vld [vmem:[#allocation2 + $0x588] sm:$0xff]
    %v375 = vld [vmem:[#allocation2 + $0x590] sm:$0xff]
    %v376 = vld [vmem:[#allocation2 + $0x598] sm:$0xff]
    %v377 = vld [vmem:[#allocation2 + $0x5a0] sm:$0xff]
    %v378 = vld [vmem:[#allocation2 + $0x5a8] sm:$0xff]
    %v379 = vld [vmem:[#allocation2 + $0x5b0] sm:$0xff]
    %v380 = vld [vmem:[#allocation2 + $0x5b8] sm:$0xff]
    %v381 = vld [vmem:[#allocation2 + $0x5c0] sm:$0xff]
    %v382 = vld [vmem:[#allocation2 + $0x5c8] sm:$0xff]
    %v383 = vld [vmem:[#allocation2 + $0x5d0] sm:$0xff]
    %v384 = vld [vmem:[#allocation2 + $0x5d8] sm:$0xff]
    %v385 = vld [vmem:[#allocation2 + $0x5e0] sm:$0xff]
    %v386 = vld [vmem:[#allocation2 + $0x5e8] sm:$0xff]
    %v387 = vld [vmem:[#allocation2 + $0x5f0] sm:$0xff]
    %v388 = vld [vmem:[#allocation2 + $0x5f8] sm:$0xff]
    %v389 = vld [vmem:[#allocation2 + $0x600] sm:$0xff]
    %v390 = vld [vmem:[#allocation2 + $0x608] sm:$0xff]
    %v391 = vld [vmem:[#allocation2 + $0x610] sm:$0xff]
    %v392 = vld [vmem:[#allocation2 + $0x618] sm:$0xff]
    %v393 = vld [vmem:[#allocation2 + $0x620] sm:$0xff]
    %v394 = vld [vmem:[#allocation2 + $0x628] sm:$0xff]
    %v395 = vld [vmem:[#allocation2 + $0x630] sm:$0xff]
    %v396 = vld [vmem:[#allocation2 + $0x638] sm:$0xff]
    %v397 = vld [vmem:[#allocation2 + $0x640] sm:$0xff]
    %v398 = vld [vmem:[#allocation2 + $0x648] sm:$0xff]
    %v399 = vld [vmem:[#allocation2 + $0x650] sm:$0xff]
    %v400 = vld [vmem:[#allocation2 + $0x658] sm:$0xff]
    %v401 = vld [vmem:[#allocation2 + $0x660] sm:$0xff]
    %v402 = vld [vmem:[#allocation2 + $0x668] sm:$0xff]
    %v403 = vld [vmem:[#allocation2 + $0x670] sm:$0xff]
    %v404 = vld [vmem:[#allocation2 + $0x678] sm:$0xff]
    %v405 = vld [vmem:[#allocation2 + $0x680] sm:$0xff]
    %v406 = vld [vmem:[#allocation2 + $0x688] sm:$0xff]
    %v407 = vld [vmem:[#allocation2 + $0x690] sm:$0xff]
    %v408 = vld [vmem:[#allocation2 + $0x698] sm:$0xff]
    %v409 = vld [vmem:[#allocation2 + $0x6a0] sm:$0xff]
    %v410 = vld [vmem:[#allocation2 + $0x6a8] sm:$0xff]
    %v411 = vld [vmem:[#allocation2 + $0x6b0] sm:$0xff]
    %v412 = vld [vmem:[#allocation2 + $0x6b8] sm:$0xff]
    %v413 = vld [vmem:[#allocation2 + $0x6c0] sm:$0xff]
    %v414 = vld [vmem:[#allocation2 + $0x6c8] sm:$0xff]
    %v415 = vld [vmem:[#allocation2 + $0x6d0] sm:$0xff]
    %v416 = vld [vmem:[#allocation2 + $0x6d8] sm:$0xff]
    %v417 = vld [vmem:[#allocation2 + $0x6e0] sm:$0xff]
    %v418 = vld [vmem:[#allocation2 + $0x6e8] sm:$0xff]
    %v419 = vld [vmem:[#allocation2 + $0x6f0] sm:$0xff]
    %v420 = vld [vmem:[#allocation2 + $0x6f8] sm:$0xff]
    %v421 = vld [vmem:[#allocation2 + $0x700] sm:$0xff]
    %v422 = vld [vmem:[#allocation2 + $0x708] sm:$0xff]
    %v423 = vld [vmem:[#allocation2 + $0x710] sm:$0xff]
    %v424 = vld [vmem:[#allocation2 + $0x718] sm:$0xff]
    %v425 = vld [vmem:[#allocation2 + $0x720] sm:$0xff]
    %v426 = vld [vmem:[#allocation2 + $0x728] sm:$0xff]
    %v427 = vld [vmem:[#allocation2 + $0x730] sm:$0xff]
    %v428 = vld [vmem:[#allocation2 + $0x738] sm:$0xff]
    %v429 = vld [vmem:[#allocation2 + $0x740] sm:$0xff]
    %v430 = vld [vmem:[#allocation2 + $0x748] sm:$0xff]
    %v431 = vld [vmem:[#allocation2 + $0x750] sm:$0xff]
    %v432 = vld [vmem:[#allocation2 + $0x758] sm:$0xff]
    %v433 = vld [vmem:[#allocation2 + $0x760] sm:$0xff]
    %v434 = vld [vmem:[#allocation2 + $0x768] sm:$0xff]
    %v435 = vld [vmem:[#allocation2 + $0x770] sm:$0xff]
    %v436 = vld [vmem:[#allocation2 + $0x778] sm:$0xff]
    %v437 = vld [vmem:[#allocation2 + $0x780] sm:$0xff]
    %v438 = vld [vmem:[#allocation2 + $0x788] sm:$0xff]
    %v439 = vld [vmem:[#allocation2 + $0x790] sm:$0xff]
    %v440 = vld [vmem:[#allocation2 + $0x798] sm:$0xff]
    %v441 = vld [vmem:[#allocation2 + $0x7a0] sm:$0xff]
    %v442 = vld [vmem:[#allocation2 + $0x7a8] sm:$0xff]
    %v443 = vld [vmem:[#allocation2 + $0x7b0] sm:$0xff]
    %v444 = vld [vmem:[#allocation2 + $0x7b8] sm:$0xff]
    %v445 = vld [vmem:[#allocation2 + $0x7c0] sm:$0xff]
    %v446 = vld [vmem:[#allocation2 + $0x7c8] sm:$0xff]
    %v447 = vld [vmem:[#allocation2 + $0x7d0] sm:$0xff]
    %v448 = vld [vmem:[#allocation2 + $0x7d8] sm:$0xff]
    %v449 = vld [vmem:[#allocation2 + $0x7e0] sm:$0xff]
    %v450 = vld [vmem:[#allocation2 + $0x7e8] sm:$0xff]
    %v451 = vld [vmem:[#allocation2 + $0x7f0] sm:$0xff]
    %v452 = vld [vmem:[#allocation2 + $0x7f8] sm:$0xff]
    %v453 = vld [vmem:[#allocation2 + $0x800] sm:$0xff]
    %v454 = vld [vmem:[#allocation2 + $0x808] sm:$0xff]
    %v455 = vld [vmem:[#allocation2 + $0x810] sm:$0xff]
    %v456 = vld [vmem:[#allocation2 + $0x818] sm:$0xff]
    %v457 = vld [vmem:[#allocation2 + $0x820] sm:$0xff]
    %v458 = vld [vmem:[#allocation2 + $0x828] sm:$0xff]
    %v459 = vld [vmem:[#allocation2 + $0x830] sm:$0xff]
    %v460 = vld [vmem:[#allocation2 + $0x838] sm:$0xff]
    %v461 = vld [vmem:[#allocation2 + $0x840] sm:$0xff]
    %v462 = vld [vmem:[#allocation2 + $0x848] sm:$0xff]
    %v463 = vld [vmem:[#allocation2 + $0x850] sm:$0xff]
    %v464 = vld [vmem:[#allocation2 + $0x858] sm:$0xff]
    %v465 = vld [vmem:[#allocation2 + $0x860] sm:$0xff]
    %v466 = vld [vmem:[#allocation2 + $0x868] sm:$0xff]
    %v467 = vld [vmem:[#allocation2 + $0x870] sm:$0xff]
    %v468 = vld [vmem:[#allocation2 + $0x878] sm:$0xff]
    %v469 = vld [vmem:[#allocation2 + $0x880] sm:$0xff]
    %v470 = vld [vmem:[#allocation2 + $0x888] sm:$0xff]
    %v471 = vld [vmem:[#allocation2 + $0x890] sm:$0xff]
    %v472 = vld [vmem:[#allocation2 + $0x898] sm:$0xff]
    %v473 = vld [vmem:[#allocation2 + $0x8a0] sm:$0xff]
    %v474 = vld [vmem:[#allocation2 + $0x8a8] sm:$0xff]
    %v475 = vld [vmem:[#allocation2 + $0x8b0] sm:$0xff]
    %v476 = vld [vmem:[#allocation2 + $0x8b8] sm:$0xff]
    %v477 = vld [vmem:[#allocation2 + $0x8c0] sm:$0xff]
    %v478 = vld [vmem:[#allocation2 + $0x8c8] sm:$0xff]
    %v479 = vld [vmem:[#allocation2 + $0x8d0] sm:$0xff]
    %v480 = vld [vmem:[#allocation2 + $0x8d8] sm:$0xff]
    %v481 = vld [vmem:[#allocation2 + $0x8e0] sm:$0xff]
    %v482 = vld [vmem:[#allocation2 + $0x8e8] sm:$0xff]
    %v483 = vld [vmem:[#allocation2 + $0x8f0] sm:$0xff]
    %v484 = vld [vmem:[#allocation2 + $0x8f8] sm:$0xff]
    %v485 = vld [vmem:[#allocation2 + $0x900] sm:$0xff]
    %v486 = vld [vmem:[#allocation2 + $0x908] sm:$0xff]
    %v487 = vld [vmem:[#allocation2 + $0x910] sm:$0xff]
    %v488 = vld [vmem:[#allocation2 + $0x918] sm:$0xff]
    %v489 = vld [vmem:[#allocation2 + $0x920] sm:$0xff]
    %v490 = vld [vmem:[#allocation2 + $0x928] sm:$0xff]
    %v491 = vld [vmem:[#allocation2 + $0x930] sm:$0xff]
    %v492 = vld [vmem:[#allocation2 + $0x938] sm:$0xff]
    %v493 = vld [vmem:[#allocation2 + $0x940] sm:$0xff]
    %v494 = vld [vmem:[#allocation2 + $0x948] sm:$0xff]
    %v495 = vld [vmem:[#allocation2 + $0x950] sm:$0xff]
    %v496 = vld [vmem:[#allocation2 + $0x958] sm:$0xff]
    %v497 = vld [vmem:[#allocation2 + $0x960] sm:$0xff]
    %v498 = vld [vmem:[#allocation2 + $0x968] sm:$0xff]
    %v499 = vld [vmem:[#allocation2 + $0x970] sm:$0xff]
    %v500 = vld [vmem:[#allocation2 + $0x978] sm:$0xff]
    %v501 = vld [vmem:[#allocation2 + $0x980] sm:$0xff]
    %v502 = vld [vmem:[#allocation2 + $0x988] sm:$0xff]
    %v503 = vld [vmem:[#allocation2 + $0x990] sm:$0xff]
    %v504 = vld [vmem:[#allocation2 + $0x998] sm:$0xff]
    %v505 = vld [vmem:[#allocation2 + $0x9a0] sm:$0xff]
    %v506 = vld [vmem:[#allocation2 + $0x9a8] sm:$0xff]
    %v507 = vld [vmem:[#allocation2 + $0x9b0] sm:$0xff]
    %v508 = vld [vmem:[#allocation2 + $0x9b8] sm:$0xff]
    %v509 = vld [vmem:[#allocation2 + $0x9c0] sm:$0xff]
    %v510 = vld [vmem:[#allocation2 + $0x9c8] sm:$0xff]
    %v511 = vld [vmem:[#allocation2 + $0x9d0] sm:$0xff]
    %v512 = vld [vmem:[#allocation2 + $0x9d8] sm:$0xff]
    %v513 = vld [vmem:[#allocation2 + $0x9e0] sm:$0xff]
    %v514 = vld [vmem:[#allocation2 + $0x9e8] sm:$0xff]
    %v515 = vld [vmem:[#allocation2 + $0x9f0] sm:$0xff]
    %v516 = vld [vmem:[#allocation2 + $0x9f8] sm:$0xff]
    %v517 = vld [vmem:[#allocation2 + $0xa00] sm:$0xff]
    %v518 = vld [vmem:[#allocation2 + $0xa08] sm:$0xff]
    %v519 = vld [vmem:[#allocation2 + $0xa10] sm:$0xff]
    %v520 = vld [vmem:[#allocation2 + $0xa18] sm:$0xff]
    %v521 = vld [vmem:[#allocation2 + $0xa20] sm:$0xff]
    %v522 = vld [vmem:[#allocation2 + $0xa28] sm:$0xff]
    %v523 = vld [vmem:[#allocation2 + $0xa30] sm:$0xff]
    %v524 = vld [vmem:[#allocation2 + $0xa38] sm:$0xff]
    %v525 = vld [vmem:[#allocation2 + $0xa40] sm:$0xff]
    %v526 = vld [vmem:[#allocation2 + $0xa48] sm:$0xff]
    %v527 = vld [vmem:[#allocation2 + $0xa50] sm:$0xff]
    %v528 = vld [vmem:[#allocation2 + $0xa58] sm:$0xff]
    %v529 = vld [vmem:[#allocation2 + $0xa60] sm:$0xff]
    %v530 = vld [vmem:[#allocation2 + $0xa68] sm:$0xff]
    %v531 = vld [vmem:[#allocation2 + $0xa70] sm:$0xff]
    %v532 = vld [vmem:[#allocation2 + $0xa78] sm:$0xff]
    %v533 = vld [vmem:[#allocation2 + $0xa80] sm:$0xff]
    %v534 = vld [vmem:[#allocation2 + $0xa88] sm:$0xff]
    %v535 = vld [vmem:[#allocation2 + $0xa90] sm:$0xff]
    %v536 = vld [vmem:[#allocation2 + $0xa98] sm:$0xff]
    %v537 = vld [vmem:[#allocation2 + $0xaa0] sm:$0xff]
    %v538 = vld [vmem:[#allocation2 + $0xaa8] sm:$0xff]
    %v539 = vld [vmem:[#allocation2 + $0xab0] sm:$0xff]
    %v540 = vld [vmem:[#allocation2 + $0xab8] sm:$0xff]
    %v541 = vld [vmem:[#allocation2 + $0xac0] sm:$0xff]
    %v542 = vld [vmem:[#allocation2 + $0xac8] sm:$0xff]
    %v543 = vld [vmem:[#allocation2 + $0xad0] sm:$0xff]
    %v544 = vld [vmem:[#allocation2 + $0xad8] sm:$0xff]
    %v545 = vld [vmem:[#allocation2 + $0xae0] sm:$0xff]
    %v546 = vld [vmem:[#allocation2 + $0xae8] sm:$0xff]
    %v547 = vld [vmem:[#allocation2 + $0xaf0] sm:$0xff]
    %v548 = vld [vmem:[#allocation2 + $0xaf8] sm:$0xff]
    %v549 = vld [vmem:[#allocation2 + $0xb00] sm:$0xff]
    %v550 = vld [vmem:[#allocation2 + $0xb08] sm:$0xff]
    %v551 = vld [vmem:[#allocation2 + $0xb10] sm:$0xff]
    %v552 = vld [vmem:[#allocation2 + $0xb18] sm:$0xff]
    %v553 = vld [vmem:[#allocation2 + $0xb20] sm:$0xff]
    %v554 = vld [vmem:[#allocation2 + $0xb28] sm:$0xff]
    %v555 = vld [vmem:[#allocation2 + $0xb30] sm:$0xff]
    %v556 = vld [vmem:[#allocation2 + $0xb38] sm:$0xff]
    %v557 = vld [vmem:[#allocation2 + $0xb40] sm:$0xff]
    %v558 = vld [vmem:[#allocation2 + $0xb48] sm:$0xff]
    %v559 = vld [vmem:[#allocation2 + $0xb50] sm:$0xff]
    %v560 = vld [vmem:[#allocation2 + $0xb58] sm:$0xff]
    %v561 = vld [vmem:[#allocation2 + $0xb60] sm:$0xff]
    %v562 = vld [vmem:[#allocation2 + $0xb68] sm:$0xff]
    %v563 = vld [vmem:[#allocation2 + $0xb70] sm:$0xff]
    %v564 = vld [vmem:[#allocation2 + $0xb78] sm:$0xff]
    %v565 = vld [vmem:[#allocation2 + $0xb80] sm:$0xff]
    %v566 = vld [vmem:[#allocation2 + $0xb88] sm:$0xff]
    %v567 = vld [vmem:[#allocation2 + $0xb90] sm:$0xff]
    %v568 = vld [vmem:[#allocation2 + $0xb98] sm:$0xff]
    %v569 = vld [vmem:[#allocation2 + $0xba0] sm:$0xff]
    %v570 = vld [vmem:[#allocation2 + $0xba8] sm:$0xff]
    %v571 = vld [vmem:[#allocation2 + $0xbb0] sm:$0xff]
    %v572 = vld [vmem:[#allocation2 + $0xbb8] sm:$0xff]
    %v573 = vld [vmem:[#allocation2 + $0xbc0] sm:$0xff]
    %v574 = vld [vmem:[#allocation2 + $0xbc8] sm:$0xff]
    %v575 = vld [vmem:[#allocation2 + $0xbd0] sm:$0xff]
    %v576 = vld [vmem:[#allocation2 + $0xbd8] sm:$0xff]
    %v577 = vld [vmem:[#allocation2 + $0xbe0] sm:$0xff]
    %v578 = vld [vmem:[#allocation2 + $0xbe8] sm:$0xff]
    %v579 = vld [vmem:[#allocation2 + $0xbf0] sm:$0xff]
    %v580 = vld [vmem:[#allocation2 + $0xbf8] sm:$0xff]
    %v581 = vld [vmem:[#allocation2 + $0xc00] sm:$0xff]
    %v582 = vld [vmem:[#allocation2 + $0xc08] sm:$0xff]
    %v583 = vld [vmem:[#allocation2 + $0xc10] sm:$0xff]
    %v584 = vld [vmem:[#allocation2 + $0xc18] sm:$0xff]
    %v585 = vld [vmem:[#allocation2 + $0xc20] sm:$0xff]
    %v586 = vld [vmem:[#allocation2 + $0xc28] sm:$0xff]
    %v587 = vld [vmem:[#allocation2 + $0xc30] sm:$0xff]
    %v588 = vld [vmem:[#allocation2 + $0xc38] sm:$0xff]
    %v589 = vld [vmem:[#allocation2 + $0xc40] sm:$0xff]
    %v590 = vld [vmem:[#allocation2 + $0xc48] sm:$0xff]
    %v591 = vld [vmem:[#allocation2 + $0xc50] sm:$0xff]
    %v592 = vld [vmem:[#allocation2 + $0xc58] sm:$0xff]
    %v593 = vld [vmem:[#allocation2 + $0xc60] sm:$0xff]
    %v594 = vld [vmem:[#allocation2 + $0xc68] sm:$0xff]
    %v595 = vld [vmem:[#allocation2 + $0xc70] sm:$0xff]
    %v596 = vld [vmem:[#allocation2 + $0xc78] sm:$0xff]
    %v597 = vld [vmem:[#allocation2 + $0xc80] sm:$0xff]
    %v598 = vld [vmem:[#allocation2 + $0xc88] sm:$0xff]
    %v599 = vld [vmem:[#allocation2 + $0xc90] sm:$0xff]
    %v600 = vld [vmem:[#allocation2 + $0xc98] sm:$0xff]
    %v601 = vld [vmem:[#allocation2 + $0xca0] sm:$0xff]
    %v602 = vld [vmem:[#allocation2 + $0xca8] sm:$0xff]
    %v603 = vld [vmem:[#allocation2 + $0xcb0] sm:$0xff]
    %v604 = vld [vmem:[#allocation2 + $0xcb8] sm:$0xff]
    %v605 = vld [vmem:[#allocation2 + $0xcc0] sm:$0xff]
    %v606 = vld [vmem:[#allocation2 + $0xcc8] sm:$0xff]
    %v607 = vld [vmem:[#allocation2 + $0xcd0] sm:$0xff]
    %v608 = vld [vmem:[#allocation2 + $0xcd8] sm:$0xff]
    %v609 = vld [vmem:[#allocation2 + $0xce0] sm:$0xff]
    %v610 = vld [vmem:[#allocation2 + $0xce8] sm:$0xff]
    %v611 = vld [vmem:[#allocation2 + $0xcf0] sm:$0xff]
    %v612 = vld [vmem:[#allocation2 + $0xcf8] sm:$0xff]
    %v613 = vld [vmem:[#allocation2 + $0xd00] sm:$0xff]
    %v614 = vld [vmem:[#allocation2 + $0xd08] sm:$0xff]
    %v615 = vld [vmem:[#allocation2 + $0xd10] sm:$0xff]
    %v616 = vld [vmem:[#allocation2 + $0xd18] sm:$0xff]
    %v617 = vld [vmem:[#allocation2 + $0xd20] sm:$0xff]
    %v618 = vld [vmem:[#allocation2 + $0xd28] sm:$0xff]
    %v619 = vld [vmem:[#allocation2 + $0xd30] sm:$0xff]
    %v620 = vld [vmem:[#allocation2 + $0xd38] sm:$0xff]
    %v621 = vld [vmem:[#allocation2 + $0xd40] sm:$0xff]
    %v622 = vld [vmem:[#allocation2 + $0xd48] sm:$0xff]
    %v623 = vld [vmem:[#allocation2 + $0xd50] sm:$0xff]
    %v624 = vld [vmem:[#allocation2 + $0xd58] sm:$0xff]
    %v625 = vld [vmem:[#allocation2 + $0xd60] sm:$0xff]
    %v626 = vld [vmem:[#allocation2 + $0xd68] sm:$0xff]
    %v627 = vld [vmem:[#allocation2 + $0xd70] sm:$0xff]
    %v628 = vld [vmem:[#allocation2 + $0xd78] sm:$0xff]
    %v629 = vld [vmem:[#allocation2 + $0xd80] sm:$0xff]
    %v630 = vld [vmem:[#allocation2 + $0xd88] sm:$0xff]
    %v631 = vld [vmem:[#allocation2 + $0xd90] sm:$0xff]
    %v632 = vld [vmem:[#allocation2 + $0xd98] sm:$0xff]
    %v633 = vld [vmem:[#allocation2 + $0xda0] sm:$0xff]
    %v634 = vld [vmem:[#allocation2 + $0xda8] sm:$0xff]
    %v635 = vld [vmem:[#allocation2 + $0xdb0] sm:$0xff]
    %v636 = vld [vmem:[#allocation2 + $0xdb8] sm:$0xff]
    %v637 = vld [vmem:[#allocation2 + $0xdc0] sm:$0xff]
    %v638 = vld [vmem:[#allocation2 + $0xdc8] sm:$0xff]
    %v639 = vld [vmem:[#allocation2 + $0xdd0] sm:$0xff]
    %v640 = vld [vmem:[#allocation2 + $0xdd8] sm:$0xff]
    %v641 = vld [vmem:[#allocation2 + $0xde0] sm:$0xff]
    %v642 = vld [vmem:[#allocation2 + $0xde8] sm:$0xff]
    %v643 = vld [vmem:[#allocation2 + $0xdf0] sm:$0xff]
    %v644 = vld [vmem:[#allocation2 + $0xdf8] sm:$0xff]
    %v645 = vld [vmem:[#allocation2 + $0xe00] sm:$0xff]
    %v646 = vld [vmem:[#allocation2 + $0xe08] sm:$0xff]
    %v647 = vld [vmem:[#allocation2 + $0xe10] sm:$0xff]
    %v648 = vld [vmem:[#allocation2 + $0xe18] sm:$0xff]
    %v649 = vld [vmem:[#allocation2 + $0xe20] sm:$0xff]
    %v650 = vld [vmem:[#allocation2 + $0xe28] sm:$0xff]
    %v651 = vld [vmem:[#allocation2 + $0xe30] sm:$0xff]
    %v652 = vld [vmem:[#allocation2 + $0xe38] sm:$0xff]
    %v653 = vld [vmem:[#allocation2 + $0xe40] sm:$0xff]
    %v654 = vld [vmem:[#allocation2 + $0xe48] sm:$0xff]
    %v655 = vld [vmem:[#allocation2 + $0xe50] sm:$0xff]
    %v656 = vld [vmem:[#allocation2 + $0xe58] sm:$0xff]
    %v657 = vld [vmem:[#allocation2 + $0xe60] sm:$0xff]
    %v658 = vld [vmem:[#allocation2 + $0xe68] sm:$0xff]
    %v659 = vld [vmem:[#allocation2 + $0xe70] sm:$0xff]
    %v660 = vld [vmem:[#allocation2 + $0xe78] sm:$0xff]
    %v661 = vld [vmem:[#allocation2 + $0xe80] sm:$0xff]
    %v662 = vld [vmem:[#allocation2 + $0xe88] sm:$0xff]
    %v663 = vld [vmem:[#allocation2 + $0xe90] sm:$0xff]
    %v664 = vld [vmem:[#allocation2 + $0xe98] sm:$0xff]
    %v665 = vld [vmem:[#allocation2 + $0xea0] sm:$0xff]
    %v666 = vld [vmem:[#allocation2 + $0xea8] sm:$0xff]
    %v667 = vld [vmem:[#allocation2 + $0xeb0] sm:$0xff]
    %v668 = vld [vmem:[#allocation2 + $0xeb8] sm:$0xff]
    %v669 = vld [vmem:[#allocation2 + $0xec0] sm:$0xff]
    %v670 = vld [vmem:[#allocation2 + $0xec8] sm:$0xff]
    %v671 = vld [vmem:[#allocation2 + $0xed0] sm:$0xff]
    %v672 = vld [vmem:[#allocation2 + $0xed8] sm:$0xff]
    %v673 = vld [vmem:[#allocation2 + $0xee0] sm:$0xff]
    %v674 = vld [vmem:[#allocation2 + $0xee8] sm:$0xff]
    %v675 = vld [vmem:[#allocation2 + $0xef0] sm:$0xff]
    %v676 = vld [vmem:[#allocation2 + $0xef8] sm:$0xff]
    %v677 = vld [vmem:[#allocation2 + $0xf00] sm:$0xff]
    %v678 = vld [vmem:[#allocation2 + $0xf08] sm:$0xff]
    %v679 = vld [vmem:[#allocation2 + $0xf10] sm:$0xff]
    %v680 = vld [vmem:[#allocation2 + $0xf18] sm:$0xff]
    %v681 = vld [vmem:[#allocation2 + $0xf20] sm:$0xff]
    %v682 = vld [vmem:[#allocation2 + $0xf28] sm:$0xff]
    %v683 = vld [vmem:[#allocation2 + $0xf30] sm:$0xff]
    %v684 = vld [vmem:[#allocation2 + $0xf38] sm:$0xff]
    %v685 = vld [vmem:[#allocation2 + $0xf40] sm:$0xff]
    %v686 = vld [vmem:[#allocation2 + $0xf48] sm:$0xff]
    %v687 = vld [vmem:[#allocation2 + $0xf50] sm:$0xff]
    %v688 = vld [vmem:[#allocation2 + $0xf58] sm:$0xff]
    %v689 = vld [vmem:[#allocation2 + $0xf60] sm:$0xff]
    %v690 = vld [vmem:[#allocation2 + $0xf68] sm:$0xff]
    %v691 = vld [vmem:[#allocation2 + $0xf70] sm:$0xff]
    %v692 = vld [vmem:[#allocation2 + $0xf78] sm:$0xff]
    %v693 = vld [vmem:[#allocation2 + $0xf80] sm:$0xff]
    %v694 = vld [vmem:[#allocation2 + $0xf88] sm:$0xff]
    %v695 = vld [vmem:[#allocation2 + $0xf90] sm:$0xff]
    %v696 = vld [vmem:[#allocation2 + $0xf98] sm:$0xff]
    %v697 = vld [vmem:[#allocation2 + $0xfa0] sm:$0xff]
    %v698 = vld [vmem:[#allocation2 + $0xfa8] sm:$0xff]
    %v699 = vld [vmem:[#allocation2 + $0xfb0] sm:$0xff]
    %v700 = vld [vmem:[#allocation2 + $0xfb8] sm:$0xff]
    %v701 = vld [vmem:[#allocation2 + $0xfc0] sm:$0xff]
    %v702 = vld [vmem:[#allocation2 + $0xfc8] sm:$0xff]
    %v703 = vld [vmem:[#allocation2 + $0xfd0] sm:$0xff]
    %v704 = vld [vmem:[#allocation2 + $0xfd8] sm:$0xff]
    %v705 = vld [vmem:[#allocation2 + $0xfe0] sm:$0xff]
    %v706 = vld [vmem:[#allocation2 + $0xfe8] sm:$0xff]
    %v707 = vld [vmem:[#allocation2 + $0xff0] sm:$0xff]
    %v708 = vld [vmem:[#allocation2 + $0xff8] sm:$0xff]
    %v711 = vunpack.c.l.b16 %v195
    %v712 = vunpack.c.h.b16 %v195
    %v713 = vunpack.c.l.b16 %v196
    %v714 = vunpack.c.h.b16 %v196
    %v715 = vpack.c.b16 %v713, %v711
    %v716 = vpack.c.b16 %v714, %v712
    %v1231 = vunpack.c.l.b16 %v197
    %v1232 = vunpack.c.h.b16 %v197
    %v1233 = vunpack.c.l.b16 %v198
    %v1234 = vunpack.c.h.b16 %v198
    %v1235 = vunpack.c.l.b16 %v199
    %v1236 = vunpack.c.h.b16 %v199
    %v1237 = vunpack.c.l.b16 %v200
    %v1238 = vunpack.c.h.b16 %v200
    %v1239 = vunpack.c.l.b16 %v201
    %v1240 = vunpack.c.h.b16 %v201
    %v1241 = vunpack.c.l.b16 %v202
    %v1242 = vunpack.c.h.b16 %v202
    %v1243 = vunpack.c.l.b16 %v203
    %v1244 = vunpack.c.h.b16 %v203
    %v1245 = vunpack.c.l.b16 %v204
    %v1246 = vunpack.c.h.b16 %v204
    %v1247 = vunpack.c.l.b16 %v205
    %v1248 = vunpack.c.h.b16 %v205
    %v1249 = vunpack.c.l.b16 %v206
    %v1250 = vunpack.c.h.b16 %v206
    %v1251 = vunpack.c.l.b16 %v207
    %v1252 = vunpack.c.h.b16 %v207
    %v1253 = vunpack.c.l.b16 %v208
    %v1254 = vunpack.c.h.b16 %v208
    %v1255 = vunpack.c.l.b16 %v209
    %v1256 = vunpack.c.h.b16 %v209
    %v1257 = vunpack.c.l.b16 %v210
    %v1258 = vunpack.c.h.b16 %v210
    %v1259 = vunpack.c.l.b16 %v211
    %v1260 = vunpack.c.h.b16 %v211
    %v1261 = vunpack.c.l.b16 %v212
    %v1262 = vunpack.c.h.b16 %v212
    %v1263 = vunpack.c.l.b16 %v213
    %v1264 = vunpack.c.h.b16 %v213
    %v1265 = vunpack.c.l.b16 %v214
    %v1266 = vunpack.c.h.b16 %v214
    %v1267 = vunpack.c.l.b16 %v215
    %v1268 = vunpack.c.h.b16 %v215
    %v1269 = vunpack.c.l.b16 %v216
    %v1270 = vunpack.c.h.b16 %v216
    %v1271 = vunpack.c.l.b16 %v217
    %v1272 = vunpack.c.h.b16 %v217
    %v1273 = vunpack.c.l.b16 %v218
    %v1274 = vunpack.c.h.b16 %v218
    %v1275 = vunpack.c.l.b16 %v219
    %v1276 = vunpack.c.h.b16 %v219
    %v1277 = vunpack.c.l.b16 %v220
    %v1278 = vunpack.c.h.b16 %v220
    %v1279 = vunpack.c.l.b16 %v221
    %v1280 = vunpack.c.h.b16 %v221
    %v1281 = vunpack.c.l.b16 %v222
    %v1282 = vunpack.c.h.b16 %v222
    %v1283 = vunpack.c.l.b16 %v223
    %v1284 = vunpack.c.h.b16 %v223
    %v1285 = vunpack.c.l.b16 %v224
    %v1286 = vunpack.c.h.b16 %v224
    %v1287 = vunpack.c.l.b16 %v225
    %v1288 = vunpack.c.h.b16 %v225
    %v1289 = vunpack.c.l.b16 %v226
    %v1290 = vunpack.c.h.b16 %v226
    %v1291 = vunpack.c.l.b16 %v227
    %v1292 = vunpack.c.h.b16 %v227
    %v1293 = vunpack.c.l.b16 %v228
    %v1294 = vunpack.c.h.b16 %v228
    %v1295 = vunpack.c.l.b16 %v229
    %v1296 = vunpack.c.h.b16 %v229
    %v1297 = vunpack.c.l.b16 %v230
    %v1298 = vunpack.c.h.b16 %v230
    %v1299 = vunpack.c.l.b16 %v231
    %v1300 = vunpack.c.h.b16 %v231
    %v1301 = vunpack.c.l.b16 %v232
    %v1302 = vunpack.c.h.b16 %v232
    %v1303 = vunpack.c.l.b16 %v233
    %v1304 = vunpack.c.h.b16 %v233
    %v1305 = vunpack.c.l.b16 %v234
    %v1306 = vunpack.c.h.b16 %v234
    %v1307 = vunpack.c.l.b16 %v235
    %v1308 = vunpack.c.h.b16 %v235
    %v1309 = vunpack.c.l.b16 %v236
    %v1310 = vunpack.c.h.b16 %v236
    %v1311 = vunpack.c.l.b16 %v237
    %v1312 = vunpack.c.h.b16 %v237
    %v1313 = vunpack.c.l.b16 %v238
    %v1314 = vunpack.c.h.b16 %v238
    %v1315 = vunpack.c.l.b16 %v239
    %v1316 = vunpack.c.h.b16 %v239
    %v1317 = vunpack.c.l.b16 %v240
    %v1318 = vunpack.c.h.b16 %v240
    %v1319 = vunpack.c.l.b16 %v241
    %v1320 = vunpack.c.h.b16 %v241
    %v1321 = vunpack.c.l.b16 %v242
    %v1322 = vunpack.c.h.b16 %v242
    %v1323 = vunpack.c.l.b16 %v243
    %v1324 = vunpack.c.h.b16 %v243
    %v1325 = vunpack.c.l.b16 %v244
    %v1326 = vunpack.c.h.b16 %v244
    %v1327 = vunpack.c.l.b16 %v245
    %v1328 = vunpack.c.h.b16 %v245
    %v1329 = vunpack.c.l.b16 %v246
    %v1330 = vunpack.c.h.b16 %v246
    %v1331 = vunpack.c.l.b16 %v247
    %v1332 = vunpack.c.h.b16 %v247
    %v1333 = vunpack.c.l.b16 %v248
    %v1334 = vunpack.c.h.b16 %v248
    %v1335 = vunpack.c.l.b16 %v249
    %v1336 = vunpack.c.h.b16 %v249
    %v1337 = vunpack.c.l.b16 %v250
    %v1338 = vunpack.c.h.b16 %v250
    %v1339 = vunpack.c.l.b16 %v251
    %v1340 = vunpack.c.h.b16 %v251
    %v1341 = vunpack.c.l.b16 %v252
    %v1342 = vunpack.c.h.b16 %v252
    %v1343 = vunpack.c.l.b16 %v253
    %v1344 = vunpack.c.h.b16 %v253
    %v1345 = vunpack.c.l.b16 %v254
    %v1346 = vunpack.c.h.b16 %v254
    %v1347 = vunpack.c.l.b16 %v255
    %v1348 = vunpack.c.h.b16 %v255
    %v1349 = vunpack.c.l.b16 %v256
    %v1350 = vunpack.c.h.b16 %v256
    %v1351 = vunpack.c.l.b16 %v257
    %v1352 = vunpack.c.h.b16 %v257
    %v1353 = vunpack.c.l.b16 %v258
    %v1354 = vunpack.c.h.b16 %v258
    %v1355 = vunpack.c.l.b16 %v259
    %v1356 = vunpack.c.h.b16 %v259
    %v1357 = vunpack.c.l.b16 %v260
    %v1358 = vunpack.c.h.b16 %v260
    %v1359 = vunpack.c.l.b16 %v261
    %v1360 = vunpack.c.h.b16 %v261
    %v1361 = vunpack.c.l.b16 %v262
    %v1362 = vunpack.c.h.b16 %v262
    %v1363 = vunpack.c.l.b16 %v263
    %v1364 = vunpack.c.h.b16 %v263
    %v1365 = vunpack.c.l.b16 %v264
    %v1366 = vunpack.c.h.b16 %v264
    %v1367 = vunpack.c.l.b16 %v265
    %v1368 = vunpack.c.h.b16 %v265
    %v1369 = vunpack.c.l.b16 %v266
    %v1370 = vunpack.c.h.b16 %v266
    %v1371 = vunpack.c.l.b16 %v267
    %v1372 = vunpack.c.h.b16 %v267
    %v1373 = vunpack.c.l.b16 %v268
    %v1374 = vunpack.c.h.b16 %v268
    %v1375 = vunpack.c.l.b16 %v269
    %v1376 = vunpack.c.h.b16 %v269
    %v1377 = vunpack.c.l.b16 %v270
    %v1378 = vunpack.c.h.b16 %v270
    %v1379 = vunpack.c.l.b16 %v271
    %v1380 = vunpack.c.h.b16 %v271
    %v1381 = vunpack.c.l.b16 %v272
    %v1382 = vunpack.c.h.b16 %v272
    %v1383 = vunpack.c.l.b16 %v273
    %v1384 = vunpack.c.h.b16 %v273
    %v1385 = vunpack.c.l.b16 %v274
    %v1386 = vunpack.c.h.b16 %v274
    %v1387 = vunpack.c.l.b16 %v275
    %v1388 = vunpack.c.h.b16 %v275
    %v1389 = vunpack.c.l.b16 %v276
    %v1390 = vunpack.c.h.b16 %v276
    %v1391 = vunpack.c.l.b16 %v277
    %v1392 = vunpack.c.h.b16 %v277
    %v1393 = vunpack.c.l.b16 %v278
    %v1394 = vunpack.c.h.b16 %v278
    %v1395 = vunpack.c.l.b16 %v279
    %v1396 = vunpack.c.h.b16 %v279
    %v1397 = vunpack.c.l.b16 %v280
    %v1398 = vunpack.c.h.b16 %v280
    %v1399 = vunpack.c.l.b16 %v281
    %v1400 = vunpack.c.h.b16 %v281
    %v1401 = vunpack.c.l.b16 %v282
    %v1402 = vunpack.c.h.b16 %v282
    %v1403 = vunpack.c.l.b16 %v283
    %v1404 = vunpack.c.h.b16 %v283
    %v1405 = vunpack.c.l.b16 %v284
    %v1406 = vunpack.c.h.b16 %v284
    %v1407 = vunpack.c.l.b16 %v285
    %v1408 = vunpack.c.h.b16 %v285
    %v1409 = vunpack.c.l.b16 %v286
    %v1410 = vunpack.c.h.b16 %v286
    %v1411 = vunpack.c.l.b16 %v287
    %v1412 = vunpack.c.h.b16 %v287
    %v1413 = vunpack.c.l.b16 %v288
    %v1414 = vunpack.c.h.b16 %v288
    %v1415 = vunpack.c.l.b16 %v289
    %v1416 = vunpack.c.h.b16 %v289
    %v1417 = vunpack.c.l.b16 %v290
    %v1418 = vunpack.c.h.b16 %v290
    %v1419 = vunpack.c.l.b16 %v291
    %v1420 = vunpack.c.h.b16 %v291
    %v1421 = vunpack.c.l.b16 %v292
    %v1422 = vunpack.c.h.b16 %v292
    %v1423 = vunpack.c.l.b16 %v293
    %v1424 = vunpack.c.h.b16 %v293
    %v1425 = vunpack.c.l.b16 %v294
    %v1426 = vunpack.c.h.b16 %v294
    %v1427 = vunpack.c.l.b16 %v295
    %v1428 = vunpack.c.h.b16 %v295
    %v1429 = vunpack.c.l.b16 %v296
    %v1430 = vunpack.c.h.b16 %v296
    %v1431 = vunpack.c.l.b16 %v297
    %v1432 = vunpack.c.h.b16 %v297
    %v1433 = vunpack.c.l.b16 %v298
    %v1434 = vunpack.c.h.b16 %v298
    %v1435 = vunpack.c.l.b16 %v299
    %v1436 = vunpack.c.h.b16 %v299
    %v1437 = vunpack.c.l.b16 %v300
    %v1438 = vunpack.c.h.b16 %v300
    %v1439 = vunpack.c.l.b16 %v301
    %v1440 = vunpack.c.h.b16 %v301
    %v1441 = vunpack.c.l.b16 %v302
    %v1442 = vunpack.c.h.b16 %v302
    %v1443 = vunpack.c.l.b16 %v303
    %v1444 = vunpack.c.h.b16 %v303
    %v1445 = vunpack.c.l.b16 %v304
    %v1446 = vunpack.c.h.b16 %v304
    %v1447 = vunpack.c.l.b16 %v305
    %v1448 = vunpack.c.h.b16 %v305
    %v1449 = vunpack.c.l.b16 %v306
    %v1450 = vunpack.c.h.b16 %v306
    %v1451 = vunpack.c.l.b16 %v307
    %v1452 = vunpack.c.h.b16 %v307
    %v1453 = vunpack.c.l.b16 %v308
    %v1454 = vunpack.c.h.b16 %v308
    %v1455 = vunpack.c.l.b16 %v309
    %v1456 = vunpack.c.h.b16 %v309
    %v1457 = vunpack.c.l.b16 %v310
    %v1458 = vunpack.c.h.b16 %v310
    %v1459 = vunpack.c.l.b16 %v311
    %v1460 = vunpack.c.h.b16 %v311
    %v1461 = vunpack.c.l.b16 %v312
    %v1462 = vunpack.c.h.b16 %v312
    %v1463 = vunpack.c.l.b16 %v313
    %v1464 = vunpack.c.h.b16 %v313
    %v1465 = vunpack.c.l.b16 %v314
    %v1466 = vunpack.c.h.b16 %v314
    %v1467 = vunpack.c.l.b16 %v315
    %v1468 = vunpack.c.h.b16 %v315
    %v1469 = vunpack.c.l.b16 %v316
    %v1470 = vunpack.c.h.b16 %v316
    %v1471 = vunpack.c.l.b16 %v317
    %v1472 = vunpack.c.h.b16 %v317
    %v1473 = vunpack.c.l.b16 %v318
    %v1474 = vunpack.c.h.b16 %v318
    %v1475 = vunpack.c.l.b16 %v319
    %v1476 = vunpack.c.h.b16 %v319
    %v1477 = vunpack.c.l.b16 %v320
    %v1478 = vunpack.c.h.b16 %v320
    %v1479 = vunpack.c.l.b16 %v321
    %v1480 = vunpack.c.h.b16 %v321
    %v1481 = vunpack.c.l.b16 %v322
    %v1482 = vunpack.c.h.b16 %v322
    %v1483 = vunpack.c.l.b16 %v323
    %v1484 = vunpack.c.h.b16 %v323
    %v1485 = vunpack.c.l.b16 %v324
    %v1486 = vunpack.c.h.b16 %v324
    %v1487 = vunpack.c.l.b16 %v325
    %v1488 = vunpack.c.h.b16 %v325
    %v1489 = vunpack.c.l.b16 %v326
    %v1490 = vunpack.c.h.b16 %v326
    %v1491 = vunpack.c.l.b16 %v327
    %v1492 = vunpack.c.h.b16 %v327
    %v1493 = vunpack.c.l.b16 %v328
    %v1494 = vunpack.c.h.b16 %v328
    %v1495 = vunpack.c.l.b16 %v329
    %v1496 = vunpack.c.h.b16 %v329
    %v1497 = vunpack.c.l.b16 %v330
    %v1498 = vunpack.c.h.b16 %v330
    %v1499 = vunpack.c.l.b16 %v331
    %v1500 = vunpack.c.h.b16 %v331
    %v1501 = vunpack.c.l.b16 %v332
    %v1502 = vunpack.c.h.b16 %v332
    %v1503 = vunpack.c.l.b16 %v333
    %v1504 = vunpack.c.h.b16 %v333
    %v1505 = vunpack.c.l.b16 %v334
    %v1506 = vunpack.c.h.b16 %v334
    %v1507 = vunpack.c.l.b16 %v335
    %v1508 = vunpack.c.h.b16 %v335
    %v1509 = vunpack.c.l.b16 %v336
    %v1510 = vunpack.c.h.b16 %v336
    %v1511 = vunpack.c.l.b16 %v337
    %v1512 = vunpack.c.h.b16 %v337
    %v1513 = vunpack.c.l.b16 %v338
    %v1514 = vunpack.c.h.b16 %v338
    %v1515 = vunpack.c.l.b16 %v339
    %v1516 = vunpack.c.h.b16 %v339
    %v1517 = vunpack.c.l.b16 %v340
    %v1518 = vunpack.c.h.b16 %v340
    %v1519 = vunpack.c.l.b16 %v341
    %v1520 = vunpack.c.h.b16 %v341
    %v1521 = vunpack.c.l.b16 %v342
    %v1522 = vunpack.c.h.b16 %v342
    %v1523 = vunpack.c.l.b16 %v343
    %v1524 = vunpack.c.h.b16 %v343
    %v1525 = vunpack.c.l.b16 %v344
    %v1526 = vunpack.c.h.b16 %v344
    %v1527 = vunpack.c.l.b16 %v345
    %v1528 = vunpack.c.h.b16 %v345
    %v1529 = vunpack.c.l.b16 %v346
    %v1530 = vunpack.c.h.b16 %v346
    %v1531 = vunpack.c.l.b16 %v347
    %v1532 = vunpack.c.h.b16 %v347
    %v1533 = vunpack.c.l.b16 %v348
    %v1534 = vunpack.c.h.b16 %v348
    %v1535 = vunpack.c.l.b16 %v349
    %v1536 = vunpack.c.h.b16 %v349
    %v1537 = vunpack.c.l.b16 %v350
    %v1538 = vunpack.c.h.b16 %v350
    %v1539 = vunpack.c.l.b16 %v351
    %v1540 = vunpack.c.h.b16 %v351
    %v1541 = vunpack.c.l.b16 %v352
    %v1542 = vunpack.c.h.b16 %v352
    %v1543 = vunpack.c.l.b16 %v353
    %v1544 = vunpack.c.h.b16 %v353
    %v1545 = vunpack.c.l.b16 %v354
    %v1546 = vunpack.c.h.b16 %v354
    %v1547 = vunpack.c.l.b16 %v355
    %v1548 = vunpack.c.h.b16 %v355
    %v1549 = vunpack.c.l.b16 %v356
    %v1550 = vunpack.c.h.b16 %v356
    %v1551 = vunpack.c.l.b16 %v357
    %v1552 = vunpack.c.h.b16 %v357
    %v1553 = vunpack.c.l.b16 %v358
    %v1554 = vunpack.c.h.b16 %v358
    %v1555 = vunpack.c.l.b16 %v359
    %v1556 = vunpack.c.h.b16 %v359
    %v1557 = vunpack.c.l.b16 %v360
    %v1558 = vunpack.c.h.b16 %v360
    %v1559 = vunpack.c.l.b16 %v361
    %v1560 = vunpack.c.h.b16 %v361
    %v1561 = vunpack.c.l.b16 %v362
    %v1562 = vunpack.c.h.b16 %v362
    %v1563 = vunpack.c.l.b16 %v363
    %v1564 = vunpack.c.h.b16 %v363
    %v1565 = vunpack.c.l.b16 %v364
    %v1566 = vunpack.c.h.b16 %v364
    %v1567 = vunpack.c.l.b16 %v365
    %v1568 = vunpack.c.h.b16 %v365
    %v1569 = vunpack.c.l.b16 %v366
    %v1570 = vunpack.c.h.b16 %v366
    %v1571 = vunpack.c.l.b16 %v367
    %v1572 = vunpack.c.h.b16 %v367
    %v1573 = vunpack.c.l.b16 %v368
    %v1574 = vunpack.c.h.b16 %v368
    %v1575 = vunpack.c.l.b16 %v369
    %v1576 = vunpack.c.h.b16 %v369
    %v1577 = vunpack.c.l.b16 %v370
    %v1578 = vunpack.c.h.b16 %v370
    %v1579 = vunpack.c.l.b16 %v371
    %v1580 = vunpack.c.h.b16 %v371
    %v1581 = vunpack.c.l.b16 %v372
    %v1582 = vunpack.c.h.b16 %v372
    %v1583 = vunpack.c.l.b16 %v373
    %v1584 = vunpack.c.h.b16 %v373
    %v1585 = vunpack.c.l.b16 %v374
    %v1586 = vunpack.c.h.b16 %v374
    %v1587 = vunpack.c.l.b16 %v375
    %v1588 = vunpack.c.h.b16 %v375
    %v1589 = vunpack.c.l.b16 %v376
    %v1590 = vunpack.c.h.b16 %v376
    %v1591 = vunpack.c.l.b16 %v377
    %v1592 = vunpack.c.h.b16 %v377
    %v1593 = vunpack.c.l.b16 %v378
    %v1594 = vunpack.c.h.b16 %v378
    %v1595 = vunpack.c.l.b16 %v379
    %v1596 = vunpack.c.h.b16 %v379
    %v1597 = vunpack.c.l.b16 %v380
    %v1598 = vunpack.c.h.b16 %v380
    %v1599 = vunpack.c.l.b16 %v381
    %v1600 = vunpack.c.h.b16 %v381
    %v1601 = vunpack.c.l.b16 %v382
    %v1602 = vunpack.c.h.b16 %v382
    %v1603 = vunpack.c.l.b16 %v383
    %v1604 = vunpack.c.h.b16 %v383
    %v1605 = vunpack.c.l.b16 %v384
    %v1606 = vunpack.c.h.b16 %v384
    %v1607 = vunpack.c.l.b16 %v385
    %v1608 = vunpack.c.h.b16 %v385
    %v1609 = vunpack.c.l.b16 %v386
    %v1610 = vunpack.c.h.b16 %v386
    %v1611 = vunpack.c.l.b16 %v387
    %v1612 = vunpack.c.h.b16 %v387
    %v1613 = vunpack.c.l.b16 %v388
    %v1614 = vunpack.c.h.b16 %v388
    %v1615 = vunpack.c.l.b16 %v389
    %v1616 = vunpack.c.h.b16 %v389
    %v1617 = vunpack.c.l.b16 %v390
    %v1618 = vunpack.c.h.b16 %v390
    %v1619 = vunpack.c.l.b16 %v391
    %v1620 = vunpack.c.h.b16 %v391
    %v1621 = vunpack.c.l.b16 %v392
    %v1622 = vunpack.c.h.b16 %v392
    %v1623 = vunpack.c.l.b16 %v393
    %v1624 = vunpack.c.h.b16 %v393
    %v1625 = vunpack.c.l.b16 %v394
    %v1626 = vunpack.c.h.b16 %v394
    %v1627 = vunpack.c.l.b16 %v395
    %v1628 = vunpack.c.h.b16 %v395
    %v1629 = vunpack.c.l.b16 %v396
    %v1630 = vunpack.c.h.b16 %v396
    %v1631 = vunpack.c.l.b16 %v397
    %v1632 = vunpack.c.h.b16 %v397
    %v1633 = vunpack.c.l.b16 %v398
    %v1634 = vunpack.c.h.b16 %v398
    %v1635 = vunpack.c.l.b16 %v399
    %v1636 = vunpack.c.h.b16 %v399
    %v1637 = vunpack.c.l.b16 %v400
    %v1638 = vunpack.c.h.b16 %v400
    %v1639 = vunpack.c.l.b16 %v401
    %v1640 = vunpack.c.h.b16 %v401
    %v1641 = vunpack.c.l.b16 %v402
    %v1642 = vunpack.c.h.b16 %v402
    %v1643 = vunpack.c.l.b16 %v403
    %v1644 = vunpack.c.h.b16 %v403
    %v1645 = vunpack.c.l.b16 %v404
    %v1646 = vunpack.c.h.b16 %v404
    %v1647 = vunpack.c.l.b16 %v405
    %v1648 = vunpack.c.h.b16 %v405
    %v1649 = vunpack.c.l.b16 %v406
    %v1650 = vunpack.c.h.b16 %v406
    %v1651 = vunpack.c.l.b16 %v407
    %v1652 = vunpack.c.h.b16 %v407
    %v1653 = vunpack.c.l.b16 %v408
    %v1654 = vunpack.c.h.b16 %v408
    %v1655 = vunpack.c.l.b16 %v409
    %v1656 = vunpack.c.h.b16 %v409
    %v1657 = vunpack.c.l.b16 %v410
    %v1658 = vunpack.c.h.b16 %v410
    %v1659 = vunpack.c.l.b16 %v411
    %v1660 = vunpack.c.h.b16 %v411
    %v1661 = vunpack.c.l.b16 %v412
    %v1662 = vunpack.c.h.b16 %v412
    %v1663 = vunpack.c.l.b16 %v413
    %v1664 = vunpack.c.h.b16 %v413
    %v1665 = vunpack.c.l.b16 %v414
    %v1666 = vunpack.c.h.b16 %v414
    %v1667 = vunpack.c.l.b16 %v415
    %v1668 = vunpack.c.h.b16 %v415
    %v1669 = vunpack.c.l.b16 %v416
    %v1670 = vunpack.c.h.b16 %v416
    %v1671 = vunpack.c.l.b16 %v417
    %v1672 = vunpack.c.h.b16 %v417
    %v1673 = vunpack.c.l.b16 %v418
    %v1674 = vunpack.c.h.b16 %v418
    %v1675 = vunpack.c.l.b16 %v419
    %v1676 = vunpack.c.h.b16 %v419
    %v1677 = vunpack.c.l.b16 %v420
    %v1678 = vunpack.c.h.b16 %v420
    %v1679 = vunpack.c.l.b16 %v421
    %v1680 = vunpack.c.h.b16 %v421
    %v1681 = vunpack.c.l.b16 %v422
    %v1682 = vunpack.c.h.b16 %v422
    %v1683 = vunpack.c.l.b16 %v423
    %v1684 = vunpack.c.h.b16 %v423
    %v1685 = vunpack.c.l.b16 %v424
    %v1686 = vunpack.c.h.b16 %v424
    %v1687 = vunpack.c.l.b16 %v425
    %v1688 = vunpack.c.h.b16 %v425
    %v1689 = vunpack.c.l.b16 %v426
    %v1690 = vunpack.c.h.b16 %v426
    %v1691 = vunpack.c.l.b16 %v427
    %v1692 = vunpack.c.h.b16 %v427
    %v1693 = vunpack.c.l.b16 %v428
    %v1694 = vunpack.c.h.b16 %v428
    %v1695 = vunpack.c.l.b16 %v429
    %v1696 = vunpack.c.h.b16 %v429
    %v1697 = vunpack.c.l.b16 %v430
    %v1698 = vunpack.c.h.b16 %v430
    %v1699 = vunpack.c.l.b16 %v431
    %v1700 = vunpack.c.h.b16 %v431
    %v1701 = vunpack.c.l.b16 %v432
    %v1702 = vunpack.c.h.b16 %v432
    %v1703 = vunpack.c.l.b16 %v433
    %v1704 = vunpack.c.h.b16 %v433
    %v1705 = vunpack.c.l.b16 %v434
    %v1706 = vunpack.c.h.b16 %v434
    %v1707 = vunpack.c.l.b16 %v435
    %v1708 = vunpack.c.h.b16 %v435
    %v1709 = vunpack.c.l.b16 %v436
    %v1710 = vunpack.c.h.b16 %v436
    %v1711 = vunpack.c.l.b16 %v437
    %v1712 = vunpack.c.h.b16 %v437
    %v1713 = vunpack.c.l.b16 %v438
    %v1714 = vunpack.c.h.b16 %v438
    %v1715 = vunpack.c.l.b16 %v439
    %v1716 = vunpack.c.h.b16 %v439
    %v1717 = vunpack.c.l.b16 %v440
    %v1718 = vunpack.c.h.b16 %v440
    %v1719 = vunpack.c.l.b16 %v441
    %v1720 = vunpack.c.h.b16 %v441
    %v1721 = vunpack.c.l.b16 %v442
    %v1722 = vunpack.c.h.b16 %v442
    %v1723 = vunpack.c.l.b16 %v443
    %v1724 = vunpack.c.h.b16 %v443
    %v1725 = vunpack.c.l.b16 %v444
    %v1726 = vunpack.c.h.b16 %v444
    %v1727 = vunpack.c.l.b16 %v445
    %v1728 = vunpack.c.h.b16 %v445
    %v1729 = vunpack.c.l.b16 %v446
    %v1730 = vunpack.c.h.b16 %v446
    %v1731 = vunpack.c.l.b16 %v447
    %v1732 = vunpack.c.h.b16 %v447
    %v1733 = vunpack.c.l.b16 %v448
    %v1734 = vunpack.c.h.b16 %v448
    %v1735 = vunpack.c.l.b16 %v449
    %v1736 = vunpack.c.h.b16 %v449
    %v1737 = vunpack.c.l.b16 %v450
    %v1738 = vunpack.c.h.b16 %v450
    %v1739 = vunpack.c.l.b16 %v451
    %v1740 = vunpack.c.h.b16 %v451
    %v1741 = vunpack.c.l.b16 %v452
    %v1742 = vunpack.c.h.b16 %v452
    %v1743 = vunpack.c.l.b16 %v453
    %v1744 = vunpack.c.h.b16 %v453
    %v1745 = vunpack.c.l.b16 %v454
    %v1746 = vunpack.c.h.b16 %v454
    %v1747 = vunpack.c.l.b16 %v455
    %v1748 = vunpack.c.h.b16 %v455
    %v1749 = vunpack.c.l.b16 %v456
    %v1750 = vunpack.c.h.b16 %v456
    %v1751 = vunpack.c.l.b16 %v457
    %v1752 = vunpack.c.h.b16 %v457
    %v1753 = vunpack.c.l.b16 %v458
    %v1754 = vunpack.c.h.b16 %v458
    %v1755 = vunpack.c.l.b16 %v459
    %v1756 = vunpack.c.h.b16 %v459
    %v1757 = vunpack.c.l.b16 %v460
    %v1758 = vunpack.c.h.b16 %v460
    %v1759 = vunpack.c.l.b16 %v461
    %v1760 = vunpack.c.h.b16 %v461
    %v1761 = vunpack.c.l.b16 %v462
    %v1762 = vunpack.c.h.b16 %v462
    %v1763 = vunpack.c.l.b16 %v463
    %v1764 = vunpack.c.h.b16 %v463
    %v1765 = vunpack.c.l.b16 %v464
    %v1766 = vunpack.c.h.b16 %v464
    %v1767 = vunpack.c.l.b16 %v465
    %v1768 = vunpack.c.h.b16 %v465
    %v1769 = vunpack.c.l.b16 %v466
    %v1770 = vunpack.c.h.b16 %v466
    %v1771 = vunpack.c.l.b16 %v467
    %v1772 = vunpack.c.h.b16 %v467
    %v1773 = vunpack.c.l.b16 %v468
    %v1774 = vunpack.c.h.b16 %v468
    %v1775 = vunpack.c.l.b16 %v469
    %v1776 = vunpack.c.h.b16 %v469
    %v1777 = vunpack.c.l.b16 %v470
    %v1778 = vunpack.c.h.b16 %v470
    %v1779 = vunpack.c.l.b16 %v471
    %v1780 = vunpack.c.h.b16 %v471
    %v1781 = vunpack.c.l.b16 %v472
    %v1782 = vunpack.c.h.b16 %v472
    %v1783 = vunpack.c.l.b16 %v473
    %v1784 = vunpack.c.h.b16 %v473
    %v1785 = vunpack.c.l.b16 %v474
    %v1786 = vunpack.c.h.b16 %v474
    %v1787 = vunpack.c.l.b16 %v475
    %v1788 = vunpack.c.h.b16 %v475
    %v1789 = vunpack.c.l.b16 %v476
    %v1790 = vunpack.c.h.b16 %v476
    %v1791 = vunpack.c.l.b16 %v477
    %v1792 = vunpack.c.h.b16 %v477
    %v1793 = vunpack.c.l.b16 %v478
    %v1794 = vunpack.c.h.b16 %v478
    %v1795 = vunpack.c.l.b16 %v479
    %v1796 = vunpack.c.h.b16 %v479
    %v1797 = vunpack.c.l.b16 %v480
    %v1798 = vunpack.c.h.b16 %v480
    %v1799 = vunpack.c.l.b16 %v481
    %v1800 = vunpack.c.h.b16 %v481
    %v1801 = vunpack.c.l.b16 %v482
    %v1802 = vunpack.c.h.b16 %v482
    %v1803 = vunpack.c.l.b16 %v483
    %v1804 = vunpack.c.h.b16 %v483
    %v1805 = vunpack.c.l.b16 %v484
    %v1806 = vunpack.c.h.b16 %v484
    %v1807 = vunpack.c.l.b16 %v485
    %v1808 = vunpack.c.h.b16 %v485
    %v1809 = vunpack.c.l.b16 %v486
    %v1810 = vunpack.c.h.b16 %v486
    %v1811 = vunpack.c.l.b16 %v487
    %v1812 = vunpack.c.h.b16 %v487
    %v1813 = vunpack.c.l.b16 %v488
    %v1814 = vunpack.c.h.b16 %v488
    %v1815 = vunpack.c.l.b16 %v489
    %v1816 = vunpack.c.h.b16 %v489
    %v1817 = vunpack.c.l.b16 %v490
    %v1818 = vunpack.c.h.b16 %v490
    %v1819 = vunpack.c.l.b16 %v491
    %v1820 = vunpack.c.h.b16 %v491
    %v1821 = vunpack.c.l.b16 %v492
    %v1822 = vunpack.c.h.b16 %v492
    %v1823 = vunpack.c.l.b16 %v493
    %v1824 = vunpack.c.h.b16 %v493
    %v1825 = vunpack.c.l.b16 %v494
    %v1826 = vunpack.c.h.b16 %v494
    %v1827 = vunpack.c.l.b16 %v495
    %v1828 = vunpack.c.h.b16 %v495
    %v1829 = vunpack.c.l.b16 %v496
    %v1830 = vunpack.c.h.b16 %v496
    %v1831 = vunpack.c.l.b16 %v497
    %v1832 = vunpack.c.h.b16 %v497
    %v1833 = vunpack.c.l.b16 %v498
    %v1834 = vunpack.c.h.b16 %v498
    %v1835 = vunpack.c.l.b16 %v499
    %v1836 = vunpack.c.h.b16 %v499
    %v1837 = vunpack.c.l.b16 %v500
    %v1838 = vunpack.c.h.b16 %v500
    %v1839 = vunpack.c.l.b16 %v501
    %v1840 = vunpack.c.h.b16 %v501
    %v1841 = vunpack.c.l.b16 %v502
    %v1842 = vunpack.c.h.b16 %v502
    %v1843 = vunpack.c.l.b16 %v503
    %v1844 = vunpack.c.h.b16 %v503
    %v1845 = vunpack.c.l.b16 %v504
    %v1846 = vunpack.c.h.b16 %v504
    %v1847 = vunpack.c.l.b16 %v505
    %v1848 = vunpack.c.h.b16 %v505
    %v1849 = vunpack.c.l.b16 %v506
    %v1850 = vunpack.c.h.b16 %v506
    %v1851 = vunpack.c.l.b16 %v507
    %v1852 = vunpack.c.h.b16 %v507
    %v1853 = vunpack.c.l.b16 %v508
    %v1854 = vunpack.c.h.b16 %v508
    %v1855 = vunpack.c.l.b16 %v509
    %v1856 = vunpack.c.h.b16 %v509
    %v1857 = vunpack.c.l.b16 %v510
    %v1858 = vunpack.c.h.b16 %v510
    %v1859 = vunpack.c.l.b16 %v511
    %v1860 = vunpack.c.h.b16 %v511
    %v1861 = vunpack.c.l.b16 %v512
    %v1862 = vunpack.c.h.b16 %v512
    %v1863 = vunpack.c.l.b16 %v513
    %v1864 = vunpack.c.h.b16 %v513
    %v1865 = vunpack.c.l.b16 %v514
    %v1866 = vunpack.c.h.b16 %v514
    %v1867 = vunpack.c.l.b16 %v515
    %v1868 = vunpack.c.h.b16 %v515
    %v1869 = vunpack.c.l.b16 %v516
    %v1870 = vunpack.c.h.b16 %v516
    %v1871 = vunpack.c.l.b16 %v517
    %v1872 = vunpack.c.h.b16 %v517
    %v1873 = vunpack.c.l.b16 %v518
    %v1874 = vunpack.c.h.b16 %v518
    %v1875 = vunpack.c.l.b16 %v519
    %v1876 = vunpack.c.h.b16 %v519
    %v1877 = vunpack.c.l.b16 %v520
    %v1878 = vunpack.c.h.b16 %v520
    %v1879 = vunpack.c.l.b16 %v521
    %v1880 = vunpack.c.h.b16 %v521
    %v1881 = vunpack.c.l.b16 %v522
    %v1882 = vunpack.c.h.b16 %v522
    %v1883 = vunpack.c.l.b16 %v523
    %v1884 = vunpack.c.h.b16 %v523
    %v1885 = vunpack.c.l.b16 %v524
    %v1886 = vunpack.c.h.b16 %v524
    %v1887 = vunpack.c.l.b16 %v525
    %v1888 = vunpack.c.h.b16 %v525
    %v1889 = vunpack.c.l.b16 %v526
    %v1890 = vunpack.c.h.b16 %v526
    %v1891 = vunpack.c.l.b16 %v527
    %v1892 = vunpack.c.h.b16 %v527
    %v1893 = vunpack.c.l.b16 %v528
    %v1894 = vunpack.c.h.b16 %v528
    %v1895 = vunpack.c.l.b16 %v529
    %v1896 = vunpack.c.h.b16 %v529
    %v1897 = vunpack.c.l.b16 %v530
    %v1898 = vunpack.c.h.b16 %v530
    %v1899 = vunpack.c.l.b16 %v531
    %v1900 = vunpack.c.h.b16 %v531
    %v1901 = vunpack.c.l.b16 %v532
    %v1902 = vunpack.c.h.b16 %v532
    %v1903 = vunpack.c.l.b16 %v533
    %v1904 = vunpack.c.h.b16 %v533
    %v1905 = vunpack.c.l.b16 %v534
    %v1906 = vunpack.c.h.b16 %v534
    %v1907 = vunpack.c.l.b16 %v535
    %v1908 = vunpack.c.h.b16 %v535
    %v1909 = vunpack.c.l.b16 %v536
    %v1910 = vunpack.c.h.b16 %v536
    %v1911 = vunpack.c.l.b16 %v537
    %v1912 = vunpack.c.h.b16 %v537
    %v1913 = vunpack.c.l.b16 %v538
    %v1914 = vunpack.c.h.b16 %v538
    %v1915 = vunpack.c.l.b16 %v539
    %v1916 = vunpack.c.h.b16 %v539
    %v1917 = vunpack.c.l.b16 %v540
    %v1918 = vunpack.c.h.b16 %v540
    %v1919 = vunpack.c.l.b16 %v541
    %v1920 = vunpack.c.h.b16 %v541
    %v1921 = vunpack.c.l.b16 %v542
    %v1922 = vunpack.c.h.b16 %v542
    %v1923 = vunpack.c.l.b16 %v543
    %v1924 = vunpack.c.h.b16 %v543
    %v1925 = vunpack.c.l.b16 %v544
    %v1926 = vunpack.c.h.b16 %v544
    %v1927 = vunpack.c.l.b16 %v545
    %v1928 = vunpack.c.h.b16 %v545
    %v1929 = vunpack.c.l.b16 %v546
    %v1930 = vunpack.c.h.b16 %v546
    %v1931 = vunpack.c.l.b16 %v547
    %v1932 = vunpack.c.h.b16 %v547
    %v1933 = vunpack.c.l.b16 %v548
    %v1934 = vunpack.c.h.b16 %v548
    %v1935 = vunpack.c.l.b16 %v549
    %v1936 = vunpack.c.h.b16 %v549
    %v1937 = vunpack.c.l.b16 %v550
    %v1938 = vunpack.c.h.b16 %v550
    %v1939 = vunpack.c.l.b16 %v551
    %v1940 = vunpack.c.h.b16 %v551
    %v1941 = vunpack.c.l.b16 %v552
    %v1942 = vunpack.c.h.b16 %v552
    %v1943 = vunpack.c.l.b16 %v553
    %v1944 = vunpack.c.h.b16 %v553
    %v1945 = vunpack.c.l.b16 %v554
    %v1946 = vunpack.c.h.b16 %v554
    %v1947 = vunpack.c.l.b16 %v555
    %v1948 = vunpack.c.h.b16 %v555
    %v1949 = vunpack.c.l.b16 %v556
    %v1950 = vunpack.c.h.b16 %v556
    %v1951 = vunpack.c.l.b16 %v557
    %v1952 = vunpack.c.h.b16 %v557
    %v1953 = vunpack.c.l.b16 %v558
    %v1954 = vunpack.c.h.b16 %v558
    %v1955 = vunpack.c.l.b16 %v559
    %v1956 = vunpack.c.h.b16 %v559
    %v1957 = vunpack.c.l.b16 %v560
    %v1958 = vunpack.c.h.b16 %v560
    %v1959 = vunpack.c.l.b16 %v561
    %v1960 = vunpack.c.h.b16 %v561
    %v1961 = vunpack.c.l.b16 %v562
    %v1962 = vunpack.c.h.b16 %v562
    %v1963 = vunpack.c.l.b16 %v563
    %v1964 = vunpack.c.h.b16 %v563
    %v1965 = vunpack.c.l.b16 %v564
    %v1966 = vunpack.c.h.b16 %v564
    %v1967 = vunpack.c.l.b16 %v565
    %v1968 = vunpack.c.h.b16 %v565
    %v1969 = vunpack.c.l.b16 %v566
    %v1970 = vunpack.c.h.b16 %v566
    %v1971 = vunpack.c.l.b16 %v567
    %v1972 = vunpack.c.h.b16 %v567
    %v1973 = vunpack.c.l.b16 %v568
    %v1974 = vunpack.c.h.b16 %v568
    %v1975 = vunpack.c.l.b16 %v569
    %v1976 = vunpack.c.h.b16 %v569
    %v1977 = vunpack.c.l.b16 %v570
    %v1978 = vunpack.c.h.b16 %v570
    %v1979 = vunpack.c.l.b16 %v571
    %v1980 = vunpack.c.h.b16 %v571
    %v1981 = vunpack.c.l.b16 %v572
    %v1982 = vunpack.c.h.b16 %v572
    %v1983 = vunpack.c.l.b16 %v573
    %v1984 = vunpack.c.h.b16 %v573
    %v1985 = vunpack.c.l.b16 %v574
    %v1986 = vunpack.c.h.b16 %v574
    %v1987 = vunpack.c.l.b16 %v575
    %v1988 = vunpack.c.h.b16 %v575
    %v1989 = vunpack.c.l.b16 %v576
    %v1990 = vunpack.c.h.b16 %v576
    %v1991 = vunpack.c.l.b16 %v577
    %v1992 = vunpack.c.h.b16 %v577
    %v1993 = vunpack.c.l.b16 %v578
    %v1994 = vunpack.c.h.b16 %v578
    %v1995 = vunpack.c.l.b16 %v579
    %v1996 = vunpack.c.h.b16 %v579
    %v1997 = vunpack.c.l.b16 %v580
    %v1998 = vunpack.c.h.b16 %v580
    %v1999 = vunpack.c.l.b16 %v581
    %v2000 = vunpack.c.h.b16 %v581
    %v2001 = vunpack.c.l.b16 %v582
    %v2002 = vunpack.c.h.b16 %v582
    %v2003 = vunpack.c.l.b16 %v583
    %v2004 = vunpack.c.h.b16 %v583
    %v2005 = vunpack.c.l.b16 %v584
    %v2006 = vunpack.c.h.b16 %v584
    %v2007 = vunpack.c.l.b16 %v585
    %v2008 = vunpack.c.h.b16 %v585
    %v2009 = vunpack.c.l.b16 %v586
    %v2010 = vunpack.c.h.b16 %v586
    %v2011 = vunpack.c.l.b16 %v587
    %v2012 = vunpack.c.h.b16 %v587
    %v2013 = vunpack.c.l.b16 %v588
    %v2014 = vunpack.c.h.b16 %v588
    %v2015 = vunpack.c.l.b16 %v589
    %v2016 = vunpack.c.h.b16 %v589
    %v2017 = vunpack.c.l.b16 %v590
    %v2018 = vunpack.c.h.b16 %v590
    %v2019 = vunpack.c.l.b16 %v591
    %v2020 = vunpack.c.h.b16 %v591
    %v2021 = vunpack.c.l.b16 %v592
    %v2022 = vunpack.c.h.b16 %v592
    %v2023 = vunpack.c.l.b16 %v593
    %v2024 = vunpack.c.h.b16 %v593
    %v2025 = vunpack.c.l.b16 %v594
    %v2026 = vunpack.c.h.b16 %v594
    %v2027 = vunpack.c.l.b16 %v595
    %v2028 = vunpack.c.h.b16 %v595
    %v2029 = vunpack.c.l.b16 %v596
    %v2030 = vunpack.c.h.b16 %v596
    %v2031 = vunpack.c.l.b16 %v597
    %v2032 = vunpack.c.h.b16 %v597
    %v2033 = vunpack.c.l.b16 %v598
    %v2034 = vunpack.c.h.b16 %v598
    %v2035 = vunpack.c.l.b16 %v599
    %v2036 = vunpack.c.h.b16 %v599
    %v2037 = vunpack.c.l.b16 %v600
    %v2038 = vunpack.c.h.b16 %v600
    %v2039 = vunpack.c.l.b16 %v601
    %v2040 = vunpack.c.h.b16 %v601
    %v2041 = vunpack.c.l.b16 %v602
    %v2042 = vunpack.c.h.b16 %v602
    %v2043 = vunpack.c.l.b16 %v603
    %v2044 = vunpack.c.h.b16 %v603
    %v2045 = vunpack.c.l.b16 %v604
    %v2046 = vunpack.c.h.b16 %v604
    %v2047 = vunpack.c.l.b16 %v605
    %v2048 = vunpack.c.h.b16 %v605
    %v2049 = vunpack.c.l.b16 %v606
    %v2050 = vunpack.c.h.b16 %v606
    %v2051 = vunpack.c.l.b16 %v607
    %v2052 = vunpack.c.h.b16 %v607
    %v2053 = vunpack.c.l.b16 %v608
    %v2054 = vunpack.c.h.b16 %v608
    %v2055 = vunpack.c.l.b16 %v609
    %v2056 = vunpack.c.h.b16 %v609
    %v2057 = vunpack.c.l.b16 %v610
    %v2058 = vunpack.c.h.b16 %v610
    %v2059 = vunpack.c.l.b16 %v611
    %v2060 = vunpack.c.h.b16 %v611
    %v2061 = vunpack.c.l.b16 %v612
    %v2062 = vunpack.c.h.b16 %v612
    %v2063 = vunpack.c.l.b16 %v613
    %v2064 = vunpack.c.h.b16 %v613
    %v2065 = vunpack.c.l.b16 %v614
    %v2066 = vunpack.c.h.b16 %v614
    %v2067 = vunpack.c.l.b16 %v615
    %v2068 = vunpack.c.h.b16 %v615
    %v2069 = vunpack.c.l.b16 %v616
    %v2070 = vunpack.c.h.b16 %v616
    %v2071 = vunpack.c.l.b16 %v617
    %v2072 = vunpack.c.h.b16 %v617
    %v2073 = vunpack.c.l.b16 %v618
    %v2074 = vunpack.c.h.b16 %v618
    %v2075 = vunpack.c.l.b16 %v619
    %v2076 = vunpack.c.h.b16 %v619
    %v2077 = vunpack.c.l.b16 %v620
    %v2078 = vunpack.c.h.b16 %v620
    %v2079 = vunpack.c.l.b16 %v621
    %v2080 = vunpack.c.h.b16 %v621
    %v2081 = vunpack.c.l.b16 %v622
    %v2082 = vunpack.c.h.b16 %v622
    %v2083 = vunpack.c.l.b16 %v623
    %v2084 = vunpack.c.h.b16 %v623
    %v2085 = vunpack.c.l.b16 %v624
    %v2086 = vunpack.c.h.b16 %v624
    %v2087 = vunpack.c.l.b16 %v625
    %v2088 = vunpack.c.h.b16 %v625
    %v2089 = vunpack.c.l.b16 %v626
    %v2090 = vunpack.c.h.b16 %v626
    %v2091 = vunpack.c.l.b16 %v627
    %v2092 = vunpack.c.h.b16 %v627
    %v2093 = vunpack.c.l.b16 %v628
    %v2094 = vunpack.c.h.b16 %v628
    %v2095 = vunpack.c.l.b16 %v629
    %v2096 = vunpack.c.h.b16 %v629
    %v2097 = vunpack.c.l.b16 %v630
    %v2098 = vunpack.c.h.b16 %v630
    %v2099 = vunpack.c.l.b16 %v631
    %v2100 = vunpack.c.h.b16 %v631
    %v2101 = vunpack.c.l.b16 %v632
    %v2102 = vunpack.c.h.b16 %v632
    %v2103 = vunpack.c.l.b16 %v633
    %v2104 = vunpack.c.h.b16 %v633
    %v2105 = vunpack.c.l.b16 %v634
    %v2106 = vunpack.c.h.b16 %v634
    %v2107 = vunpack.c.l.b16 %v635
    %v2108 = vunpack.c.h.b16 %v635
    %v2109 = vunpack.c.l.b16 %v636
    %v2110 = vunpack.c.h.b16 %v636
    %v2111 = vunpack.c.l.b16 %v637
    %v2112 = vunpack.c.h.b16 %v637
    %v2113 = vunpack.c.l.b16 %v638
    %v2114 = vunpack.c.h.b16 %v638
    %v2115 = vunpack.c.l.b16 %v639
    %v2116 = vunpack.c.h.b16 %v639
    %v2117 = vunpack.c.l.b16 %v640
    %v2118 = vunpack.c.h.b16 %v640
    %v2119 = vunpack.c.l.b16 %v641
    %v2120 = vunpack.c.h.b16 %v641
    %v2121 = vunpack.c.l.b16 %v642
    %v2122 = vunpack.c.h.b16 %v642
    %v2123 = vunpack.c.l.b16 %v643
    %v2124 = vunpack.c.h.b16 %v643
    %v2125 = vunpack.c.l.b16 %v644
    %v2126 = vunpack.c.h.b16 %v644
    %v2127 = vunpack.c.l.b16 %v645
    %v2128 = vunpack.c.h.b16 %v645
    %v2129 = vunpack.c.l.b16 %v646
    %v2130 = vunpack.c.h.b16 %v646
    %v2131 = vunpack.c.l.b16 %v647
    %v2132 = vunpack.c.h.b16 %v647
    %v2133 = vunpack.c.l.b16 %v648
    %v2134 = vunpack.c.h.b16 %v648
    %v2135 = vunpack.c.l.b16 %v649
    %v2136 = vunpack.c.h.b16 %v649
    %v2137 = vunpack.c.l.b16 %v650
    %v2138 = vunpack.c.h.b16 %v650
    %v2139 = vunpack.c.l.b16 %v651
    %v2140 = vunpack.c.h.b16 %v651
    %v2141 = vunpack.c.l.b16 %v652
    %v2142 = vunpack.c.h.b16 %v652
    %v2143 = vunpack.c.l.b16 %v653
    %v2144 = vunpack.c.h.b16 %v653
    %v2145 = vunpack.c.l.b16 %v654
    %v2146 = vunpack.c.h.b16 %v654
    %v2147 = vunpack.c.l.b16 %v655
    %v2148 = vunpack.c.h.b16 %v655
    %v2149 = vunpack.c.l.b16 %v656
    %v2150 = vunpack.c.h.b16 %v656
    %v2151 = vunpack.c.l.b16 %v657
    %v2152 = vunpack.c.h.b16 %v657
    %v2153 = vunpack.c.l.b16 %v658
    %v2154 = vunpack.c.h.b16 %v658
    %v2155 = vunpack.c.l.b16 %v659
    %v2156 = vunpack.c.h.b16 %v659
    %v2157 = vunpack.c.l.b16 %v660
    %v2158 = vunpack.c.h.b16 %v660
    %v2159 = vunpack.c.l.b16 %v661
    %v2160 = vunpack.c.h.b16 %v661
    %v2161 = vunpack.c.l.b16 %v662
    %v2162 = vunpack.c.h.b16 %v662
    %v2163 = vunpack.c.l.b16 %v663
    %v2164 = vunpack.c.h.b16 %v663
    %v2165 = vunpack.c.l.b16 %v664
    %v2166 = vunpack.c.h.b16 %v664
    %v2167 = vunpack.c.l.b16 %v665
    %v2168 = vunpack.c.h.b16 %v665
    %v2169 = vunpack.c.l.b16 %v666
    %v2170 = vunpack.c.h.b16 %v666
    %v2171 = vunpack.c.l.b16 %v667
    %v2172 = vunpack.c.h.b16 %v667
    %v2173 = vunpack.c.l.b16 %v668
    %v2174 = vunpack.c.h.b16 %v668
    %v2175 = vunpack.c.l.b16 %v669
    %v2176 = vunpack.c.h.b16 %v669
    %v2177 = vunpack.c.l.b16 %v670
    %v2178 = vunpack.c.h.b16 %v670
    %v2179 = vunpack.c.l.b16 %v671
    %v2180 = vunpack.c.h.b16 %v671
    %v2181 = vunpack.c.l.b16 %v672
    %v2182 = vunpack.c.h.b16 %v672
    %v2183 = vunpack.c.l.b16 %v673
    %v2184 = vunpack.c.h.b16 %v673
    %v2185 = vunpack.c.l.b16 %v674
    %v2186 = vunpack.c.h.b16 %v674
    %v2187 = vunpack.c.l.b16 %v675
    %v2188 = vunpack.c.h.b16 %v675
    %v2189 = vunpack.c.l.b16 %v676
    %v2190 = vunpack.c.h.b16 %v676
    %v2191 = vunpack.c.l.b16 %v677
    %v2192 = vunpack.c.h.b16 %v677
    %v2193 = vunpack.c.l.b16 %v678
    %v2194 = vunpack.c.h.b16 %v678
    %v2195 = vunpack.c.l.b16 %v679
    %v2196 = vunpack.c.h.b16 %v679
    %v2197 = vunpack.c.l.b16 %v680
    %v2198 = vunpack.c.h.b16 %v680
    %v2199 = vunpack.c.l.b16 %v681
    %v2200 = vunpack.c.h.b16 %v681
    %v2201 = vunpack.c.l.b16 %v682
    %v2202 = vunpack.c.h.b16 %v682
    %v2203 = vunpack.c.l.b16 %v683
    %v2204 = vunpack.c.h.b16 %v683
    %v2205 = vunpack.c.l.b16 %v684
    %v2206 = vunpack.c.h.b16 %v684
    %v2207 = vunpack.c.l.b16 %v685
    %v2208 = vunpack.c.h.b16 %v685
    %v2209 = vunpack.c.l.b16 %v686
    %v2210 = vunpack.c.h.b16 %v686
    %v2211 = vunpack.c.l.b16 %v687
    %v2212 = vunpack.c.h.b16 %v687
    %v2213 = vunpack.c.l.b16 %v688
    %v2214 = vunpack.c.h.b16 %v688
    %v2215 = vunpack.c.l.b16 %v689
    %v2216 = vunpack.c.h.b16 %v689
    %v2217 = vunpack.c.l.b16 %v690
    %v2218 = vunpack.c.h.b16 %v690
    %v2219 = vunpack.c.l.b16 %v691
    %v2220 = vunpack.c.h.b16 %v691
    %v2221 = vunpack.c.l.b16 %v692
    %v2222 = vunpack.c.h.b16 %v692
    %v2223 = vunpack.c.l.b16 %v693
    %v2224 = vunpack.c.h.b16 %v693
    %v2225 = vunpack.c.l.b16 %v694
    %v2226 = vunpack.c.h.b16 %v694
    %v2227 = vunpack.c.l.b16 %v695
    %v2228 = vunpack.c.h.b16 %v695
    %v2229 = vunpack.c.l.b16 %v696
    %v2230 = vunpack.c.h.b16 %v696
    %v2231 = vunpack.c.l.b16 %v697
    %v2232 = vunpack.c.h.b16 %v697
    %v2233 = vunpack.c.l.b16 %v698
    %v2234 = vunpack.c.h.b16 %v698
    %v2235 = vunpack.c.l.b16 %v699
    %v2236 = vunpack.c.h.b16 %v699
    %v2237 = vunpack.c.l.b16 %v700
    %v2238 = vunpack.c.h.b16 %v700
    %v2239 = vunpack.c.l.b16 %v701
    %v2240 = vunpack.c.h.b16 %v701
    %v2241 = vunpack.c.l.b16 %v702
    %v2242 = vunpack.c.h.b16 %v702
    %v2243 = vunpack.c.l.b16 %v703
    %v2244 = vunpack.c.h.b16 %v703
    %v2245 = vunpack.c.l.b16 %v704
    %v2246 = vunpack.c.h.b16 %v704
    %v2247 = vunpack.c.l.b16 %v705
    %v2248 = vunpack.c.h.b16 %v705
    %v2249 = vunpack.c.l.b16 %v706
    %v2250 = vunpack.c.h.b16 %v706
    %v2251 = vunpack.c.l.b16 %v707
    %v2252 = vunpack.c.h.b16 %v707
    %v2253 = vunpack.c.l.b16 %v708
    %v2254 = vunpack.c.h.b16 %v708
    %v2255 = vpack.c.b16 %v1263, %v1231
    %v2256 = vpack.c.b16 %v1264, %v1232
    %v2257 = vpack.c.b16 %v1265, %v1233
    %v2258 = vpack.c.b16 %v1266, %v1234
    %v2259 = vpack.c.b16 %v1267, %v1235
    %v2260 = vpack.c.b16 %v1268, %v1236
    %v2261 = vpack.c.b16 %v1269, %v1237
    %v2262 = vpack.c.b16 %v1270, %v1238
    %v2263 = vpack.c.b16 %v1271, %v1239
    %v2264 = vpack.c.b16 %v1272, %v1240
    %v2265 = vpack.c.b16 %v1273, %v1241
    %v2266 = vpack.c.b16 %v1274, %v1242
    %v2267 = vpack.c.b16 %v1275, %v1243
    %v2268 = vpack.c.b16 %v1276, %v1244
    %v2269 = vpack.c.b16 %v1277, %v1245
    %v2270 = vpack.c.b16 %v1278, %v1246
    %v2271 = vpack.c.b16 %v1279, %v1247
    %v2272 = vpack.c.b16 %v1280, %v1248
    %v2273 = vpack.c.b16 %v1281, %v1249
    %v2274 = vpack.c.b16 %v1282, %v1250
    %v2275 = vpack.c.b16 %v1283, %v1251
    %v2276 = vpack.c.b16 %v1284, %v1252
    %v2277 = vpack.c.b16 %v1285, %v1253
    %v2278 = vpack.c.b16 %v1286, %v1254
    %v2279 = vpack.c.b16 %v1287, %v1255
    %v2280 = vpack.c.b16 %v1288, %v1256
    %v2281 = vpack.c.b16 %v1289, %v1257
    %v2282 = vpack.c.b16 %v1290, %v1258
    %v2283 = vpack.c.b16 %v1291, %v1259
    %v2284 = vpack.c.b16 %v1292, %v1260
    %v2285 = vpack.c.b16 %v1293, %v1261
    %v2286 = vpack.c.b16 %v1294, %v1262
    %v2287 = vpack.c.b16 %v1327, %v1295
    %v2288 = vpack.c.b16 %v1328, %v1296
    %v2289 = vpack.c.b16 %v1329, %v1297
    %v2290 = vpack.c.b16 %v1330, %v1298
    %v2291 = vpack.c.b16 %v1331, %v1299
    %v2292 = vpack.c.b16 %v1332, %v1300
    %v2293 = vpack.c.b16 %v1333, %v1301
    %v2294 = vpack.c.b16 %v1334, %v1302
    %v2295 = vpack.c.b16 %v1335, %v1303
    %v2296 = vpack.c.b16 %v1336, %v1304
    %v2297 = vpack.c.b16 %v1337, %v1305
    %v2298 = vpack.c.b16 %v1338, %v1306
    %v2299 = vpack.c.b16 %v1339, %v1307
    %v2300 = vpack.c.b16 %v1340, %v1308
    %v2301 = vpack.c.b16 %v1341, %v1309
    %v2302 = vpack.c.b16 %v1342, %v1310
    %v2303 = vpack.c.b16 %v1343, %v1311
    %v2304 = vpack.c.b16 %v1344, %v1312
    %v2305 = vpack.c.b16 %v1345, %v1313
    %v2306 = vpack.c.b16 %v1346, %v1314
    %v2307 = vpack.c.b16 %v1347, %v1315
    %v2308 = vpack.c.b16 %v1348, %v1316
    %v2309 = vpack.c.b16 %v1349, %v1317
    %v2310 = vpack.c.b16 %v1350, %v1318
    %v2311 = vpack.c.b16 %v1351, %v1319
    %v2312 = vpack.c.b16 %v1352, %v1320
    %v2313 = vpack.c.b16 %v1353, %v1321
    %v2314 = vpack.c.b16 %v1354, %v1322
    %v2315 = vpack.c.b16 %v1355, %v1323
    %v2316 = vpack.c.b16 %v1356, %v1324
    %v2317 = vpack.c.b16 %v1357, %v1325
    %v2318 = vpack.c.b16 %v1358, %v1326
    %v2319 = vpack.c.b16 %v1391, %v1359
    %v2320 = vpack.c.b16 %v1392, %v1360
    %v2321 = vpack.c.b16 %v1393, %v1361
    %v2322 = vpack.c.b16 %v1394, %v1362
    %v2323 = vpack.c.b16 %v1395, %v1363
    %v2324 = vpack.c.b16 %v1396, %v1364
    %v2325 = vpack.c.b16 %v1397, %v1365
    %v2326 = vpack.c.b16 %v1398, %v1366
    %v2327 = vpack.c.b16 %v1399, %v1367
    %v2328 = vpack.c.b16 %v1400, %v1368
    %v2329 = vpack.c.b16 %v1401, %v1369
    %v2330 = vpack.c.b16 %v1402, %v1370
    %v2331 = vpack.c.b16 %v1403, %v1371
    %v2332 = vpack.c.b16 %v1404, %v1372
    %v2333 = vpack.c.b16 %v1405, %v1373
    %v2334 = vpack.c.b16 %v1406, %v1374
    %v2335 = vpack.c.b16 %v1407, %v1375
    %v2336 = vpack.c.b16 %v1408, %v1376
    %v2337 = vpack.c.b16 %v1409, %v1377
    %v2338 = vpack.c.b16 %v1410, %v1378
    %v2339 = vpack.c.b16 %v1411, %v1379
    %v2340 = vpack.c.b16 %v1412, %v1380
    %v2341 = vpack.c.b16 %v1413, %v1381
    %v2342 = vpack.c.b16 %v1414, %v1382
    %v2343 = vpack.c.b16 %v1415, %v1383
    %v2344 = vpack.c.b16 %v1416, %v1384
    %v2345 = vpack.c.b16 %v1417, %v1385
    %v2346 = vpack.c.b16 %v1418, %v1386
    %v2347 = vpack.c.b16 %v1419, %v1387
    %v2348 = vpack.c.b16 %v1420, %v1388
    %v2349 = vpack.c.b16 %v1421, %v1389
    %v2350 = vpack.c.b16 %v1422, %v1390
    %v2351 = vpack.c.b16 %v1455, %v1423
    %v2352 = vpack.c.b16 %v1456, %v1424
    %v2353 = vpack.c.b16 %v1457, %v1425
    %v2354 = vpack.c.b16 %v1458, %v1426
    %v2355 = vpack.c.b16 %v1459, %v1427
    %v2356 = vpack.c.b16 %v1460, %v1428
    %v2357 = vpack.c.b16 %v1461, %v1429
    %v2358 = vpack.c.b16 %v1462, %v1430
    %v2359 = vpack.c.b16 %v1463, %v1431
    %v2360 = vpack.c.b16 %v1464, %v1432
    %v2361 = vpack.c.b16 %v1465, %v1433
    %v2362 = vpack.c.b16 %v1466, %v1434
    %v2363 = vpack.c.b16 %v1467, %v1435
    %v2364 = vpack.c.b16 %v1468, %v1436
    %v2365 = vpack.c.b16 %v1469, %v1437
    %v2366 = vpack.c.b16 %v1470, %v1438
    %v2367 = vpack.c.b16 %v1471, %v1439
    %v2368 = vpack.c.b16 %v1472, %v1440
    %v2369 = vpack.c.b16 %v1473, %v1441
    %v2370 = vpack.c.b16 %v1474, %v1442
    %v2371 = vpack.c.b16 %v1475, %v1443
    %v2372 = vpack.c.b16 %v1476, %v1444
    %v2373 = vpack.c.b16 %v1477, %v1445
    %v2374 = vpack.c.b16 %v1478, %v1446
    %v2375 = vpack.c.b16 %v1479, %v1447
    %v2376 = vpack.c.b16 %v1480, %v1448
    %v2377 = vpack.c.b16 %v1481, %v1449
    %v2378 = vpack.c.b16 %v1482, %v1450
    %v2379 = vpack.c.b16 %v1483, %v1451
    %v2380 = vpack.c.b16 %v1484, %v1452
    %v2381 = vpack.c.b16 %v1485, %v1453
    %v2382 = vpack.c.b16 %v1486, %v1454
    %v2383 = vpack.c.b16 %v1519, %v1487
    %v2384 = vpack.c.b16 %v1520, %v1488
    %v2385 = vpack.c.b16 %v1521, %v1489
    %v2386 = vpack.c.b16 %v1522, %v1490
    %v2387 = vpack.c.b16 %v1523, %v1491
    %v2388 = vpack.c.b16 %v1524, %v1492
    %v2389 = vpack.c.b16 %v1525, %v1493
    %v2390 = vpack.c.b16 %v1526, %v1494
    %v2391 = vpack.c.b16 %v1527, %v1495
    %v2392 = vpack.c.b16 %v1528, %v1496
    %v2393 = vpack.c.b16 %v1529, %v1497
    %v2394 = vpack.c.b16 %v1530, %v1498
    %v2395 = vpack.c.b16 %v1531, %v1499
    %v2396 = vpack.c.b16 %v1532, %v1500
    %v2397 = vpack.c.b16 %v1533, %v1501
    %v2398 = vpack.c.b16 %v1534, %v1502
    %v2399 = vpack.c.b16 %v1535, %v1503
    %v2400 = vpack.c.b16 %v1536, %v1504
    %v2401 = vpack.c.b16 %v1537, %v1505
    %v2402 = vpack.c.b16 %v1538, %v1506
    %v2403 = vpack.c.b16 %v1539, %v1507
    %v2404 = vpack.c.b16 %v1540, %v1508
    %v2405 = vpack.c.b16 %v1541, %v1509
    %v2406 = vpack.c.b16 %v1542, %v1510
    %v2407 = vpack.c.b16 %v1543, %v1511
    %v2408 = vpack.c.b16 %v1544, %v1512
    %v2409 = vpack.c.b16 %v1545, %v1513
    %v2410 = vpack.c.b16 %v1546, %v1514
    %v2411 = vpack.c.b16 %v1547, %v1515
    %v2412 = vpack.c.b16 %v1548, %v1516
    %v2413 = vpack.c.b16 %v1549, %v1517
    %v2414 = vpack.c.b16 %v1550, %v1518
    %v2415 = vpack.c.b16 %v1583, %v1551
    %v2416 = vpack.c.b16 %v1584, %v1552
    %v2417 = vpack.c.b16 %v1585, %v1553
    %v2418 = vpack.c.b16 %v1586, %v1554
    %v2419 = vpack.c.b16 %v1587, %v1555
    %v2420 = vpack.c.b16 %v1588, %v1556
    %v2421 = vpack.c.b16 %v1589, %v1557
    %v2422 = vpack.c.b16 %v1590, %v1558
    %v2423 = vpack.c.b16 %v1591, %v1559
    %v2424 = vpack.c.b16 %v1592, %v1560
    %v2425 = vpack.c.b16 %v1593, %v1561
    %v2426 = vpack.c.b16 %v1594, %v1562
    %v2427 = vpack.c.b16 %v1595, %v1563
    %v2428 = vpack.c.b16 %v1596, %v1564
    %v2429 = vpack.c.b16 %v1597, %v1565
    %v2430 = vpack.c.b16 %v1598, %v1566
    %v2431 = vpack.c.b16 %v1599, %v1567
    %v2432 = vpack.c.b16 %v1600, %v1568
    %v2433 = vpack.c.b16 %v1601, %v1569
    %v2434 = vpack.c.b16 %v1602, %v1570
    %v2435 = vpack.c.b16 %v1603, %v1571
    %v2436 = vpack.c.b16 %v1604, %v1572
    %v2437 = vpack.c.b16 %v1605, %v1573
    %v2438 = vpack.c.b16 %v1606, %v1574
    %v2439 = vpack.c.b16 %v1607, %v1575
    %v2440 = vpack.c.b16 %v1608, %v1576
    %v2441 = vpack.c.b16 %v1609, %v1577
    %v2442 = vpack.c.b16 %v1610, %v1578
    %v2443 = vpack.c.b16 %v1611, %v1579
    %v2444 = vpack.c.b16 %v1612, %v1580
    %v2445 = vpack.c.b16 %v1613, %v1581
    %v2446 = vpack.c.b16 %v1614, %v1582
    %v2447 = vpack.c.b16 %v1647, %v1615
    %v2448 = vpack.c.b16 %v1648, %v1616
    %v2449 = vpack.c.b16 %v1649, %v1617
    %v2450 = vpack.c.b16 %v1650, %v1618
    %v2451 = vpack.c.b16 %v1651, %v1619
    %v2452 = vpack.c.b16 %v1652, %v1620
    %v2453 = vpack.c.b16 %v1653, %v1621
    %v2454 = vpack.c.b16 %v1654, %v1622
    %v2455 = vpack.c.b16 %v1655, %v1623
    %v2456 = vpack.c.b16 %v1656, %v1624
    %v2457 = vpack.c.b16 %v1657, %v1625
    %v2458 = vpack.c.b16 %v1658, %v1626
    %v2459 = vpack.c.b16 %v1659, %v1627
    %v2460 = vpack.c.b16 %v1660, %v1628
    %v2461 = vpack.c.b16 %v1661, %v1629
    %v2462 = vpack.c.b16 %v1662, %v1630
    %v2463 = vpack.c.b16 %v1663, %v1631
    %v2464 = vpack.c.b16 %v1664, %v1632
    %v2465 = vpack.c.b16 %v1665, %v1633
    %v2466 = vpack.c.b16 %v1666, %v1634
    %v2467 = vpack.c.b16 %v1667, %v1635
    %v2468 = vpack.c.b16 %v1668, %v1636
    %v2469 = vpack.c.b16 %v1669, %v1637
    %v2470 = vpack.c.b16 %v1670, %v1638
    %v2471 = vpack.c.b16 %v1671, %v1639
    %v2472 = vpack.c.b16 %v1672, %v1640
    %v2473 = vpack.c.b16 %v1673, %v1641
    %v2474 = vpack.c.b16 %v1674, %v1642
    %v2475 = vpack.c.b16 %v1675, %v1643
    %v2476 = vpack.c.b16 %v1676, %v1644
    %v2477 = vpack.c.b16 %v1677, %v1645
    %v2478 = vpack.c.b16 %v1678, %v1646
    %v2479 = vpack.c.b16 %v1711, %v1679
    %v2480 = vpack.c.b16 %v1712, %v1680
    %v2481 = vpack.c.b16 %v1713, %v1681
    %v2482 = vpack.c.b16 %v1714, %v1682
    %v2483 = vpack.c.b16 %v1715, %v1683
    %v2484 = vpack.c.b16 %v1716, %v1684
    %v2485 = vpack.c.b16 %v1717, %v1685
    %v2486 = vpack.c.b16 %v1718, %v1686
    %v2487 = vpack.c.b16 %v1719, %v1687
    %v2488 = vpack.c.b16 %v1720, %v1688
    %v2489 = vpack.c.b16 %v1721, %v1689
    %v2490 = vpack.c.b16 %v1722, %v1690
    %v2491 = vpack.c.b16 %v1723, %v1691
    %v2492 = vpack.c.b16 %v1724, %v1692
    %v2493 = vpack.c.b16 %v1725, %v1693
    %v2494 = vpack.c.b16 %v1726, %v1694
    %v2495 = vpack.c.b16 %v1727, %v1695
    %v2496 = vpack.c.b16 %v1728, %v1696
    %v2497 = vpack.c.b16 %v1729, %v1697
    %v2498 = vpack.c.b16 %v1730, %v1698
    %v2499 = vpack.c.b16 %v1731, %v1699
    %v2500 = vpack.c.b16 %v1732, %v1700
    %v2501 = vpack.c.b16 %v1733, %v1701
    %v2502 = vpack.c.b16 %v1734, %v1702
    %v2503 = vpack.c.b16 %v1735, %v1703
    %v2504 = vpack.c.b16 %v1736, %v1704
    %v2505 = vpack.c.b16 %v1737, %v1705
    %v2506 = vpack.c.b16 %v1738, %v1706
    %v2507 = vpack.c.b16 %v1739, %v1707
    %v2508 = vpack.c.b16 %v1740, %v1708
    %v2509 = vpack.c.b16 %v1741, %v1709
    %v2510 = vpack.c.b16 %v1742, %v1710
    %v2511 = vpack.c.b16 %v1775, %v1743
    %v2512 = vpack.c.b16 %v1776, %v1744
    %v2513 = vpack.c.b16 %v1777, %v1745
    %v2514 = vpack.c.b16 %v1778, %v1746
    %v2515 = vpack.c.b16 %v1779, %v1747
    %v2516 = vpack.c.b16 %v1780, %v1748
    %v2517 = vpack.c.b16 %v1781, %v1749
    %v2518 = vpack.c.b16 %v1782, %v1750
    %v2519 = vpack.c.b16 %v1783, %v1751
    %v2520 = vpack.c.b16 %v1784, %v1752
    %v2521 = vpack.c.b16 %v1785, %v1753
    %v2522 = vpack.c.b16 %v1786, %v1754
    %v2523 = vpack.c.b16 %v1787, %v1755
    %v2524 = vpack.c.b16 %v1788, %v1756
    %v2525 = vpack.c.b16 %v1789, %v1757
    %v2526 = vpack.c.b16 %v1790, %v1758
    %v2527 = vpack.c.b16 %v1791, %v1759
    %v2528 = vpack.c.b16 %v1792, %v1760
    %v2529 = vpack.c.b16 %v1793, %v1761
    %v2530 = vpack.c.b16 %v1794, %v1762
    %v2531 = vpack.c.b16 %v1795, %v1763
    %v2532 = vpack.c.b16 %v1796, %v1764
    %v2533 = vpack.c.b16 %v1797, %v1765
    %v2534 = vpack.c.b16 %v1798, %v1766
    %v2535 = vpack.c.b16 %v1799, %v1767
    %v2536 = vpack.c.b16 %v1800, %v1768
    %v2537 = vpack.c.b16 %v1801, %v1769
    %v2538 = vpack.c.b16 %v1802, %v1770
    %v2539 = vpack.c.b16 %v1803, %v1771
    %v2540 = vpack.c.b16 %v1804, %v1772
    %v2541 = vpack.c.b16 %v1805, %v1773
    %v2542 = vpack.c.b16 %v1806, %v1774
    %v2543 = vpack.c.b16 %v1839, %v1807
    %v2544 = vpack.c.b16 %v1840, %v1808
    %v2545 = vpack.c.b16 %v1841, %v1809
    %v2546 = vpack.c.b16 %v1842, %v1810
    %v2547 = vpack.c.b16 %v1843, %v1811
    %v2548 = vpack.c.b16 %v1844, %v1812
    %v2549 = vpack.c.b16 %v1845, %v1813
    %v2550 = vpack.c.b16 %v1846, %v1814
    %v2551 = vpack.c.b16 %v1847, %v1815
    %v2552 = vpack.c.b16 %v1848, %v1816
    %v2553 = vpack.c.b16 %v1849, %v1817
    %v2554 = vpack.c.b16 %v1850, %v1818
    %v2555 = vpack.c.b16 %v1851, %v1819
    %v2556 = vpack.c.b16 %v1852, %v1820
    %v2557 = vpack.c.b16 %v1853, %v1821
    %v2558 = vpack.c.b16 %v1854, %v1822
    %v2559 = vpack.c.b16 %v1855, %v1823
    %v2560 = vpack.c.b16 %v1856, %v1824
    %v2561 = vpack.c.b16 %v1857, %v1825
    %v2562 = vpack.c.b16 %v1858, %v1826
    %v2563 = vpack.c.b16 %v1859, %v1827
    %v2564 = vpack.c.b16 %v1860, %v1828
    %v2565 = vpack.c.b16 %v1861, %v1829
    %v2566 = vpack.c.b16 %v1862, %v1830
    %v2567 = vpack.c.b16 %v1863, %v1831
    %v2568 = vpack.c.b16 %v1864, %v1832
    %v2569 = vpack.c.b16 %v1865, %v1833
    %v2570 = vpack.c.b16 %v1866, %v1834
    %v2571 = vpack.c.b16 %v1867, %v1835
    %v2572 = vpack.c.b16 %v1868, %v1836
    %v2573 = vpack.c.b16 %v1869, %v1837
    %v2574 = vpack.c.b16 %v1870, %v1838
    %v2575 = vpack.c.b16 %v1903, %v1871
    %v2576 = vpack.c.b16 %v1904, %v1872
    %v2577 = vpack.c.b16 %v1905, %v1873
    %v2578 = vpack.c.b16 %v1906, %v1874
    %v2579 = vpack.c.b16 %v1907, %v1875
    %v2580 = vpack.c.b16 %v1908, %v1876
    %v2581 = vpack.c.b16 %v1909, %v1877
    %v2582 = vpack.c.b16 %v1910, %v1878
    %v2583 = vpack.c.b16 %v1911, %v1879
    %v2584 = vpack.c.b16 %v1912, %v1880
    %v2585 = vpack.c.b16 %v1913, %v1881
    %v2586 = vpack.c.b16 %v1914, %v1882
    %v2587 = vpack.c.b16 %v1915, %v1883
    %v2588 = vpack.c.b16 %v1916, %v1884
    %v2589 = vpack.c.b16 %v1917, %v1885
    %v2590 = vpack.c.b16 %v1918, %v1886
    %v2591 = vpack.c.b16 %v1919, %v1887
    %v2592 = vpack.c.b16 %v1920, %v1888
    %v2593 = vpack.c.b16 %v1921, %v1889
    %v2594 = vpack.c.b16 %v1922, %v1890
    %v2595 = vpack.c.b16 %v1923, %v1891
    %v2596 = vpack.c.b16 %v1924, %v1892
    %v2597 = vpack.c.b16 %v1925, %v1893
    %v2598 = vpack.c.b16 %v1926, %v1894
    %v2599 = vpack.c.b16 %v1927, %v1895
    %v2600 = vpack.c.b16 %v1928, %v1896
    %v2601 = vpack.c.b16 %v1929, %v1897
    %v2602 = vpack.c.b16 %v1930, %v1898
    %v2603 = vpack.c.b16 %v1931, %v1899
    %v2604 = vpack.c.b16 %v1932, %v1900
    %v2605 = vpack.c.b16 %v1933, %v1901
    %v2606 = vpack.c.b16 %v1934, %v1902
    %v2607 = vpack.c.b16 %v1967, %v1935
    %v2608 = vpack.c.b16 %v1968, %v1936
    %v2609 = vpack.c.b16 %v1969, %v1937
    %v2610 = vpack.c.b16 %v1970, %v1938
    %v2611 = vpack.c.b16 %v1971, %v1939
    %v2612 = vpack.c.b16 %v1972, %v1940
    %v2613 = vpack.c.b16 %v1973, %v1941
    %v2614 = vpack.c.b16 %v1974, %v1942
    %v2615 = vpack.c.b16 %v1975, %v1943
    %v2616 = vpack.c.b16 %v1976, %v1944
    %v2617 = vpack.c.b16 %v1977, %v1945
    %v2618 = vpack.c.b16 %v1978, %v1946
    %v2619 = vpack.c.b16 %v1979, %v1947
    %v2620 = vpack.c.b16 %v1980, %v1948
    %v2621 = vpack.c.b16 %v1981, %v1949
    %v2622 = vpack.c.b16 %v1982, %v1950
    %v2623 = vpack.c.b16 %v1983, %v1951
    %v2624 = vpack.c.b16 %v1984, %v1952
    %v2625 = vpack.c.b16 %v1985, %v1953
    %v2626 = vpack.c.b16 %v1986, %v1954
    %v2627 = vpack.c.b16 %v1987, %v1955
    %v2628 = vpack.c.b16 %v1988, %v1956
    %v2629 = vpack.c.b16 %v1989, %v1957
    %v2630 = vpack.c.b16 %v1990, %v1958
    %v2631 = vpack.c.b16 %v1991, %v1959
    %v2632 = vpack.c.b16 %v1992, %v1960
    %v2633 = vpack.c.b16 %v1993, %v1961
    %v2634 = vpack.c.b16 %v1994, %v1962
    %v2635 = vpack.c.b16 %v1995, %v1963
    %v2636 = vpack.c.b16 %v1996, %v1964
    %v2637 = vpack.c.b16 %v1997, %v1965
    %v2638 = vpack.c.b16 %v1998, %v1966
    %v2639 = vpack.c.b16 %v2031, %v1999
    %v2640 = vpack.c.b16 %v2032, %v2000
    %v2641 = vpack.c.b16 %v2033, %v2001
    %v2642 = vpack.c.b16 %v2034, %v2002
    %v2643 = vpack.c.b16 %v2035, %v2003
    %v2644 = vpack.c.b16 %v2036, %v2004
    %v2645 = vpack.c.b16 %v2037, %v2005
    %v2646 = vpack.c.b16 %v2038, %v2006
    %v2647 = vpack.c.b16 %v2039, %v2007
    %v2648 = vpack.c.b16 %v2040, %v2008
    %v2649 = vpack.c.b16 %v2041, %v2009
    %v2650 = vpack.c.b16 %v2042, %v2010
    %v2651 = vpack.c.b16 %v2043, %v2011
    %v2652 = vpack.c.b16 %v2044, %v2012
    %v2653 = vpack.c.b16 %v2045, %v2013
    %v2654 = vpack.c.b16 %v2046, %v2014
    %v2655 = vpack.c.b16 %v2047, %v2015
    %v2656 = vpack.c.b16 %v2048, %v2016
    %v2657 = vpack.c.b16 %v2049, %v2017
    %v2658 = vpack.c.b16 %v2050, %v2018
    %v2659 = vpack.c.b16 %v2051, %v2019
    %v2660 = vpack.c.b16 %v2052, %v2020
    %v2661 = vpack.c.b16 %v2053, %v2021
    %v2662 = vpack.c.b16 %v2054, %v2022
    %v2663 = vpack.c.b16 %v2055, %v2023
    %v2664 = vpack.c.b16 %v2056, %v2024
    %v2665 = vpack.c.b16 %v2057, %v2025
    %v2666 = vpack.c.b16 %v2058, %v2026
    %v2667 = vpack.c.b16 %v2059, %v2027
    %v2668 = vpack.c.b16 %v2060, %v2028
    %v2669 = vpack.c.b16 %v2061, %v2029
    %v2670 = vpack.c.b16 %v2062, %v2030
    %v2671 = vpack.c.b16 %v2095, %v2063
    %v2672 = vpack.c.b16 %v2096, %v2064
    %v2673 = vpack.c.b16 %v2097, %v2065
    %v2674 = vpack.c.b16 %v2098, %v2066
    %v2675 = vpack.c.b16 %v2099, %v2067
    %v2676 = vpack.c.b16 %v2100, %v2068
    %v2677 = vpack.c.b16 %v2101, %v2069
    %v2678 = vpack.c.b16 %v2102, %v2070
    %v2679 = vpack.c.b16 %v2103, %v2071
    %v2680 = vpack.c.b16 %v2104, %v2072
    %v2681 = vpack.c.b16 %v2105, %v2073
    %v2682 = vpack.c.b16 %v2106, %v2074
    %v2683 = vpack.c.b16 %v2107, %v2075
    %v2684 = vpack.c.b16 %v2108, %v2076
    %v2685 = vpack.c.b16 %v2109, %v2077
    %v2686 = vpack.c.b16 %v2110, %v2078
    %v2687 = vpack.c.b16 %v2111, %v2079
    %v2688 = vpack.c.b16 %v2112, %v2080
    %v2689 = vpack.c.b16 %v2113, %v2081
    %v2690 = vpack.c.b16 %v2114, %v2082
    %v2691 = vpack.c.b16 %v2115, %v2083
    %v2692 = vpack.c.b16 %v2116, %v2084
    %v2693 = vpack.c.b16 %v2117, %v2085
    %v2694 = vpack.c.b16 %v2118, %v2086
    %v2695 = vpack.c.b16 %v2119, %v2087
    %v2696 = vpack.c.b16 %v2120, %v2088
    %v2697 = vpack.c.b16 %v2121, %v2089
    %v2698 = vpack.c.b16 %v2122, %v2090
    %v2699 = vpack.c.b16 %v2123, %v2091
    %v2700 = vpack.c.b16 %v2124, %v2092
    %v2701 = vpack.c.b16 %v2125, %v2093
    %v2702 = vpack.c.b16 %v2126, %v2094
    %v2703 = vpack.c.b16 %v2159, %v2127
    %v2704 = vpack.c.b16 %v2160, %v2128
    %v2705 = vpack.c.b16 %v2161, %v2129
    %v2706 = vpack.c.b16 %v2162, %v2130
    %v2707 = vpack.c.b16 %v2163, %v2131
    %v2708 = vpack.c.b16 %v2164, %v2132
    %v2709 = vpack.c.b16 %v2165, %v2133
    %v2710 = vpack.c.b16 %v2166, %v2134
    %v2711 = vpack.c.b16 %v2167, %v2135
    %v2712 = vpack.c.b16 %v2168, %v2136
    %v2713 = vpack.c.b16 %v2169, %v2137
    %v2714 = vpack.c.b16 %v2170, %v2138
    %v2715 = vpack.c.b16 %v2171, %v2139
    %v2716 = vpack.c.b16 %v2172, %v2140
    %v2717 = vpack.c.b16 %v2173, %v2141
    %v2718 = vpack.c.b16 %v2174, %v2142
    %v2719 = vpack.c.b16 %v2175, %v2143
    %v2720 = vpack.c.b16 %v2176, %v2144
    %v2721 = vpack.c.b16 %v2177, %v2145
    %v2722 = vpack.c.b16 %v2178, %v2146
    %v2723 = vpack.c.b16 %v2179, %v2147
    %v2724 = vpack.c.b16 %v2180, %v2148
    %v2725 = vpack.c.b16 %v2181, %v2149
    %v2726 = vpack.c.b16 %v2182, %v2150
    %v2727 = vpack.c.b16 %v2183, %v2151
    %v2728 = vpack.c.b16 %v2184, %v2152
    %v2729 = vpack.c.b16 %v2185, %v2153
    %v2730 = vpack.c.b16 %v2186, %v2154
    %v2731 = vpack.c.b16 %v2187, %v2155
    %v2732 = vpack.c.b16 %v2188, %v2156
    %v2733 = vpack.c.b16 %v2189, %v2157
    %v2734 = vpack.c.b16 %v2190, %v2158
    %v2735 = vpack.c.b16 %v2223, %v2191
    %v2736 = vpack.c.b16 %v2224, %v2192
    %v2737 = vpack.c.b16 %v2225, %v2193
    %v2738 = vpack.c.b16 %v2226, %v2194
    %v2739 = vpack.c.b16 %v2227, %v2195
    %v2740 = vpack.c.b16 %v2228, %v2196
    %v2741 = vpack.c.b16 %v2229, %v2197
    %v2742 = vpack.c.b16 %v2230, %v2198
    %v2743 = vpack.c.b16 %v2231, %v2199
    %v2744 = vpack.c.b16 %v2232, %v2200
    %v2745 = vpack.c.b16 %v2233, %v2201
    %v2746 = vpack.c.b16 %v2234, %v2202
    %v2747 = vpack.c.b16 %v2235, %v2203
    %v2748 = vpack.c.b16 %v2236, %v2204
    %v2749 = vpack.c.b16 %v2237, %v2205
    %v2750 = vpack.c.b16 %v2238, %v2206
    %v2751 = vpack.c.b16 %v2239, %v2207
    %v2752 = vpack.c.b16 %v2240, %v2208
    %v2753 = vpack.c.b16 %v2241, %v2209
    %v2754 = vpack.c.b16 %v2242, %v2210
    %v2755 = vpack.c.b16 %v2243, %v2211
    %v2756 = vpack.c.b16 %v2244, %v2212
    %v2757 = vpack.c.b16 %v2245, %v2213
    %v2758 = vpack.c.b16 %v2246, %v2214
    %v2759 = vpack.c.b16 %v2247, %v2215
    %v2760 = vpack.c.b16 %v2248, %v2216
    %v2761 = vpack.c.b16 %v2249, %v2217
    %v2762 = vpack.c.b16 %v2250, %v2218
    %v2763 = vpack.c.b16 %v2251, %v2219
    %v2764 = vpack.c.b16 %v2252, %v2220
    %v2765 = vpack.c.b16 %v2253, %v2221
    %v2766 = vpack.c.b16 %v2254, %v2222
    %3279 = vmatprep.subr.bf16.mxu0 %v2256
    %3280 = vmatpush1.bf16.msra.mxu0 %v2255
    %3281 = vmatprep.subr.bf16.mxu0 %v2288
    %3282 = vmatpush1.bf16.msra.mxu0 %v2287
    %3283 = vmatprep.subr.bf16.mxu0 %v2320
    %3284 = vmatpush1.bf16.msra.mxu0 %v2319
    %3285 = vmatprep.subr.bf16.mxu0 %v2352
    %3286 = vmatpush1.bf16.msra.mxu0 %v2351
    %3287 = vmatprep.subr.bf16.mxu0 %v2384
    %3288 = vmatpush1.bf16.msra.mxu0 %v2383
    %3289 = vmatprep.subr.bf16.mxu0 %v2416
    %3290 = vmatpush1.bf16.msra.mxu0 %v2415
    %3291 = vmatprep.subr.bf16.mxu0 %v2448
    %3292 = vmatpush1.bf16.msra.mxu0 %v2447
    %3293 = vmatprep.subr.bf16.mxu0 %v2480
    %3294 = vmatpush1.bf16.msra.mxu0 %v2479
    %3295 = vmatprep.subr.bf16.mxu0 %v2512
    %3296 = vmatpush1.bf16.msra.mxu0 %v2511
    %3297 = vmatprep.subr.bf16.mxu0 %v2544
    %3298 = vmatpush1.bf16.msra.mxu0 %v2543
    %3299 = vmatprep.subr.bf16.mxu0 %v2576
    %3300 = vmatpush1.bf16.msra.mxu0 %v2575
    %3301 = vmatprep.subr.bf16.mxu0 %v2608
    %3302 = vmatpush1.bf16.msra.mxu0 %v2607
    %3303 = vmatprep.subr.bf16.mxu0 %v2640
    %3304 = vmatpush1.bf16.msra.mxu0 %v2639
    %3305 = vmatprep.subr.bf16.mxu0 %v2672
    %3306 = vmatpush1.bf16.msra.mxu0 %v2671
    %3307 = vmatprep.subr.bf16.mxu0 %v2704
    %3308 = vmatpush1.bf16.msra.mxu0 %v2703
    %3309 = vmatprep.subr.bf16.mxu0 %v2736
    %3310 = vmatpush1.bf16.msra.mxu0 %v2735
    %3311 = vmatprep.mubr.bf16.mxu0 %v716
    %3312 = vmatmul.mubr.bf16.gmra.mrb[0].mxu0 %v715
    %v3313 = vpop.f32.mrb[0].mxu0
    %v3314 = vadd.f32 0.0, %v3313
    %v3315 = vpop.f32.mrb[0].mxu0
    %v3316 = vadd.f32 0.0, %v3315
    %v3317 = vpop.f32.mrb[0].mxu0
    %v3318 = vadd.f32 0.0, %v3317
    %v3319 = vpop.f32.mrb[0].mxu0
    %v3320 = vadd.f32 0.0, %v3319
    %3321 = vdwg.mxu0
    %3322 = vmatprep.subr.bf16.mxu0 %v2258
    %3323 = vmatpush1.bf16.msra.mxu0 %v2257
    %3324 = vmatprep.subr.bf16.mxu0 %v2290
    %3325 = vmatpush1.bf16.msra.mxu0 %v2289
    %3326 = vmatprep.subr.bf16.mxu0 %v2322
    %3327 = vmatpush1.bf16.msra.mxu0 %v2321
    %3328 = vmatprep.subr.bf16.mxu0 %v2354
    %3329 = vmatpush1.bf16.msra.mxu0 %v2353
    %3330 = vmatprep.subr.bf16.mxu0 %v2386
    %3331 = vmatpush1.bf16.msra.mxu0 %v2385
    %3332 = vmatprep.subr.bf16.mxu0 %v2418
    %3333 = vmatpush1.bf16.msra.mxu0 %v2417
    %3334 = vmatprep.subr.bf16.mxu0 %v2450
    %3335 = vmatpush1.bf16.msra.mxu0 %v2449
    %3336 = vmatprep.subr.bf16.mxu0 %v2482
    %3337 = vmatpush1.bf16.msra.mxu0 %v2481
    %3338 = vmatprep.subr.bf16.mxu0 %v2514
    %3339 = vmatpush1.bf16.msra.mxu0 %v2513
    %3340 = vmatprep.subr.bf16.mxu0 %v2546
    %3341 = vmatpush1.bf16.msra.mxu0 %v2545
    %3342 = vmatprep.subr.bf16.mxu0 %v2578
    %3343 = vmatpush1.bf16.msra.mxu0 %v2577
    %3344 = vmatprep.subr.bf16.mxu0 %v2610
    %3345 = vmatpush1.bf16.msra.mxu0 %v2609
    %3346 = vmatprep.subr.bf16.mxu0 %v2642
    %3347 = vmatpush1.bf16.msra.mxu0 %v2641
    %3348 = vmatprep.subr.bf16.mxu0 %v2674
    %3349 = vmatpush1.bf16.msra.mxu0 %v2673
    %3350 = vmatprep.subr.bf16.mxu0 %v2706
    %3351 = vmatpush1.bf16.msra.mxu0 %v2705
    %3352 = vmatprep.subr.bf16.mxu0 %v2738
    %3353 = vmatpush1.bf16.msra.mxu0 %v2737
    %3354 = vmatprep.mubr.bf16.mxu0 %v716
    %3355 = vmatmul.mubr.bf16.gmra.mrb[0].mxu0 %v715
    %v3356 = vpop.f32.mrb[0].mxu0
    %v3357 = vadd.f32 0.0, %v3356
    %v3358 = vpop.f32.mrb[0].mxu0
    %v3359 = vadd.f32 0.0, %v3358
    %v3360 = vpop.f32.mrb[0].mxu0
    %v3361 = vadd.f32 0.0, %v3360
    %v3362 = vpop.f32.mrb[0].mxu0
    %v3363 = vadd.f32 0.0, %v3362
    %3364 = vdwg.mxu0
    %3365 = vmatprep.subr.bf16.mxu0 %v2260
    %3366 = vmatpush1.bf16.msra.mxu0 %v2259
    %3367 = vmatprep.subr.bf16.mxu0 %v2292
    %3368 = vmatpush1.bf16.msra.mxu0 %v2291
    %3369 = vmatprep.subr.bf16.mxu0 %v2324
    %3370 = vmatpush1.bf16.msra.mxu0 %v2323
    %3371 = vmatprep.subr.bf16.mxu0 %v2356
    %3372 = vmatpush1.bf16.msra.mxu0 %v2355
    %3373 = vmatprep.subr.bf16.mxu0 %v2388
    %3374 = vmatpush1.bf16.msra.mxu0 %v2387
    %3375 = vmatprep.subr.bf16.mxu0 %v2420
    %3376 = vmatpush1.bf16.msra.mxu0 %v2419
    %3377 = vmatprep.subr.bf16.mxu0 %v2452
    %3378 = vmatpush1.bf16.msra.mxu0 %v2451
    %3379 = vmatprep.subr.bf16.mxu0 %v2484
    %3380 = vmatpush1.bf16.msra.mxu0 %v2483
    %3381 = vmatprep.subr.bf16.mxu0 %v2516
    %3382 = vmatpush1.bf16.msra.mxu0 %v2515
    %3383 = vmatprep.subr.bf16.mxu0 %v2548
    %3384 = vmatpush1.bf16.msra.mxu0 %v2547
    %3385 = vmatprep.subr.bf16.mxu0 %v2580
    %3386 = vmatpush1.bf16.msra.mxu0 %v2579
    %3387 = vmatprep.subr.bf16.mxu0 %v2612
    %3388 = vmatpush1.bf16.msra.mxu0 %v2611
    %3389 = vmatprep.subr.bf16.mxu0 %v2644
    %3390 = vmatpush1.bf16.msra.mxu0 %v2643
    %3391 = vmatprep.subr.bf16.mxu0 %v2676
    %3392 = vmatpush1.bf16.msra.mxu0 %v2675
    %3393 = vmatprep.subr.bf16.mxu0 %v2708
    %3394 = vmatpush1.bf16.msra.mxu0 %v2707
    %3395 = vmatprep.subr.bf16.mxu0 %v2740
    %3396 = vmatpush1.bf16.msra.mxu0 %v2739
    %3397 = vmatprep.mubr.bf16.mxu0 %v716
    %3398 = vmatmul.mubr.bf16.gmra.mrb[0].mxu0 %v715
    %v3399 = vpop.f32.mrb[0].mxu0
    %v3400 = vadd.f32 0.0, %v3399
    %v3401 = vpop.f32.mrb[0].mxu0
    %v3402 = vadd.f32 0.0, %v3401
    %v3403 = vpop.f32.mrb[0].mxu0
    %v3404 = vadd.f32 0.0, %v3403
    %v3405 = vpop.f32.mrb[0].mxu0
    %v3406 = vadd.f32 0.0, %v3405
    %3407 = vdwg.mxu0
    %3408 = vmatprep.subr.bf16.mxu0 %v2262
    %3409 = vmatpush1.bf16.msra.mxu0 %v2261
    %3410 = vmatprep.subr.bf16.mxu0 %v2294
    %3411 = vmatpush1.bf16.msra.mxu0 %v2293
    %3412 = vmatprep.subr.bf16.mxu0 %v2326
    %3413 = vmatpush1.bf16.msra.mxu0 %v2325
    %3414 = vmatprep.subr.bf16.mxu0 %v2358
    %3415 = vmatpush1.bf16.msra.mxu0 %v2357
    %3416 = vmatprep.subr.bf16.mxu0 %v2390
    %3417 = vmatpush1.bf16.msra.mxu0 %v2389
    %3418 = vmatprep.subr.bf16.mxu0 %v2422
    %3419 = vmatpush1.bf16.msra.mxu0 %v2421
    %3420 = vmatprep.subr.bf16.mxu0 %v2454
    %3421 = vmatpush1.bf16.msra.mxu0 %v2453
    %3422 = vmatprep.subr.bf16.mxu0 %v2486
    %3423 = vmatpush1.bf16.msra.mxu0 %v2485
    %3424 = vmatprep.subr.bf16.mxu0 %v2518
    %3425 = vmatpush1.bf16.msra.mxu0 %v2517
    %3426 = vmatprep.subr.bf16.mxu0 %v2550
    %3427 = vmatpush1.bf16.msra.mxu0 %v2549
    %3428 = vmatprep.subr.bf16.mxu0 %v2582
    %3429 = vmatpush1.bf16.msra.mxu0 %v2581
    %3430 = vmatprep.subr.bf16.mxu0 %v2614
    %3431 = vmatpush1.bf16.msra.mxu0 %v2613
    %3432 = vmatprep.subr.bf16.mxu0 %v2646
    %3433 = vmatpush1.bf16.msra.mxu0 %v2645
    %3434 = vmatprep.subr.bf16.mxu0 %v2678
    %3435 = vmatpush1.bf16.msra.mxu0 %v2677
    %3436 = vmatprep.subr.bf16.mxu0 %v2710
    %3437 = vmatpush1.bf16.msra.mxu0 %v2709
    %3438 = vmatprep.subr.bf16.mxu0 %v2742
    %3439 = vmatpush1.bf16.msra.mxu0 %v2741
    %3440 = vmatprep.mubr.bf16.mxu0 %v716
    %3441 = vmatmul.mubr.bf16.gmra.mrb[0].mxu0 %v715
    %v3442 = vpop.f32.mrb[0].mxu0
    %v3443 = vadd.f32 0.0, %v3442
    %v3444 = vpop.f32.mrb[0].mxu0
    %v3445 = vadd.f32 0.0, %v3444
    %v3446 = vpop.f32.mrb[0].mxu0
    %v3447 = vadd.f32 0.0, %v3446
    %v3448 = vpop.f32.mrb[0].mxu0
    %v3449 = vadd.f32 0.0, %v3448
    %3450 = vdwg.mxu0
    %3451 = vmatprep.subr.bf16.mxu0 %v2264
    %3452 = vmatpush1.bf16.msra.mxu0 %v2263
    %3453 = vmatprep.subr.bf16.mxu0 %v2296
    %3454 = vmatpush1.bf16.msra.mxu0 %v2295
    %3455 = vmatprep.subr.bf16.mxu0 %v2328
    %3456 = vmatpush1.bf16.msra.mxu0 %v2327
    %3457 = vmatprep.subr.bf16.mxu0 %v2360
    %3458 = vmatpush1.bf16.msra.mxu0 %v2359
    %3459 = vmatprep.subr.bf16.mxu0 %v2392
    %3460 = vmatpush1.bf16.msra.mxu0 %v2391
    %3461 = vmatprep.subr.bf16.mxu0 %v2424
    %3462 = vmatpush1.bf16.msra.mxu0 %v2423
    %3463 = vmatprep.subr.bf16.mxu0 %v2456
    %3464 = vmatpush1.bf16.msra.mxu0 %v2455
    %3465 = vmatprep.subr.bf16.mxu0 %v2488
    %3466 = vmatpush1.bf16.msra.mxu0 %v2487
    %3467 = vmatprep.subr.bf16.mxu0 %v2520
    %3468 = vmatpush1.bf16.msra.mxu0 %v2519
    %3469 = vmatprep.subr.bf16.mxu0 %v2552
    %3470 = vmatpush1.bf16.msra.mxu0 %v2551
    %3471 = vmatprep.subr.bf16.mxu0 %v2584
    %3472 = vmatpush1.bf16.msra.mxu0 %v2583
    %3473 = vmatprep.subr.bf16.mxu0 %v2616
    %3474 = vmatpush1.bf16.msra.mxu0 %v2615
    %3475 = vmatprep.subr.bf16.mxu0 %v2648
    %3476 = vmatpush1.bf16.msra.mxu0 %v2647
    %3477 = vmatprep.subr.bf16.mxu0 %v2680
    %3478 = vmatpush1.bf16.msra.mxu0 %v2679
    %3479 = vmatprep.subr.bf16.mxu0 %v2712
    %3480 = vmatpush1.bf16.msra.mxu0 %v2711
    %3481 = vmatprep.subr.bf16.mxu0 %v2744
    %3482 = vmatpush1.bf16.msra.mxu0 %v2743
    %3483 = vmatprep.mubr.bf16.mxu0 %v716
    %3484 = vmatmul.mubr.bf16.gmra.mrb[0].mxu0 %v715
    %v3485 = vpop.f32.mrb[0].mxu0
    %v3486 = vadd.f32 0.0, %v3485
    %v3487 = vpop.f32.mrb[0].mxu0
    %v3488 = vadd.f32 0.0, %v3487
    %v3489 = vpop.f32.mrb[0].mxu0
    %v3490 = vadd.f32 0.0, %v3489
    %v3491 = vpop.f32.mrb[0].mxu0
    %v3492 = vadd.f32 0.0, %v3491
    %3493 = vdwg.mxu0
    %3494 = vmatprep.subr.bf16.mxu0 %v2266
    %3495 = vmatpush1.bf16.msra.mxu0 %v2265
    %3496 = vmatprep.subr.bf16.mxu0 %v2298
    %3497 = vmatpush1.bf16.msra.mxu0 %v2297
    %3498 = vmatprep.subr.bf16.mxu0 %v2330
    %3499 = vmatpush1.bf16.msra.mxu0 %v2329
    %3500 = vmatprep.subr.bf16.mxu0 %v2362
    %3501 = vmatpush1.bf16.msra.mxu0 %v2361
    %3502 = vmatprep.subr.bf16.mxu0 %v2394
    %3503 = vmatpush1.bf16.msra.mxu0 %v2393
    %3504 = vmatprep.subr.bf16.mxu0 %v2426
    %3505 = vmatpush1.bf16.msra.mxu0 %v2425
    %3506 = vmatprep.subr.bf16.mxu0 %v2458
    %3507 = vmatpush1.bf16.msra.mxu0 %v2457
    %3508 = vmatprep.subr.bf16.mxu0 %v2490
    %3509 = vmatpush1.bf16.msra.mxu0 %v2489
    %3510 = vmatprep.subr.bf16.mxu0 %v2522
    %3511 = vmatpush1.bf16.msra.mxu0 %v2521
    %3512 = vmatprep.subr.bf16.mxu0 %v2554
    %3513 = vmatpush1.bf16.msra.mxu0 %v2553
    %3514 = vmatprep.subr.bf16.mxu0 %v2586
    %3515 = vmatpush1.bf16.msra.mxu0 %v2585
    %3516 = vmatprep.subr.bf16.mxu0 %v2618
    %3517 = vmatpush1.bf16.msra.mxu0 %v2617
    %3518 = vmatprep.subr.bf16.mxu0 %v2650
    %3519 = vmatpush1.bf16.msra.mxu0 %v2649
    %3520 = vmatprep.subr.bf16.mxu0 %v2682
    %3521 = vmatpush1.bf16.msra.mxu0 %v2681
    %3522 = vmatprep.subr.bf16.mxu0 %v2714
    %3523 = vmatpush1.bf16.msra.mxu0 %v2713
    %3524 = vmatprep.subr.bf16.mxu0 %v2746
    %3525 = vmatpush1.bf16.msra.mxu0 %v2745
    %3526 = vmatprep.mubr.bf16.mxu0 %v716
    %3527 = vmatmul.mubr.bf16.gmra.mrb[0].mxu0 %v715
    %v3528 = vpop.f32.mrb[0].mxu0
    %v3529 = vadd.f32 0.0, %v3528
    %v3530 = vpop.f32.mrb[0].mxu0
    %v3531 = vadd.f32 0.0, %v3530
    %v3532 = vpop.f32.mrb[0].mxu0
    %v3533 = vadd.f32 0.0, %v3532
    %v3534 = vpop.f32.mrb[0].mxu0
    %v3535 = vadd.f32 0.0, %v3534
    %3536 = vdwg.mxu0
    %3537 = vmatprep.subr.bf16.mxu0 %v2268
    %3538 = vmatpush1.bf16.msra.mxu0 %v2267
    %3539 = vmatprep.subr.bf16.mxu0 %v2300
    %3540 = vmatpush1.bf16.msra.mxu0 %v2299
    %3541 = vmatprep.subr.bf16.mxu0 %v2332
    %3542 = vmatpush1.bf16.msra.mxu0 %v2331
    %3543 = vmatprep.subr.bf16.mxu0 %v2364
    %3544 = vmatpush1.bf16.msra.mxu0 %v2363
    %3545 = vmatprep.subr.bf16.mxu0 %v2396
    %3546 = vmatpush1.bf16.msra.mxu0 %v2395
    %3547 = vmatprep.subr.bf16.mxu0 %v2428
    %3548 = vmatpush1.bf16.msra.mxu0 %v2427
    %3549 = vmatprep.subr.bf16.mxu0 %v2460
    %3550 = vmatpush1.bf16.msra.mxu0 %v2459
    %3551 = vmatprep.subr.bf16.mxu0 %v2492
    %3552 = vmatpush1.bf16.msra.mxu0 %v2491
    %3553 = vmatprep.subr.bf16.mxu0 %v2524
    %3554 = vmatpush1.bf16.msra.mxu0 %v2523
    %3555 = vmatprep.subr.bf16.mxu0 %v2556
    %3556 = vmatpush1.bf16.msra.mxu0 %v2555
    %3557 = vmatprep.subr.bf16.mxu0 %v2588
    %3558 = vmatpush1.bf16.msra.mxu0 %v2587
    %3559 = vmatprep.subr.bf16.mxu0 %v2620
    %3560 = vmatpush1.bf16.msra.mxu0 %v2619
    %3561 = vmatprep.subr.bf16.mxu0 %v2652
    %3562 = vmatpush1.bf16.msra.mxu0 %v2651
    %3563 = vmatprep.subr.bf16.mxu0 %v2684
    %3564 = vmatpush1.bf16.msra.mxu0 %v2683
    %3565 = vmatprep.subr.bf16.mxu0 %v2716
    %3566 = vmatpush1.bf16.msra.mxu0 %v2715
    %3567 = vmatprep.subr.bf16.mxu0 %v2748
    %3568 = vmatpush1.bf16.msra.mxu0 %v2747
    %3569 = vmatprep.mubr.bf16.mxu0 %v716
    %3570 = vmatmul.mubr.bf16.gmra.mrb[0].mxu0 %v715
    %v3571 = vpop.f32.mrb[0].mxu0
    %v3572 = vadd.f32 0.0, %v3571
    %v3573 = vpop.f32.mrb[0].mxu0
    %v3574 = vadd.f32 0.0, %v3573
    %v3575 = vpop.f32.mrb[0].mxu0
    %v3576 = vadd.f32 0.0, %v3575
    %v3577 = vpop.f32.mrb[0].mxu0
    %v3578 = vadd.f32 0.0, %v3577
    %3579 = vdwg.mxu0
    %3580 = vmatprep.subr.bf16.mxu0 %v2270
    %3581 = vmatpush1.bf16.msra.mxu0 %v2269
    %3582 = vmatprep.subr.bf16.mxu0 %v2302
    %3583 = vmatpush1.bf16.msra.mxu0 %v2301
    %3584 = vmatprep.subr.bf16.mxu0 %v2334
    %3585 = vmatpush1.bf16.msra.mxu0 %v2333
    %3586 = vmatprep.subr.bf16.mxu0 %v2366
    %3587 = vmatpush1.bf16.msra.mxu0 %v2365
    %3588 = vmatprep.subr.bf16.mxu0 %v2398
    %3589 = vmatpush1.bf16.msra.mxu0 %v2397
    %3590 = vmatprep.subr.bf16.mxu0 %v2430
    %3591 = vmatpush1.bf16.msra.mxu0 %v2429
    %3592 = vmatprep.subr.bf16.mxu0 %v2462
    %3593 = vmatpush1.bf16.msra.mxu0 %v2461
    %3594 = vmatprep.subr.bf16.mxu0 %v2494
    %3595 = vmatpush1.bf16.msra.mxu0 %v2493
    %3596 = vmatprep.subr.bf16.mxu0 %v2526
    %3597 = vmatpush1.bf16.msra.mxu0 %v2525
    %3598 = vmatprep.subr.bf16.mxu0 %v2558
    %3599 = vmatpush1.bf16.msra.mxu0 %v2557
    %3600 = vmatprep.subr.bf16.mxu0 %v2590
    %3601 = vmatpush1.bf16.msra.mxu0 %v2589
    %3602 = vmatprep.subr.bf16.mxu0 %v2622
    %3603 = vmatpush1.bf16.msra.mxu0 %v2621
    %3604 = vmatprep.subr.bf16.mxu0 %v2654
    %3605 = vmatpush1.bf16.msra.mxu0 %v2653
    %3606 = vmatprep.subr.bf16.mxu0 %v2686
    %3607 = vmatpush1.bf16.msra.mxu0 %v2685
    %3608 = vmatprep.subr.bf16.mxu0 %v2718
    %3609 = vmatpush1.bf16.msra.mxu0 %v2717
    %3610 = vmatprep.subr.bf16.mxu0 %v2750
    %3611 = vmatpush1.bf16.msra.mxu0 %v2749
    %3612 = vmatprep.mubr.bf16.mxu0 %v716
    %3613 = vmatmul.mubr.bf16.gmra.mrb[0].mxu0 %v715
    %v3614 = vpop.f32.mrb[0].mxu0
    %v3615 = vadd.f32 0.0, %v3614
    %v3616 = vpop.f32.mrb[0].mxu0
    %v3617 = vadd.f32 0.0, %v3616
    %v3618 = vpop.f32.mrb[0].mxu0
    %v3619 = vadd.f32 0.0, %v3618
    %v3620 = vpop.f32.mrb[0].mxu0
    %v3621 = vadd.f32 0.0, %v3620
    %3622 = vdwg.mxu0
    %3623 = vmatprep.subr.bf16.mxu0 %v2272
    %3624 = vmatpush1.bf16.msra.mxu0 %v2271
    %3625 = vmatprep.subr.bf16.mxu0 %v2304
    %3626 = vmatpush1.bf16.msra.mxu0 %v2303
    %3627 = vmatprep.subr.bf16.mxu0 %v2336
    %3628 = vmatpush1.bf16.msra.mxu0 %v2335
    %3629 = vmatprep.subr.bf16.mxu0 %v2368
    %3630 = vmatpush1.bf16.msra.mxu0 %v2367
    %3631 = vmatprep.subr.bf16.mxu0 %v2400
    %3632 = vmatpush1.bf16.msra.mxu0 %v2399
    %3633 = vmatprep.subr.bf16.mxu0 %v2432
    %3634 = vmatpush1.bf16.msra.mxu0 %v2431
    %3635 = vmatprep.subr.bf16.mxu0 %v2464
    %3636 = vmatpush1.bf16.msra.mxu0 %v2463
    %3637 = vmatprep.subr.bf16.mxu0 %v2496
    %3638 = vmatpush1.bf16.msra.mxu0 %v2495
    %3639 = vmatprep.subr.bf16.mxu0 %v2528
    %3640 = vmatpush1.bf16.msra.mxu0 %v2527
    %3641 = vmatprep.subr.bf16.mxu0 %v2560
    %3642 = vmatpush1.bf16.msra.mxu0 %v2559
    %3643 = vmatprep.subr.bf16.mxu0 %v2592
    %3644 = vmatpush1.bf16.msra.mxu0 %v2591
    %3645 = vmatprep.subr.bf16.mxu0 %v2624
    %3646 = vmatpush1.bf16.msra.mxu0 %v2623
    %3647 = vmatprep.subr.bf16.mxu0 %v2656
    %3648 = vmatpush1.bf16.msra.mxu0 %v2655
    %3649 = vmatprep.subr.bf16.mxu0 %v2688
    %3650 = vmatpush1.bf16.msra.mxu0 %v2687
    %3651 = vmatprep.subr.bf16.mxu0 %v2720
    %3652 = vmatpush1.bf16.msra.mxu0 %v2719
    %3653 = vmatprep.subr.bf16.mxu0 %v2752
    %3654 = vmatpush1.bf16.msra.mxu0 %v2751
    %3655 = vmatprep.mubr.bf16.mxu0 %v716
    %3656 = vmatmul.mubr.bf16.gmra.mrb[0].mxu0 %v715
    %v3657 = vpop.f32.mrb[0].mxu0
    %v3658 = vadd.f32 0.0, %v3657
    %v3659 = vpop.f32.mrb[0].mxu0
    %v3660 = vadd.f32 0.0, %v3659
    %v3661 = vpop.f32.mrb[0].mxu0
    %v3662 = vadd.f32 0.0, %v3661
    %v3663 = vpop.f32.mrb[0].mxu0
    %v3664 = vadd.f32 0.0, %v3663
    %3665 = vdwg.mxu0
    %3666 = vmatprep.subr.bf16.mxu0 %v2274
    %3667 = vmatpush1.bf16.msra.mxu0 %v2273
    %3668 = vmatprep.subr.bf16.mxu0 %v2306
    %3669 = vmatpush1.bf16.msra.mxu0 %v2305
    %3670 = vmatprep.subr.bf16.mxu0 %v2338
    %3671 = vmatpush1.bf16.msra.mxu0 %v2337
    %3672 = vmatprep.subr.bf16.mxu0 %v2370
    %3673 = vmatpush1.bf16.msra.mxu0 %v2369
    %3674 = vmatprep.subr.bf16.mxu0 %v2402
    %3675 = vmatpush1.bf16.msra.mxu0 %v2401
    %3676 = vmatprep.subr.bf16.mxu0 %v2434
    %3677 = vmatpush1.bf16.msra.mxu0 %v2433
    %3678 = vmatprep.subr.bf16.mxu0 %v2466
    %3679 = vmatpush1.bf16.msra.mxu0 %v2465
    %3680 = vmatprep.subr.bf16.mxu0 %v2498
    %3681 = vmatpush1.bf16.msra.mxu0 %v2497
    %3682 = vmatprep.subr.bf16.mxu0 %v2530
    %3683 = vmatpush1.bf16.msra.mxu0 %v2529
    %3684 = vmatprep.subr.bf16.mxu0 %v2562
    %3685 = vmatpush1.bf16.msra.mxu0 %v2561
    %3686 = vmatprep.subr.bf16.mxu0 %v2594
    %3687 = vmatpush1.bf16.msra.mxu0 %v2593
    %3688 = vmatprep.subr.bf16.mxu0 %v2626
    %3689 = vmatpush1.bf16.msra.mxu0 %v2625
    %3690 = vmatprep.subr.bf16.mxu0 %v2658
    %3691 = vmatpush1.bf16.msra.mxu0 %v2657
    %3692 = vmatprep.subr.bf16.mxu0 %v2690
    %3693 = vmatpush1.bf16.msra.mxu0 %v2689
    %3694 = vmatprep.subr.bf16.mxu0 %v2722
    %3695 = vmatpush1.bf16.msra.mxu0 %v2721
    %3696 = vmatprep.subr.bf16.mxu0 %v2754
    %3697 = vmatpush1.bf16.msra.mxu0 %v2753
    %3698 = vmatprep.mubr.bf16.mxu0 %v716
    %3699 = vmatmul.mubr.bf16.gmra.mrb[0].mxu0 %v715
    %v3700 = vpop.f32.mrb[0].mxu0
    %v3701 = vadd.f32 0.0, %v3700
    %v3702 = vpop.f32.mrb[0].mxu0
    %v3703 = vadd.f32 0.0, %v3702
    %v3704 = vpop.f32.mrb[0].mxu0
    %v3705 = vadd.f32 0.0, %v3704
    %v3706 = vpop.f32.mrb[0].mxu0
    %v3707 = vadd.f32 0.0, %v3706
    %3708 = vdwg.mxu0
    %3709 = vmatprep.subr.bf16.mxu0 %v2276
    %3710 = vmatpush1.bf16.msra.mxu0 %v2275
    %3711 = vmatprep.subr.bf16.mxu0 %v2308
    %3712 = vmatpush1.bf16.msra.mxu0 %v2307
    %3713 = vmatprep.subr.bf16.mxu0 %v2340
    %3714 = vmatpush1.bf16.msra.mxu0 %v2339
    %3715 = vmatprep.subr.bf16.mxu0 %v2372
    %3716 = vmatpush1.bf16.msra.mxu0 %v2371
    %3717 = vmatprep.subr.bf16.mxu0 %v2404
    %3718 = vmatpush1.bf16.msra.mxu0 %v2403
    %3719 = vmatprep.subr.bf16.mxu0 %v2436
    %3720 = vmatpush1.bf16.msra.mxu0 %v2435
    %3721 = vmatprep.subr.bf16.mxu0 %v2468
    %3722 = vmatpush1.bf16.msra.mxu0 %v2467
    %3723 = vmatprep.subr.bf16.mxu0 %v2500
    %3724 = vmatpush1.bf16.msra.mxu0 %v2499
    %3725 = vmatprep.subr.bf16.mxu0 %v2532
    %3726 = vmatpush1.bf16.msra.mxu0 %v2531
    %3727 = vmatprep.subr.bf16.mxu0 %v2564
    %3728 = vmatpush1.bf16.msra.mxu0 %v2563
    %3729 = vmatprep.subr.bf16.mxu0 %v2596
    %3730 = vmatpush1.bf16.msra.mxu0 %v2595
    %3731 = vmatprep.subr.bf16.mxu0 %v2628
    %3732 = vmatpush1.bf16.msra.mxu0 %v2627
    %3733 = vmatprep.subr.bf16.mxu0 %v2660
    %3734 = vmatpush1.bf16.msra.mxu0 %v2659
    %3735 = vmatprep.subr.bf16.mxu0 %v2692
    %3736 = vmatpush1.bf16.msra.mxu0 %v2691
    %3737 = vmatprep.subr.bf16.mxu0 %v2724
    %3738 = vmatpush1.bf16.msra.mxu0 %v2723
    %3739 = vmatprep.subr.bf16.mxu0 %v2756
    %3740 = vmatpush1.bf16.msra.mxu0 %v2755
    %3741 = vmatprep.mubr.bf16.mxu0 %v716
    %3742 = vmatmul.mubr.bf16.gmra.mrb[0].mxu0 %v715
    %v3743 = vpop.f32.mrb[0].mxu0
    %v3744 = vadd.f32 0.0, %v3743
    %v3745 = vpop.f32.mrb[0].mxu0
    %v3746 = vadd.f32 0.0, %v3745
    %v3747 = vpop.f32.mrb[0].mxu0
    %v3748 = vadd.f32 0.0, %v3747
    %v3749 = vpop.f32.mrb[0].mxu0
    %v3750 = vadd.f32 0.0, %v3749
    %3751 = vdwg.mxu0
    %3752 = vmatprep.subr.bf16.mxu0 %v2278
    %3753 = vmatpush1.bf16.msra.mxu0 %v2277
    %3754 = vmatprep.subr.bf16.mxu0 %v2310
    %3755 = vmatpush1.bf16.msra.mxu0 %v2309
    %3756 = vmatprep.subr.bf16.mxu0 %v2342
    %3757 = vmatpush1.bf16.msra.mxu0 %v2341
    %3758 = vmatprep.subr.bf16.mxu0 %v2374
    %3759 = vmatpush1.bf16.msra.mxu0 %v2373
    %3760 = vmatprep.subr.bf16.mxu0 %v2406
    %3761 = vmatpush1.bf16.msra.mxu0 %v2405
    %3762 = vmatprep.subr.bf16.mxu0 %v2438
    %3763 = vmatpush1.bf16.msra.mxu0 %v2437
    %3764 = vmatprep.subr.bf16.mxu0 %v2470
    %3765 = vmatpush1.bf16.msra.mxu0 %v2469
    %3766 = vmatprep.subr.bf16.mxu0 %v2502
    %3767 = vmatpush1.bf16.msra.mxu0 %v2501
    %3768 = vmatprep.subr.bf16.mxu0 %v2534
    %3769 = vmatpush1.bf16.msra.mxu0 %v2533
    %3770 = vmatprep.subr.bf16.mxu0 %v2566
    %3771 = vmatpush1.bf16.msra.mxu0 %v2565
    %3772 = vmatprep.subr.bf16.mxu0 %v2598
    %3773 = vmatpush1.bf16.msra.mxu0 %v2597
    %3774 = vmatprep.subr.bf16.mxu0 %v2630
    %3775 = vmatpush1.bf16.msra.mxu0 %v2629
    %3776 = vmatprep.subr.bf16.mxu0 %v2662
    %3777 = vmatpush1.bf16.msra.mxu0 %v2661
    %3778 = vmatprep.subr.bf16.mxu0 %v2694
    %3779 = vmatpush1.bf16.msra.mxu0 %v2693
    %3780 = vmatprep.subr.bf16.mxu0 %v2726
    %3781 = vmatpush1.bf16.msra.mxu0 %v2725
    %3782 = vmatprep.subr.bf16.mxu0 %v2758
    %3783 = vmatpush1.bf16.msra.mxu0 %v2757
    %3784 = vmatprep.mubr.bf16.mxu0 %v716
    %3785 = vmatmul.mubr.bf16.gmra.mrb[0].mxu0 %v715
    %v3786 = vpop.f32.mrb[0].mxu0
    %v3787 = vadd.f32 0.0, %v3786
    %v3788 = vpop.f32.mrb[0].mxu0
    %v3789 = vadd.f32 0.0, %v3788
    %v3790 = vpop.f32.mrb[0].mxu0
    %v3791 = vadd.f32 0.0, %v3790
    %v3792 = vpop.f32.mrb[0].mxu0
    %v3793 = vadd.f32 0.0, %v3792
    %3794 = vdwg.mxu0
    %3795 = vmatprep.subr.bf16.mxu0 %v2280
    %3796 = vmatpush1.bf16.msra.mxu0 %v2279
    %3797 = vmatprep.subr.bf16.mxu0 %v2312
    %3798 = vmatpush1.bf16.msra.mxu0 %v2311
    %3799 = vmatprep.subr.bf16.mxu0 %v2344
    %3800 = vmatpush1.bf16.msra.mxu0 %v2343
    %3801 = vmatprep.subr.bf16.mxu0 %v2376
    %3802 = vmatpush1.bf16.msra.mxu0 %v2375
    %3803 = vmatprep.subr.bf16.mxu0 %v2408
    %3804 = vmatpush1.bf16.msra.mxu0 %v2407
    %3805 = vmatprep.subr.bf16.mxu0 %v2440
    %3806 = vmatpush1.bf16.msra.mxu0 %v2439
    %3807 = vmatprep.subr.bf16.mxu0 %v2472
    %3808 = vmatpush1.bf16.msra.mxu0 %v2471
    %3809 = vmatprep.subr.bf16.mxu0 %v2504
    %3810 = vmatpush1.bf16.msra.mxu0 %v2503
    %3811 = vmatprep.subr.bf16.mxu0 %v2536
    %3812 = vmatpush1.bf16.msra.mxu0 %v2535
    %3813 = vmatprep.subr.bf16.mxu0 %v2568
    %3814 = vmatpush1.bf16.msra.mxu0 %v2567
    %3815 = vmatprep.subr.bf16.mxu0 %v2600
    %3816 = vmatpush1.bf16.msra.mxu0 %v2599
    %3817 = vmatprep.subr.bf16.mxu0 %v2632
    %3818 = vmatpush1.bf16.msra.mxu0 %v2631
    %3819 = vmatprep.subr.bf16.mxu0 %v2664
    %3820 = vmatpush1.bf16.msra.mxu0 %v2663
    %3821 = vmatprep.subr.bf16.mxu0 %v2696
    %3822 = vmatpush1.bf16.msra.mxu0 %v2695
    %3823 = vmatprep.subr.bf16.mxu0 %v2728
    %3824 = vmatpush1.bf16.msra.mxu0 %v2727
    %3825 = vmatprep.subr.bf16.mxu0 %v2760
    %3826 = vmatpush1.bf16.msra.mxu0 %v2759
    %3827 = vmatprep.mubr.bf16.mxu0 %v716
    %3828 = vmatmul.mubr.bf16.gmra.mrb[0].mxu0 %v715
    %v3829 = vpop.f32.mrb[0].mxu0
    %v3830 = vadd.f32 0.0, %v3829
    %v3831 = vpop.f32.mrb[0].mxu0
    %v3832 = vadd.f32 0.0, %v3831
    %v3833 = vpop.f32.mrb[0].mxu0
    %v3834 = vadd.f32 0.0, %v3833
    %v3835 = vpop.f32.mrb[0].mxu0
    %v3836 = vadd.f32 0.0, %v3835
    %3837 = vdwg.mxu0
    %3838 = vmatprep.subr.bf16.mxu0 %v2282
    %3839 = vmatpush1.bf16.msra.mxu0 %v2281
    %3840 = vmatprep.subr.bf16.mxu0 %v2314
    %3841 = vmatpush1.bf16.msra.mxu0 %v2313
    %3842 = vmatprep.subr.bf16.mxu0 %v2346
    %3843 = vmatpush1.bf16.msra.mxu0 %v2345
    %3844 = vmatprep.subr.bf16.mxu0 %v2378
    %3845 = vmatpush1.bf16.msra.mxu0 %v2377
    %3846 = vmatprep.subr.bf16.mxu0 %v2410
    %3847 = vmatpush1.bf16.msra.mxu0 %v2409
    %3848 = vmatprep.subr.bf16.mxu0 %v2442
    %3849 = vmatpush1.bf16.msra.mxu0 %v2441
    %3850 = vmatprep.subr.bf16.mxu0 %v2474
    %3851 = vmatpush1.bf16.msra.mxu0 %v2473
    %3852 = vmatprep.subr.bf16.mxu0 %v2506
    %3853 = vmatpush1.bf16.msra.mxu0 %v2505
    %3854 = vmatprep.subr.bf16.mxu0 %v2538
    %3855 = vmatpush1.bf16.msra.mxu0 %v2537
    %3856 = vmatprep.subr.bf16.mxu0 %v2570
    %3857 = vmatpush1.bf16.msra.mxu0 %v2569
    %3858 = vmatprep.subr.bf16.mxu0 %v2602
    %3859 = vmatpush1.bf16.msra.mxu0 %v2601
    %3860 = vmatprep.subr.bf16.mxu0 %v2634
    %3861 = vmatpush1.bf16.msra.mxu0 %v2633
    %3862 = vmatprep.subr.bf16.mxu0 %v2666
    %3863 = vmatpush1.bf16.msra.mxu0 %v2665
    %3864 = vmatprep.subr.bf16.mxu0 %v2698
    %3865 = vmatpush1.bf16.msra.mxu0 %v2697
    %3866 = vmatprep.subr.bf16.mxu0 %v2730
    %3867 = vmatpush1.bf16.msra.mxu0 %v2729
    %3868 = vmatprep.subr.bf16.mxu0 %v2762
    %3869 = vmatpush1.bf16.msra.mxu0 %v2761
    %3870 = vmatprep.mubr.bf16.mxu0 %v716
    %3871 = vmatmul.mubr.bf16.gmra.mrb[0].mxu0 %v715
    %v3872 = vpop.f32.mrb[0].mxu0
    %v3873 = vadd.f32 0.0, %v3872
    %v3874 = vpop.f32.mrb[0].mxu0
    %v3875 = vadd.f32 0.0, %v3874
    %v3876 = vpop.f32.mrb[0].mxu0
    %v3877 = vadd.f32 0.0, %v3876
    %v3878 = vpop.f32.mrb[0].mxu0
    %v3879 = vadd.f32 0.0, %v3878
    %3880 = vdwg.mxu0
    %3881 = vmatprep.subr.bf16.mxu0 %v2284
    %3882 = vmatpush1.bf16.msra.mxu0 %v2283
    %3883 = vmatprep.subr.bf16.mxu0 %v2316
    %3884 = vmatpush1.bf16.msra.mxu0 %v2315
    %3885 = vmatprep.subr.bf16.mxu0 %v2348
    %3886 = vmatpush1.bf16.msra.mxu0 %v2347
    %3887 = vmatprep.subr.bf16.mxu0 %v2380
    %3888 = vmatpush1.bf16.msra.mxu0 %v2379
    %3889 = vmatprep.subr.bf16.mxu0 %v2412
    %3890 = vmatpush1.bf16.msra.mxu0 %v2411
    %3891 = vmatprep.subr.bf16.mxu0 %v2444
    %3892 = vmatpush1.bf16.msra.mxu0 %v2443
    %3893 = vmatprep.subr.bf16.mxu0 %v2476
    %3894 = vmatpush1.bf16.msra.mxu0 %v2475
    %3895 = vmatprep.subr.bf16.mxu0 %v2508
    %3896 = vmatpush1.bf16.msra.mxu0 %v2507
    %3897 = vmatprep.subr.bf16.mxu0 %v2540
    %3898 = vmatpush1.bf16.msra.mxu0 %v2539
    %3899 = vmatprep.subr.bf16.mxu0 %v2572
    %3900 = vmatpush1.bf16.msra.mxu0 %v2571
    %3901 = vmatprep.subr.bf16.mxu0 %v2604
    %3902 = vmatpush1.bf16.msra.mxu0 %v2603
    %3903 = vmatprep.subr.bf16.mxu0 %v2636
    %3904 = vmatpush1.bf16.msra.mxu0 %v2635
    %3905 = vmatprep.subr.bf16.mxu0 %v2668
    %3906 = vmatpush1.bf16.msra.mxu0 %v2667
    %3907 = vmatprep.subr.bf16.mxu0 %v2700
    %3908 = vmatpush1.bf16.msra.mxu0 %v2699
    %3909 = vmatprep.subr.bf16.mxu0 %v2732
    %3910 = vmatpush1.bf16.msra.mxu0 %v2731
    %3911 = vmatprep.subr.bf16.mxu0 %v2764
    %3912 = vmatpush1.bf16.msra.mxu0 %v2763
    %3913 = vmatprep.mubr.bf16.mxu0 %v716
    %3914 = vmatmul.mubr.bf16.gmra.mrb[0].mxu0 %v715
    %v3915 = vpop.f32.mrb[0].mxu0
    %v3916 = vadd.f32 0.0, %v3915
    %v3917 = vpop.f32.mrb[0].mxu0
    %v3918 = vadd.f32 0.0, %v3917
    %v3919 = vpop.f32.mrb[0].mxu0
    %v3920 = vadd.f32 0.0, %v3919
    %v3921 = vpop.f32.mrb[0].mxu0
    %v3922 = vadd.f32 0.0, %v3921
    %3923 = vdwg.mxu0
    %3924 = vmatprep.subr.bf16.mxu0 %v2286
    %3925 = vmatpush1.bf16.msra.mxu0 %v2285
    %3926 = vmatprep.subr.bf16.mxu0 %v2318
    %3927 = vmatpush1.bf16.msra.mxu0 %v2317
    %3928 = vmatprep.subr.bf16.mxu0 %v2350
    %3929 = vmatpush1.bf16.msra.mxu0 %v2349
    %3930 = vmatprep.subr.bf16.mxu0 %v2382
    %3931 = vmatpush1.bf16.msra.mxu0 %v2381
    %3932 = vmatprep.subr.bf16.mxu0 %v2414
    %3933 = vmatpush1.bf16.msra.mxu0 %v2413
    %3934 = vmatprep.subr.bf16.mxu0 %v2446
    %3935 = vmatpush1.bf16.msra.mxu0 %v2445
    %3936 = vmatprep.subr.bf16.mxu0 %v2478
    %3937 = vmatpush1.bf16.msra.mxu0 %v2477
    %3938 = vmatprep.subr.bf16.mxu0 %v2510
    %3939 = vmatpush1.bf16.msra.mxu0 %v2509
    %3940 = vmatprep.subr.bf16.mxu0 %v2542
    %3941 = vmatpush1.bf16.msra.mxu0 %v2541
    %3942 = vmatprep.subr.bf16.mxu0 %v2574
    %3943 = vmatpush1.bf16.msra.mxu0 %v2573
    %3944 = vmatprep.subr.bf16.mxu0 %v2606
    %3945 = vmatpush1.bf16.msra.mxu0 %v2605
    %3946 = vmatprep.subr.bf16.mxu0 %v2638
    %3947 = vmatpush1.bf16.msra.mxu0 %v2637
    %3948 = vmatprep.subr.bf16.mxu0 %v2670
    %3949 = vmatpush1.bf16.msra.mxu0 %v2669
    %3950 = vmatprep.subr.bf16.mxu0 %v2702
    %3951 = vmatpush1.bf16.msra.mxu0 %v2701
    %3952 = vmatprep.subr.bf16.mxu0 %v2734
    %3953 = vmatpush1.bf16.msra.mxu0 %v2733
    %3954 = vmatprep.subr.bf16.mxu0 %v2766
    %3955 = vmatpush1.bf16.msra.mxu0 %v2765
    %3956 = vmatprep.mubr.bf16.mxu0 %v716
    %3957 = vmatmul.mubr.bf16.gmra.mrb[0].mxu0 %v715
    %v3958 = vpop.f32.mrb[0].mxu0
    %v3959 = vadd.f32 0.0, %v3958
    %v3960 = vpop.f32.mrb[0].mxu0
    %v3961 = vadd.f32 0.0, %v3960
    %v3962 = vpop.f32.mrb[0].mxu0
    %v3963 = vadd.f32 0.0, %v3962
    %v3964 = vpop.f32.mrb[0].mxu0
    %v3965 = vadd.f32 0.0, %v3964
    %3966 = vdwg.mxu0
    %v3967 = vmax.f32 %v3314, %v3486
    %v3968 = vmax.f32 %v3316, %v3488
    %v3969 = vmax.f32 %v3357, %v3529
    %v3970 = vmax.f32 %v3359, %v3531
    %v3971 = vmax.f32 %v3400, %v3572
    %v3972 = vmax.f32 %v3402, %v3574
    %v3973 = vmax.f32 %v3443, %v3615
    %v3974 = vmax.f32 %v3445, %v3617
    %v3975 = vmax.f32 %v3318, %v3490
    %v3976 = vmax.f32 %v3320, %v3492
    %v3977 = vmax.f32 %v3361, %v3533
    %v3978 = vmax.f32 %v3363, %v3535
    %v3979 = vmax.f32 %v3404, %v3576
    %v3980 = vmax.f32 %v3406, %v3578
    %v3981 = vmax.f32 %v3447, %v3619
    %v3982 = vmax.f32 %v3449, %v3621
    %v3983 = vmax.f32 %v3967, %v3658
    %v3984 = vmax.f32 %v3968, %v3660
    %v3985 = vmax.f32 %v3969, %v3701
    %v3986 = vmax.f32 %v3970, %v3703
    %v3987 = vmax.f32 %v3971, %v3744
    %v3988 = vmax.f32 %v3972, %v3746
    %v3989 = vmax.f32 %v3973, %v3787
    %v3990 = vmax.f32 %v3974, %v3789
    %v3991 = vmax.f32 %v3975, %v3662
    %v3992 = vmax.f32 %v3976, %v3664
    %v3993 = vmax.f32 %v3977, %v3705
    %v3994 = vmax.f32 %v3978, %v3707
    %v3995 = vmax.f32 %v3979, %v3748
    %v3996 = vmax.f32 %v3980, %v3750
    %v3997 = vmax.f32 %v3981, %v3791
    %v3998 = vmax.f32 %v3982, %v3793
    %v3999 = vmax.f32 %v3983, %v3830
    %v4000 = vmax.f32 %v3984, %v3832
    %v4001 = vmax.f32 %v3985, %v3873
    %v4002 = vmax.f32 %v3986, %v3875
    %v4003 = vmax.f32 %v3987, %v3916
    %v4004 = vmax.f32 %v3988, %v3918
    %v4005 = vmax.f32 %v3989, %v3959
    %v4006 = vmax.f32 %v3990, %v3961
    %v4007 = vmax.f32 %v3991, %v3834
    %v4008 = vmax.f32 %v3992, %v3836
    %v4009 = vmax.f32 %v3993, %v3877
    %v4010 = vmax.f32 %v3994, %v3879
    %v4011 = vmax.f32 %v3995, %v3920
    %v4012 = vmax.f32 %v3996, %v3922
    %v4013 = vmax.f32 %v3997, %v3963
    %v4014 = vmax.f32 %v3998, %v3965
    %v4015 = vld [vmem:[#allocation4] sm:$0xff]
    %v4017 = vlaneseq
    %v4018 = vshrl.u32 %v4017, 7
    %v4019 = vsub.s32 0, %v4018
    %v4020 = vrot.slane %v4015, %v4019
    %v4021 = vlaneseq
    %v4022 = vshrl.u32 %v4021, 7
    %v4023 = vsub.s32 1, %v4022
    %v4024 = vrot.slane %v4015, %v4023
    %v4025 = vlaneseq
    %v4026 = vshrl.u32 %v4025, 7
    %v4027 = vsub.s32 2, %v4026
    %v4028 = vrot.slane %v4015, %v4027
    %v4029 = vlaneseq
    %v4030 = vshrl.u32 %v4029, 7
    %v4031 = vsub.s32 3, %v4030
    %v4032 = vrot.slane %v4015, %v4031
    %v4033 = vlaneseq
    %v4034 = vshrl.u32 %v4033, 7
    %v4035 = vsub.s32 4, %v4034
    %v4036 = vrot.slane %v4015, %v4035
    %v4037 = vlaneseq
    %v4038 = vshrl.u32 %v4037, 7
    %v4039 = vsub.s32 5, %v4038
    %v4040 = vrot.slane %v4015, %v4039
    %v4041 = vlaneseq
    %v4042 = vshrl.u32 %v4041, 7
    %v4043 = vsub.s32 6, %v4042
    %v4044 = vrot.slane %v4015, %v4043
    %v4045 = vlaneseq
    %v4046 = vshrl.u32 %v4045, 7
    %v4047 = vsub.s32 7, %v4046
    %v4048 = vrot.slane %v4015, %v4047
    %v4057 = vadd.f32 %v3999, %v4020
    %v4058 = vadd.f32 %v4000, %v4024
    %v4059 = vadd.f32 %v4001, %v4028
    %v4060 = vadd.f32 %v4002, %v4032
    %v4061 = vadd.f32 %v4003, %v4036
    %v4062 = vadd.f32 %v4004, %v4040
    %v4063 = vadd.f32 %v4005, %v4044
    %v4064 = vadd.f32 %v4006, %v4048
    %v4065 = vadd.f32 %v4007, %v4020
    %v4066 = vadd.f32 %v4008, %v4024
    %v4067 = vadd.f32 %v4009, %v4028
    %v4068 = vadd.f32 %v4010, %v4032
    %v4069 = vadd.f32 %v4011, %v4036
    %v4070 = vadd.f32 %v4012, %v4040
    %v4071 = vadd.f32 %v4013, %v4044
    %v4072 = vadd.f32 %v4014, %v4048
    %v4073 = vmax.f32 %v4057, 0.0
    %v4074 = vmax.f32 %v4058, 0.0
    %v4075 = vmax.f32 %v4059, 0.0
    %v4076 = vmax.f32 %v4060, 0.0
    %v4077 = vmax.f32 %v4061, 0.0
    %v4078 = vmax.f32 %v4062, 0.0
    %v4079 = vmax.f32 %v4063, 0.0
    %v4080 = vmax.f32 %v4064, 0.0
    %v4081 = vmax.f32 %v4065, 0.0
    %v4082 = vmax.f32 %v4066, 0.0
    %v4083 = vmax.f32 %v4067, 0.0
    %v4084 = vmax.f32 %v4068, 0.0
    %v4085 = vmax.f32 %v4069, 0.0
    %v4086 = vmax.f32 %v4070, 0.0
    %v4087 = vmax.f32 %v4071, 0.0
    %v4088 = vmax.f32 %v4072, 0.0
    %v4089 = vpack.c.bf16 %v4081, %v4073
    %v4090 = vpack.c.bf16 %v4082, %v4074
    %v4091 = vpack.c.bf16 %v4083, %v4075
    %v4092 = vpack.c.bf16 %v4084, %v4076
    %v4093 = vpack.c.bf16 %v4085, %v4077
    %v4094 = vpack.c.bf16 %v4086, %v4078
    %v4095 = vpack.c.bf16 %v4087, %v4079
    %v4096 = vpack.c.bf16 %v4088, %v4080
    %v4097 = vld [vmem:[#allocation6] sm:$0xff]
    %v4098 = vld [vmem:[#allocation6 + $0x8] sm:$0xff]
    %v4099 = vld [vmem:[#allocation6 + $0x10] sm:$0xff]
    %v4100 = vld [vmem:[#allocation6 + $0x18] sm:$0xff]
    %v4101 = vld [vmem:[#allocation6 + $0x20] sm:$0xff]
    %v4102 = vld [vmem:[#allocation6 + $0x28] sm:$0xff]
    %v4103 = vld [vmem:[#allocation6 + $0x30] sm:$0xff]
    %v4104 = vld [vmem:[#allocation6 + $0x38] sm:$0xff]
    %v4105 = vld [vmem:[#allocation6 + $0x40] sm:$0xff]
    %v4106 = vld [vmem:[#allocation6 + $0x48] sm:$0xff]
    %v4107 = vld [vmem:[#allocation6 + $0x50] sm:$0xff]
    %v4108 = vld [vmem:[#allocation6 + $0x58] sm:$0xff]
    %v4109 = vld [vmem:[#allocation6 + $0x60] sm:$0xff]
    %v4110 = vld [vmem:[#allocation6 + $0x68] sm:$0xff]
    %v4111 = vld [vmem:[#allocation6 + $0x70] sm:$0xff]
    %v4112 = vld [vmem:[#allocation6 + $0x78] sm:$0xff]
    %v4113 = vld [vmem:[#allocation6 + $0x80] sm:$0xff]
    %v4114 = vld [vmem:[#allocation6 + $0x88] sm:$0xff]
    %v4115 = vld [vmem:[#allocation6 + $0x90] sm:$0xff]
    %v4116 = vld [vmem:[#allocation6 + $0x98] sm:$0xff]
    %v4117 = vld [vmem:[#allocation6 + $0xa0] sm:$0xff]
    %v4118 = vld [vmem:[#allocation6 + $0xa8] sm:$0xff]
    %v4119 = vld [vmem:[#allocation6 + $0xb0] sm:$0xff]
    %v4120 = vld [vmem:[#allocation6 + $0xb8] sm:$0xff]
    %v4121 = vld [vmem:[#allocation6 + $0xc0] sm:$0xff]
    %v4122 = vld [vmem:[#allocation6 + $0xc8] sm:$0xff]
    %v4123 = vld [vmem:[#allocation6 + $0xd0] sm:$0xff]
    %v4124 = vld [vmem:[#allocation6 + $0xd8] sm:$0xff]
    %v4125 = vld [vmem:[#allocation6 + $0xe0] sm:$0xff]
    %v4126 = vld [vmem:[#allocation6 + $0xe8] sm:$0xff]
    %v4127 = vld [vmem:[#allocation6 + $0xf0] sm:$0xff]
    %v4128 = vld [vmem:[#allocation6 + $0xf8] sm:$0xff]
    %v4129 = vld [vmem:[#allocation6 + $0x100] sm:$0xff]
    %v4130 = vld [vmem:[#allocation6 + $0x108] sm:$0xff]
    %v4131 = vld [vmem:[#allocation6 + $0x110] sm:$0xff]
    %v4132 = vld [vmem:[#allocation6 + $0x118] sm:$0xff]
    %v4133 = vld [vmem:[#allocation6 + $0x120] sm:$0xff]
    %v4134 = vld [vmem:[#allocation6 + $0x128] sm:$0xff]
    %v4135 = vld [vmem:[#allocation6 + $0x130] sm:$0xff]
    %v4136 = vld [vmem:[#allocation6 + $0x138] sm:$0xff]
    %v4137 = vld [vmem:[#allocation6 + $0x140] sm:$0xff]
    %v4138 = vld [vmem:[#allocation6 + $0x148] sm:$0xff]
    %v4139 = vld [vmem:[#allocation6 + $0x150] sm:$0xff]
    %v4140 = vld [vmem:[#allocation6 + $0x158] sm:$0xff]
    %v4141 = vld [vmem:[#allocation6 + $0x160] sm:$0xff]
    %v4142 = vld [vmem:[#allocation6 + $0x168] sm:$0xff]
    %v4143 = vld [vmem:[#allocation6 + $0x170] sm:$0xff]
    %v4144 = vld [vmem:[#allocation6 + $0x178] sm:$0xff]
    %v4145 = vld [vmem:[#allocation6 + $0x180] sm:$0xff]
    %v4146 = vld [vmem:[#allocation6 + $0x188] sm:$0xff]
    %v4147 = vld [vmem:[#allocation6 + $0x190] sm:$0xff]
    %v4148 = vld [vmem:[#allocation6 + $0x198] sm:$0xff]
    %v4149 = vld [vmem:[#allocation6 + $0x1a0] sm:$0xff]
    %v4150 = vld [vmem:[#allocation6 + $0x1a8] sm:$0xff]
    %v4151 = vld [vmem:[#allocation6 + $0x1b0] sm:$0xff]
    %v4152 = vld [vmem:[#allocation6 + $0x1b8] sm:$0xff]
    %v4153 = vld [vmem:[#allocation6 + $0x1c0] sm:$0xff]
    %v4154 = vld [vmem:[#allocation6 + $0x1c8] sm:$0xff]
    %v4155 = vld [vmem:[#allocation6 + $0x1d0] sm:$0xff]
    %v4156 = vld [vmem:[#allocation6 + $0x1d8] sm:$0xff]
    %v4157 = vld [vmem:[#allocation6 + $0x1e0] sm:$0xff]
    %v4158 = vld [vmem:[#allocation6 + $0x1e8] sm:$0xff]
    %v4159 = vld [vmem:[#allocation6 + $0x1f0] sm:$0xff]
    %v4160 = vld [vmem:[#allocation6 + $0x1f8] sm:$0xff]
    %v4161 = vld [vmem:[#allocation6 + $0x200] sm:$0xff]
    %v4162 = vld [vmem:[#allocation6 + $0x208] sm:$0xff]
    %v4163 = vld [vmem:[#allocation6 + $0x210] sm:$0xff]
    %v4164 = vld [vmem:[#allocation6 + $0x218] sm:$0xff]
    %v4165 = vld [vmem:[#allocation6 + $0x220] sm:$0xff]
    %v4166 = vld [vmem:[#allocation6 + $0x228] sm:$0xff]
    %v4167 = vld [vmem:[#allocation6 + $0x230] sm:$0xff]
    %v4168 = vld [vmem:[#allocation6 + $0x238] sm:$0xff]
    %v4169 = vld [vmem:[#allocation6 + $0x240] sm:$0xff]
    %v4170 = vld [vmem:[#allocation6 + $0x248] sm:$0xff]
    %v4171 = vld [vmem:[#allocation6 + $0x250] sm:$0xff]
    %v4172 = vld [vmem:[#allocation6 + $0x258] sm:$0xff]
    %v4173 = vld [vmem:[#allocation6 + $0x260] sm:$0xff]
    %v4174 = vld [vmem:[#allocation6 + $0x268] sm:$0xff]
    %v4175 = vld [vmem:[#allocation6 + $0x270] sm:$0xff]
    %v4176 = vld [vmem:[#allocation6 + $0x278] sm:$0xff]
    %v4177 = vld [vmem:[#allocation6 + $0x280] sm:$0xff]
    %v4178 = vld [vmem:[#allocation6 + $0x288] sm:$0xff]
    %v4179 = vld [vmem:[#allocation6 + $0x290] sm:$0xff]
    %v4180 = vld [vmem:[#allocation6 + $0x298] sm:$0xff]
    %v4181 = vld [vmem:[#allocation6 + $0x2a0] sm:$0xff]
    %v4182 = vld [vmem:[#allocation6 + $0x2a8] sm:$0xff]
    %v4183 = vld [vmem:[#allocation6 + $0x2b0] sm:$0xff]
    %v4184 = vld [vmem:[#allocation6 + $0x2b8] sm:$0xff]
    %v4185 = vld [vmem:[#allocation6 + $0x2c0] sm:$0xff]
    %v4186 = vld [vmem:[#allocation6 + $0x2c8] sm:$0xff]
    %v4187 = vld [vmem:[#allocation6 + $0x2d0] sm:$0xff]
    %v4188 = vld [vmem:[#allocation6 + $0x2d8] sm:$0xff]
    %v4189 = vld [vmem:[#allocation6 + $0x2e0] sm:$0xff]
    %v4190 = vld [vmem:[#allocation6 + $0x2e8] sm:$0xff]
    %v4191 = vld [vmem:[#allocation6 + $0x2f0] sm:$0xff]
    %v4192 = vld [vmem:[#allocation6 + $0x2f8] sm:$0xff]
    %v4193 = vld [vmem:[#allocation6 + $0x300] sm:$0xff]
    %v4194 = vld [vmem:[#allocation6 + $0x308] sm:$0xff]
    %v4195 = vld [vmem:[#allocation6 + $0x310] sm:$0xff]
    %v4196 = vld [vmem:[#allocation6 + $0x318] sm:$0xff]
    %v4197 = vld [vmem:[#allocation6 + $0x320] sm:$0xff]
    %v4198 = vld [vmem:[#allocation6 + $0x328] sm:$0xff]
    %v4199 = vld [vmem:[#allocation6 + $0x330] sm:$0xff]
    %v4200 = vld [vmem:[#allocation6 + $0x338] sm:$0xff]
    %v4201 = vld [vmem:[#allocation6 + $0x340] sm:$0xff]
    %v4202 = vld [vmem:[#allocation6 + $0x348] sm:$0xff]
    %v4203 = vld [vmem:[#allocation6 + $0x350] sm:$0xff]
    %v4204 = vld [vmem:[#allocation6 + $0x358] sm:$0xff]
    %v4205 = vld [vmem:[#allocation6 + $0x360] sm:$0xff]
    %v4206 = vld [vmem:[#allocation6 + $0x368] sm:$0xff]
    %v4207 = vld [vmem:[#allocation6 + $0x370] sm:$0xff]
    %v4208 = vld [vmem:[#allocation6 + $0x378] sm:$0xff]
    %v4209 = vld [vmem:[#allocation6 + $0x380] sm:$0xff]
    %v4210 = vld [vmem:[#allocation6 + $0x388] sm:$0xff]
    %v4211 = vld [vmem:[#allocation6 + $0x390] sm:$0xff]
    %v4212 = vld [vmem:[#allocation6 + $0x398] sm:$0xff]
    %v4213 = vld [vmem:[#allocation6 + $0x3a0] sm:$0xff]
    %v4214 = vld [vmem:[#allocation6 + $0x3a8] sm:$0xff]
    %v4215 = vld [vmem:[#allocation6 + $0x3b0] sm:$0xff]
    %v4216 = vld [vmem:[#allocation6 + $0x3b8] sm:$0xff]
    %v4217 = vld [vmem:[#allocation6 + $0x3c0] sm:$0xff]
    %v4218 = vld [vmem:[#allocation6 + $0x3c8] sm:$0xff]
    %v4219 = vld [vmem:[#allocation6 + $0x3d0] sm:$0xff]
    %v4220 = vld [vmem:[#allocation6 + $0x3d8] sm:$0xff]
    %v4221 = vld [vmem:[#allocation6 + $0x3e0] sm:$0xff]
    %v4222 = vld [vmem:[#allocation6 + $0x3e8] sm:$0xff]
    %v4223 = vld [vmem:[#allocation6 + $0x3f0] sm:$0xff]
    %v4224 = vld [vmem:[#allocation6 + $0x3f8] sm:$0xff]
    %v4225 = vld [vmem:[#allocation6 + $0x400] sm:$0xff]
    %v4226 = vld [vmem:[#allocation6 + $0x408] sm:$0xff]
    %v4227 = vld [vmem:[#allocation6 + $0x410] sm:$0xff]
    %v4228 = vld [vmem:[#allocation6 + $0x418] sm:$0xff]
    %v4229 = vld [vmem:[#allocation6 + $0x420] sm:$0xff]
    %v4230 = vld [vmem:[#allocation6 + $0x428] sm:$0xff]
    %v4231 = vld [vmem:[#allocation6 + $0x430] sm:$0xff]
    %v4232 = vld [vmem:[#allocation6 + $0x438] sm:$0xff]
    %v4233 = vld [vmem:[#allocation6 + $0x440] sm:$0xff]
    %v4234 = vld [vmem:[#allocation6 + $0x448] sm:$0xff]
    %v4235 = vld [vmem:[#allocation6 + $0x450] sm:$0xff]
    %v4236 = vld [vmem:[#allocation6 + $0x458] sm:$0xff]
    %v4237 = vld [vmem:[#allocation6 + $0x460] sm:$0xff]
    %v4238 = vld [vmem:[#allocation6 + $0x468] sm:$0xff]
    %v4239 = vld [vmem:[#allocation6 + $0x470] sm:$0xff]
    %v4240 = vld [vmem:[#allocation6 + $0x478] sm:$0xff]
    %v4241 = vld [vmem:[#allocation6 + $0x480] sm:$0xff]
    %v4242 = vld [vmem:[#allocation6 + $0x488] sm:$0xff]
    %v4243 = vld [vmem:[#allocation6 + $0x490] sm:$0xff]
    %v4244 = vld [vmem:[#allocation6 + $0x498] sm:$0xff]
    %v4245 = vld [vmem:[#allocation6 + $0x4a0] sm:$0xff]
    %v4246 = vld [vmem:[#allocation6 + $0x4a8] sm:$0xff]
    %v4247 = vld [vmem:[#allocation6 + $0x4b0] sm:$0xff]
    %v4248 = vld [vmem:[#allocation6 + $0x4b8] sm:$0xff]
    %v4249 = vld [vmem:[#allocation6 + $0x4c0] sm:$0xff]
    %v4250 = vld [vmem:[#allocation6 + $0x4c8] sm:$0xff]
    %v4251 = vld [vmem:[#allocation6 + $0x4d0] sm:$0xff]
    %v4252 = vld [vmem:[#allocation6 + $0x4d8] sm:$0xff]
    %v4253 = vld [vmem:[#allocation6 + $0x4e0] sm:$0xff]
    %v4254 = vld [vmem:[#allocation6 + $0x4e8] sm:$0xff]
    %v4255 = vld [vmem:[#allocation6 + $0x4f0] sm:$0xff]
    %v4256 = vld [vmem:[#allocation6 + $0x4f8] sm:$0xff]
    %v4257 = vld [vmem:[#allocation6 + $0x500] sm:$0xff]
    %v4258 = vld [vmem:[#allocation6 + $0x508] sm:$0xff]
    %v4259 = vld [vmem:[#allocation6 + $0x510] sm:$0xff]
    %v4260 = vld [vmem:[#allocation6 + $0x518] sm:$0xff]
    %v4261 = vld [vmem:[#allocation6 + $0x520] sm:$0xff]
    %v4262 = vld [vmem:[#allocation6 + $0x528] sm:$0xff]
    %v4263 = vld [vmem:[#allocation6 + $0x530] sm:$0xff]
    %v4264 = vld [vmem:[#allocation6 + $0x538] sm:$0xff]
    %v4265 = vld [vmem:[#allocation6 + $0x540] sm:$0xff]
    %v4266 = vld [vmem:[#allocation6 + $0x548] sm:$0xff]
    %v4267 = vld [vmem:[#allocation6 + $0x550] sm:$0xff]
    %v4268 = vld [vmem:[#allocation6 + $0x558] sm:$0xff]
    %v4269 = vld [vmem:[#allocation6 + $0x560] sm:$0xff]
    %v4270 = vld [vmem:[#allocation6 + $0x568] sm:$0xff]
    %v4271 = vld [vmem:[#allocation6 + $0x570] sm:$0xff]
    %v4272 = vld [vmem:[#allocation6 + $0x578] sm:$0xff]
    %v4273 = vld [vmem:[#allocation6 + $0x580] sm:$0xff]
    %v4274 = vld [vmem:[#allocation6 + $0x588] sm:$0xff]
    %v4275 = vld [vmem:[#allocation6 + $0x590] sm:$0xff]
    %v4276 = vld [vmem:[#allocation6 + $0x598] sm:$0xff]
    %v4277 = vld [vmem:[#allocation6 + $0x5a0] sm:$0xff]
    %v4278 = vld [vmem:[#allocation6 + $0x5a8] sm:$0xff]
    %v4279 = vld [vmem:[#allocation6 + $0x5b0] sm:$0xff]
    %v4280 = vld [vmem:[#allocation6 + $0x5b8] sm:$0xff]
    %v4281 = vld [vmem:[#allocation6 + $0x5c0] sm:$0xff]
    %v4282 = vld [vmem:[#allocation6 + $0x5c8] sm:$0xff]
    %v4283 = vld [vmem:[#allocation6 + $0x5d0] sm:$0xff]
    %v4284 = vld [vmem:[#allocation6 + $0x5d8] sm:$0xff]
    %v4285 = vld [vmem:[#allocation6 + $0x5e0] sm:$0xff]
    %v4286 = vld [vmem:[#allocation6 + $0x5e8] sm:$0xff]
    %v4287 = vld [vmem:[#allocation6 + $0x5f0] sm:$0xff]
    %v4288 = vld [vmem:[#allocation6 + $0x5f8] sm:$0xff]
    %v4289 = vld [vmem:[#allocation6 + $0x600] sm:$0xff]
    %v4290 = vld [vmem:[#allocation6 + $0x608] sm:$0xff]
    %v4291 = vld [vmem:[#allocation6 + $0x610] sm:$0xff]
    %v4292 = vld [vmem:[#allocation6 + $0x618] sm:$0xff]
    %v4293 = vld [vmem:[#allocation6 + $0x620] sm:$0xff]
    %v4294 = vld [vmem:[#allocation6 + $0x628] sm:$0xff]
    %v4295 = vld [vmem:[#allocation6 + $0x630] sm:$0xff]
    %v4296 = vld [vmem:[#allocation6 + $0x638] sm:$0xff]
    %v4297 = vld [vmem:[#allocation6 + $0x640] sm:$0xff]
    %v4298 = vld [vmem:[#allocation6 + $0x648] sm:$0xff]
    %v4299 = vld [vmem:[#allocation6 + $0x650] sm:$0xff]
    %v4300 = vld [vmem:[#allocation6 + $0x658] sm:$0xff]
    %v4301 = vld [vmem:[#allocation6 + $0x660] sm:$0xff]
    %v4302 = vld [vmem:[#allocation6 + $0x668] sm:$0xff]
    %v4303 = vld [vmem:[#allocation6 + $0x670] sm:$0xff]
    %v4304 = vld [vmem:[#allocation6 + $0x678] sm:$0xff]
    %v4305 = vld [vmem:[#allocation6 + $0x680] sm:$0xff]
    %v4306 = vld [vmem:[#allocation6 + $0x688] sm:$0xff]
    %v4307 = vld [vmem:[#allocation6 + $0x690] sm:$0xff]
    %v4308 = vld [vmem:[#allocation6 + $0x698] sm:$0xff]
    %v4309 = vld [vmem:[#allocation6 + $0x6a0] sm:$0xff]
    %v4310 = vld [vmem:[#allocation6 + $0x6a8] sm:$0xff]
    %v4311 = vld [vmem:[#allocation6 + $0x6b0] sm:$0xff]
    %v4312 = vld [vmem:[#allocation6 + $0x6b8] sm:$0xff]
    %v4313 = vld [vmem:[#allocation6 + $0x6c0] sm:$0xff]
    %v4314 = vld [vmem:[#allocation6 + $0x6c8] sm:$0xff]
    %v4315 = vld [vmem:[#allocation6 + $0x6d0] sm:$0xff]
    %v4316 = vld [vmem:[#allocation6 + $0x6d8] sm:$0xff]
    %v4317 = vld [vmem:[#allocation6 + $0x6e0] sm:$0xff]
    %v4318 = vld [vmem:[#allocation6 + $0x6e8] sm:$0xff]
    %v4319 = vld [vmem:[#allocation6 + $0x6f0] sm:$0xff]
    %v4320 = vld [vmem:[#allocation6 + $0x6f8] sm:$0xff]
    %v4321 = vld [vmem:[#allocation6 + $0x700] sm:$0xff]
    %v4322 = vld [vmem:[#allocation6 + $0x708] sm:$0xff]
    %v4323 = vld [vmem:[#allocation6 + $0x710] sm:$0xff]
    %v4324 = vld [vmem:[#allocation6 + $0x718] sm:$0xff]
    %v4325 = vld [vmem:[#allocation6 + $0x720] sm:$0xff]
    %v4326 = vld [vmem:[#allocation6 + $0x728] sm:$0xff]
    %v4327 = vld [vmem:[#allocation6 + $0x730] sm:$0xff]
    %v4328 = vld [vmem:[#allocation6 + $0x738] sm:$0xff]
    %v4329 = vld [vmem:[#allocation6 + $0x740] sm:$0xff]
    %v4330 = vld [vmem:[#allocation6 + $0x748] sm:$0xff]
    %v4331 = vld [vmem:[#allocation6 + $0x750] sm:$0xff]
    %v4332 = vld [vmem:[#allocation6 + $0x758] sm:$0xff]
    %v4333 = vld [vmem:[#allocation6 + $0x760] sm:$0xff]
    %v4334 = vld [vmem:[#allocation6 + $0x768] sm:$0xff]
    %v4335 = vld [vmem:[#allocation6 + $0x770] sm:$0xff]
    %v4336 = vld [vmem:[#allocation6 + $0x778] sm:$0xff]
    %v4337 = vld [vmem:[#allocation6 + $0x780] sm:$0xff]
    %v4338 = vld [vmem:[#allocation6 + $0x788] sm:$0xff]
    %v4339 = vld [vmem:[#allocation6 + $0x790] sm:$0xff]
    %v4340 = vld [vmem:[#allocation6 + $0x798] sm:$0xff]
    %v4341 = vld [vmem:[#allocation6 + $0x7a0] sm:$0xff]
    %v4342 = vld [vmem:[#allocation6 + $0x7a8] sm:$0xff]
    %v4343 = vld [vmem:[#allocation6 + $0x7b0] sm:$0xff]
    %v4344 = vld [vmem:[#allocation6 + $0x7b8] sm:$0xff]
    %v4345 = vld [vmem:[#allocation6 + $0x7c0] sm:$0xff]
    %v4346 = vld [vmem:[#allocation6 + $0x7c8] sm:$0xff]
    %v4347 = vld [vmem:[#allocation6 + $0x7d0] sm:$0xff]
    %v4348 = vld [vmem:[#allocation6 + $0x7d8] sm:$0xff]
    %v4349 = vld [vmem:[#allocation6 + $0x7e0] sm:$0xff]
    %v4350 = vld [vmem:[#allocation6 + $0x7e8] sm:$0xff]
    %v4351 = vld [vmem:[#allocation6 + $0x7f0] sm:$0xff]
    %v4352 = vld [vmem:[#allocation6 + $0x7f8] sm:$0xff]
    %v4353 = vld [vmem:[#allocation6 + $0x800] sm:$0xff]
    %v4354 = vld [vmem:[#allocation6 + $0x808] sm:$0xff]
    %v4355 = vld [vmem:[#allocation6 + $0x810] sm:$0xff]
    %v4356 = vld [vmem:[#allocation6 + $0x818] sm:$0xff]
    %v4357 = vld [vmem:[#allocation6 + $0x820] sm:$0xff]
    %v4358 = vld [vmem:[#allocation6 + $0x828] sm:$0xff]
    %v4359 = vld [vmem:[#allocation6 + $0x830] sm:$0xff]
    %v4360 = vld [vmem:[#allocation6 + $0x838] sm:$0xff]
    %v4361 = vld [vmem:[#allocation6 + $0x840] sm:$0xff]
    %v4362 = vld [vmem:[#allocation6 + $0x848] sm:$0xff]
    %v4363 = vld [vmem:[#allocation6 + $0x850] sm:$0xff]
    %v4364 = vld [vmem:[#allocation6 + $0x858] sm:$0xff]
    %v4365 = vld [vmem:[#allocation6 + $0x860] sm:$0xff]
    %v4366 = vld [vmem:[#allocation6 + $0x868] sm:$0xff]
    %v4367 = vld [vmem:[#allocation6 + $0x870] sm:$0xff]
    %v4368 = vld [vmem:[#allocation6 + $0x878] sm:$0xff]
    %v4369 = vld [vmem:[#allocation6 + $0x880] sm:$0xff]
    %v4370 = vld [vmem:[#allocation6 + $0x888] sm:$0xff]
    %v4371 = vld [vmem:[#allocation6 + $0x890] sm:$0xff]
    %v4372 = vld [vmem:[#allocation6 + $0x898] sm:$0xff]
    %v4373 = vld [vmem:[#allocation6 + $0x8a0] sm:$0xff]
    %v4374 = vld [vmem:[#allocation6 + $0x8a8] sm:$0xff]
    %v4375 = vld [vmem:[#allocation6 + $0x8b0] sm:$0xff]
    %v4376 = vld [vmem:[#allocation6 + $0x8b8] sm:$0xff]
    %v4377 = vld [vmem:[#allocation6 + $0x8c0] sm:$0xff]
    %v4378 = vld [vmem:[#allocation6 + $0x8c8] sm:$0xff]
    %v4379 = vld [vmem:[#allocation6 + $0x8d0] sm:$0xff]
    %v4380 = vld [vmem:[#allocation6 + $0x8d8] sm:$0xff]
    %v4381 = vld [vmem:[#allocation6 + $0x8e0] sm:$0xff]
    %v4382 = vld [vmem:[#allocation6 + $0x8e8] sm:$0xff]
    %v4383 = vld [vmem:[#allocation6 + $0x8f0] sm:$0xff]
    %v4384 = vld [vmem:[#allocation6 + $0x8f8] sm:$0xff]
    %v4385 = vld [vmem:[#allocation6 + $0x900] sm:$0xff]
    %v4386 = vld [vmem:[#allocation6 + $0x908] sm:$0xff]
    %v4387 = vld [vmem:[#allocation6 + $0x910] sm:$0xff]
    %v4388 = vld [vmem:[#allocation6 + $0x918] sm:$0xff]
    %v4389 = vld [vmem:[#allocation6 + $0x920] sm:$0xff]
    %v4390 = vld [vmem:[#allocation6 + $0x928] sm:$0xff]
    %v4391 = vld [vmem:[#allocation6 + $0x930] sm:$0xff]
    %v4392 = vld [vmem:[#allocation6 + $0x938] sm:$0xff]
    %v4393 = vld [vmem:[#allocation6 + $0x940] sm:$0xff]
    %v4394 = vld [vmem:[#allocation6 + $0x948] sm:$0xff]
    %v4395 = vld [vmem:[#allocation6 + $0x950] sm:$0xff]
    %v4396 = vld [vmem:[#allocation6 + $0x958] sm:$0xff]
    %v4397 = vld [vmem:[#allocation6 + $0x960] sm:$0xff]
    %v4398 = vld [vmem:[#allocation6 + $0x968] sm:$0xff]
    %v4399 = vld [vmem:[#allocation6 + $0x970] sm:$0xff]
    %v4400 = vld [vmem:[#allocation6 + $0x978] sm:$0xff]
    %v4401 = vld [vmem:[#allocation6 + $0x980] sm:$0xff]
    %v4402 = vld [vmem:[#allocation6 + $0x988] sm:$0xff]
    %v4403 = vld [vmem:[#allocation6 + $0x990] sm:$0xff]
    %v4404 = vld [vmem:[#allocation6 + $0x998] sm:$0xff]
    %v4405 = vld [vmem:[#allocation6 + $0x9a0] sm:$0xff]
    %v4406 = vld [vmem:[#allocation6 + $0x9a8] sm:$0xff]
    %v4407 = vld [vmem:[#allocation6 + $0x9b0] sm:$0xff]
    %v4408 = vld [vmem:[#allocation6 + $0x9b8] sm:$0xff]
    %v4409 = vld [vmem:[#allocation6 + $0x9c0] sm:$0xff]
    %v4410 = vld [vmem:[#allocation6 + $0x9c8] sm:$0xff]
    %v4411 = vld [vmem:[#allocation6 + $0x9d0] sm:$0xff]
    %v4412 = vld [vmem:[#allocation6 + $0x9d8] sm:$0xff]
    %v4413 = vld [vmem:[#allocation6 + $0x9e0] sm:$0xff]
    %v4414 = vld [vmem:[#allocation6 + $0x9e8] sm:$0xff]
    %v4415 = vld [vmem:[#allocation6 + $0x9f0] sm:$0xff]
    %v4416 = vld [vmem:[#allocation6 + $0x9f8] sm:$0xff]
    %v4417 = vld [vmem:[#allocation6 + $0xa00] sm:$0xff]
    %v4418 = vld [vmem:[#allocation6 + $0xa08] sm:$0xff]
    %v4419 = vld [vmem:[#allocation6 + $0xa10] sm:$0xff]
    %v4420 = vld [vmem:[#allocation6 + $0xa18] sm:$0xff]
    %v4421 = vld [vmem:[#allocation6 + $0xa20] sm:$0xff]
    %v4422 = vld [vmem:[#allocation6 + $0xa28] sm:$0xff]
    %v4423 = vld [vmem:[#allocation6 + $0xa30] sm:$0xff]
    %v4424 = vld [vmem:[#allocation6 + $0xa38] sm:$0xff]
    %v4425 = vld [vmem:[#allocation6 + $0xa40] sm:$0xff]
    %v4426 = vld [vmem:[#allocation6 + $0xa48] sm:$0xff]
    %v4427 = vld [vmem:[#allocation6 + $0xa50] sm:$0xff]
    %v4428 = vld [vmem:[#allocation6 + $0xa58] sm:$0xff]
    %v4429 = vld [vmem:[#allocation6 + $0xa60] sm:$0xff]
    %v4430 = vld [vmem:[#allocation6 + $0xa68] sm:$0xff]
    %v4431 = vld [vmem:[#allocation6 + $0xa70] sm:$0xff]
    %v4432 = vld [vmem:[#allocation6 + $0xa78] sm:$0xff]
    %v4433 = vld [vmem:[#allocation6 + $0xa80] sm:$0xff]
    %v4434 = vld [vmem:[#allocation6 + $0xa88] sm:$0xff]
    %v4435 = vld [vmem:[#allocation6 + $0xa90] sm:$0xff]
    %v4436 = vld [vmem:[#allocation6 + $0xa98] sm:$0xff]
    %v4437 = vld [vmem:[#allocation6 + $0xaa0] sm:$0xff]
    %v4438 = vld [vmem:[#allocation6 + $0xaa8] sm:$0xff]
    %v4439 = vld [vmem:[#allocation6 + $0xab0] sm:$0xff]
    %v4440 = vld [vmem:[#allocation6 + $0xab8] sm:$0xff]
    %v4441 = vld [vmem:[#allocation6 + $0xac0] sm:$0xff]
    %v4442 = vld [vmem:[#allocation6 + $0xac8] sm:$0xff]
    %v4443 = vld [vmem:[#allocation6 + $0xad0] sm:$0xff]
    %v4444 = vld [vmem:[#allocation6 + $0xad8] sm:$0xff]
    %v4445 = vld [vmem:[#allocation6 + $0xae0] sm:$0xff]
    %v4446 = vld [vmem:[#allocation6 + $0xae8] sm:$0xff]
    %v4447 = vld [vmem:[#allocation6 + $0xaf0] sm:$0xff]
    %v4448 = vld [vmem:[#allocation6 + $0xaf8] sm:$0xff]
    %v4449 = vld [vmem:[#allocation6 + $0xb00] sm:$0xff]
    %v4450 = vld [vmem:[#allocation6 + $0xb08] sm:$0xff]
    %v4451 = vld [vmem:[#allocation6 + $0xb10] sm:$0xff]
    %v4452 = vld [vmem:[#allocation6 + $0xb18] sm:$0xff]
    %v4453 = vld [vmem:[#allocation6 + $0xb20] sm:$0xff]
    %v4454 = vld [vmem:[#allocation6 + $0xb28] sm:$0xff]
    %v4455 = vld [vmem:[#allocation6 + $0xb30] sm:$0xff]
    %v4456 = vld [vmem:[#allocation6 + $0xb38] sm:$0xff]
    %v4457 = vld [vmem:[#allocation6 + $0xb40] sm:$0xff]
    %v4458 = vld [vmem:[#allocation6 + $0xb48] sm:$0xff]
    %v4459 = vld [vmem:[#allocation6 + $0xb50] sm:$0xff]
    %v4460 = vld [vmem:[#allocation6 + $0xb58] sm:$0xff]
    %v4461 = vld [vmem:[#allocation6 + $0xb60] sm:$0xff]
    %v4462 = vld [vmem:[#allocation6 + $0xb68] sm:$0xff]
    %v4463 = vld [vmem:[#allocation6 + $0xb70] sm:$0xff]
    %v4464 = vld [vmem:[#allocation6 + $0xb78] sm:$0xff]
    %v4465 = vld [vmem:[#allocation6 + $0xb80] sm:$0xff]
    %v4466 = vld [vmem:[#allocation6 + $0xb88] sm:$0xff]
    %v4467 = vld [vmem:[#allocation6 + $0xb90] sm:$0xff]
    %v4468 = vld [vmem:[#allocation6 + $0xb98] sm:$0xff]
    %v4469 = vld [vmem:[#allocation6 + $0xba0] sm:$0xff]
    %v4470 = vld [vmem:[#allocation6 + $0xba8] sm:$0xff]
    %v4471 = vld [vmem:[#allocation6 + $0xbb0] sm:$0xff]
    %v4472 = vld [vmem:[#allocation6 + $0xbb8] sm:$0xff]
    %v4473 = vld [vmem:[#allocation6 + $0xbc0] sm:$0xff]
    %v4474 = vld [vmem:[#allocation6 + $0xbc8] sm:$0xff]
    %v4475 = vld [vmem:[#allocation6 + $0xbd0] sm:$0xff]
    %v4476 = vld [vmem:[#allocation6 + $0xbd8] sm:$0xff]
    %v4477 = vld [vmem:[#allocation6 + $0xbe0] sm:$0xff]
    %v4478 = vld [vmem:[#allocation6 + $0xbe8] sm:$0xff]
    %v4479 = vld [vmem:[#allocation6 + $0xbf0] sm:$0xff]
    %v4480 = vld [vmem:[#allocation6 + $0xbf8] sm:$0xff]
    %v4481 = vld [vmem:[#allocation6 + $0xc00] sm:$0xff]
    %v4482 = vld [vmem:[#allocation6 + $0xc08] sm:$0xff]
    %v4483 = vld [vmem:[#allocation6 + $0xc10] sm:$0xff]
    %v4484 = vld [vmem:[#allocation6 + $0xc18] sm:$0xff]
    %v4485 = vld [vmem:[#allocation6 + $0xc20] sm:$0xff]
    %v4486 = vld [vmem:[#allocation6 + $0xc28] sm:$0xff]
    %v4487 = vld [vmem:[#allocation6 + $0xc30] sm:$0xff]
    %v4488 = vld [vmem:[#allocation6 + $0xc38] sm:$0xff]
    %v4489 = vld [vmem:[#allocation6 + $0xc40] sm:$0xff]
    %v4490 = vld [vmem:[#allocation6 + $0xc48] sm:$0xff]
    %v4491 = vld [vmem:[#allocation6 + $0xc50] sm:$0xff]
    %v4492 = vld [vmem:[#allocation6 + $0xc58] sm:$0xff]
    %v4493 = vld [vmem:[#allocation6 + $0xc60] sm:$0xff]
    %v4494 = vld [vmem:[#allocation6 + $0xc68] sm:$0xff]
    %v4495 = vld [vmem:[#allocation6 + $0xc70] sm:$0xff]
    %v4496 = vld [vmem:[#allocation6 + $0xc78] sm:$0xff]
    %v4497 = vld [vmem:[#allocation6 + $0xc80] sm:$0xff]
    %v4498 = vld [vmem:[#allocation6 + $0xc88] sm:$0xff]
    %v4499 = vld [vmem:[#allocation6 + $0xc90] sm:$0xff]
    %v4500 = vld [vmem:[#allocation6 + $0xc98] sm:$0xff]
    %v4501 = vld [vmem:[#allocation6 + $0xca0] sm:$0xff]
    %v4502 = vld [vmem:[#allocation6 + $0xca8] sm:$0xff]
    %v4503 = vld [vmem:[#allocation6 + $0xcb0] sm:$0xff]
    %v4504 = vld [vmem:[#allocation6 + $0xcb8] sm:$0xff]
    %v4505 = vld [vmem:[#allocation6 + $0xcc0] sm:$0xff]
    %v4506 = vld [vmem:[#allocation6 + $0xcc8] sm:$0xff]
    %v4507 = vld [vmem:[#allocation6 + $0xcd0] sm:$0xff]
    %v4508 = vld [vmem:[#allocation6 + $0xcd8] sm:$0xff]
    %v4509 = vld [vmem:[#allocation6 + $0xce0] sm:$0xff]
    %v4510 = vld [vmem:[#allocation6 + $0xce8] sm:$0xff]
    %v4511 = vld [vmem:[#allocation6 + $0xcf0] sm:$0xff]
    %v4512 = vld [vmem:[#allocation6 + $0xcf8] sm:$0xff]
    %v4513 = vld [vmem:[#allocation6 + $0xd00] sm:$0xff]
    %v4514 = vld [vmem:[#allocation6 + $0xd08] sm:$0xff]
    %v4515 = vld [vmem:[#allocation6 + $0xd10] sm:$0xff]
    %v4516 = vld [vmem:[#allocation6 + $0xd18] sm:$0xff]
    %v4517 = vld [vmem:[#allocation6 + $0xd20] sm:$0xff]
    %v4518 = vld [vmem:[#allocation6 + $0xd28] sm:$0xff]
    %v4519 = vld [vmem:[#allocation6 + $0xd30] sm:$0xff]
    %v4520 = vld [vmem:[#allocation6 + $0xd38] sm:$0xff]
    %v4521 = vld [vmem:[#allocation6 + $0xd40] sm:$0xff]
    %v4522 = vld [vmem:[#allocation6 + $0xd48] sm:$0xff]
    %v4523 = vld [vmem:[#allocation6 + $0xd50] sm:$0xff]
    %v4524 = vld [vmem:[#allocation6 + $0xd58] sm:$0xff]
    %v4525 = vld [vmem:[#allocation6 + $0xd60] sm:$0xff]
    %v4526 = vld [vmem:[#allocation6 + $0xd68] sm:$0xff]
    %v4527 = vld [vmem:[#allocation6 + $0xd70] sm:$0xff]
    %v4528 = vld [vmem:[#allocation6 + $0xd78] sm:$0xff]
    %v4529 = vld [vmem:[#allocation6 + $0xd80] sm:$0xff]
    %v4530 = vld [vmem:[#allocation6 + $0xd88] sm:$0xff]
    %v4531 = vld [vmem:[#allocation6 + $0xd90] sm:$0xff]
    %v4532 = vld [vmem:[#allocation6 + $0xd98] sm:$0xff]
    %v4533 = vld [vmem:[#allocation6 + $0xda0] sm:$0xff]
    %v4534 = vld [vmem:[#allocation6 + $0xda8] sm:$0xff]
    %v4535 = vld [vmem:[#allocation6 + $0xdb0] sm:$0xff]
    %v4536 = vld [vmem:[#allocation6 + $0xdb8] sm:$0xff]
    %v4537 = vld [vmem:[#allocation6 + $0xdc0] sm:$0xff]
    %v4538 = vld [vmem:[#allocation6 + $0xdc8] sm:$0xff]
    %v4539 = vld [vmem:[#allocation6 + $0xdd0] sm:$0xff]
    %v4540 = vld [vmem:[#allocation6 + $0xdd8] sm:$0xff]
    %v4541 = vld [vmem:[#allocation6 + $0xde0] sm:$0xff]
    %v4542 = vld [vmem:[#allocation6 + $0xde8] sm:$0xff]
    %v4543 = vld [vmem:[#allocation6 + $0xdf0] sm:$0xff]
    %v4544 = vld [vmem:[#allocation6 + $0xdf8] sm:$0xff]
    %v4545 = vld [vmem:[#allocation6 + $0xe00] sm:$0xff]
    %v4546 = vld [vmem:[#allocation6 + $0xe08] sm:$0xff]
    %v4547 = vld [vmem:[#allocation6 + $0xe10] sm:$0xff]
    %v4548 = vld [vmem:[#allocation6 + $0xe18] sm:$0xff]
    %v4549 = vld [vmem:[#allocation6 + $0xe20] sm:$0xff]
    %v4550 = vld [vmem:[#allocation6 + $0xe28] sm:$0xff]
    %v4551 = vld [vmem:[#allocation6 + $0xe30] sm:$0xff]
    %v4552 = vld [vmem:[#allocation6 + $0xe38] sm:$0xff]
    %v4553 = vld [vmem:[#allocation6 + $0xe40] sm:$0xff]
    %v4554 = vld [vmem:[#allocation6 + $0xe48] sm:$0xff]
    %v4555 = vld [vmem:[#allocation6 + $0xe50] sm:$0xff]
    %v4556 = vld [vmem:[#allocation6 + $0xe58] sm:$0xff]
    %v4557 = vld [vmem:[#allocation6 + $0xe60] sm:$0xff]
    %v4558 = vld [vmem:[#allocation6 + $0xe68] sm:$0xff]
    %v4559 = vld [vmem:[#allocation6 + $0xe70] sm:$0xff]
    %v4560 = vld [vmem:[#allocation6 + $0xe78] sm:$0xff]
    %v4561 = vld [vmem:[#allocation6 + $0xe80] sm:$0xff]
    %v4562 = vld [vmem:[#allocation6 + $0xe88] sm:$0xff]
    %v4563 = vld [vmem:[#allocation6 + $0xe90] sm:$0xff]
    %v4564 = vld [vmem:[#allocation6 + $0xe98] sm:$0xff]
    %v4565 = vld [vmem:[#allocation6 + $0xea0] sm:$0xff]
    %v4566 = vld [vmem:[#allocation6 + $0xea8] sm:$0xff]
    %v4567 = vld [vmem:[#allocation6 + $0xeb0] sm:$0xff]
    %v4568 = vld [vmem:[#allocation6 + $0xeb8] sm:$0xff]
    %v4569 = vld [vmem:[#allocation6 + $0xec0] sm:$0xff]
    %v4570 = vld [vmem:[#allocation6 + $0xec8] sm:$0xff]
    %v4571 = vld [vmem:[#allocation6 + $0xed0] sm:$0xff]
    %v4572 = vld [vmem:[#allocation6 + $0xed8] sm:$0xff]
    %v4573 = vld [vmem:[#allocation6 + $0xee0] sm:$0xff]
    %v4574 = vld [vmem:[#allocation6 + $0xee8] sm:$0xff]
    %v4575 = vld [vmem:[#allocation6 + $0xef0] sm:$0xff]
    %v4576 = vld [vmem:[#allocation6 + $0xef8] sm:$0xff]
    %v4577 = vld [vmem:[#allocation6 + $0xf00] sm:$0xff]
    %v4578 = vld [vmem:[#allocation6 + $0xf08] sm:$0xff]
    %v4579 = vld [vmem:[#allocation6 + $0xf10] sm:$0xff]
    %v4580 = vld [vmem:[#allocation6 + $0xf18] sm:$0xff]
    %v4581 = vld [vmem:[#allocation6 + $0xf20] sm:$0xff]
    %v4582 = vld [vmem:[#allocation6 + $0xf28] sm:$0xff]
    %v4583 = vld [vmem:[#allocation6 + $0xf30] sm:$0xff]
    %v4584 = vld [vmem:[#allocation6 + $0xf38] sm:$0xff]
    %v4585 = vld [vmem:[#allocation6 + $0xf40] sm:$0xff]
    %v4586 = vld [vmem:[#allocation6 + $0xf48] sm:$0xff]
    %v4587 = vld [vmem:[#allocation6 + $0xf50] sm:$0xff]
    %v4588 = vld [vmem:[#allocation6 + $0xf58] sm:$0xff]
    %v4589 = vld [vmem:[#allocation6 + $0xf60] sm:$0xff]
    %v4590 = vld [vmem:[#allocation6 + $0xf68] sm:$0xff]
    %v4591 = vld [vmem:[#allocation6 + $0xf70] sm:$0xff]
    %v4592 = vld [vmem:[#allocation6 + $0xf78] sm:$0xff]
    %v4593 = vld [vmem:[#allocation6 + $0xf80] sm:$0xff]
    %v4594 = vld [vmem:[#allocation6 + $0xf88] sm:$0xff]
    %v4595 = vld [vmem:[#allocation6 + $0xf90] sm:$0xff]
    %v4596 = vld [vmem:[#allocation6 + $0xf98] sm:$0xff]
    %v4597 = vld [vmem:[#allocation6 + $0xfa0] sm:$0xff]
    %v4598 = vld [vmem:[#allocation6 + $0xfa8] sm:$0xff]
    %v4599 = vld [vmem:[#allocation6 + $0xfb0] sm:$0xff]
    %v4600 = vld [vmem:[#allocation6 + $0xfb8] sm:$0xff]
    %v4601 = vld [vmem:[#allocation6 + $0xfc0] sm:$0xff]
    %v4602 = vld [vmem:[#allocation6 + $0xfc8] sm:$0xff]
    %v4603 = vld [vmem:[#allocation6 + $0xfd0] sm:$0xff]
    %v4604 = vld [vmem:[#allocation6 + $0xfd8] sm:$0xff]
    %v4605 = vld [vmem:[#allocation6 + $0xfe0] sm:$0xff]
    %v4606 = vld [vmem:[#allocation6 + $0xfe8] sm:$0xff]
    %v4607 = vld [vmem:[#allocation6 + $0xff0] sm:$0xff]
    %v4608 = vld [vmem:[#allocation6 + $0xff8] sm:$0xff]
    %v4609 = vld [vmem:[#allocation6 + $0x1000] sm:$0xff]
    %v4610 = vld [vmem:[#allocation6 + $0x1008] sm:$0xff]
    %v4611 = vld [vmem:[#allocation6 + $0x1010] sm:$0xff]
    %v4612 = vld [vmem:[#allocation6 + $0x1018] sm:$0xff]
    %v4613 = vld [vmem:[#allocation6 + $0x1020] sm:$0xff]
    %v4614 = vld [vmem:[#allocation6 + $0x1028] sm:$0xff]
    %v4615 = vld [vmem:[#allocation6 + $0x1030] sm:$0xff]
    %v4616 = vld [vmem:[#allocation6 + $0x1038] sm:$0xff]
    %v4617 = vld [vmem:[#allocation6 + $0x1040] sm:$0xff]
    %v4618 = vld [vmem:[#allocation6 + $0x1048] sm:$0xff]
    %v4619 = vld [vmem:[#allocation6 + $0x1050] sm:$0xff]
    %v4620 = vld [vmem:[#allocation6 + $0x1058] sm:$0xff]
    %v4621 = vld [vmem:[#allocation6 + $0x1060] sm:$0xff]
    %v4622 = vld [vmem:[#allocation6 + $0x1068] sm:$0xff]
    %v4623 = vld [vmem:[#allocation6 + $0x1070] sm:$0xff]
    %v4624 = vld [vmem:[#allocation6 + $0x1078] sm:$0xff]
    %v4625 = vld [vmem:[#allocation6 + $0x1080] sm:$0xff]
    %v4626 = vld [vmem:[#allocation6 + $0x1088] sm:$0xff]
    %v4627 = vld [vmem:[#allocation6 + $0x1090] sm:$0xff]
    %v4628 = vld [vmem:[#allocation6 + $0x1098] sm:$0xff]
    %v4629 = vld [vmem:[#allocation6 + $0x10a0] sm:$0xff]
    %v4630 = vld [vmem:[#allocation6 + $0x10a8] sm:$0xff]
    %v4631 = vld [vmem:[#allocation6 + $0x10b0] sm:$0xff]
    %v4632 = vld [vmem:[#allocation6 + $0x10b8] sm:$0xff]
    %v4633 = vld [vmem:[#allocation6 + $0x10c0] sm:$0xff]
    %v4634 = vld [vmem:[#allocation6 + $0x10c8] sm:$0xff]
    %v4635 = vld [vmem:[#allocation6 + $0x10d0] sm:$0xff]
    %v4636 = vld [vmem:[#allocation6 + $0x10d8] sm:$0xff]
    %v4637 = vld [vmem:[#allocation6 + $0x10e0] sm:$0xff]
    %v4638 = vld [vmem:[#allocation6 + $0x10e8] sm:$0xff]
    %v4639 = vld [vmem:[#allocation6 + $0x10f0] sm:$0xff]
    %v4640 = vld [vmem:[#allocation6 + $0x10f8] sm:$0xff]
    %v4641 = vld [vmem:[#allocation6 + $0x1100] sm:$0xff]
    %v4642 = vld [vmem:[#allocation6 + $0x1108] sm:$0xff]
    %v4643 = vld [vmem:[#allocation6 + $0x1110] sm:$0xff]
    %v4644 = vld [vmem:[#allocation6 + $0x1118] sm:$0xff]
    %v4645 = vld [vmem:[#allocation6 + $0x1120] sm:$0xff]
    %v4646 = vld [vmem:[#allocation6 + $0x1128] sm:$0xff]
    %v4647 = vld [vmem:[#allocation6 + $0x1130] sm:$0xff]
    %v4648 = vld [vmem:[#allocation6 + $0x1138] sm:$0xff]
    %v4649 = vld [vmem:[#allocation6 + $0x1140] sm:$0xff]
    %v4650 = vld [vmem:[#allocation6 + $0x1148] sm:$0xff]
    %v4651 = vld [vmem:[#allocation6 + $0x1150] sm:$0xff]
    %v4652 = vld [vmem:[#allocation6 + $0x1158] sm:$0xff]
    %v4653 = vld [vmem:[#allocation6 + $0x1160] sm:$0xff]
    %v4654 = vld [vmem:[#allocation6 + $0x1168] sm:$0xff]
    %v4655 = vld [vmem:[#allocation6 + $0x1170] sm:$0xff]
    %v4656 = vld [vmem:[#allocation6 + $0x1178] sm:$0xff]
    %v4657 = vld [vmem:[#allocation6 + $0x1180] sm:$0xff]
    %v4658 = vld [vmem:[#allocation6 + $0x1188] sm:$0xff]
    %v4659 = vld [vmem:[#allocation6 + $0x1190] sm:$0xff]
    %v4660 = vld [vmem:[#allocation6 + $0x1198] sm:$0xff]
    %v4661 = vld [vmem:[#allocation6 + $0x11a0] sm:$0xff]
    %v4662 = vld [vmem:[#allocation6 + $0x11a8] sm:$0xff]
    %v4663 = vld [vmem:[#allocation6 + $0x11b0] sm:$0xff]
    %v4664 = vld [vmem:[#allocation6 + $0x11b8] sm:$0xff]
    %v4665 = vld [vmem:[#allocation6 + $0x11c0] sm:$0xff]
    %v4666 = vld [vmem:[#allocation6 + $0x11c8] sm:$0xff]
    %v4667 = vld [vmem:[#allocation6 + $0x11d0] sm:$0xff]
    %v4668 = vld [vmem:[#allocation6 + $0x11d8] sm:$0xff]
    %v4669 = vld [vmem:[#allocation6 + $0x11e0] sm:$0xff]
    %v4670 = vld [vmem:[#allocation6 + $0x11e8] sm:$0xff]
    %v4671 = vld [vmem:[#allocation6 + $0x11f0] sm:$0xff]
    %v4672 = vld [vmem:[#allocation6 + $0x11f8] sm:$0xff]
    %v4673 = vld [vmem:[#allocation6 + $0x1200] sm:$0xff]
    %v4674 = vld [vmem:[#allocation6 + $0x1208] sm:$0xff]
    %v4675 = vld [vmem:[#allocation6 + $0x1210] sm:$0xff]
    %v4676 = vld [vmem:[#allocation6 + $0x1218] sm:$0xff]
    %v4677 = vld [vmem:[#allocation6 + $0x1220] sm:$0xff]
    %v4678 = vld [vmem:[#allocation6 + $0x1228] sm:$0xff]
    %v4679 = vld [vmem:[#allocation6 + $0x1230] sm:$0xff]
    %v4680 = vld [vmem:[#allocation6 + $0x1238] sm:$0xff]
    %v4681 = vld [vmem:[#allocation6 + $0x1240] sm:$0xff]
    %v4682 = vld [vmem:[#allocation6 + $0x1248] sm:$0xff]
    %v4683 = vld [vmem:[#allocation6 + $0x1250] sm:$0xff]
    %v4684 = vld [vmem:[#allocation6 + $0x1258] sm:$0xff]
    %v4685 = vld [vmem:[#allocation6 + $0x1260] sm:$0xff]
    %v4686 = vld [vmem:[#allocation6 + $0x1268] sm:$0xff]
    %v4687 = vld [vmem:[#allocation6 + $0x1270] sm:$0xff]
    %v4688 = vld [vmem:[#allocation6 + $0x1278] sm:$0xff]
    %v4689 = vld [vmem:[#allocation6 + $0x1280] sm:$0xff]
    %v4690 = vld [vmem:[#allocation6 + $0x1288] sm:$0xff]
    %v4691 = vld [vmem:[#allocation6 + $0x1290] sm:$0xff]
    %v4692 = vld [vmem:[#allocation6 + $0x1298] sm:$0xff]
    %v4693 = vld [vmem:[#allocation6 + $0x12a0] sm:$0xff]
    %v4694 = vld [vmem:[#allocation6 + $0x12a8] sm:$0xff]
    %v4695 = vld [vmem:[#allocation6 + $0x12b0] sm:$0xff]
    %v4696 = vld [vmem:[#allocation6 + $0x12b8] sm:$0xff]
    %v4697 = vld [vmem:[#allocation6 + $0x12c0] sm:$0xff]
    %v4698 = vld [vmem:[#allocation6 + $0x12c8] sm:$0xff]
    %v4699 = vld [vmem:[#allocation6 + $0x12d0] sm:$0xff]
    %v4700 = vld [vmem:[#allocation6 + $0x12d8] sm:$0xff]
    %v4701 = vld [vmem:[#allocation6 + $0x12e0] sm:$0xff]
    %v4702 = vld [vmem:[#allocation6 + $0x12e8] sm:$0xff]
    %v4703 = vld [vmem:[#allocation6 + $0x12f0] sm:$0xff]
    %v4704 = vld [vmem:[#allocation6 + $0x12f8] sm:$0xff]
    %v4705 = vld [vmem:[#allocation6 + $0x1300] sm:$0xff]
    %v4706 = vld [vmem:[#allocation6 + $0x1308] sm:$0xff]
    %v4707 = vld [vmem:[#allocation6 + $0x1310] sm:$0xff]
    %v4708 = vld [vmem:[#allocation6 + $0x1318] sm:$0xff]
    %v4709 = vld [vmem:[#allocation6 + $0x1320] sm:$0xff]
    %v4710 = vld [vmem:[#allocation6 + $0x1328] sm:$0xff]
    %v4711 = vld [vmem:[#allocation6 + $0x1330] sm:$0xff]
    %v4712 = vld [vmem:[#allocation6 + $0x1338] sm:$0xff]
    %v4713 = vld [vmem:[#allocation6 + $0x1340] sm:$0xff]
    %v4714 = vld [vmem:[#allocation6 + $0x1348] sm:$0xff]
    %v4715 = vld [vmem:[#allocation6 + $0x1350] sm:$0xff]
    %v4716 = vld [vmem:[#allocation6 + $0x1358] sm:$0xff]
    %v4717 = vld [vmem:[#allocation6 + $0x1360] sm:$0xff]
    %v4718 = vld [vmem:[#allocation6 + $0x1368] sm:$0xff]
    %v4719 = vld [vmem:[#allocation6 + $0x1370] sm:$0xff]
    %v4720 = vld [vmem:[#allocation6 + $0x1378] sm:$0xff]
    %v4721 = vld [vmem:[#allocation6 + $0x1380] sm:$0xff]
    %v4722 = vld [vmem:[#allocation6 + $0x1388] sm:$0xff]
    %v4723 = vld [vmem:[#allocation6 + $0x1390] sm:$0xff]
    %v4724 = vld [vmem:[#allocation6 + $0x1398] sm:$0xff]
    %v4725 = vld [vmem:[#allocation6 + $0x13a0] sm:$0xff]
    %v4726 = vld [vmem:[#allocation6 + $0x13a8] sm:$0xff]
    %v4727 = vld [vmem:[#allocation6 + $0x13b0] sm:$0xff]
    %v4728 = vld [vmem:[#allocation6 + $0x13b8] sm:$0xff]
    %v4729 = vld [vmem:[#allocation6 + $0x13c0] sm:$0xff]
    %v4730 = vld [vmem:[#allocation6 + $0x13c8] sm:$0xff]
    %v4731 = vld [vmem:[#allocation6 + $0x13d0] sm:$0xff]
    %v4732 = vld [vmem:[#allocation6 + $0x13d8] sm:$0xff]
    %v4733 = vld [vmem:[#allocation6 + $0x13e0] sm:$0xff]
    %v4734 = vld [vmem:[#allocation6 + $0x13e8] sm:$0xff]
    %v4735 = vld [vmem:[#allocation6 + $0x13f0] sm:$0xff]
    %v4736 = vld [vmem:[#allocation6 + $0x13f8] sm:$0xff]
    %v4737 = vld [vmem:[#allocation6 + $0x1400] sm:$0xff]
    %v4738 = vld [vmem:[#allocation6 + $0x1408] sm:$0xff]
    %v4739 = vld [vmem:[#allocation6 + $0x1410] sm:$0xff]
    %v4740 = vld [vmem:[#allocation6 + $0x1418] sm:$0xff]
    %v4741 = vld [vmem:[#allocation6 + $0x1420] sm:$0xff]
    %v4742 = vld [vmem:[#allocation6 + $0x1428] sm:$0xff]
    %v4743 = vld [vmem:[#allocation6 + $0x1430] sm:$0xff]
    %v4744 = vld [vmem:[#allocation6 + $0x1438] sm:$0xff]
    %v4745 = vld [vmem:[#allocation6 + $0x1440] sm:$0xff]
    %v4746 = vld [vmem:[#allocation6 + $0x1448] sm:$0xff]
    %v4747 = vld [vmem:[#allocation6 + $0x1450] sm:$0xff]
    %v4748 = vld [vmem:[#allocation6 + $0x1458] sm:$0xff]
    %v4749 = vld [vmem:[#allocation6 + $0x1460] sm:$0xff]
    %v4750 = vld [vmem:[#allocation6 + $0x1468] sm:$0xff]
    %v4751 = vld [vmem:[#allocation6 + $0x1470] sm:$0xff]
    %v4752 = vld [vmem:[#allocation6 + $0x1478] sm:$0xff]
    %v4753 = vld [vmem:[#allocation6 + $0x1480] sm:$0xff]
    %v4754 = vld [vmem:[#allocation6 + $0x1488] sm:$0xff]
    %v4755 = vld [vmem:[#allocation6 + $0x1490] sm:$0xff]
    %v4756 = vld [vmem:[#allocation6 + $0x1498] sm:$0xff]
    %v4757 = vld [vmem:[#allocation6 + $0x14a0] sm:$0xff]
    %v4758 = vld [vmem:[#allocation6 + $0x14a8] sm:$0xff]
    %v4759 = vld [vmem:[#allocation6 + $0x14b0] sm:$0xff]
    %v4760 = vld [vmem:[#allocation6 + $0x14b8] sm:$0xff]
    %v4761 = vld [vmem:[#allocation6 + $0x14c0] sm:$0xff]
    %v4762 = vld [vmem:[#allocation6 + $0x14c8] sm:$0xff]
    %v4763 = vld [vmem:[#allocation6 + $0x14d0] sm:$0xff]
    %v4764 = vld [vmem:[#allocation6 + $0x14d8] sm:$0xff]
    %v4765 = vld [vmem:[#allocation6 + $0x14e0] sm:$0xff]
    %v4766 = vld [vmem:[#allocation6 + $0x14e8] sm:$0xff]
    %v4767 = vld [vmem:[#allocation6 + $0x14f0] sm:$0xff]
    %v4768 = vld [vmem:[#allocation6 + $0x14f8] sm:$0xff]
    %v4769 = vld [vmem:[#allocation6 + $0x1500] sm:$0xff]
    %v4770 = vld [vmem:[#allocation6 + $0x1508] sm:$0xff]
    %v4771 = vld [vmem:[#allocation6 + $0x1510] sm:$0xff]
    %v4772 = vld [vmem:[#allocation6 + $0x1518] sm:$0xff]
    %v4773 = vld [vmem:[#allocation6 + $0x1520] sm:$0xff]
    %v4774 = vld [vmem:[#allocation6 + $0x1528] sm:$0xff]
    %v4775 = vld [vmem:[#allocation6 + $0x1530] sm:$0xff]
    %v4776 = vld [vmem:[#allocation6 + $0x1538] sm:$0xff]
    %v4777 = vld [vmem:[#allocation6 + $0x1540] sm:$0xff]
    %v4778 = vld [vmem:[#allocation6 + $0x1548] sm:$0xff]
    %v4779 = vld [vmem:[#allocation6 + $0x1550] sm:$0xff]
    %v4780 = vld [vmem:[#allocation6 + $0x1558] sm:$0xff]
    %v4781 = vld [vmem:[#allocation6 + $0x1560] sm:$0xff]
    %v4782 = vld [vmem:[#allocation6 + $0x1568] sm:$0xff]
    %v4783 = vld [vmem:[#allocation6 + $0x1570] sm:$0xff]
    %v4784 = vld [vmem:[#allocation6 + $0x1578] sm:$0xff]
    %v4785 = vld [vmem:[#allocation6 + $0x1580] sm:$0xff]
    %v4786 = vld [vmem:[#allocation6 + $0x1588] sm:$0xff]
    %v4787 = vld [vmem:[#allocation6 + $0x1590] sm:$0xff]
    %v4788 = vld [vmem:[#allocation6 + $0x1598] sm:$0xff]
    %v4789 = vld [vmem:[#allocation6 + $0x15a0] sm:$0xff]
    %v4790 = vld [vmem:[#allocation6 + $0x15a8] sm:$0xff]
    %v4791 = vld [vmem:[#allocation6 + $0x15b0] sm:$0xff]
    %v4792 = vld [vmem:[#allocation6 + $0x15b8] sm:$0xff]
    %v4793 = vld [vmem:[#allocation6 + $0x15c0] sm:$0xff]
    %v4794 = vld [vmem:[#allocation6 + $0x15c8] sm:$0xff]
    %v4795 = vld [vmem:[#allocation6 + $0x15d0] sm:$0xff]
    %v4796 = vld [vmem:[#allocation6 + $0x15d8] sm:$0xff]
    %v4797 = vld [vmem:[#allocation6 + $0x15e0] sm:$0xff]
    %v4798 = vld [vmem:[#allocation6 + $0x15e8] sm:$0xff]
    %v4799 = vld [vmem:[#allocation6 + $0x15f0] sm:$0xff]
    %v4800 = vld [vmem:[#allocation6 + $0x15f8] sm:$0xff]
    %v4801 = vld [vmem:[#allocation6 + $0x1600] sm:$0xff]
    %v4802 = vld [vmem:[#allocation6 + $0x1608] sm:$0xff]
    %v4803 = vld [vmem:[#allocation6 + $0x1610] sm:$0xff]
    %v4804 = vld [vmem:[#allocation6 + $0x1618] sm:$0xff]
    %v4805 = vld [vmem:[#allocation6 + $0x1620] sm:$0xff]
    %v4806 = vld [vmem:[#allocation6 + $0x1628] sm:$0xff]
    %v4807 = vld [vmem:[#allocation6 + $0x1630] sm:$0xff]
    %v4808 = vld [vmem:[#allocation6 + $0x1638] sm:$0xff]
    %v4809 = vld [vmem:[#allocation6 + $0x1640] sm:$0xff]
    %v4810 = vld [vmem:[#allocation6 + $0x1648] sm:$0xff]
    %v4811 = vld [vmem:[#allocation6 + $0x1650] sm:$0xff]
    %v4812 = vld [vmem:[#allocation6 + $0x1658] sm:$0xff]
    %v4813 = vld [vmem:[#allocation6 + $0x1660] sm:$0xff]
    %v4814 = vld [vmem:[#allocation6 + $0x1668] sm:$0xff]
    %v4815 = vld [vmem:[#allocation6 + $0x1670] sm:$0xff]
    %v4816 = vld [vmem:[#allocation6 + $0x1678] sm:$0xff]
    %v4817 = vld [vmem:[#allocation6 + $0x1680] sm:$0xff]
    %v4818 = vld [vmem:[#allocation6 + $0x1688] sm:$0xff]
    %v4819 = vld [vmem:[#allocation6 + $0x1690] sm:$0xff]
    %v4820 = vld [vmem:[#allocation6 + $0x1698] sm:$0xff]
    %v4821 = vld [vmem:[#allocation6 + $0x16a0] sm:$0xff]
    %v4822 = vld [vmem:[#allocation6 + $0x16a8] sm:$0xff]
    %v4823 = vld [vmem:[#allocation6 + $0x16b0] sm:$0xff]
    %v4824 = vld [vmem:[#allocation6 + $0x16b8] sm:$0xff]
    %v4825 = vld [vmem:[#allocation6 + $0x16c0] sm:$0xff]
    %v4826 = vld [vmem:[#allocation6 + $0x16c8] sm:$0xff]
    %v4827 = vld [vmem:[#allocation6 + $0x16d0] sm:$0xff]
    %v4828 = vld [vmem:[#allocation6 + $0x16d8] sm:$0xff]
    %v4829 = vld [vmem:[#allocation6 + $0x16e0] sm:$0xff]
    %v4830 = vld [vmem:[#allocation6 + $0x16e8] sm:$0xff]
    %v4831 = vld [vmem:[#allocation6 + $0x16f0] sm:$0xff]
    %v4832 = vld [vmem:[#allocation6 + $0x16f8] sm:$0xff]
    %v4833 = vld [vmem:[#allocation6 + $0x1700] sm:$0xff]
    %v4834 = vld [vmem:[#allocation6 + $0x1708] sm:$0xff]
    %v4835 = vld [vmem:[#allocation6 + $0x1710] sm:$0xff]
    %v4836 = vld [vmem:[#allocation6 + $0x1718] sm:$0xff]
    %v4837 = vld [vmem:[#allocation6 + $0x1720] sm:$0xff]
    %v4838 = vld [vmem:[#allocation6 + $0x1728] sm:$0xff]
    %v4839 = vld [vmem:[#allocation6 + $0x1730] sm:$0xff]
    %v4840 = vld [vmem:[#allocation6 + $0x1738] sm:$0xff]
    %v4841 = vld [vmem:[#allocation6 + $0x1740] sm:$0xff]
    %v4842 = vld [vmem:[#allocation6 + $0x1748] sm:$0xff]
    %v4843 = vld [vmem:[#allocation6 + $0x1750] sm:$0xff]
    %v4844 = vld [vmem:[#allocation6 + $0x1758] sm:$0xff]
    %v4845 = vld [vmem:[#allocation6 + $0x1760] sm:$0xff]
    %v4846 = vld [vmem:[#allocation6 + $0x1768] sm:$0xff]
    %v4847 = vld [vmem:[#allocation6 + $0x1770] sm:$0xff]
    %v4848 = vld [vmem:[#allocation6 + $0x1778] sm:$0xff]
    %v4849 = vld [vmem:[#allocation6 + $0x1780] sm:$0xff]
    %v4850 = vld [vmem:[#allocation6 + $0x1788] sm:$0xff]
    %v4851 = vld [vmem:[#allocation6 + $0x1790] sm:$0xff]
    %v4852 = vld [vmem:[#allocation6 + $0x1798] sm:$0xff]
    %v4853 = vld [vmem:[#allocation6 + $0x17a0] sm:$0xff]
    %v4854 = vld [vmem:[#allocation6 + $0x17a8] sm:$0xff]
    %v4855 = vld [vmem:[#allocation6 + $0x17b0] sm:$0xff]
    %v4856 = vld [vmem:[#allocation6 + $0x17b8] sm:$0xff]
    %v4857 = vld [vmem:[#allocation6 + $0x17c0] sm:$0xff]
    %v4858 = vld [vmem:[#allocation6 + $0x17c8] sm:$0xff]
    %v4859 = vld [vmem:[#allocation6 + $0x17d0] sm:$0xff]
    %v4860 = vld [vmem:[#allocation6 + $0x17d8] sm:$0xff]
    %v4861 = vld [vmem:[#allocation6 + $0x17e0] sm:$0xff]
    %v4862 = vld [vmem:[#allocation6 + $0x17e8] sm:$0xff]
    %v4863 = vld [vmem:[#allocation6 + $0x17f0] sm:$0xff]
    %v4864 = vld [vmem:[#allocation6 + $0x17f8] sm:$0xff]
    %v4865 = vld [vmem:[#allocation6 + $0x1800] sm:$0xff]
    %v4866 = vld [vmem:[#allocation6 + $0x1808] sm:$0xff]
    %v4867 = vld [vmem:[#allocation6 + $0x1810] sm:$0xff]
    %v4868 = vld [vmem:[#allocation6 + $0x1818] sm:$0xff]
    %v4869 = vld [vmem:[#allocation6 + $0x1820] sm:$0xff]
    %v4870 = vld [vmem:[#allocation6 + $0x1828] sm:$0xff]
    %v4871 = vld [vmem:[#allocation6 + $0x1830] sm:$0xff]
    %v4872 = vld [vmem:[#allocation6 + $0x1838] sm:$0xff]
    %v4873 = vld [vmem:[#allocation6 + $0x1840] sm:$0xff]
    %v4874 = vld [vmem:[#allocation6 + $0x1848] sm:$0xff]
    %v4875 = vld [vmem:[#allocation6 + $0x1850] sm:$0xff]
    %v4876 = vld [vmem:[#allocation6 + $0x1858] sm:$0xff]
    %v4877 = vld [vmem:[#allocation6 + $0x1860] sm:$0xff]
    %v4878 = vld [vmem:[#allocation6 + $0x1868] sm:$0xff]
    %v4879 = vld [vmem:[#allocation6 + $0x1870] sm:$0xff]
    %v4880 = vld [vmem:[#allocation6 + $0x1878] sm:$0xff]
    %v4881 = vld [vmem:[#allocation6 + $0x1880] sm:$0xff]
    %v4882 = vld [vmem:[#allocation6 + $0x1888] sm:$0xff]
    %v4883 = vld [vmem:[#allocation6 + $0x1890] sm:$0xff]
    %v4884 = vld [vmem:[#allocation6 + $0x1898] sm:$0xff]
    %v4885 = vld [vmem:[#allocation6 + $0x18a0] sm:$0xff]
    %v4886 = vld [vmem:[#allocation6 + $0x18a8] sm:$0xff]
    %v4887 = vld [vmem:[#allocation6 + $0x18b0] sm:$0xff]
    %v4888 = vld [vmem:[#allocation6 + $0x18b8] sm:$0xff]
    %v4889 = vld [vmem:[#allocation6 + $0x18c0] sm:$0xff]
    %v4890 = vld [vmem:[#allocation6 + $0x18c8] sm:$0xff]
    %v4891 = vld [vmem:[#allocation6 + $0x18d0] sm:$0xff]
    %v4892 = vld [vmem:[#allocation6 + $0x18d8] sm:$0xff]
    %v4893 = vld [vmem:[#allocation6 + $0x18e0] sm:$0xff]
    %v4894 = vld [vmem:[#allocation6 + $0x18e8] sm:$0xff]
    %v4895 = vld [vmem:[#allocation6 + $0x18f0] sm:$0xff]
    %v4896 = vld [vmem:[#allocation6 + $0x18f8] sm:$0xff]
    %v4897 = vld [vmem:[#allocation6 + $0x1900] sm:$0xff]
    %v4898 = vld [vmem:[#allocation6 + $0x1908] sm:$0xff]
    %v4899 = vld [vmem:[#allocation6 + $0x1910] sm:$0xff]
    %v4900 = vld [vmem:[#allocation6 + $0x1918] sm:$0xff]
    %v4901 = vld [vmem:[#allocation6 + $0x1920] sm:$0xff]
    %v4902 = vld [vmem:[#allocation6 + $0x1928] sm:$0xff]
    %v4903 = vld [vmem:[#allocation6 + $0x1930] sm:$0xff]
    %v4904 = vld [vmem:[#allocation6 + $0x1938] sm:$0xff]
    %v4905 = vld [vmem:[#allocation6 + $0x1940] sm:$0xff]
    %v4906 = vld [vmem:[#allocation6 + $0x1948] sm:$0xff]
    %v4907 = vld [vmem:[#allocation6 + $0x1950] sm:$0xff]
    %v4908 = vld [vmem:[#allocation6 + $0x1958] sm:$0xff]
    %v4909 = vld [vmem:[#allocation6 + $0x1960] sm:$0xff]
    %v4910 = vld [vmem:[#allocation6 + $0x1968] sm:$0xff]
    %v4911 = vld [vmem:[#allocation6 + $0x1970] sm:$0xff]
    %v4912 = vld [vmem:[#allocation6 + $0x1978] sm:$0xff]
    %v4913 = vld [vmem:[#allocation6 + $0x1980] sm:$0xff]
    %v4914 = vld [vmem:[#allocation6 + $0x1988] sm:$0xff]
    %v4915 = vld [vmem:[#allocation6 + $0x1990] sm:$0xff]
    %v4916 = vld [vmem:[#allocation6 + $0x1998] sm:$0xff]
    %v4917 = vld [vmem:[#allocation6 + $0x19a0] sm:$0xff]
    %v4918 = vld [vmem:[#allocation6 + $0x19a8] sm:$0xff]
    %v4919 = vld [vmem:[#allocation6 + $0x19b0] sm:$0xff]
    %v4920 = vld [vmem:[#allocation6 + $0x19b8] sm:$0xff]
    %v4921 = vld [vmem:[#allocation6 + $0x19c0] sm:$0xff]
    %v4922 = vld [vmem:[#allocation6 + $0x19c8] sm:$0xff]
    %v4923 = vld [vmem:[#allocation6 + $0x19d0] sm:$0xff]
    %v4924 = vld [vmem:[#allocation6 + $0x19d8] sm:$0xff]
    %v4925 = vld [vmem:[#allocation6 + $0x19e0] sm:$0xff]
    %v4926 = vld [vmem:[#allocation6 + $0x19e8] sm:$0xff]
    %v4927 = vld [vmem:[#allocation6 + $0x19f0] sm:$0xff]
    %v4928 = vld [vmem:[#allocation6 + $0x19f8] sm:$0xff]
    %v4929 = vld [vmem:[#allocation6 + $0x1a00] sm:$0xff]
    %v4930 = vld [vmem:[#allocation6 + $0x1a08] sm:$0xff]
    %v4931 = vld [vmem:[#allocation6 + $0x1a10] sm:$0xff]
    %v4932 = vld [vmem:[#allocation6 + $0x1a18] sm:$0xff]
    %v4933 = vld [vmem:[#allocation6 + $0x1a20] sm:$0xff]
    %v4934 = vld [vmem:[#allocation6 + $0x1a28] sm:$0xff]
    %v4935 = vld [vmem:[#allocation6 + $0x1a30] sm:$0xff]
    %v4936 = vld [vmem:[#allocation6 + $0x1a38] sm:$0xff]
    %v4937 = vld [vmem:[#allocation6 + $0x1a40] sm:$0xff]
    %v4938 = vld [vmem:[#allocation6 + $0x1a48] sm:$0xff]
    %v4939 = vld [vmem:[#allocation6 + $0x1a50] sm:$0xff]
    %v4940 = vld [vmem:[#allocation6 + $0x1a58] sm:$0xff]
    %v4941 = vld [vmem:[#allocation6 + $0x1a60] sm:$0xff]
    %v4942 = vld [vmem:[#allocation6 + $0x1a68] sm:$0xff]
    %v4943 = vld [vmem:[#allocation6 + $0x1a70] sm:$0xff]
    %v4944 = vld [vmem:[#allocation6 + $0x1a78] sm:$0xff]
    %v4945 = vld [vmem:[#allocation6 + $0x1a80] sm:$0xff]
    %v4946 = vld [vmem:[#allocation6 + $0x1a88] sm:$0xff]
    %v4947 = vld [vmem:[#allocation6 + $0x1a90] sm:$0xff]
    %v4948 = vld [vmem:[#allocation6 + $0x1a98] sm:$0xff]
    %v4949 = vld [vmem:[#allocation6 + $0x1aa0] sm:$0xff]
    %v4950 = vld [vmem:[#allocation6 + $0x1aa8] sm:$0xff]
    %v4951 = vld [vmem:[#allocation6 + $0x1ab0] sm:$0xff]
    %v4952 = vld [vmem:[#allocation6 + $0x1ab8] sm:$0xff]
    %v4953 = vld [vmem:[#allocation6 + $0x1ac0] sm:$0xff]
    %v4954 = vld [vmem:[#allocation6 + $0x1ac8] sm:$0xff]
    %v4955 = vld [vmem:[#allocation6 + $0x1ad0] sm:$0xff]
    %v4956 = vld [vmem:[#allocation6 + $0x1ad8] sm:$0xff]
    %v4957 = vld [vmem:[#allocation6 + $0x1ae0] sm:$0xff]
    %v4958 = vld [vmem:[#allocation6 + $0x1ae8] sm:$0xff]
    %v4959 = vld [vmem:[#allocation6 + $0x1af0] sm:$0xff]
    %v4960 = vld [vmem:[#allocation6 + $0x1af8] sm:$0xff]
    %v4961 = vld [vmem:[#allocation6 + $0x1b00] sm:$0xff]
    %v4962 = vld [vmem:[#allocation6 + $0x1b08] sm:$0xff]
    %v4963 = vld [vmem:[#allocation6 + $0x1b10] sm:$0xff]
    %v4964 = vld [vmem:[#allocation6 + $0x1b18] sm:$0xff]
    %v4965 = vld [vmem:[#allocation6 + $0x1b20] sm:$0xff]
    %v4966 = vld [vmem:[#allocation6 + $0x1b28] sm:$0xff]
    %v4967 = vld [vmem:[#allocation6 + $0x1b30] sm:$0xff]
    %v4968 = vld [vmem:[#allocation6 + $0x1b38] sm:$0xff]
    %v4969 = vld [vmem:[#allocation6 + $0x1b40] sm:$0xff]
    %v4970 = vld [vmem:[#allocation6 + $0x1b48] sm:$0xff]
    %v4971 = vld [vmem:[#allocation6 + $0x1b50] sm:$0xff]
    %v4972 = vld [vmem:[#allocation6 + $0x1b58] sm:$0xff]
    %v4973 = vld [vmem:[#allocation6 + $0x1b60] sm:$0xff]
    %v4974 = vld [vmem:[#allocation6 + $0x1b68] sm:$0xff]
    %v4975 = vld [vmem:[#allocation6 + $0x1b70] sm:$0xff]
    %v4976 = vld [vmem:[#allocation6 + $0x1b78] sm:$0xff]
    %v4977 = vld [vmem:[#allocation6 + $0x1b80] sm:$0xff]
    %v4978 = vld [vmem:[#allocation6 + $0x1b88] sm:$0xff]
    %v4979 = vld [vmem:[#allocation6 + $0x1b90] sm:$0xff]
    %v4980 = vld [vmem:[#allocation6 + $0x1b98] sm:$0xff]
    %v4981 = vld [vmem:[#allocation6 + $0x1ba0] sm:$0xff]
    %v4982 = vld [vmem:[#allocation6 + $0x1ba8] sm:$0xff]
    %v4983 = vld [vmem:[#allocation6 + $0x1bb0] sm:$0xff]
    %v4984 = vld [vmem:[#allocation6 + $0x1bb8] sm:$0xff]
    %v4985 = vld [vmem:[#allocation6 + $0x1bc0] sm:$0xff]
    %v4986 = vld [vmem:[#allocation6 + $0x1bc8] sm:$0xff]
    %v4987 = vld [vmem:[#allocation6 + $0x1bd0] sm:$0xff]
    %v4988 = vld [vmem:[#allocation6 + $0x1bd8] sm:$0xff]
    %v4989 = vld [vmem:[#allocation6 + $0x1be0] sm:$0xff]
    %v4990 = vld [vmem:[#allocation6 + $0x1be8] sm:$0xff]
    %v4991 = vld [vmem:[#allocation6 + $0x1bf0] sm:$0xff]
    %v4992 = vld [vmem:[#allocation6 + $0x1bf8] sm:$0xff]
    %v4993 = vld [vmem:[#allocation6 + $0x1c00] sm:$0xff]
    %v4994 = vld [vmem:[#allocation6 + $0x1c08] sm:$0xff]
    %v4995 = vld [vmem:[#allocation6 + $0x1c10] sm:$0xff]
    %v4996 = vld [vmem:[#allocation6 + $0x1c18] sm:$0xff]
    %v4997 = vld [vmem:[#allocation6 + $0x1c20] sm:$0xff]
    %v4998 = vld [vmem:[#allocation6 + $0x1c28] sm:$0xff]
    %v4999 = vld [vmem:[#allocation6 + $0x1c30] sm:$0xff]
    %v5000 = vld [vmem:[#allocation6 + $0x1c38] sm:$0xff]
    %v5001 = vld [vmem:[#allocation6 + $0x1c40] sm:$0xff]
    %v5002 = vld [vmem:[#allocation6 + $0x1c48] sm:$0xff]
    %v5003 = vld [vmem:[#allocation6 + $0x1c50] sm:$0xff]
    %v5004 = vld [vmem:[#allocation6 + $0x1c58] sm:$0xff]
    %v5005 = vld [vmem:[#allocation6 + $0x1c60] sm:$0xff]
    %v5006 = vld [vmem:[#allocation6 + $0x1c68] sm:$0xff]
    %v5007 = vld [vmem:[#allocation6 + $0x1c70] sm:$0xff]
    %v5008 = vld [vmem:[#allocation6 + $0x1c78] sm:$0xff]
    %v5009 = vld [vmem:[#allocation6 + $0x1c80] sm:$0xff]
    %v5010 = vld [vmem:[#allocation6 + $0x1c88] sm:$0xff]
    %v5011 = vld [vmem:[#allocation6 + $0x1c90] sm:$0xff]
    %v5012 = vld [vmem:[#allocation6 + $0x1c98] sm:$0xff]
    %v5013 = vld [vmem:[#allocation6 + $0x1ca0] sm:$0xff]
    %v5014 = vld [vmem:[#allocation6 + $0x1ca8] sm:$0xff]
    %v5015 = vld [vmem:[#allocation6 + $0x1cb0] sm:$0xff]
    %v5016 = vld [vmem:[#allocation6 + $0x1cb8] sm:$0xff]
    %v5017 = vld [vmem:[#allocation6 + $0x1cc0] sm:$0xff]
    %v5018 = vld [vmem:[#allocation6 + $0x1cc8] sm:$0xff]
    %v5019 = vld [vmem:[#allocation6 + $0x1cd0] sm:$0xff]
    %v5020 = vld [vmem:[#allocation6 + $0x1cd8] sm:$0xff]
    %v5021 = vld [vmem:[#allocation6 + $0x1ce0] sm:$0xff]
    %v5022 = vld [vmem:[#allocation6 + $0x1ce8] sm:$0xff]
    %v5023 = vld [vmem:[#allocation6 + $0x1cf0] sm:$0xff]
    %v5024 = vld [vmem:[#allocation6 + $0x1cf8] sm:$0xff]
    %v5025 = vld [vmem:[#allocation6 + $0x1d00] sm:$0xff]
    %v5026 = vld [vmem:[#allocation6 + $0x1d08] sm:$0xff]
    %v5027 = vld [vmem:[#allocation6 + $0x1d10] sm:$0xff]
    %v5028 = vld [vmem:[#allocation6 + $0x1d18] sm:$0xff]
    %v5029 = vld [vmem:[#allocation6 + $0x1d20] sm:$0xff]
    %v5030 = vld [vmem:[#allocation6 + $0x1d28] sm:$0xff]
    %v5031 = vld [vmem:[#allocation6 + $0x1d30] sm:$0xff]
    %v5032 = vld [vmem:[#allocation6 + $0x1d38] sm:$0xff]
    %v5033 = vld [vmem:[#allocation6 + $0x1d40] sm:$0xff]
    %v5034 = vld [vmem:[#allocation6 + $0x1d48] sm:$0xff]
    %v5035 = vld [vmem:[#allocation6 + $0x1d50] sm:$0xff]
    %v5036 = vld [vmem:[#allocation6 + $0x1d58] sm:$0xff]
    %v5037 = vld [vmem:[#allocation6 + $0x1d60] sm:$0xff]
    %v5038 = vld [vmem:[#allocation6 + $0x1d68] sm:$0xff]
    %v5039 = vld [vmem:[#allocation6 + $0x1d70] sm:$0xff]
    %v5040 = vld [vmem:[#allocation6 + $0x1d78] sm:$0xff]
    %v5041 = vld [vmem:[#allocation6 + $0x1d80] sm:$0xff]
    %v5042 = vld [vmem:[#allocation6 + $0x1d88] sm:$0xff]
    %v5043 = vld [vmem:[#allocation6 + $0x1d90] sm:$0xff]
    %v5044 = vld [vmem:[#allocation6 + $0x1d98] sm:$0xff]
    %v5045 = vld [vmem:[#allocation6 + $0x1da0] sm:$0xff]
    %v5046 = vld [vmem:[#allocation6 + $0x1da8] sm:$0xff]
    %v5047 = vld [vmem:[#allocation6 + $0x1db0] sm:$0xff]
    %v5048 = vld [vmem:[#allocation6 + $0x1db8] sm:$0xff]
    %v5049 = vld [vmem:[#allocation6 + $0x1dc0] sm:$0xff]
    %v5050 = vld [vmem:[#allocation6 + $0x1dc8] sm:$0xff]
    %v5051 = vld [vmem:[#allocation6 + $0x1dd0] sm:$0xff]
    %v5052 = vld [vmem:[#allocation6 + $0x1dd8] sm:$0xff]
    %v5053 = vld [vmem:[#allocation6 + $0x1de0] sm:$0xff]
    %v5054 = vld [vmem:[#allocation6 + $0x1de8] sm:$0xff]
    %v5055 = vld [vmem:[#allocation6 + $0x1df0] sm:$0xff]
    %v5056 = vld [vmem:[#allocation6 + $0x1df8] sm:$0xff]
    %v5057 = vld [vmem:[#allocation6 + $0x1e00] sm:$0xff]
    %v5058 = vld [vmem:[#allocation6 + $0x1e08] sm:$0xff]
    %v5059 = vld [vmem:[#allocation6 + $0x1e10] sm:$0xff]
    %v5060 = vld [vmem:[#allocation6 + $0x1e18] sm:$0xff]
    %v5061 = vld [vmem:[#allocation6 + $0x1e20] sm:$0xff]
    %v5062 = vld [vmem:[#allocation6 + $0x1e28] sm:$0xff]
    %v5063 = vld [vmem:[#allocation6 + $0x1e30] sm:$0xff]
    %v5064 = vld [vmem:[#allocation6 + $0x1e38] sm:$0xff]
    %v5065 = vld [vmem:[#allocation6 + $0x1e40] sm:$0xff]
    %v5066 = vld [vmem:[#allocation6 + $0x1e48] sm:$0xff]
    %v5067 = vld [vmem:[#allocation6 + $0x1e50] sm:$0xff]
    %v5068 = vld [vmem:[#allocation6 + $0x1e58] sm:$0xff]
    %v5069 = vld [vmem:[#allocation6 + $0x1e60] sm:$0xff]
    %v5070 = vld [vmem:[#allocation6 + $0x1e68] sm:$0xff]
    %v5071 = vld [vmem:[#allocation6 + $0x1e70] sm:$0xff]
    %v5072 = vld [vmem:[#allocation6 + $0x1e78] sm:$0xff]
    %v5073 = vld [vmem:[#allocation6 + $0x1e80] sm:$0xff]
    %v5074 = vld [vmem:[#allocation6 + $0x1e88] sm:$0xff]
    %v5075 = vld [vmem:[#allocation6 + $0x1e90] sm:$0xff]
    %v5076 = vld [vmem:[#allocation6 + $0x1e98] sm:$0xff]
    %v5077 = vld [vmem:[#allocation6 + $0x1ea0] sm:$0xff]
    %v5078 = vld [vmem:[#allocation6 + $0x1ea8] sm:$0xff]
    %v5079 = vld [vmem:[#allocation6 + $0x1eb0] sm:$0xff]
    %v5080 = vld [vmem:[#allocation6 + $0x1eb8] sm:$0xff]
    %v5081 = vld [vmem:[#allocation6 + $0x1ec0] sm:$0xff]
    %v5082 = vld [vmem:[#allocation6 + $0x1ec8] sm:$0xff]
    %v5083 = vld [vmem:[#allocation6 + $0x1ed0] sm:$0xff]
    %v5084 = vld [vmem:[#allocation6 + $0x1ed8] sm:$0xff]
    %v5085 = vld [vmem:[#allocation6 + $0x1ee0] sm:$0xff]
    %v5086 = vld [vmem:[#allocation6 + $0x1ee8] sm:$0xff]
    %v5087 = vld [vmem:[#allocation6 + $0x1ef0] sm:$0xff]
    %v5088 = vld [vmem:[#allocation6 + $0x1ef8] sm:$0xff]
    %v5089 = vld [vmem:[#allocation6 + $0x1f00] sm:$0xff]
    %v5090 = vld [vmem:[#allocation6 + $0x1f08] sm:$0xff]
    %v5091 = vld [vmem:[#allocation6 + $0x1f10] sm:$0xff]
    %v5092 = vld [vmem:[#allocation6 + $0x1f18] sm:$0xff]
    %v5093 = vld [vmem:[#allocation6 + $0x1f20] sm:$0xff]
    %v5094 = vld [vmem:[#allocation6 + $0x1f28] sm:$0xff]
    %v5095 = vld [vmem:[#allocation6 + $0x1f30] sm:$0xff]
    %v5096 = vld [vmem:[#allocation6 + $0x1f38] sm:$0xff]
    %v5097 = vld [vmem:[#allocation6 + $0x1f40] sm:$0xff]
    %v5098 = vld [vmem:[#allocation6 + $0x1f48] sm:$0xff]
    %v5099 = vld [vmem:[#allocation6 + $0x1f50] sm:$0xff]
    %v5100 = vld [vmem:[#allocation6 + $0x1f58] sm:$0xff]
    %v5101 = vld [vmem:[#allocation6 + $0x1f60] sm:$0xff]
    %v5102 = vld [vmem:[#allocation6 + $0x1f68] sm:$0xff]
    %v5103 = vld [vmem:[#allocation6 + $0x1f70] sm:$0xff]
    %v5104 = vld [vmem:[#allocation6 + $0x1f78] sm:$0xff]
    %v5105 = vld [vmem:[#allocation6 + $0x1f80] sm:$0xff]
    %v5106 = vld [vmem:[#allocation6 + $0x1f88] sm:$0xff]
    %v5107 = vld [vmem:[#allocation6 + $0x1f90] sm:$0xff]
    %v5108 = vld [vmem:[#allocation6 + $0x1f98] sm:$0xff]
    %v5109 = vld [vmem:[#allocation6 + $0x1fa0] sm:$0xff]
    %v5110 = vld [vmem:[#allocation6 + $0x1fa8] sm:$0xff]
    %v5111 = vld [vmem:[#allocation6 + $0x1fb0] sm:$0xff]
    %v5112 = vld [vmem:[#allocation6 + $0x1fb8] sm:$0xff]
    %v5113 = vld [vmem:[#allocation6 + $0x1fc0] sm:$0xff]
    %v5114 = vld [vmem:[#allocation6 + $0x1fc8] sm:$0xff]
    %v5115 = vld [vmem:[#allocation6 + $0x1fd0] sm:$0xff]
    %v5116 = vld [vmem:[#allocation6 + $0x1fd8] sm:$0xff]
    %v5117 = vld [vmem:[#allocation6 + $0x1fe0] sm:$0xff]
    %v5118 = vld [vmem:[#allocation6 + $0x1fe8] sm:$0xff]
    %v5119 = vld [vmem:[#allocation6 + $0x1ff0] sm:$0xff]
    %v5120 = vld [vmem:[#allocation6 + $0x1ff8] sm:$0xff]
    %v6145 = vunpack.c.l.b16 %v4097
    %v6146 = vunpack.c.h.b16 %v4097
    %v6147 = vunpack.c.l.b16 %v4098
    %v6148 = vunpack.c.h.b16 %v4098
    %v6149 = vunpack.c.l.b16 %v4099
    %v6150 = vunpack.c.h.b16 %v4099
    %v6151 = vunpack.c.l.b16 %v4100
    %v6152 = vunpack.c.h.b16 %v4100
    %v6153 = vunpack.c.l.b16 %v4101
    %v6154 = vunpack.c.h.b16 %v4101
    %v6155 = vunpack.c.l.b16 %v4102
    %v6156 = vunpack.c.h.b16 %v4102
    %v6157 = vunpack.c.l.b16 %v4103
    %v6158 = vunpack.c.h.b16 %v4103
    %v6159 = vunpack.c.l.b16 %v4104
    %v6160 = vunpack.c.h.b16 %v4104
    %v6161 = vunpack.c.l.b16 %v4105
    %v6162 = vunpack.c.h.b16 %v4105
    %v6163 = vunpack.c.l.b16 %v4106
    %v6164 = vunpack.c.h.b16 %v4106
    %v6165 = vunpack.c.l.b16 %v4107
    %v6166 = vunpack.c.h.b16 %v4107
    %v6167 = vunpack.c.l.b16 %v4108
    %v6168 = vunpack.c.h.b16 %v4108
    %v6169 = vunpack.c.l.b16 %v4109
    %v6170 = vunpack.c.h.b16 %v4109
    %v6171 = vunpack.c.l.b16 %v4110
    %v6172 = vunpack.c.h.b16 %v4110
    %v6173 = vunpack.c.l.b16 %v4111
    %v6174 = vunpack.c.h.b16 %v4111
    %v6175 = vunpack.c.l.b16 %v4112
    %v6176 = vunpack.c.h.b16 %v4112
    %v6177 = vunpack.c.l.b16 %v4113
    %v6178 = vunpack.c.h.b16 %v4113
    %v6179 = vunpack.c.l.b16 %v4114
    %v6180 = vunpack.c.h.b16 %v4114
    %v6181 = vunpack.c.l.b16 %v4115
    %v6182 = vunpack.c.h.b16 %v4115
    %v6183 = vunpack.c.l.b16 %v4116
    %v6184 = vunpack.c.h.b16 %v4116
    %v6185 = vunpack.c.l.b16 %v4117
    %v6186 = vunpack.c.h.b16 %v4117
    %v6187 = vunpack.c.l.b16 %v4118
    %v6188 = vunpack.c.h.b16 %v4118
    %v6189 = vunpack.c.l.b16 %v4119
    %v6190 = vunpack.c.h.b16 %v4119
    %v6191 = vunpack.c.l.b16 %v4120
    %v6192 = vunpack.c.h.b16 %v4120
    %v6193 = vunpack.c.l.b16 %v4121
    %v6194 = vunpack.c.h.b16 %v4121
    %v6195 = vunpack.c.l.b16 %v4122
    %v6196 = vunpack.c.h.b16 %v4122
    %v6197 = vunpack.c.l.b16 %v4123
    %v6198 = vunpack.c.h.b16 %v4123
    %v6199 = vunpack.c.l.b16 %v4124
    %v6200 = vunpack.c.h.b16 %v4124
    %v6201 = vunpack.c.l.b16 %v4125
    %v6202 = vunpack.c.h.b16 %v4125
    %v6203 = vunpack.c.l.b16 %v4126
    %v6204 = vunpack.c.h.b16 %v4126
    %v6205 = vunpack.c.l.b16 %v4127
    %v6206 = vunpack.c.h.b16 %v4127
    %v6207 = vunpack.c.l.b16 %v4128
    %v6208 = vunpack.c.h.b16 %v4128
    %v6209 = vunpack.c.l.b16 %v4129
    %v6210 = vunpack.c.h.b16 %v4129
    %v6211 = vunpack.c.l.b16 %v4130
    %v6212 = vunpack.c.h.b16 %v4130
    %v6213 = vunpack.c.l.b16 %v4131
    %v6214 = vunpack.c.h.b16 %v4131
    %v6215 = vunpack.c.l.b16 %v4132
    %v6216 = vunpack.c.h.b16 %v4132
    %v6217 = vunpack.c.l.b16 %v4133
    %v6218 = vunpack.c.h.b16 %v4133
    %v6219 = vunpack.c.l.b16 %v4134
    %v6220 = vunpack.c.h.b16 %v4134
    %v6221 = vunpack.c.l.b16 %v4135
    %v6222 = vunpack.c.h.b16 %v4135
    %v6223 = vunpack.c.l.b16 %v4136
    %v6224 = vunpack.c.h.b16 %v4136
    %v6225 = vunpack.c.l.b16 %v4137
    %v6226 = vunpack.c.h.b16 %v4137
    %v6227 = vunpack.c.l.b16 %v4138
    %v6228 = vunpack.c.h.b16 %v4138
    %v6229 = vunpack.c.l.b16 %v4139
    %v6230 = vunpack.c.h.b16 %v4139
    %v6231 = vunpack.c.l.b16 %v4140
    %v6232 = vunpack.c.h.b16 %v4140
    %v6233 = vunpack.c.l.b16 %v4141
    %v6234 = vunpack.c.h.b16 %v4141
    %v6235 = vunpack.c.l.b16 %v4142
    %v6236 = vunpack.c.h.b16 %v4142
    %v6237 = vunpack.c.l.b16 %v4143
    %v6238 = vunpack.c.h.b16 %v4143
    %v6239 = vunpack.c.l.b16 %v4144
    %v6240 = vunpack.c.h.b16 %v4144
    %v6241 = vunpack.c.l.b16 %v4145
    %v6242 = vunpack.c.h.b16 %v4145
    %v6243 = vunpack.c.l.b16 %v4146
    %v6244 = vunpack.c.h.b16 %v4146
    %v6245 = vunpack.c.l.b16 %v4147
    %v6246 = vunpack.c.h.b16 %v4147
    %v6247 = vunpack.c.l.b16 %v4148
    %v6248 = vunpack.c.h.b16 %v4148
    %v6249 = vunpack.c.l.b16 %v4149
    %v6250 = vunpack.c.h.b16 %v4149
    %v6251 = vunpack.c.l.b16 %v4150
    %v6252 = vunpack.c.h.b16 %v4150
    %v6253 = vunpack.c.l.b16 %v4151
    %v6254 = vunpack.c.h.b16 %v4151
    %v6255 = vunpack.c.l.b16 %v4152
    %v6256 = vunpack.c.h.b16 %v4152
    %v6257 = vunpack.c.l.b16 %v4153
    %v6258 = vunpack.c.h.b16 %v4153
    %v6259 = vunpack.c.l.b16 %v4154
    %v6260 = vunpack.c.h.b16 %v4154
    %v6261 = vunpack.c.l.b16 %v4155
    %v6262 = vunpack.c.h.b16 %v4155
    %v6263 = vunpack.c.l.b16 %v4156
    %v6264 = vunpack.c.h.b16 %v4156
    %v6265 = vunpack.c.l.b16 %v4157
    %v6266 = vunpack.c.h.b16 %v4157
    %v6267 = vunpack.c.l.b16 %v4158
    %v6268 = vunpack.c.h.b16 %v4158
    %v6269 = vunpack.c.l.b16 %v4159
    %v6270 = vunpack.c.h.b16 %v4159
    %v6271 = vunpack.c.l.b16 %v4160
    %v6272 = vunpack.c.h.b16 %v4160
    %v6273 = vunpack.c.l.b16 %v4161
    %v6274 = vunpack.c.h.b16 %v4161
    %v6275 = vunpack.c.l.b16 %v4162
    %v6276 = vunpack.c.h.b16 %v4162
    %v6277 = vunpack.c.l.b16 %v4163
    %v6278 = vunpack.c.h.b16 %v4163
    %v6279 = vunpack.c.l.b16 %v4164
    %v6280 = vunpack.c.h.b16 %v4164
    %v6281 = vunpack.c.l.b16 %v4165
    %v6282 = vunpack.c.h.b16 %v4165
    %v6283 = vunpack.c.l.b16 %v4166
    %v6284 = vunpack.c.h.b16 %v4166
    %v6285 = vunpack.c.l.b16 %v4167
    %v6286 = vunpack.c.h.b16 %v4167
    %v6287 = vunpack.c.l.b16 %v4168
    %v6288 = vunpack.c.h.b16 %v4168
    %v6289 = vunpack.c.l.b16 %v4169
    %v6290 = vunpack.c.h.b16 %v4169
    %v6291 = vunpack.c.l.b16 %v4170
    %v6292 = vunpack.c.h.b16 %v4170
    %v6293 = vunpack.c.l.b16 %v4171
    %v6294 = vunpack.c.h.b16 %v4171
    %v6295 = vunpack.c.l.b16 %v4172
    %v6296 = vunpack.c.h.b16 %v4172
    %v6297 = vunpack.c.l.b16 %v4173
    %v6298 = vunpack.c.h.b16 %v4173
    %v6299 = vunpack.c.l.b16 %v4174
    %v6300 = vunpack.c.h.b16 %v4174
    %v6301 = vunpack.c.l.b16 %v4175
    %v6302 = vunpack.c.h.b16 %v4175
    %v6303 = vunpack.c.l.b16 %v4176
    %v6304 = vunpack.c.h.b16 %v4176
    %v6305 = vunpack.c.l.b16 %v4177
    %v6306 = vunpack.c.h.b16 %v4177
    %v6307 = vunpack.c.l.b16 %v4178
    %v6308 = vunpack.c.h.b16 %v4178
    %v6309 = vunpack.c.l.b16 %v4179
    %v6310 = vunpack.c.h.b16 %v4179
    %v6311 = vunpack.c.l.b16 %v4180
    %v6312 = vunpack.c.h.b16 %v4180
    %v6313 = vunpack.c.l.b16 %v4181
    %v6314 = vunpack.c.h.b16 %v4181
    %v6315 = vunpack.c.l.b16 %v4182
    %v6316 = vunpack.c.h.b16 %v4182
    %v6317 = vunpack.c.l.b16 %v4183
    %v6318 = vunpack.c.h.b16 %v4183
    %v6319 = vunpack.c.l.b16 %v4184
    %v6320 = vunpack.c.h.b16 %v4184
    %v6321 = vunpack.c.l.b16 %v4185
    %v6322 = vunpack.c.h.b16 %v4185
    %v6323 = vunpack.c.l.b16 %v4186
    %v6324 = vunpack.c.h.b16 %v4186
    %v6325 = vunpack.c.l.b16 %v4187
    %v6326 = vunpack.c.h.b16 %v4187
    %v6327 = vunpack.c.l.b16 %v4188
    %v6328 = vunpack.c.h.b16 %v4188
    %v6329 = vunpack.c.l.b16 %v4189
    %v6330 = vunpack.c.h.b16 %v4189
    %v6331 = vunpack.c.l.b16 %v4190
    %v6332 = vunpack.c.h.b16 %v4190
    %v6333 = vunpack.c.l.b16 %v4191
    %v6334 = vunpack.c.h.b16 %v4191
    %v6335 = vunpack.c.l.b16 %v4192
    %v6336 = vunpack.c.h.b16 %v4192
    %v6337 = vunpack.c.l.b16 %v4193
    %v6338 = vunpack.c.h.b16 %v4193
    %v6339 = vunpack.c.l.b16 %v4194
    %v6340 = vunpack.c.h.b16 %v4194
    %v6341 = vunpack.c.l.b16 %v4195
    %v6342 = vunpack.c.h.b16 %v4195
    %v6343 = vunpack.c.l.b16 %v4196
    %v6344 = vunpack.c.h.b16 %v4196
    %v6345 = vunpack.c.l.b16 %v4197
    %v6346 = vunpack.c.h.b16 %v4197
    %v6347 = vunpack.c.l.b16 %v4198
    %v6348 = vunpack.c.h.b16 %v4198
    %v6349 = vunpack.c.l.b16 %v4199
    %v6350 = vunpack.c.h.b16 %v4199
    %v6351 = vunpack.c.l.b16 %v4200
    %v6352 = vunpack.c.h.b16 %v4200
    %v6353 = vunpack.c.l.b16 %v4201
    %v6354 = vunpack.c.h.b16 %v4201
    %v6355 = vunpack.c.l.b16 %v4202
    %v6356 = vunpack.c.h.b16 %v4202
    %v6357 = vunpack.c.l.b16 %v4203
    %v6358 = vunpack.c.h.b16 %v4203
    %v6359 = vunpack.c.l.b16 %v4204
    %v6360 = vunpack.c.h.b16 %v4204
    %v6361 = vunpack.c.l.b16 %v4205
    %v6362 = vunpack.c.h.b16 %v4205
    %v6363 = vunpack.c.l.b16 %v4206
    %v6364 = vunpack.c.h.b16 %v4206
    %v6365 = vunpack.c.l.b16 %v4207
    %v6366 = vunpack.c.h.b16 %v4207
    %v6367 = vunpack.c.l.b16 %v4208
    %v6368 = vunpack.c.h.b16 %v4208
    %v6369 = vunpack.c.l.b16 %v4209
    %v6370 = vunpack.c.h.b16 %v4209
    %v6371 = vunpack.c.l.b16 %v4210
    %v6372 = vunpack.c.h.b16 %v4210
    %v6373 = vunpack.c.l.b16 %v4211
    %v6374 = vunpack.c.h.b16 %v4211
    %v6375 = vunpack.c.l.b16 %v4212
    %v6376 = vunpack.c.h.b16 %v4212
    %v6377 = vunpack.c.l.b16 %v4213
    %v6378 = vunpack.c.h.b16 %v4213
    %v6379 = vunpack.c.l.b16 %v4214
    %v6380 = vunpack.c.h.b16 %v4214
    %v6381 = vunpack.c.l.b16 %v4215
    %v6382 = vunpack.c.h.b16 %v4215
    %v6383 = vunpack.c.l.b16 %v4216
    %v6384 = vunpack.c.h.b16 %v4216
    %v6385 = vunpack.c.l.b16 %v4217
    %v6386 = vunpack.c.h.b16 %v4217
    %v6387 = vunpack.c.l.b16 %v4218
    %v6388 = vunpack.c.h.b16 %v4218
    %v6389 = vunpack.c.l.b16 %v4219
    %v6390 = vunpack.c.h.b16 %v4219
    %v6391 = vunpack.c.l.b16 %v4220
    %v6392 = vunpack.c.h.b16 %v4220
    %v6393 = vunpack.c.l.b16 %v4221
    %v6394 = vunpack.c.h.b16 %v4221
    %v6395 = vunpack.c.l.b16 %v4222
    %v6396 = vunpack.c.h.b16 %v4222
    %v6397 = vunpack.c.l.b16 %v4223
    %v6398 = vunpack.c.h.b16 %v4223
    %v6399 = vunpack.c.l.b16 %v4224
    %v6400 = vunpack.c.h.b16 %v4224
    %v6401 = vunpack.c.l.b16 %v4225
    %v6402 = vunpack.c.h.b16 %v4225
    %v6403 = vunpack.c.l.b16 %v4226
    %v6404 = vunpack.c.h.b16 %v4226
    %v6405 = vunpack.c.l.b16 %v4227
    %v6406 = vunpack.c.h.b16 %v4227
    %v6407 = vunpack.c.l.b16 %v4228
    %v6408 = vunpack.c.h.b16 %v4228
    %v6409 = vunpack.c.l.b16 %v4229
    %v6410 = vunpack.c.h.b16 %v4229
    %v6411 = vunpack.c.l.b16 %v4230
    %v6412 = vunpack.c.h.b16 %v4230
    %v6413 = vunpack.c.l.b16 %v4231
    %v6414 = vunpack.c.h.b16 %v4231
    %v6415 = vunpack.c.l.b16 %v4232
    %v6416 = vunpack.c.h.b16 %v4232
    %v6417 = vunpack.c.l.b16 %v4233
    %v6418 = vunpack.c.h.b16 %v4233
    %v6419 = vunpack.c.l.b16 %v4234
    %v6420 = vunpack.c.h.b16 %v4234
    %v6421 = vunpack.c.l.b16 %v4235
    %v6422 = vunpack.c.h.b16 %v4235
    %v6423 = vunpack.c.l.b16 %v4236
    %v6424 = vunpack.c.h.b16 %v4236
    %v6425 = vunpack.c.l.b16 %v4237
    %v6426 = vunpack.c.h.b16 %v4237
    %v6427 = vunpack.c.l.b16 %v4238
    %v6428 = vunpack.c.h.b16 %v4238
    %v6429 = vunpack.c.l.b16 %v4239
    %v6430 = vunpack.c.h.b16 %v4239
    %v6431 = vunpack.c.l.b16 %v4240
    %v6432 = vunpack.c.h.b16 %v4240
    %v6433 = vunpack.c.l.b16 %v4241
    %v6434 = vunpack.c.h.b16 %v4241
    %v6435 = vunpack.c.l.b16 %v4242
    %v6436 = vunpack.c.h.b16 %v4242
    %v6437 = vunpack.c.l.b16 %v4243
    %v6438 = vunpack.c.h.b16 %v4243
    %v6439 = vunpack.c.l.b16 %v4244
    %v6440 = vunpack.c.h.b16 %v4244
    %v6441 = vunpack.c.l.b16 %v4245
    %v6442 = vunpack.c.h.b16 %v4245
    %v6443 = vunpack.c.l.b16 %v4246
    %v6444 = vunpack.c.h.b16 %v4246
    %v6445 = vunpack.c.l.b16 %v4247
    %v6446 = vunpack.c.h.b16 %v4247
    %v6447 = vunpack.c.l.b16 %v4248
    %v6448 = vunpack.c.h.b16 %v4248
    %v6449 = vunpack.c.l.b16 %v4249
    %v6450 = vunpack.c.h.b16 %v4249
    %v6451 = vunpack.c.l.b16 %v4250
    %v6452 = vunpack.c.h.b16 %v4250
    %v6453 = vunpack.c.l.b16 %v4251
    %v6454 = vunpack.c.h.b16 %v4251
    %v6455 = vunpack.c.l.b16 %v4252
    %v6456 = vunpack.c.h.b16 %v4252
    %v6457 = vunpack.c.l.b16 %v4253
    %v6458 = vunpack.c.h.b16 %v4253
    %v6459 = vunpack.c.l.b16 %v4254
    %v6460 = vunpack.c.h.b16 %v4254
    %v6461 = vunpack.c.l.b16 %v4255
    %v6462 = vunpack.c.h.b16 %v4255
    %v6463 = vunpack.c.l.b16 %v4256
    %v6464 = vunpack.c.h.b16 %v4256
    %v6465 = vunpack.c.l.b16 %v4257
    %v6466 = vunpack.c.h.b16 %v4257
    %v6467 = vunpack.c.l.b16 %v4258
    %v6468 = vunpack.c.h.b16 %v4258
    %v6469 = vunpack.c.l.b16 %v4259
    %v6470 = vunpack.c.h.b16 %v4259
    %v6471 = vunpack.c.l.b16 %v4260
    %v6472 = vunpack.c.h.b16 %v4260
    %v6473 = vunpack.c.l.b16 %v4261
    %v6474 = vunpack.c.h.b16 %v4261
    %v6475 = vunpack.c.l.b16 %v4262
    %v6476 = vunpack.c.h.b16 %v4262
    %v6477 = vunpack.c.l.b16 %v4263
    %v6478 = vunpack.c.h.b16 %v4263
    %v6479 = vunpack.c.l.b16 %v4264
    %v6480 = vunpack.c.h.b16 %v4264
    %v6481 = vunpack.c.l.b16 %v4265
    %v6482 = vunpack.c.h.b16 %v4265
    %v6483 = vunpack.c.l.b16 %v4266
    %v6484 = vunpack.c.h.b16 %v4266
    %v6485 = vunpack.c.l.b16 %v4267
    %v6486 = vunpack.c.h.b16 %v4267
    %v6487 = vunpack.c.l.b16 %v4268
    %v6488 = vunpack.c.h.b16 %v4268
    %v6489 = vunpack.c.l.b16 %v4269
    %v6490 = vunpack.c.h.b16 %v4269
    %v6491 = vunpack.c.l.b16 %v4270
    %v6492 = vunpack.c.h.b16 %v4270
    %v6493 = vunpack.c.l.b16 %v4271
    %v6494 = vunpack.c.h.b16 %v4271
    %v6495 = vunpack.c.l.b16 %v4272
    %v6496 = vunpack.c.h.b16 %v4272
    %v6497 = vunpack.c.l.b16 %v4273
    %v6498 = vunpack.c.h.b16 %v4273
    %v6499 = vunpack.c.l.b16 %v4274
    %v6500 = vunpack.c.h.b16 %v4274
    %v6501 = vunpack.c.l.b16 %v4275
    %v6502 = vunpack.c.h.b16 %v4275
    %v6503 = vunpack.c.l.b16 %v4276
    %v6504 = vunpack.c.h.b16 %v4276
    %v6505 = vunpack.c.l.b16 %v4277
    %v6506 = vunpack.c.h.b16 %v4277
    %v6507 = vunpack.c.l.b16 %v4278
    %v6508 = vunpack.c.h.b16 %v4278
    %v6509 = vunpack.c.l.b16 %v4279
    %v6510 = vunpack.c.h.b16 %v4279
    %v6511 = vunpack.c.l.b16 %v4280
    %v6512 = vunpack.c.h.b16 %v4280
    %v6513 = vunpack.c.l.b16 %v4281
    %v6514 = vunpack.c.h.b16 %v4281
    %v6515 = vunpack.c.l.b16 %v4282
    %v6516 = vunpack.c.h.b16 %v4282
    %v6517 = vunpack.c.l.b16 %v4283
    %v6518 = vunpack.c.h.b16 %v4283
    %v6519 = vunpack.c.l.b16 %v4284
    %v6520 = vunpack.c.h.b16 %v4284
    %v6521 = vunpack.c.l.b16 %v4285
    %v6522 = vunpack.c.h.b16 %v4285
    %v6523 = vunpack.c.l.b16 %v4286
    %v6524 = vunpack.c.h.b16 %v4286
    %v6525 = vunpack.c.l.b16 %v4287
    %v6526 = vunpack.c.h.b16 %v4287
    %v6527 = vunpack.c.l.b16 %v4288
    %v6528 = vunpack.c.h.b16 %v4288
    %v6529 = vunpack.c.l.b16 %v4289
    %v6530 = vunpack.c.h.b16 %v4289
    %v6531 = vunpack.c.l.b16 %v4290
    %v6532 = vunpack.c.h.b16 %v4290
    %v6533 = vunpack.c.l.b16 %v4291
    %v6534 = vunpack.c.h.b16 %v4291
    %v6535 = vunpack.c.l.b16 %v4292
    %v6536 = vunpack.c.h.b16 %v4292
    %v6537 = vunpack.c.l.b16 %v4293
    %v6538 = vunpack.c.h.b16 %v4293
    %v6539 = vunpack.c.l.b16 %v4294
    %v6540 = vunpack.c.h.b16 %v4294
    %v6541 = vunpack.c.l.b16 %v4295
    %v6542 = vunpack.c.h.b16 %v4295
    %v6543 = vunpack.c.l.b16 %v4296
    %v6544 = vunpack.c.h.b16 %v4296
    %v6545 = vunpack.c.l.b16 %v4297
    %v6546 = vunpack.c.h.b16 %v4297
    %v6547 = vunpack.c.l.b16 %v4298
    %v6548 = vunpack.c.h.b16 %v4298
    %v6549 = vunpack.c.l.b16 %v4299
    %v6550 = vunpack.c.h.b16 %v4299
    %v6551 = vunpack.c.l.b16 %v4300
    %v6552 = vunpack.c.h.b16 %v4300
    %v6553 = vunpack.c.l.b16 %v4301
    %v6554 = vunpack.c.h.b16 %v4301
    %v6555 = vunpack.c.l.b16 %v4302
    %v6556 = vunpack.c.h.b16 %v4302
    %v6557 = vunpack.c.l.b16 %v4303
    %v6558 = vunpack.c.h.b16 %v4303
    %v6559 = vunpack.c.l.b16 %v4304
    %v6560 = vunpack.c.h.b16 %v4304
    %v6561 = vunpack.c.l.b16 %v4305
    %v6562 = vunpack.c.h.b16 %v4305
    %v6563 = vunpack.c.l.b16 %v4306
    %v6564 = vunpack.c.h.b16 %v4306
    %v6565 = vunpack.c.l.b16 %v4307
    %v6566 = vunpack.c.h.b16 %v4307
    %v6567 = vunpack.c.l.b16 %v4308
    %v6568 = vunpack.c.h.b16 %v4308
    %v6569 = vunpack.c.l.b16 %v4309
    %v6570 = vunpack.c.h.b16 %v4309
    %v6571 = vunpack.c.l.b16 %v4310
    %v6572 = vunpack.c.h.b16 %v4310
    %v6573 = vunpack.c.l.b16 %v4311
    %v6574 = vunpack.c.h.b16 %v4311
    %v6575 = vunpack.c.l.b16 %v4312
    %v6576 = vunpack.c.h.b16 %v4312
    %v6577 = vunpack.c.l.b16 %v4313
    %v6578 = vunpack.c.h.b16 %v4313
    %v6579 = vunpack.c.l.b16 %v4314
    %v6580 = vunpack.c.h.b16 %v4314
    %v6581 = vunpack.c.l.b16 %v4315
    %v6582 = vunpack.c.h.b16 %v4315
    %v6583 = vunpack.c.l.b16 %v4316
    %v6584 = vunpack.c.h.b16 %v4316
    %v6585 = vunpack.c.l.b16 %v4317
    %v6586 = vunpack.c.h.b16 %v4317
    %v6587 = vunpack.c.l.b16 %v4318
    %v6588 = vunpack.c.h.b16 %v4318
    %v6589 = vunpack.c.l.b16 %v4319
    %v6590 = vunpack.c.h.b16 %v4319
    %v6591 = vunpack.c.l.b16 %v4320
    %v6592 = vunpack.c.h.b16 %v4320
    %v6593 = vunpack.c.l.b16 %v4321
    %v6594 = vunpack.c.h.b16 %v4321
    %v6595 = vunpack.c.l.b16 %v4322
    %v6596 = vunpack.c.h.b16 %v4322
    %v6597 = vunpack.c.l.b16 %v4323
    %v6598 = vunpack.c.h.b16 %v4323
    %v6599 = vunpack.c.l.b16 %v4324
    %v6600 = vunpack.c.h.b16 %v4324
    %v6601 = vunpack.c.l.b16 %v4325
    %v6602 = vunpack.c.h.b16 %v4325
    %v6603 = vunpack.c.l.b16 %v4326
    %v6604 = vunpack.c.h.b16 %v4326
    %v6605 = vunpack.c.l.b16 %v4327
    %v6606 = vunpack.c.h.b16 %v4327
    %v6607 = vunpack.c.l.b16 %v4328
    %v6608 = vunpack.c.h.b16 %v4328
    %v6609 = vunpack.c.l.b16 %v4329
    %v6610 = vunpack.c.h.b16 %v4329
    %v6611 = vunpack.c.l.b16 %v4330
    %v6612 = vunpack.c.h.b16 %v4330
    %v6613 = vunpack.c.l.b16 %v4331
    %v6614 = vunpack.c.h.b16 %v4331
    %v6615 = vunpack.c.l.b16 %v4332
    %v6616 = vunpack.c.h.b16 %v4332
    %v6617 = vunpack.c.l.b16 %v4333
    %v6618 = vunpack.c.h.b16 %v4333
    %v6619 = vunpack.c.l.b16 %v4334
    %v6620 = vunpack.c.h.b16 %v4334
    %v6621 = vunpack.c.l.b16 %v4335
    %v6622 = vunpack.c.h.b16 %v4335
    %v6623 = vunpack.c.l.b16 %v4336
    %v6624 = vunpack.c.h.b16 %v4336
    %v6625 = vunpack.c.l.b16 %v4337
    %v6626 = vunpack.c.h.b16 %v4337
    %v6627 = vunpack.c.l.b16 %v4338
    %v6628 = vunpack.c.h.b16 %v4338
    %v6629 = vunpack.c.l.b16 %v4339
    %v6630 = vunpack.c.h.b16 %v4339
    %v6631 = vunpack.c.l.b16 %v4340
    %v6632 = vunpack.c.h.b16 %v4340
    %v6633 = vunpack.c.l.b16 %v4341
    %v6634 = vunpack.c.h.b16 %v4341
    %v6635 = vunpack.c.l.b16 %v4342
    %v6636 = vunpack.c.h.b16 %v4342
    %v6637 = vunpack.c.l.b16 %v4343
    %v6638 = vunpack.c.h.b16 %v4343
    %v6639 = vunpack.c.l.b16 %v4344
    %v6640 = vunpack.c.h.b16 %v4344
    %v6641 = vunpack.c.l.b16 %v4345
    %v6642 = vunpack.c.h.b16 %v4345
    %v6643 = vunpack.c.l.b16 %v4346
    %v6644 = vunpack.c.h.b16 %v4346
    %v6645 = vunpack.c.l.b16 %v4347
    %v6646 = vunpack.c.h.b16 %v4347
    %v6647 = vunpack.c.l.b16 %v4348
    %v6648 = vunpack.c.h.b16 %v4348
    %v6649 = vunpack.c.l.b16 %v4349
    %v6650 = vunpack.c.h.b16 %v4349
    %v6651 = vunpack.c.l.b16 %v4350
    %v6652 = vunpack.c.h.b16 %v4350
    %v6653 = vunpack.c.l.b16 %v4351
    %v6654 = vunpack.c.h.b16 %v4351
    %v6655 = vunpack.c.l.b16 %v4352
    %v6656 = vunpack.c.h.b16 %v4352
    %v6657 = vunpack.c.l.b16 %v4353
    %v6658 = vunpack.c.h.b16 %v4353
    %v6659 = vunpack.c.l.b16 %v4354
    %v6660 = vunpack.c.h.b16 %v4354
    %v6661 = vunpack.c.l.b16 %v4355
    %v6662 = vunpack.c.h.b16 %v4355
    %v6663 = vunpack.c.l.b16 %v4356
    %v6664 = vunpack.c.h.b16 %v4356
    %v6665 = vunpack.c.l.b16 %v4357
    %v6666 = vunpack.c.h.b16 %v4357
    %v6667 = vunpack.c.l.b16 %v4358
    %v6668 = vunpack.c.h.b16 %v4358
    %v6669 = vunpack.c.l.b16 %v4359
    %v6670 = vunpack.c.h.b16 %v4359
    %v6671 = vunpack.c.l.b16 %v4360
    %v6672 = vunpack.c.h.b16 %v4360
    %v6673 = vunpack.c.l.b16 %v4361
    %v6674 = vunpack.c.h.b16 %v4361
    %v6675 = vunpack.c.l.b16 %v4362
    %v6676 = vunpack.c.h.b16 %v4362
    %v6677 = vunpack.c.l.b16 %v4363
    %v6678 = vunpack.c.h.b16 %v4363
    %v6679 = vunpack.c.l.b16 %v4364
    %v6680 = vunpack.c.h.b16 %v4364
    %v6681 = vunpack.c.l.b16 %v4365
    %v6682 = vunpack.c.h.b16 %v4365
    %v6683 = vunpack.c.l.b16 %v4366
    %v6684 = vunpack.c.h.b16 %v4366
    %v6685 = vunpack.c.l.b16 %v4367
    %v6686 = vunpack.c.h.b16 %v4367
    %v6687 = vunpack.c.l.b16 %v4368
    %v6688 = vunpack.c.h.b16 %v4368
    %v6689 = vunpack.c.l.b16 %v4369
    %v6690 = vunpack.c.h.b16 %v4369
    %v6691 = vunpack.c.l.b16 %v4370
    %v6692 = vunpack.c.h.b16 %v4370
    %v6693 = vunpack.c.l.b16 %v4371
    %v6694 = vunpack.c.h.b16 %v4371
    %v6695 = vunpack.c.l.b16 %v4372
    %v6696 = vunpack.c.h.b16 %v4372
    %v6697 = vunpack.c.l.b16 %v4373
    %v6698 = vunpack.c.h.b16 %v4373
    %v6699 = vunpack.c.l.b16 %v4374
    %v6700 = vunpack.c.h.b16 %v4374
    %v6701 = vunpack.c.l.b16 %v4375
    %v6702 = vunpack.c.h.b16 %v4375
    %v6703 = vunpack.c.l.b16 %v4376
    %v6704 = vunpack.c.h.b16 %v4376
    %v6705 = vunpack.c.l.b16 %v4377
    %v6706 = vunpack.c.h.b16 %v4377
    %v6707 = vunpack.c.l.b16 %v4378
    %v6708 = vunpack.c.h.b16 %v4378
    %v6709 = vunpack.c.l.b16 %v4379
    %v6710 = vunpack.c.h.b16 %v4379
    %v6711 = vunpack.c.l.b16 %v4380
    %v6712 = vunpack.c.h.b16 %v4380
    %v6713 = vunpack.c.l.b16 %v4381
    %v6714 = vunpack.c.h.b16 %v4381
    %v6715 = vunpack.c.l.b16 %v4382
    %v6716 = vunpack.c.h.b16 %v4382
    %v6717 = vunpack.c.l.b16 %v4383
    %v6718 = vunpack.c.h.b16 %v4383
    %v6719 = vunpack.c.l.b16 %v4384
    %v6720 = vunpack.c.h.b16 %v4384
    %v6721 = vunpack.c.l.b16 %v4385
    %v6722 = vunpack.c.h.b16 %v4385
    %v6723 = vunpack.c.l.b16 %v4386
    %v6724 = vunpack.c.h.b16 %v4386
    %v6725 = vunpack.c.l.b16 %v4387
    %v6726 = vunpack.c.h.b16 %v4387
    %v6727 = vunpack.c.l.b16 %v4388
    %v6728 = vunpack.c.h.b16 %v4388
    %v6729 = vunpack.c.l.b16 %v4389
    %v6730 = vunpack.c.h.b16 %v4389
    %v6731 = vunpack.c.l.b16 %v4390
    %v6732 = vunpack.c.h.b16 %v4390
    %v6733 = vunpack.c.l.b16 %v4391
    %v6734 = vunpack.c.h.b16 %v4391
    %v6735 = vunpack.c.l.b16 %v4392
    %v6736 = vunpack.c.h.b16 %v4392
    %v6737 = vunpack.c.l.b16 %v4393
    %v6738 = vunpack.c.h.b16 %v4393
    %v6739 = vunpack.c.l.b16 %v4394
    %v6740 = vunpack.c.h.b16 %v4394
    %v6741 = vunpack.c.l.b16 %v4395
    %v6742 = vunpack.c.h.b16 %v4395
    %v6743 = vunpack.c.l.b16 %v4396
    %v6744 = vunpack.c.h.b16 %v4396
    %v6745 = vunpack.c.l.b16 %v4397
    %v6746 = vunpack.c.h.b16 %v4397
    %v6747 = vunpack.c.l.b16 %v4398
    %v6748 = vunpack.c.h.b16 %v4398
    %v6749 = vunpack.c.l.b16 %v4399
    %v6750 = vunpack.c.h.b16 %v4399
    %v6751 = vunpack.c.l.b16 %v4400
    %v6752 = vunpack.c.h.b16 %v4400
    %v6753 = vunpack.c.l.b16 %v4401
    %v6754 = vunpack.c.h.b16 %v4401
    %v6755 = vunpack.c.l.b16 %v4402
    %v6756 = vunpack.c.h.b16 %v4402
    %v6757 = vunpack.c.l.b16 %v4403
    %v6758 = vunpack.c.h.b16 %v4403
    %v6759 = vunpack.c.l.b16 %v4404
    %v6760 = vunpack.c.h.b16 %v4404
    %v6761 = vunpack.c.l.b16 %v4405
    %v6762 = vunpack.c.h.b16 %v4405
    %v6763 = vunpack.c.l.b16 %v4406
    %v6764 = vunpack.c.h.b16 %v4406
    %v6765 = vunpack.c.l.b16 %v4407
    %v6766 = vunpack.c.h.b16 %v4407
    %v6767 = vunpack.c.l.b16 %v4408
    %v6768 = vunpack.c.h.b16 %v4408
    %v6769 = vunpack.c.l.b16 %v4409
    %v6770 = vunpack.c.h.b16 %v4409
    %v6771 = vunpack.c.l.b16 %v4410
    %v6772 = vunpack.c.h.b16 %v4410
    %v6773 = vunpack.c.l.b16 %v4411
    %v6774 = vunpack.c.h.b16 %v4411
    %v6775 = vunpack.c.l.b16 %v4412
    %v6776 = vunpack.c.h.b16 %v4412
    %v6777 = vunpack.c.l.b16 %v4413
    %v6778 = vunpack.c.h.b16 %v4413
    %v6779 = vunpack.c.l.b16 %v4414
    %v6780 = vunpack.c.h.b16 %v4414
    %v6781 = vunpack.c.l.b16 %v4415
    %v6782 = vunpack.c.h.b16 %v4415
    %v6783 = vunpack.c.l.b16 %v4416
    %v6784 = vunpack.c.h.b16 %v4416
    %v6785 = vunpack.c.l.b16 %v4417
    %v6786 = vunpack.c.h.b16 %v4417
    %v6787 = vunpack.c.l.b16 %v4418
    %v6788 = vunpack.c.h.b16 %v4418
    %v6789 = vunpack.c.l.b16 %v4419
    %v6790 = vunpack.c.h.b16 %v4419
    %v6791 = vunpack.c.l.b16 %v4420
    %v6792 = vunpack.c.h.b16 %v4420
    %v6793 = vunpack.c.l.b16 %v4421
    %v6794 = vunpack.c.h.b16 %v4421
    %v6795 = vunpack.c.l.b16 %v4422
    %v6796 = vunpack.c.h.b16 %v4422
    %v6797 = vunpack.c.l.b16 %v4423
    %v6798 = vunpack.c.h.b16 %v4423
    %v6799 = vunpack.c.l.b16 %v4424
    %v6800 = vunpack.c.h.b16 %v4424
    %v6801 = vunpack.c.l.b16 %v4425
    %v6802 = vunpack.c.h.b16 %v4425
    %v6803 = vunpack.c.l.b16 %v4426
    %v6804 = vunpack.c.h.b16 %v4426
    %v6805 = vunpack.c.l.b16 %v4427
    %v6806 = vunpack.c.h.b16 %v4427
    %v6807 = vunpack.c.l.b16 %v4428
    %v6808 = vunpack.c.h.b16 %v4428
    %v6809 = vunpack.c.l.b16 %v4429
    %v6810 = vunpack.c.h.b16 %v4429
    %v6811 = vunpack.c.l.b16 %v4430
    %v6812 = vunpack.c.h.b16 %v4430
    %v6813 = vunpack.c.l.b16 %v4431
    %v6814 = vunpack.c.h.b16 %v4431
    %v6815 = vunpack.c.l.b16 %v4432
    %v6816 = vunpack.c.h.b16 %v4432
    %v6817 = vunpack.c.l.b16 %v4433
    %v6818 = vunpack.c.h.b16 %v4433
    %v6819 = vunpack.c.l.b16 %v4434
    %v6820 = vunpack.c.h.b16 %v4434
    %v6821 = vunpack.c.l.b16 %v4435
    %v6822 = vunpack.c.h.b16 %v4435
    %v6823 = vunpack.c.l.b16 %v4436
    %v6824 = vunpack.c.h.b16 %v4436
    %v6825 = vunpack.c.l.b16 %v4437
    %v6826 = vunpack.c.h.b16 %v4437
    %v6827 = vunpack.c.l.b16 %v4438
    %v6828 = vunpack.c.h.b16 %v4438
    %v6829 = vunpack.c.l.b16 %v4439
    %v6830 = vunpack.c.h.b16 %v4439
    %v6831 = vunpack.c.l.b16 %v4440
    %v6832 = vunpack.c.h.b16 %v4440
    %v6833 = vunpack.c.l.b16 %v4441
    %v6834 = vunpack.c.h.b16 %v4441
    %v6835 = vunpack.c.l.b16 %v4442
    %v6836 = vunpack.c.h.b16 %v4442
    %v6837 = vunpack.c.l.b16 %v4443
    %v6838 = vunpack.c.h.b16 %v4443
    %v6839 = vunpack.c.l.b16 %v4444
    %v6840 = vunpack.c.h.b16 %v4444
    %v6841 = vunpack.c.l.b16 %v4445
    %v6842 = vunpack.c.h.b16 %v4445
    %v6843 = vunpack.c.l.b16 %v4446
    %v6844 = vunpack.c.h.b16 %v4446
    %v6845 = vunpack.c.l.b16 %v4447
    %v6846 = vunpack.c.h.b16 %v4447
    %v6847 = vunpack.c.l.b16 %v4448
    %v6848 = vunpack.c.h.b16 %v4448
    %v6849 = vunpack.c.l.b16 %v4449
    %v6850 = vunpack.c.h.b16 %v4449
    %v6851 = vunpack.c.l.b16 %v4450
    %v6852 = vunpack.c.h.b16 %v4450
    %v6853 = vunpack.c.l.b16 %v4451
    %v6854 = vunpack.c.h.b16 %v4451
    %v6855 = vunpack.c.l.b16 %v4452
    %v6856 = vunpack.c.h.b16 %v4452
    %v6857 = vunpack.c.l.b16 %v4453
    %v6858 = vunpack.c.h.b16 %v4453
    %v6859 = vunpack.c.l.b16 %v4454
    %v6860 = vunpack.c.h.b16 %v4454
    %v6861 = vunpack.c.l.b16 %v4455
    %v6862 = vunpack.c.h.b16 %v4455
    %v6863 = vunpack.c.l.b16 %v4456
    %v6864 = vunpack.c.h.b16 %v4456
    %v6865 = vunpack.c.l.b16 %v4457
    %v6866 = vunpack.c.h.b16 %v4457
    %v6867 = vunpack.c.l.b16 %v4458
    %v6868 = vunpack.c.h.b16 %v4458
    %v6869 = vunpack.c.l.b16 %v4459
    %v6870 = vunpack.c.h.b16 %v4459
    %v6871 = vunpack.c.l.b16 %v4460
    %v6872 = vunpack.c.h.b16 %v4460
    %v6873 = vunpack.c.l.b16 %v4461
    %v6874 = vunpack.c.h.b16 %v4461
    %v6875 = vunpack.c.l.b16 %v4462
    %v6876 = vunpack.c.h.b16 %v4462
    %v6877 = vunpack.c.l.b16 %v4463
    %v6878 = vunpack.c.h.b16 %v4463
    %v6879 = vunpack.c.l.b16 %v4464
    %v6880 = vunpack.c.h.b16 %v4464
    %v6881 = vunpack.c.l.b16 %v4465
    %v6882 = vunpack.c.h.b16 %v4465
    %v6883 = vunpack.c.l.b16 %v4466
    %v6884 = vunpack.c.h.b16 %v4466
    %v6885 = vunpack.c.l.b16 %v4467
    %v6886 = vunpack.c.h.b16 %v4467
    %v6887 = vunpack.c.l.b16 %v4468
    %v6888 = vunpack.c.h.b16 %v4468
    %v6889 = vunpack.c.l.b16 %v4469
    %v6890 = vunpack.c.h.b16 %v4469
    %v6891 = vunpack.c.l.b16 %v4470
    %v6892 = vunpack.c.h.b16 %v4470
    %v6893 = vunpack.c.l.b16 %v4471
    %v6894 = vunpack.c.h.b16 %v4471
    %v6895 = vunpack.c.l.b16 %v4472
    %v6896 = vunpack.c.h.b16 %v4472
    %v6897 = vunpack.c.l.b16 %v4473
    %v6898 = vunpack.c.h.b16 %v4473
    %v6899 = vunpack.c.l.b16 %v4474
    %v6900 = vunpack.c.h.b16 %v4474
    %v6901 = vunpack.c.l.b16 %v4475
    %v6902 = vunpack.c.h.b16 %v4475
    %v6903 = vunpack.c.l.b16 %v4476
    %v6904 = vunpack.c.h.b16 %v4476
    %v6905 = vunpack.c.l.b16 %v4477
    %v6906 = vunpack.c.h.b16 %v4477
    %v6907 = vunpack.c.l.b16 %v4478
    %v6908 = vunpack.c.h.b16 %v4478
    %v6909 = vunpack.c.l.b16 %v4479
    %v6910 = vunpack.c.h.b16 %v4479
    %v6911 = vunpack.c.l.b16 %v4480
    %v6912 = vunpack.c.h.b16 %v4480
    %v6913 = vunpack.c.l.b16 %v4481
    %v6914 = vunpack.c.h.b16 %v4481
    %v6915 = vunpack.c.l.b16 %v4482
    %v6916 = vunpack.c.h.b16 %v4482
    %v6917 = vunpack.c.l.b16 %v4483
    %v6918 = vunpack.c.h.b16 %v4483
    %v6919 = vunpack.c.l.b16 %v4484
    %v6920 = vunpack.c.h.b16 %v4484
    %v6921 = vunpack.c.l.b16 %v4485
    %v6922 = vunpack.c.h.b16 %v4485
    %v6923 = vunpack.c.l.b16 %v4486
    %v6924 = vunpack.c.h.b16 %v4486
    %v6925 = vunpack.c.l.b16 %v4487
    %v6926 = vunpack.c.h.b16 %v4487
    %v6927 = vunpack.c.l.b16 %v4488
    %v6928 = vunpack.c.h.b16 %v4488
    %v6929 = vunpack.c.l.b16 %v4489
    %v6930 = vunpack.c.h.b16 %v4489
    %v6931 = vunpack.c.l.b16 %v4490
    %v6932 = vunpack.c.h.b16 %v4490
    %v6933 = vunpack.c.l.b16 %v4491
    %v6934 = vunpack.c.h.b16 %v4491
    %v6935 = vunpack.c.l.b16 %v4492
    %v6936 = vunpack.c.h.b16 %v4492
    %v6937 = vunpack.c.l.b16 %v4493
    %v6938 = vunpack.c.h.b16 %v4493
    %v6939 = vunpack.c.l.b16 %v4494
    %v6940 = vunpack.c.h.b16 %v4494
    %v6941 = vunpack.c.l.b16 %v4495
    %v6942 = vunpack.c.h.b16 %v4495
    %v6943 = vunpack.c.l.b16 %v4496
    %v6944 = vunpack.c.h.b16 %v4496
    %v6945 = vunpack.c.l.b16 %v4497
    %v6946 = vunpack.c.h.b16 %v4497
    %v6947 = vunpack.c.l.b16 %v4498
    %v6948 = vunpack.c.h.b16 %v4498
    %v6949 = vunpack.c.l.b16 %v4499
    %v6950 = vunpack.c.h.b16 %v4499
    %v6951 = vunpack.c.l.b16 %v4500
    %v6952 = vunpack.c.h.b16 %v4500
    %v6953 = vunpack.c.l.b16 %v4501
    %v6954 = vunpack.c.h.b16 %v4501
    %v6955 = vunpack.c.l.b16 %v4502
    %v6956 = vunpack.c.h.b16 %v4502
    %v6957 = vunpack.c.l.b16 %v4503
    %v6958 = vunpack.c.h.b16 %v4503
    %v6959 = vunpack.c.l.b16 %v4504
    %v6960 = vunpack.c.h.b16 %v4504
    %v6961 = vunpack.c.l.b16 %v4505
    %v6962 = vunpack.c.h.b16 %v4505
    %v6963 = vunpack.c.l.b16 %v4506
    %v6964 = vunpack.c.h.b16 %v4506
    %v6965 = vunpack.c.l.b16 %v4507
    %v6966 = vunpack.c.h.b16 %v4507
    %v6967 = vunpack.c.l.b16 %v4508
    %v6968 = vunpack.c.h.b16 %v4508
    %v6969 = vunpack.c.l.b16 %v4509
    %v6970 = vunpack.c.h.b16 %v4509
    %v6971 = vunpack.c.l.b16 %v4510
    %v6972 = vunpack.c.h.b16 %v4510
    %v6973 = vunpack.c.l.b16 %v4511
    %v6974 = vunpack.c.h.b16 %v4511
    %v6975 = vunpack.c.l.b16 %v4512
    %v6976 = vunpack.c.h.b16 %v4512
    %v6977 = vunpack.c.l.b16 %v4513
    %v6978 = vunpack.c.h.b16 %v4513
    %v6979 = vunpack.c.l.b16 %v4514
    %v6980 = vunpack.c.h.b16 %v4514
    %v6981 = vunpack.c.l.b16 %v4515
    %v6982 = vunpack.c.h.b16 %v4515
    %v6983 = vunpack.c.l.b16 %v4516
    %v6984 = vunpack.c.h.b16 %v4516
    %v6985 = vunpack.c.l.b16 %v4517
    %v6986 = vunpack.c.h.b16 %v4517
    %v6987 = vunpack.c.l.b16 %v4518
    %v6988 = vunpack.c.h.b16 %v4518
    %v6989 = vunpack.c.l.b16 %v4519
    %v6990 = vunpack.c.h.b16 %v4519
    %v6991 = vunpack.c.l.b16 %v4520
    %v6992 = vunpack.c.h.b16 %v4520
    %v6993 = vunpack.c.l.b16 %v4521
    %v6994 = vunpack.c.h.b16 %v4521
    %v6995 = vunpack.c.l.b16 %v4522
    %v6996 = vunpack.c.h.b16 %v4522
    %v6997 = vunpack.c.l.b16 %v4523
    %v6998 = vunpack.c.h.b16 %v4523
    %v6999 = vunpack.c.l.b16 %v4524
    %v7000 = vunpack.c.h.b16 %v4524
    %v7001 = vunpack.c.l.b16 %v4525
    %v7002 = vunpack.c.h.b16 %v4525
    %v7003 = vunpack.c.l.b16 %v4526
    %v7004 = vunpack.c.h.b16 %v4526
    %v7005 = vunpack.c.l.b16 %v4527
    %v7006 = vunpack.c.h.b16 %v4527
    %v7007 = vunpack.c.l.b16 %v4528
    %v7008 = vunpack.c.h.b16 %v4528
    %v7009 = vunpack.c.l.b16 %v4529
    %v7010 = vunpack.c.h.b16 %v4529
    %v7011 = vunpack.c.l.b16 %v4530
    %v7012 = vunpack.c.h.b16 %v4530
    %v7013 = vunpack.c.l.b16 %v4531
    %v7014 = vunpack.c.h.b16 %v4531
    %v7015 = vunpack.c.l.b16 %v4532
    %v7016 = vunpack.c.h.b16 %v4532
    %v7017 = vunpack.c.l.b16 %v4533
    %v7018 = vunpack.c.h.b16 %v4533
    %v7019 = vunpack.c.l.b16 %v4534
    %v7020 = vunpack.c.h.b16 %v4534
    %v7021 = vunpack.c.l.b16 %v4535
    %v7022 = vunpack.c.h.b16 %v4535
    %v7023 = vunpack.c.l.b16 %v4536
    %v7024 = vunpack.c.h.b16 %v4536
    %v7025 = vunpack.c.l.b16 %v4537
    %v7026 = vunpack.c.h.b16 %v4537
    %v7027 = vunpack.c.l.b16 %v4538
    %v7028 = vunpack.c.h.b16 %v4538
    %v7029 = vunpack.c.l.b16 %v4539
    %v7030 = vunpack.c.h.b16 %v4539
    %v7031 = vunpack.c.l.b16 %v4540
    %v7032 = vunpack.c.h.b16 %v4540
    %v7033 = vunpack.c.l.b16 %v4541
    %v7034 = vunpack.c.h.b16 %v4541
    %v7035 = vunpack.c.l.b16 %v4542
    %v7036 = vunpack.c.h.b16 %v4542
    %v7037 = vunpack.c.l.b16 %v4543
    %v7038 = vunpack.c.h.b16 %v4543
    %v7039 = vunpack.c.l.b16 %v4544
    %v7040 = vunpack.c.h.b16 %v4544
    %v7041 = vunpack.c.l.b16 %v4545
    %v7042 = vunpack.c.h.b16 %v4545
    %v7043 = vunpack.c.l.b16 %v4546
    %v7044 = vunpack.c.h.b16 %v4546
    %v7045 = vunpack.c.l.b16 %v4547
    %v7046 = vunpack.c.h.b16 %v4547
    %v7047 = vunpack.c.l.b16 %v4548
    %v7048 = vunpack.c.h.b16 %v4548
    %v7049 = vunpack.c.l.b16 %v4549
    %v7050 = vunpack.c.h.b16 %v4549
    %v7051 = vunpack.c.l.b16 %v4550
    %v7052 = vunpack.c.h.b16 %v4550
    %v7053 = vunpack.c.l.b16 %v4551
    %v7054 = vunpack.c.h.b16 %v4551
    %v7055 = vunpack.c.l.b16 %v4552
    %v7056 = vunpack.c.h.b16 %v4552
    %v7057 = vunpack.c.l.b16 %v4553
    %v7058 = vunpack.c.h.b16 %v4553
    %v7059 = vunpack.c.l.b16 %v4554
    %v7060 = vunpack.c.h.b16 %v4554
    %v7061 = vunpack.c.l.b16 %v4555
    %v7062 = vunpack.c.h.b16 %v4555
    %v7063 = vunpack.c.l.b16 %v4556
    %v7064 = vunpack.c.h.b16 %v4556
    %v7065 = vunpack.c.l.b16 %v4557
    %v7066 = vunpack.c.h.b16 %v4557
    %v7067 = vunpack.c.l.b16 %v4558
    %v7068 = vunpack.c.h.b16 %v4558
    %v7069 = vunpack.c.l.b16 %v4559
    %v7070 = vunpack.c.h.b16 %v4559
    %v7071 = vunpack.c.l.b16 %v4560
    %v7072 = vunpack.c.h.b16 %v4560
    %v7073 = vunpack.c.l.b16 %v4561
    %v7074 = vunpack.c.h.b16 %v4561
    %v7075 = vunpack.c.l.b16 %v4562
    %v7076 = vunpack.c.h.b16 %v4562
    %v7077 = vunpack.c.l.b16 %v4563
    %v7078 = vunpack.c.h.b16 %v4563
    %v7079 = vunpack.c.l.b16 %v4564
    %v7080 = vunpack.c.h.b16 %v4564
    %v7081 = vunpack.c.l.b16 %v4565
    %v7082 = vunpack.c.h.b16 %v4565
    %v7083 = vunpack.c.l.b16 %v4566
    %v7084 = vunpack.c.h.b16 %v4566
    %v7085 = vunpack.c.l.b16 %v4567
    %v7086 = vunpack.c.h.b16 %v4567
    %v7087 = vunpack.c.l.b16 %v4568
    %v7088 = vunpack.c.h.b16 %v4568
    %v7089 = vunpack.c.l.b16 %v4569
    %v7090 = vunpack.c.h.b16 %v4569
    %v7091 = vunpack.c.l.b16 %v4570
    %v7092 = vunpack.c.h.b16 %v4570
    %v7093 = vunpack.c.l.b16 %v4571
    %v7094 = vunpack.c.h.b16 %v4571
    %v7095 = vunpack.c.l.b16 %v4572
    %v7096 = vunpack.c.h.b16 %v4572
    %v7097 = vunpack.c.l.b16 %v4573
    %v7098 = vunpack.c.h.b16 %v4573
    %v7099 = vunpack.c.l.b16 %v4574
    %v7100 = vunpack.c.h.b16 %v4574
    %v7101 = vunpack.c.l.b16 %v4575
    %v7102 = vunpack.c.h.b16 %v4575
    %v7103 = vunpack.c.l.b16 %v4576
    %v7104 = vunpack.c.h.b16 %v4576
    %v7105 = vunpack.c.l.b16 %v4577
    %v7106 = vunpack.c.h.b16 %v4577
    %v7107 = vunpack.c.l.b16 %v4578
    %v7108 = vunpack.c.h.b16 %v4578
    %v7109 = vunpack.c.l.b16 %v4579
    %v7110 = vunpack.c.h.b16 %v4579
    %v7111 = vunpack.c.l.b16 %v4580
    %v7112 = vunpack.c.h.b16 %v4580
    %v7113 = vunpack.c.l.b16 %v4581
    %v7114 = vunpack.c.h.b16 %v4581
    %v7115 = vunpack.c.l.b16 %v4582
    %v7116 = vunpack.c.h.b16 %v4582
    %v7117 = vunpack.c.l.b16 %v4583
    %v7118 = vunpack.c.h.b16 %v4583
    %v7119 = vunpack.c.l.b16 %v4584
    %v7120 = vunpack.c.h.b16 %v4584
    %v7121 = vunpack.c.l.b16 %v4585
    %v7122 = vunpack.c.h.b16 %v4585
    %v7123 = vunpack.c.l.b16 %v4586
    %v7124 = vunpack.c.h.b16 %v4586
    %v7125 = vunpack.c.l.b16 %v4587
    %v7126 = vunpack.c.h.b16 %v4587
    %v7127 = vunpack.c.l.b16 %v4588
    %v7128 = vunpack.c.h.b16 %v4588
    %v7129 = vunpack.c.l.b16 %v4589
    %v7130 = vunpack.c.h.b16 %v4589
    %v7131 = vunpack.c.l.b16 %v4590
    %v7132 = vunpack.c.h.b16 %v4590
    %v7133 = vunpack.c.l.b16 %v4591
    %v7134 = vunpack.c.h.b16 %v4591
    %v7135 = vunpack.c.l.b16 %v4592
    %v7136 = vunpack.c.h.b16 %v4592
    %v7137 = vunpack.c.l.b16 %v4593
    %v7138 = vunpack.c.h.b16 %v4593
    %v7139 = vunpack.c.l.b16 %v4594
    %v7140 = vunpack.c.h.b16 %v4594
    %v7141 = vunpack.c.l.b16 %v4595
    %v7142 = vunpack.c.h.b16 %v4595
    %v7143 = vunpack.c.l.b16 %v4596
    %v7144 = vunpack.c.h.b16 %v4596
    %v7145 = vunpack.c.l.b16 %v4597
    %v7146 = vunpack.c.h.b16 %v4597
    %v7147 = vunpack.c.l.b16 %v4598
    %v7148 = vunpack.c.h.b16 %v4598
    %v7149 = vunpack.c.l.b16 %v4599
    %v7150 = vunpack.c.h.b16 %v4599
    %v7151 = vunpack.c.l.b16 %v4600
    %v7152 = vunpack.c.h.b16 %v4600
    %v7153 = vunpack.c.l.b16 %v4601
    %v7154 = vunpack.c.h.b16 %v4601
    %v7155 = vunpack.c.l.b16 %v4602
    %v7156 = vunpack.c.h.b16 %v4602
    %v7157 = vunpack.c.l.b16 %v4603
    %v7158 = vunpack.c.h.b16 %v4603
    %v7159 = vunpack.c.l.b16 %v4604
    %v7160 = vunpack.c.h.b16 %v4604
    %v7161 = vunpack.c.l.b16 %v4605
    %v7162 = vunpack.c.h.b16 %v4605
    %v7163 = vunpack.c.l.b16 %v4606
    %v7164 = vunpack.c.h.b16 %v4606
    %v7165 = vunpack.c.l.b16 %v4607
    %v7166 = vunpack.c.h.b16 %v4607
    %v7167 = vunpack.c.l.b16 %v4608
    %v7168 = vunpack.c.h.b16 %v4608
    %v7169 = vunpack.c.l.b16 %v4609
    %v7170 = vunpack.c.h.b16 %v4609
    %v7171 = vunpack.c.l.b16 %v4610
    %v7172 = vunpack.c.h.b16 %v4610
    %v7173 = vunpack.c.l.b16 %v4611
    %v7174 = vunpack.c.h.b16 %v4611
    %v7175 = vunpack.c.l.b16 %v4612
    %v7176 = vunpack.c.h.b16 %v4612
    %v7177 = vunpack.c.l.b16 %v4613
    %v7178 = vunpack.c.h.b16 %v4613
    %v7179 = vunpack.c.l.b16 %v4614
    %v7180 = vunpack.c.h.b16 %v4614
    %v7181 = vunpack.c.l.b16 %v4615
    %v7182 = vunpack.c.h.b16 %v4615
    %v7183 = vunpack.c.l.b16 %v4616
    %v7184 = vunpack.c.h.b16 %v4616
    %v7185 = vunpack.c.l.b16 %v4617
    %v7186 = vunpack.c.h.b16 %v4617
    %v7187 = vunpack.c.l.b16 %v4618
    %v7188 = vunpack.c.h.b16 %v4618
    %v7189 = vunpack.c.l.b16 %v4619
    %v7190 = vunpack.c.h.b16 %v4619
    %v7191 = vunpack.c.l.b16 %v4620
    %v7192 = vunpack.c.h.b16 %v4620
    %v7193 = vunpack.c.l.b16 %v4621
    %v7194 = vunpack.c.h.b16 %v4621
    %v7195 = vunpack.c.l.b16 %v4622
    %v7196 = vunpack.c.h.b16 %v4622
    %v7197 = vunpack.c.l.b16 %v4623
    %v7198 = vunpack.c.h.b16 %v4623
    %v7199 = vunpack.c.l.b16 %v4624
    %v7200 = vunpack.c.h.b16 %v4624
    %v7201 = vunpack.c.l.b16 %v4625
    %v7202 = vunpack.c.h.b16 %v4625
    %v7203 = vunpack.c.l.b16 %v4626
    %v7204 = vunpack.c.h.b16 %v4626
    %v7205 = vunpack.c.l.b16 %v4627
    %v7206 = vunpack.c.h.b16 %v4627
    %v7207 = vunpack.c.l.b16 %v4628
    %v7208 = vunpack.c.h.b16 %v4628
    %v7209 = vunpack.c.l.b16 %v4629
    %v7210 = vunpack.c.h.b16 %v4629
    %v7211 = vunpack.c.l.b16 %v4630
    %v7212 = vunpack.c.h.b16 %v4630
    %v7213 = vunpack.c.l.b16 %v4631
    %v7214 = vunpack.c.h.b16 %v4631
    %v7215 = vunpack.c.l.b16 %v4632
    %v7216 = vunpack.c.h.b16 %v4632
    %v7217 = vunpack.c.l.b16 %v4633
    %v7218 = vunpack.c.h.b16 %v4633
    %v7219 = vunpack.c.l.b16 %v4634
    %v7220 = vunpack.c.h.b16 %v4634
    %v7221 = vunpack.c.l.b16 %v4635
    %v7222 = vunpack.c.h.b16 %v4635
    %v7223 = vunpack.c.l.b16 %v4636
    %v7224 = vunpack.c.h.b16 %v4636
    %v7225 = vunpack.c.l.b16 %v4637
    %v7226 = vunpack.c.h.b16 %v4637
    %v7227 = vunpack.c.l.b16 %v4638
    %v7228 = vunpack.c.h.b16 %v4638
    %v7229 = vunpack.c.l.b16 %v4639
    %v7230 = vunpack.c.h.b16 %v4639
    %v7231 = vunpack.c.l.b16 %v4640
    %v7232 = vunpack.c.h.b16 %v4640
    %v7233 = vunpack.c.l.b16 %v4641
    %v7234 = vunpack.c.h.b16 %v4641
    %v7235 = vunpack.c.l.b16 %v4642
    %v7236 = vunpack.c.h.b16 %v4642
    %v7237 = vunpack.c.l.b16 %v4643
    %v7238 = vunpack.c.h.b16 %v4643
    %v7239 = vunpack.c.l.b16 %v4644
    %v7240 = vunpack.c.h.b16 %v4644
    %v7241 = vunpack.c.l.b16 %v4645
    %v7242 = vunpack.c.h.b16 %v4645
    %v7243 = vunpack.c.l.b16 %v4646
    %v7244 = vunpack.c.h.b16 %v4646
    %v7245 = vunpack.c.l.b16 %v4647
    %v7246 = vunpack.c.h.b16 %v4647
    %v7247 = vunpack.c.l.b16 %v4648
    %v7248 = vunpack.c.h.b16 %v4648
    %v7249 = vunpack.c.l.b16 %v4649
    %v7250 = vunpack.c.h.b16 %v4649
    %v7251 = vunpack.c.l.b16 %v4650
    %v7252 = vunpack.c.h.b16 %v4650
    %v7253 = vunpack.c.l.b16 %v4651
    %v7254 = vunpack.c.h.b16 %v4651
    %v7255 = vunpack.c.l.b16 %v4652
    %v7256 = vunpack.c.h.b16 %v4652
    %v7257 = vunpack.c.l.b16 %v4653
    %v7258 = vunpack.c.h.b16 %v4653
    %v7259 = vunpack.c.l.b16 %v4654
    %v7260 = vunpack.c.h.b16 %v4654
    %v7261 = vunpack.c.l.b16 %v4655
    %v7262 = vunpack.c.h.b16 %v4655
    %v7263 = vunpack.c.l.b16 %v4656
    %v7264 = vunpack.c.h.b16 %v4656
    %v7265 = vunpack.c.l.b16 %v4657
    %v7266 = vunpack.c.h.b16 %v4657
    %v7267 = vunpack.c.l.b16 %v4658
    %v7268 = vunpack.c.h.b16 %v4658
    %v7269 = vunpack.c.l.b16 %v4659
    %v7270 = vunpack.c.h.b16 %v4659
    %v7271 = vunpack.c.l.b16 %v4660
    %v7272 = vunpack.c.h.b16 %v4660
    %v7273 = vunpack.c.l.b16 %v4661
    %v7274 = vunpack.c.h.b16 %v4661
    %v7275 = vunpack.c.l.b16 %v4662
    %v7276 = vunpack.c.h.b16 %v4662
    %v7277 = vunpack.c.l.b16 %v4663
    %v7278 = vunpack.c.h.b16 %v4663
    %v7279 = vunpack.c.l.b16 %v4664
    %v7280 = vunpack.c.h.b16 %v4664
    %v7281 = vunpack.c.l.b16 %v4665
    %v7282 = vunpack.c.h.b16 %v4665
    %v7283 = vunpack.c.l.b16 %v4666
    %v7284 = vunpack.c.h.b16 %v4666
    %v7285 = vunpack.c.l.b16 %v4667
    %v7286 = vunpack.c.h.b16 %v4667
    %v7287 = vunpack.c.l.b16 %v4668
    %v7288 = vunpack.c.h.b16 %v4668
    %v7289 = vunpack.c.l.b16 %v4669
    %v7290 = vunpack.c.h.b16 %v4669
    %v7291 = vunpack.c.l.b16 %v4670
    %v7292 = vunpack.c.h.b16 %v4670
    %v7293 = vunpack.c.l.b16 %v4671
    %v7294 = vunpack.c.h.b16 %v4671
    %v7295 = vunpack.c.l.b16 %v4672
    %v7296 = vunpack.c.h.b16 %v4672
    %v7297 = vunpack.c.l.b16 %v4673
    %v7298 = vunpack.c.h.b16 %v4673
    %v7299 = vunpack.c.l.b16 %v4674
    %v7300 = vunpack.c.h.b16 %v4674
    %v7301 = vunpack.c.l.b16 %v4675
    %v7302 = vunpack.c.h.b16 %v4675
    %v7303 = vunpack.c.l.b16 %v4676
    %v7304 = vunpack.c.h.b16 %v4676
    %v7305 = vunpack.c.l.b16 %v4677
    %v7306 = vunpack.c.h.b16 %v4677
    %v7307 = vunpack.c.l.b16 %v4678
    %v7308 = vunpack.c.h.b16 %v4678
    %v7309 = vunpack.c.l.b16 %v4679
    %v7310 = vunpack.c.h.b16 %v4679
    %v7311 = vunpack.c.l.b16 %v4680
    %v7312 = vunpack.c.h.b16 %v4680
    %v7313 = vunpack.c.l.b16 %v4681
    %v7314 = vunpack.c.h.b16 %v4681
    %v7315 = vunpack.c.l.b16 %v4682
    %v7316 = vunpack.c.h.b16 %v4682
    %v7317 = vunpack.c.l.b16 %v4683
    %v7318 = vunpack.c.h.b16 %v4683
    %v7319 = vunpack.c.l.b16 %v4684
    %v7320 = vunpack.c.h.b16 %v4684
    %v7321 = vunpack.c.l.b16 %v4685
    %v7322 = vunpack.c.h.b16 %v4685
    %v7323 = vunpack.c.l.b16 %v4686
    %v7324 = vunpack.c.h.b16 %v4686
    %v7325 = vunpack.c.l.b16 %v4687
    %v7326 = vunpack.c.h.b16 %v4687
    %v7327 = vunpack.c.l.b16 %v4688
    %v7328 = vunpack.c.h.b16 %v4688
    %v7329 = vunpack.c.l.b16 %v4689
    %v7330 = vunpack.c.h.b16 %v4689
    %v7331 = vunpack.c.l.b16 %v4690
    %v7332 = vunpack.c.h.b16 %v4690
    %v7333 = vunpack.c.l.b16 %v4691
    %v7334 = vunpack.c.h.b16 %v4691
    %v7335 = vunpack.c.l.b16 %v4692
    %v7336 = vunpack.c.h.b16 %v4692
    %v7337 = vunpack.c.l.b16 %v4693
    %v7338 = vunpack.c.h.b16 %v4693
    %v7339 = vunpack.c.l.b16 %v4694
    %v7340 = vunpack.c.h.b16 %v4694
    %v7341 = vunpack.c.l.b16 %v4695
    %v7342 = vunpack.c.h.b16 %v4695
    %v7343 = vunpack.c.l.b16 %v4696
    %v7344 = vunpack.c.h.b16 %v4696
    %v7345 = vunpack.c.l.b16 %v4697
    %v7346 = vunpack.c.h.b16 %v4697
    %v7347 = vunpack.c.l.b16 %v4698
    %v7348 = vunpack.c.h.b16 %v4698
    %v7349 = vunpack.c.l.b16 %v4699
    %v7350 = vunpack.c.h.b16 %v4699
    %v7351 = vunpack.c.l.b16 %v4700
    %v7352 = vunpack.c.h.b16 %v4700
    %v7353 = vunpack.c.l.b16 %v4701
    %v7354 = vunpack.c.h.b16 %v4701
    %v7355 = vunpack.c.l.b16 %v4702
    %v7356 = vunpack.c.h.b16 %v4702
    %v7357 = vunpack.c.l.b16 %v4703
    %v7358 = vunpack.c.h.b16 %v4703
    %v7359 = vunpack.c.l.b16 %v4704
    %v7360 = vunpack.c.h.b16 %v4704
    %v7361 = vunpack.c.l.b16 %v4705
    %v7362 = vunpack.c.h.b16 %v4705
    %v7363 = vunpack.c.l.b16 %v4706
    %v7364 = vunpack.c.h.b16 %v4706
    %v7365 = vunpack.c.l.b16 %v4707
    %v7366 = vunpack.c.h.b16 %v4707
    %v7367 = vunpack.c.l.b16 %v4708
    %v7368 = vunpack.c.h.b16 %v4708
    %v7369 = vunpack.c.l.b16 %v4709
    %v7370 = vunpack.c.h.b16 %v4709
    %v7371 = vunpack.c.l.b16 %v4710
    %v7372 = vunpack.c.h.b16 %v4710
    %v7373 = vunpack.c.l.b16 %v4711
    %v7374 = vunpack.c.h.b16 %v4711
    %v7375 = vunpack.c.l.b16 %v4712
    %v7376 = vunpack.c.h.b16 %v4712
    %v7377 = vunpack.c.l.b16 %v4713
    %v7378 = vunpack.c.h.b16 %v4713
    %v7379 = vunpack.c.l.b16 %v4714
    %v7380 = vunpack.c.h.b16 %v4714
    %v7381 = vunpack.c.l.b16 %v4715
    %v7382 = vunpack.c.h.b16 %v4715
    %v7383 = vunpack.c.l.b16 %v4716
    %v7384 = vunpack.c.h.b16 %v4716
    %v7385 = vunpack.c.l.b16 %v4717
    %v7386 = vunpack.c.h.b16 %v4717
    %v7387 = vunpack.c.l.b16 %v4718
    %v7388 = vunpack.c.h.b16 %v4718
    %v7389 = vunpack.c.l.b16 %v4719
    %v7390 = vunpack.c.h.b16 %v4719
    %v7391 = vunpack.c.l.b16 %v4720
    %v7392 = vunpack.c.h.b16 %v4720
    %v7393 = vunpack.c.l.b16 %v4721
    %v7394 = vunpack.c.h.b16 %v4721
    %v7395 = vunpack.c.l.b16 %v4722
    %v7396 = vunpack.c.h.b16 %v4722
    %v7397 = vunpack.c.l.b16 %v4723
    %v7398 = vunpack.c.h.b16 %v4723
    %v7399 = vunpack.c.l.b16 %v4724
    %v7400 = vunpack.c.h.b16 %v4724
    %v7401 = vunpack.c.l.b16 %v4725
    %v7402 = vunpack.c.h.b16 %v4725
    %v7403 = vunpack.c.l.b16 %v4726
    %v7404 = vunpack.c.h.b16 %v4726
    %v7405 = vunpack.c.l.b16 %v4727
    %v7406 = vunpack.c.h.b16 %v4727
    %v7407 = vunpack.c.l.b16 %v4728
    %v7408 = vunpack.c.h.b16 %v4728
    %v7409 = vunpack.c.l.b16 %v4729
    %v7410 = vunpack.c.h.b16 %v4729
    %v7411 = vunpack.c.l.b16 %v4730
    %v7412 = vunpack.c.h.b16 %v4730
    %v7413 = vunpack.c.l.b16 %v4731
    %v7414 = vunpack.c.h.b16 %v4731
    %v7415 = vunpack.c.l.b16 %v4732
    %v7416 = vunpack.c.h.b16 %v4732
    %v7417 = vunpack.c.l.b16 %v4733
    %v7418 = vunpack.c.h.b16 %v4733
    %v7419 = vunpack.c.l.b16 %v4734
    %v7420 = vunpack.c.h.b16 %v4734
    %v7421 = vunpack.c.l.b16 %v4735
    %v7422 = vunpack.c.h.b16 %v4735
    %v7423 = vunpack.c.l.b16 %v4736
    %v7424 = vunpack.c.h.b16 %v4736
    %v7425 = vunpack.c.l.b16 %v4737
    %v7426 = vunpack.c.h.b16 %v4737
    %v7427 = vunpack.c.l.b16 %v4738
    %v7428 = vunpack.c.h.b16 %v4738
    %v7429 = vunpack.c.l.b16 %v4739
    %v7430 = vunpack.c.h.b16 %v4739
    %v7431 = vunpack.c.l.b16 %v4740
    %v7432 = vunpack.c.h.b16 %v4740
    %v7433 = vunpack.c.l.b16 %v4741
    %v7434 = vunpack.c.h.b16 %v4741
    %v7435 = vunpack.c.l.b16 %v4742
    %v7436 = vunpack.c.h.b16 %v4742
    %v7437 = vunpack.c.l.b16 %v4743
    %v7438 = vunpack.c.h.b16 %v4743
    %v7439 = vunpack.c.l.b16 %v4744
    %v7440 = vunpack.c.h.b16 %v4744
    %v7441 = vunpack.c.l.b16 %v4745
    %v7442 = vunpack.c.h.b16 %v4745
    %v7443 = vunpack.c.l.b16 %v4746
    %v7444 = vunpack.c.h.b16 %v4746
    %v7445 = vunpack.c.l.b16 %v4747
    %v7446 = vunpack.c.h.b16 %v4747
    %v7447 = vunpack.c.l.b16 %v4748
    %v7448 = vunpack.c.h.b16 %v4748
    %v7449 = vunpack.c.l.b16 %v4749
    %v7450 = vunpack.c.h.b16 %v4749
    %v7451 = vunpack.c.l.b16 %v4750
    %v7452 = vunpack.c.h.b16 %v4750
    %v7453 = vunpack.c.l.b16 %v4751
    %v7454 = vunpack.c.h.b16 %v4751
    %v7455 = vunpack.c.l.b16 %v4752
    %v7456 = vunpack.c.h.b16 %v4752
    %v7457 = vunpack.c.l.b16 %v4753
    %v7458 = vunpack.c.h.b16 %v4753
    %v7459 = vunpack.c.l.b16 %v4754
    %v7460 = vunpack.c.h.b16 %v4754
    %v7461 = vunpack.c.l.b16 %v4755
    %v7462 = vunpack.c.h.b16 %v4755
    %v7463 = vunpack.c.l.b16 %v4756
    %v7464 = vunpack.c.h.b16 %v4756
    %v7465 = vunpack.c.l.b16 %v4757
    %v7466 = vunpack.c.h.b16 %v4757
    %v7467 = vunpack.c.l.b16 %v4758
    %v7468 = vunpack.c.h.b16 %v4758
    %v7469 = vunpack.c.l.b16 %v4759
    %v7470 = vunpack.c.h.b16 %v4759
    %v7471 = vunpack.c.l.b16 %v4760
    %v7472 = vunpack.c.h.b16 %v4760
    %v7473 = vunpack.c.l.b16 %v4761
    %v7474 = vunpack.c.h.b16 %v4761
    %v7475 = vunpack.c.l.b16 %v4762
    %v7476 = vunpack.c.h.b16 %v4762
    %v7477 = vunpack.c.l.b16 %v4763
    %v7478 = vunpack.c.h.b16 %v4763
    %v7479 = vunpack.c.l.b16 %v4764
    %v7480 = vunpack.c.h.b16 %v4764
    %v7481 = vunpack.c.l.b16 %v4765
    %v7482 = vunpack.c.h.b16 %v4765
    %v7483 = vunpack.c.l.b16 %v4766
    %v7484 = vunpack.c.h.b16 %v4766
    %v7485 = vunpack.c.l.b16 %v4767
    %v7486 = vunpack.c.h.b16 %v4767
    %v7487 = vunpack.c.l.b16 %v4768
    %v7488 = vunpack.c.h.b16 %v4768
    %v7489 = vunpack.c.l.b16 %v4769
    %v7490 = vunpack.c.h.b16 %v4769
    %v7491 = vunpack.c.l.b16 %v4770
    %v7492 = vunpack.c.h.b16 %v4770
    %v7493 = vunpack.c.l.b16 %v4771
    %v7494 = vunpack.c.h.b16 %v4771
    %v7495 = vunpack.c.l.b16 %v4772
    %v7496 = vunpack.c.h.b16 %v4772
    %v7497 = vunpack.c.l.b16 %v4773
    %v7498 = vunpack.c.h.b16 %v4773
    %v7499 = vunpack.c.l.b16 %v4774
    %v7500 = vunpack.c.h.b16 %v4774
    %v7501 = vunpack.c.l.b16 %v4775
    %v7502 = vunpack.c.h.b16 %v4775
    %v7503 = vunpack.c.l.b16 %v4776
    %v7504 = vunpack.c.h.b16 %v4776
    %v7505 = vunpack.c.l.b16 %v4777
    %v7506 = vunpack.c.h.b16 %v4777
    %v7507 = vunpack.c.l.b16 %v4778
    %v7508 = vunpack.c.h.b16 %v4778
    %v7509 = vunpack.c.l.b16 %v4779
    %v7510 = vunpack.c.h.b16 %v4779
    %v7511 = vunpack.c.l.b16 %v4780
    %v7512 = vunpack.c.h.b16 %v4780
    %v7513 = vunpack.c.l.b16 %v4781
    %v7514 = vunpack.c.h.b16 %v4781
    %v7515 = vunpack.c.l.b16 %v4782
    %v7516 = vunpack.c.h.b16 %v4782
    %v7517 = vunpack.c.l.b16 %v4783
    %v7518 = vunpack.c.h.b16 %v4783
    %v7519 = vunpack.c.l.b16 %v4784
    %v7520 = vunpack.c.h.b16 %v4784
    %v7521 = vunpack.c.l.b16 %v4785
    %v7522 = vunpack.c.h.b16 %v4785
    %v7523 = vunpack.c.l.b16 %v4786
    %v7524 = vunpack.c.h.b16 %v4786
    %v7525 = vunpack.c.l.b16 %v4787
    %v7526 = vunpack.c.h.b16 %v4787
    %v7527 = vunpack.c.l.b16 %v4788
    %v7528 = vunpack.c.h.b16 %v4788
    %v7529 = vunpack.c.l.b16 %v4789
    %v7530 = vunpack.c.h.b16 %v4789
    %v7531 = vunpack.c.l.b16 %v4790
    %v7532 = vunpack.c.h.b16 %v4790
    %v7533 = vunpack.c.l.b16 %v4791
    %v7534 = vunpack.c.h.b16 %v4791
    %v7535 = vunpack.c.l.b16 %v4792
    %v7536 = vunpack.c.h.b16 %v4792
    %v7537 = vunpack.c.l.b16 %v4793
    %v7538 = vunpack.c.h.b16 %v4793
    %v7539 = vunpack.c.l.b16 %v4794
    %v7540 = vunpack.c.h.b16 %v4794
    %v7541 = vunpack.c.l.b16 %v4795
    %v7542 = vunpack.c.h.b16 %v4795
    %v7543 = vunpack.c.l.b16 %v4796
    %v7544 = vunpack.c.h.b16 %v4796
    %v7545 = vunpack.c.l.b16 %v4797
    %v7546 = vunpack.c.h.b16 %v4797
    %v7547 = vunpack.c.l.b16 %v4798
    %v7548 = vunpack.c.h.b16 %v4798
    %v7549 = vunpack.c.l.b16 %v4799
    %v7550 = vunpack.c.h.b16 %v4799
    %v7551 = vunpack.c.l.b16 %v4800
    %v7552 = vunpack.c.h.b16 %v4800
    %v7553 = vunpack.c.l.b16 %v4801
    %v7554 = vunpack.c.h.b16 %v4801
    %v7555 = vunpack.c.l.b16 %v4802
    %v7556 = vunpack.c.h.b16 %v4802
    %v7557 = vunpack.c.l.b16 %v4803
    %v7558 = vunpack.c.h.b16 %v4803
    %v7559 = vunpack.c.l.b16 %v4804
    %v7560 = vunpack.c.h.b16 %v4804
    %v7561 = vunpack.c.l.b16 %v4805
    %v7562 = vunpack.c.h.b16 %v4805
    %v7563 = vunpack.c.l.b16 %v4806
    %v7564 = vunpack.c.h.b16 %v4806
    %v7565 = vunpack.c.l.b16 %v4807
    %v7566 = vunpack.c.h.b16 %v4807
    %v7567 = vunpack.c.l.b16 %v4808
    %v7568 = vunpack.c.h.b16 %v4808
    %v7569 = vunpack.c.l.b16 %v4809
    %v7570 = vunpack.c.h.b16 %v4809
    %v7571 = vunpack.c.l.b16 %v4810
    %v7572 = vunpack.c.h.b16 %v4810
    %v7573 = vunpack.c.l.b16 %v4811
    %v7574 = vunpack.c.h.b16 %v4811
    %v7575 = vunpack.c.l.b16 %v4812
    %v7576 = vunpack.c.h.b16 %v4812
    %v7577 = vunpack.c.l.b16 %v4813
    %v7578 = vunpack.c.h.b16 %v4813
    %v7579 = vunpack.c.l.b16 %v4814
    %v7580 = vunpack.c.h.b16 %v4814
    %v7581 = vunpack.c.l.b16 %v4815
    %v7582 = vunpack.c.h.b16 %v4815
    %v7583 = vunpack.c.l.b16 %v4816
    %v7584 = vunpack.c.h.b16 %v4816
    %v7585 = vunpack.c.l.b16 %v4817
    %v7586 = vunpack.c.h.b16 %v4817
    %v7587 = vunpack.c.l.b16 %v4818
    %v7588 = vunpack.c.h.b16 %v4818
    %v7589 = vunpack.c.l.b16 %v4819
    %v7590 = vunpack.c.h.b16 %v4819
    %v7591 = vunpack.c.l.b16 %v4820
    %v7592 = vunpack.c.h.b16 %v4820
    %v7593 = vunpack.c.l.b16 %v4821
    %v7594 = vunpack.c.h.b16 %v4821
    %v7595 = vunpack.c.l.b16 %v4822
    %v7596 = vunpack.c.h.b16 %v4822
    %v7597 = vunpack.c.l.b16 %v4823
    %v7598 = vunpack.c.h.b16 %v4823
    %v7599 = vunpack.c.l.b16 %v4824
    %v7600 = vunpack.c.h.b16 %v4824
    %v7601 = vunpack.c.l.b16 %v4825
    %v7602 = vunpack.c.h.b16 %v4825
    %v7603 = vunpack.c.l.b16 %v4826
    %v7604 = vunpack.c.h.b16 %v4826
    %v7605 = vunpack.c.l.b16 %v4827
    %v7606 = vunpack.c.h.b16 %v4827
    %v7607 = vunpack.c.l.b16 %v4828
    %v7608 = vunpack.c.h.b16 %v4828
    %v7609 = vunpack.c.l.b16 %v4829
    %v7610 = vunpack.c.h.b16 %v4829
    %v7611 = vunpack.c.l.b16 %v4830
    %v7612 = vunpack.c.h.b16 %v4830
    %v7613 = vunpack.c.l.b16 %v4831
    %v7614 = vunpack.c.h.b16 %v4831
    %v7615 = vunpack.c.l.b16 %v4832
    %v7616 = vunpack.c.h.b16 %v4832
    %v7617 = vunpack.c.l.b16 %v4833
    %v7618 = vunpack.c.h.b16 %v4833
    %v7619 = vunpack.c.l.b16 %v4834
    %v7620 = vunpack.c.h.b16 %v4834
    %v7621 = vunpack.c.l.b16 %v4835
    %v7622 = vunpack.c.h.b16 %v4835
    %v7623 = vunpack.c.l.b16 %v4836
    %v7624 = vunpack.c.h.b16 %v4836
    %v7625 = vunpack.c.l.b16 %v4837
    %v7626 = vunpack.c.h.b16 %v4837
    %v7627 = vunpack.c.l.b16 %v4838
    %v7628 = vunpack.c.h.b16 %v4838
    %v7629 = vunpack.c.l.b16 %v4839
    %v7630 = vunpack.c.h.b16 %v4839
    %v7631 = vunpack.c.l.b16 %v4840
    %v7632 = vunpack.c.h.b16 %v4840
    %v7633 = vunpack.c.l.b16 %v4841
    %v7634 = vunpack.c.h.b16 %v4841
    %v7635 = vunpack.c.l.b16 %v4842
    %v7636 = vunpack.c.h.b16 %v4842
    %v7637 = vunpack.c.l.b16 %v4843
    %v7638 = vunpack.c.h.b16 %v4843
    %v7639 = vunpack.c.l.b16 %v4844
    %v7640 = vunpack.c.h.b16 %v4844
    %v7641 = vunpack.c.l.b16 %v4845
    %v7642 = vunpack.c.h.b16 %v4845
    %v7643 = vunpack.c.l.b16 %v4846
    %v7644 = vunpack.c.h.b16 %v4846
    %v7645 = vunpack.c.l.b16 %v4847
    %v7646 = vunpack.c.h.b16 %v4847
    %v7647 = vunpack.c.l.b16 %v4848
    %v7648 = vunpack.c.h.b16 %v4848
    %v7649 = vunpack.c.l.b16 %v4849
    %v7650 = vunpack.c.h.b16 %v4849
    %v7651 = vunpack.c.l.b16 %v4850
    %v7652 = vunpack.c.h.b16 %v4850
    %v7653 = vunpack.c.l.b16 %v4851
    %v7654 = vunpack.c.h.b16 %v4851
    %v7655 = vunpack.c.l.b16 %v4852
    %v7656 = vunpack.c.h.b16 %v4852
    %v7657 = vunpack.c.l.b16 %v4853
    %v7658 = vunpack.c.h.b16 %v4853
    %v7659 = vunpack.c.l.b16 %v4854
    %v7660 = vunpack.c.h.b16 %v4854
    %v7661 = vunpack.c.l.b16 %v4855
    %v7662 = vunpack.c.h.b16 %v4855
    %v7663 = vunpack.c.l.b16 %v4856
    %v7664 = vunpack.c.h.b16 %v4856
    %v7665 = vunpack.c.l.b16 %v4857
    %v7666 = vunpack.c.h.b16 %v4857
    %v7667 = vunpack.c.l.b16 %v4858
    %v7668 = vunpack.c.h.b16 %v4858
    %v7669 = vunpack.c.l.b16 %v4859
    %v7670 = vunpack.c.h.b16 %v4859
    %v7671 = vunpack.c.l.b16 %v4860
    %v7672 = vunpack.c.h.b16 %v4860
    %v7673 = vunpack.c.l.b16 %v4861
    %v7674 = vunpack.c.h.b16 %v4861
    %v7675 = vunpack.c.l.b16 %v4862
    %v7676 = vunpack.c.h.b16 %v4862
    %v7677 = vunpack.c.l.b16 %v4863
    %v7678 = vunpack.c.h.b16 %v4863
    %v7679 = vunpack.c.l.b16 %v4864
    %v7680 = vunpack.c.h.b16 %v4864
    %v7681 = vunpack.c.l.b16 %v4865
    %v7682 = vunpack.c.h.b16 %v4865
    %v7683 = vunpack.c.l.b16 %v4866
    %v7684 = vunpack.c.h.b16 %v4866
    %v7685 = vunpack.c.l.b16 %v4867
    %v7686 = vunpack.c.h.b16 %v4867
    %v7687 = vunpack.c.l.b16 %v4868
    %v7688 = vunpack.c.h.b16 %v4868
    %v7689 = vunpack.c.l.b16 %v4869
    %v7690 = vunpack.c.h.b16 %v4869
    %v7691 = vunpack.c.l.b16 %v4870
    %v7692 = vunpack.c.h.b16 %v4870
    %v7693 = vunpack.c.l.b16 %v4871
    %v7694 = vunpack.c.h.b16 %v4871
    %v7695 = vunpack.c.l.b16 %v4872
    %v7696 = vunpack.c.h.b16 %v4872
    %v7697 = vunpack.c.l.b16 %v4873
    %v7698 = vunpack.c.h.b16 %v4873
    %v7699 = vunpack.c.l.b16 %v4874
    %v7700 = vunpack.c.h.b16 %v4874
    %v7701 = vunpack.c.l.b16 %v4875
    %v7702 = vunpack.c.h.b16 %v4875
    %v7703 = vunpack.c.l.b16 %v4876
    %v7704 = vunpack.c.h.b16 %v4876
    %v7705 = vunpack.c.l.b16 %v4877
    %v7706 = vunpack.c.h.b16 %v4877
    %v7707 = vunpack.c.l.b16 %v4878
    %v7708 = vunpack.c.h.b16 %v4878
    %v7709 = vunpack.c.l.b16 %v4879
    %v7710 = vunpack.c.h.b16 %v4879
    %v7711 = vunpack.c.l.b16 %v4880
    %v7712 = vunpack.c.h.b16 %v4880
    %v7713 = vunpack.c.l.b16 %v4881
    %v7714 = vunpack.c.h.b16 %v4881
    %v7715 = vunpack.c.l.b16 %v4882
    %v7716 = vunpack.c.h.b16 %v4882
    %v7717 = vunpack.c.l.b16 %v4883
    %v7718 = vunpack.c.h.b16 %v4883
    %v7719 = vunpack.c.l.b16 %v4884
    %v7720 = vunpack.c.h.b16 %v4884
    %v7721 = vunpack.c.l.b16 %v4885
    %v7722 = vunpack.c.h.b16 %v4885
    %v7723 = vunpack.c.l.b16 %v4886
    %v7724 = vunpack.c.h.b16 %v4886
    %v7725 = vunpack.c.l.b16 %v4887
    %v7726 = vunpack.c.h.b16 %v4887
    %v7727 = vunpack.c.l.b16 %v4888
    %v7728 = vunpack.c.h.b16 %v4888
    %v7729 = vunpack.c.l.b16 %v4889
    %v7730 = vunpack.c.h.b16 %v4889
    %v7731 = vunpack.c.l.b16 %v4890
    %v7732 = vunpack.c.h.b16 %v4890
    %v7733 = vunpack.c.l.b16 %v4891
    %v7734 = vunpack.c.h.b16 %v4891
    %v7735 = vunpack.c.l.b16 %v4892
    %v7736 = vunpack.c.h.b16 %v4892
    %v7737 = vunpack.c.l.b16 %v4893
    %v7738 = vunpack.c.h.b16 %v4893
    %v7739 = vunpack.c.l.b16 %v4894
    %v7740 = vunpack.c.h.b16 %v4894
    %v7741 = vunpack.c.l.b16 %v4895
    %v7742 = vunpack.c.h.b16 %v4895
    %v7743 = vunpack.c.l.b16 %v4896
    %v7744 = vunpack.c.h.b16 %v4896
    %v7745 = vunpack.c.l.b16 %v4897
    %v7746 = vunpack.c.h.b16 %v4897
    %v7747 = vunpack.c.l.b16 %v4898
    %v7748 = vunpack.c.h.b16 %v4898
    %v7749 = vunpack.c.l.b16 %v4899
    %v7750 = vunpack.c.h.b16 %v4899
    %v7751 = vunpack.c.l.b16 %v4900
    %v7752 = vunpack.c.h.b16 %v4900
    %v7753 = vunpack.c.l.b16 %v4901
    %v7754 = vunpack.c.h.b16 %v4901
    %v7755 = vunpack.c.l.b16 %v4902
    %v7756 = vunpack.c.h.b16 %v4902
    %v7757 = vunpack.c.l.b16 %v4903
    %v7758 = vunpack.c.h.b16 %v4903
    %v7759 = vunpack.c.l.b16 %v4904
    %v7760 = vunpack.c.h.b16 %v4904
    %v7761 = vunpack.c.l.b16 %v4905
    %v7762 = vunpack.c.h.b16 %v4905
    %v7763 = vunpack.c.l.b16 %v4906
    %v7764 = vunpack.c.h.b16 %v4906
    %v7765 = vunpack.c.l.b16 %v4907
    %v7766 = vunpack.c.h.b16 %v4907
    %v7767 = vunpack.c.l.b16 %v4908
    %v7768 = vunpack.c.h.b16 %v4908
    %v7769 = vunpack.c.l.b16 %v4909
    %v7770 = vunpack.c.h.b16 %v4909
    %v7771 = vunpack.c.l.b16 %v4910
    %v7772 = vunpack.c.h.b16 %v4910
    %v7773 = vunpack.c.l.b16 %v4911
    %v7774 = vunpack.c.h.b16 %v4911
    %v7775 = vunpack.c.l.b16 %v4912
    %v7776 = vunpack.c.h.b16 %v4912
    %v7777 = vunpack.c.l.b16 %v4913
    %v7778 = vunpack.c.h.b16 %v4913
    %v7779 = vunpack.c.l.b16 %v4914
    %v7780 = vunpack.c.h.b16 %v4914
    %v7781 = vunpack.c.l.b16 %v4915
    %v7782 = vunpack.c.h.b16 %v4915
    %v7783 = vunpack.c.l.b16 %v4916
    %v7784 = vunpack.c.h.b16 %v4916
    %v7785 = vunpack.c.l.b16 %v4917
    %v7786 = vunpack.c.h.b16 %v4917
    %v7787 = vunpack.c.l.b16 %v4918
    %v7788 = vunpack.c.h.b16 %v4918
    %v7789 = vunpack.c.l.b16 %v4919
    %v7790 = vunpack.c.h.b16 %v4919
    %v7791 = vunpack.c.l.b16 %v4920
    %v7792 = vunpack.c.h.b16 %v4920
    %v7793 = vunpack.c.l.b16 %v4921
    %v7794 = vunpack.c.h.b16 %v4921
    %v7795 = vunpack.c.l.b16 %v4922
    %v7796 = vunpack.c.h.b16 %v4922
    %v7797 = vunpack.c.l.b16 %v4923
    %v7798 = vunpack.c.h.b16 %v4923
    %v7799 = vunpack.c.l.b16 %v4924
    %v7800 = vunpack.c.h.b16 %v4924
    %v7801 = vunpack.c.l.b16 %v4925
    %v7802 = vunpack.c.h.b16 %v4925
    %v7803 = vunpack.c.l.b16 %v4926
    %v7804 = vunpack.c.h.b16 %v4926
    %v7805 = vunpack.c.l.b16 %v4927
    %v7806 = vunpack.c.h.b16 %v4927
    %v7807 = vunpack.c.l.b16 %v4928
    %v7808 = vunpack.c.h.b16 %v4928
    %v7809 = vunpack.c.l.b16 %v4929
    %v7810 = vunpack.c.h.b16 %v4929
    %v7811 = vunpack.c.l.b16 %v4930
    %v7812 = vunpack.c.h.b16 %v4930
    %v7813 = vunpack.c.l.b16 %v4931
    %v7814 = vunpack.c.h.b16 %v4931
    %v7815 = vunpack.c.l.b16 %v4932
    %v7816 = vunpack.c.h.b16 %v4932
    %v7817 = vunpack.c.l.b16 %v4933
    %v7818 = vunpack.c.h.b16 %v4933
    %v7819 = vunpack.c.l.b16 %v4934
    %v7820 = vunpack.c.h.b16 %v4934
    %v7821 = vunpack.c.l.b16 %v4935
    %v7822 = vunpack.c.h.b16 %v4935
    %v7823 = vunpack.c.l.b16 %v4936
    %v7824 = vunpack.c.h.b16 %v4936
    %v7825 = vunpack.c.l.b16 %v4937
    %v7826 = vunpack.c.h.b16 %v4937
    %v7827 = vunpack.c.l.b16 %v4938
    %v7828 = vunpack.c.h.b16 %v4938
    %v7829 = vunpack.c.l.b16 %v4939
    %v7830 = vunpack.c.h.b16 %v4939
    %v7831 = vunpack.c.l.b16 %v4940
    %v7832 = vunpack.c.h.b16 %v4940
    %v7833 = vunpack.c.l.b16 %v4941
    %v7834 = vunpack.c.h.b16 %v4941
    %v7835 = vunpack.c.l.b16 %v4942
    %v7836 = vunpack.c.h.b16 %v4942
    %v7837 = vunpack.c.l.b16 %v4943
    %v7838 = vunpack.c.h.b16 %v4943
    %v7839 = vunpack.c.l.b16 %v4944
    %v7840 = vunpack.c.h.b16 %v4944
    %v7841 = vunpack.c.l.b16 %v4945
    %v7842 = vunpack.c.h.b16 %v4945
    %v7843 = vunpack.c.l.b16 %v4946
    %v7844 = vunpack.c.h.b16 %v4946
    %v7845 = vunpack.c.l.b16 %v4947
    %v7846 = vunpack.c.h.b16 %v4947
    %v7847 = vunpack.c.l.b16 %v4948
    %v7848 = vunpack.c.h.b16 %v4948
    %v7849 = vunpack.c.l.b16 %v4949
    %v7850 = vunpack.c.h.b16 %v4949
    %v7851 = vunpack.c.l.b16 %v4950
    %v7852 = vunpack.c.h.b16 %v4950
    %v7853 = vunpack.c.l.b16 %v4951
    %v7854 = vunpack.c.h.b16 %v4951
    %v7855 = vunpack.c.l.b16 %v4952
    %v7856 = vunpack.c.h.b16 %v4952
    %v7857 = vunpack.c.l.b16 %v4953
    %v7858 = vunpack.c.h.b16 %v4953
    %v7859 = vunpack.c.l.b16 %v4954
    %v7860 = vunpack.c.h.b16 %v4954
    %v7861 = vunpack.c.l.b16 %v4955
    %v7862 = vunpack.c.h.b16 %v4955
    %v7863 = vunpack.c.l.b16 %v4956
    %v7864 = vunpack.c.h.b16 %v4956
    %v7865 = vunpack.c.l.b16 %v4957
    %v7866 = vunpack.c.h.b16 %v4957
    %v7867 = vunpack.c.l.b16 %v4958
    %v7868 = vunpack.c.h.b16 %v4958
    %v7869 = vunpack.c.l.b16 %v4959
    %v7870 = vunpack.c.h.b16 %v4959
    %v7871 = vunpack.c.l.b16 %v4960
    %v7872 = vunpack.c.h.b16 %v4960
    %v7873 = vunpack.c.l.b16 %v4961
    %v7874 = vunpack.c.h.b16 %v4961
    %v7875 = vunpack.c.l.b16 %v4962
    %v7876 = vunpack.c.h.b16 %v4962
    %v7877 = vunpack.c.l.b16 %v4963
    %v7878 = vunpack.c.h.b16 %v4963
    %v7879 = vunpack.c.l.b16 %v4964
    %v7880 = vunpack.c.h.b16 %v4964
    %v7881 = vunpack.c.l.b16 %v4965
    %v7882 = vunpack.c.h.b16 %v4965
    %v7883 = vunpack.c.l.b16 %v4966
    %v7884 = vunpack.c.h.b16 %v4966
    %v7885 = vunpack.c.l.b16 %v4967
    %v7886 = vunpack.c.h.b16 %v4967
    %v7887 = vunpack.c.l.b16 %v4968
    %v7888 = vunpack.c.h.b16 %v4968
    %v7889 = vunpack.c.l.b16 %v4969
    %v7890 = vunpack.c.h.b16 %v4969
    %v7891 = vunpack.c.l.b16 %v4970
    %v7892 = vunpack.c.h.b16 %v4970
    %v7893 = vunpack.c.l.b16 %v4971
    %v7894 = vunpack.c.h.b16 %v4971
    %v7895 = vunpack.c.l.b16 %v4972
    %v7896 = vunpack.c.h.b16 %v4972
    %v7897 = vunpack.c.l.b16 %v4973
    %v7898 = vunpack.c.h.b16 %v4973
    %v7899 = vunpack.c.l.b16 %v4974
    %v7900 = vunpack.c.h.b16 %v4974
    %v7901 = vunpack.c.l.b16 %v4975
    %v7902 = vunpack.c.h.b16 %v4975
    %v7903 = vunpack.c.l.b16 %v4976
    %v7904 = vunpack.c.h.b16 %v4976
    %v7905 = vunpack.c.l.b16 %v4977
    %v7906 = vunpack.c.h.b16 %v4977
    %v7907 = vunpack.c.l.b16 %v4978
    %v7908 = vunpack.c.h.b16 %v4978
    %v7909 = vunpack.c.l.b16 %v4979
    %v7910 = vunpack.c.h.b16 %v4979
    %v7911 = vunpack.c.l.b16 %v4980
    %v7912 = vunpack.c.h.b16 %v4980
    %v7913 = vunpack.c.l.b16 %v4981
    %v7914 = vunpack.c.h.b16 %v4981
    %v7915 = vunpack.c.l.b16 %v4982
    %v7916 = vunpack.c.h.b16 %v4982
    %v7917 = vunpack.c.l.b16 %v4983
    %v7918 = vunpack.c.h.b16 %v4983
    %v7919 = vunpack.c.l.b16 %v4984
    %v7920 = vunpack.c.h.b16 %v4984
    %v7921 = vunpack.c.l.b16 %v4985
    %v7922 = vunpack.c.h.b16 %v4985
    %v7923 = vunpack.c.l.b16 %v4986
    %v7924 = vunpack.c.h.b16 %v4986
    %v7925 = vunpack.c.l.b16 %v4987
    %v7926 = vunpack.c.h.b16 %v4987
    %v7927 = vunpack.c.l.b16 %v4988
    %v7928 = vunpack.c.h.b16 %v4988
    %v7929 = vunpack.c.l.b16 %v4989
    %v7930 = vunpack.c.h.b16 %v4989
    %v7931 = vunpack.c.l.b16 %v4990
    %v7932 = vunpack.c.h.b16 %v4990
    %v7933 = vunpack.c.l.b16 %v4991
    %v7934 = vunpack.c.h.b16 %v4991
    %v7935 = vunpack.c.l.b16 %v4992
    %v7936 = vunpack.c.h.b16 %v4992
    %v7937 = vunpack.c.l.b16 %v4993
    %v7938 = vunpack.c.h.b16 %v4993
    %v7939 = vunpack.c.l.b16 %v4994
    %v7940 = vunpack.c.h.b16 %v4994
    %v7941 = vunpack.c.l.b16 %v4995
    %v7942 = vunpack.c.h.b16 %v4995
    %v7943 = vunpack.c.l.b16 %v4996
    %v7944 = vunpack.c.h.b16 %v4996
    %v7945 = vunpack.c.l.b16 %v4997
    %v7946 = vunpack.c.h.b16 %v4997
    %v7947 = vunpack.c.l.b16 %v4998
    %v7948 = vunpack.c.h.b16 %v4998
    %v7949 = vunpack.c.l.b16 %v4999
    %v7950 = vunpack.c.h.b16 %v4999
    %v7951 = vunpack.c.l.b16 %v5000
    %v7952 = vunpack.c.h.b16 %v5000
    %v7953 = vunpack.c.l.b16 %v5001
    %v7954 = vunpack.c.h.b16 %v5001
    %v7955 = vunpack.c.l.b16 %v5002
    %v7956 = vunpack.c.h.b16 %v5002
    %v7957 = vunpack.c.l.b16 %v5003
    %v7958 = vunpack.c.h.b16 %v5003
    %v7959 = vunpack.c.l.b16 %v5004
    %v7960 = vunpack.c.h.b16 %v5004
    %v7961 = vunpack.c.l.b16 %v5005
    %v7962 = vunpack.c.h.b16 %v5005
    %v7963 = vunpack.c.l.b16 %v5006
    %v7964 = vunpack.c.h.b16 %v5006
    %v7965 = vunpack.c.l.b16 %v5007
    %v7966 = vunpack.c.h.b16 %v5007
    %v7967 = vunpack.c.l.b16 %v5008
    %v7968 = vunpack.c.h.b16 %v5008
    %v7969 = vunpack.c.l.b16 %v5009
    %v7970 = vunpack.c.h.b16 %v5009
    %v7971 = vunpack.c.l.b16 %v5010
    %v7972 = vunpack.c.h.b16 %v5010
    %v7973 = vunpack.c.l.b16 %v5011
    %v7974 = vunpack.c.h.b16 %v5011
    %v7975 = vunpack.c.l.b16 %v5012
    %v7976 = vunpack.c.h.b16 %v5012
    %v7977 = vunpack.c.l.b16 %v5013
    %v7978 = vunpack.c.h.b16 %v5013
    %v7979 = vunpack.c.l.b16 %v5014
    %v7980 = vunpack.c.h.b16 %v5014
    %v7981 = vunpack.c.l.b16 %v5015
    %v7982 = vunpack.c.h.b16 %v5015
    %v7983 = vunpack.c.l.b16 %v5016
    %v7984 = vunpack.c.h.b16 %v5016
    %v7985 = vunpack.c.l.b16 %v5017
    %v7986 = vunpack.c.h.b16 %v5017
    %v7987 = vunpack.c.l.b16 %v5018
    %v7988 = vunpack.c.h.b16 %v5018
    %v7989 = vunpack.c.l.b16 %v5019
    %v7990 = vunpack.c.h.b16 %v5019
    %v7991 = vunpack.c.l.b16 %v5020
    %v7992 = vunpack.c.h.b16 %v5020
    %v7993 = vunpack.c.l.b16 %v5021
    %v7994 = vunpack.c.h.b16 %v5021
    %v7995 = vunpack.c.l.b16 %v5022
    %v7996 = vunpack.c.h.b16 %v5022
    %v7997 = vunpack.c.l.b16 %v5023
    %v7998 = vunpack.c.h.b16 %v5023
    %v7999 = vunpack.c.l.b16 %v5024
    %v8000 = vunpack.c.h.b16 %v5024
    %v8001 = vunpack.c.l.b16 %v5025
    %v8002 = vunpack.c.h.b16 %v5025
    %v8003 = vunpack.c.l.b16 %v5026
    %v8004 = vunpack.c.h.b16 %v5026
    %v8005 = vunpack.c.l.b16 %v5027
    %v8006 = vunpack.c.h.b16 %v5027
    %v8007 = vunpack.c.l.b16 %v5028
    %v8008 = vunpack.c.h.b16 %v5028
    %v8009 = vunpack.c.l.b16 %v5029
    %v8010 = vunpack.c.h.b16 %v5029
    %v8011 = vunpack.c.l.b16 %v5030
    %v8012 = vunpack.c.h.b16 %v5030
    %v8013 = vunpack.c.l.b16 %v5031
    %v8014 = vunpack.c.h.b16 %v5031
    %v8015 = vunpack.c.l.b16 %v5032
    %v8016 = vunpack.c.h.b16 %v5032
    %v8017 = vunpack.c.l.b16 %v5033
    %v8018 = vunpack.c.h.b16 %v5033
    %v8019 = vunpack.c.l.b16 %v5034
    %v8020 = vunpack.c.h.b16 %v5034
    %v8021 = vunpack.c.l.b16 %v5035
    %v8022 = vunpack.c.h.b16 %v5035
    %v8023 = vunpack.c.l.b16 %v5036
    %v8024 = vunpack.c.h.b16 %v5036
    %v8025 = vunpack.c.l.b16 %v5037
    %v8026 = vunpack.c.h.b16 %v5037
    %v8027 = vunpack.c.l.b16 %v5038
    %v8028 = vunpack.c.h.b16 %v5038
    %v8029 = vunpack.c.l.b16 %v5039
    %v8030 = vunpack.c.h.b16 %v5039
    %v8031 = vunpack.c.l.b16 %v5040
    %v8032 = vunpack.c.h.b16 %v5040
    %v8033 = vunpack.c.l.b16 %v5041
    %v8034 = vunpack.c.h.b16 %v5041
    %v8035 = vunpack.c.l.b16 %v5042
    %v8036 = vunpack.c.h.b16 %v5042
    %v8037 = vunpack.c.l.b16 %v5043
    %v8038 = vunpack.c.h.b16 %v5043
    %v8039 = vunpack.c.l.b16 %v5044
    %v8040 = vunpack.c.h.b16 %v5044
    %v8041 = vunpack.c.l.b16 %v5045
    %v8042 = vunpack.c.h.b16 %v5045
    %v8043 = vunpack.c.l.b16 %v5046
    %v8044 = vunpack.c.h.b16 %v5046
    %v8045 = vunpack.c.l.b16 %v5047
    %v8046 = vunpack.c.h.b16 %v5047
    %v8047 = vunpack.c.l.b16 %v5048
    %v8048 = vunpack.c.h.b16 %v5048
    %v8049 = vunpack.c.l.b16 %v5049
    %v8050 = vunpack.c.h.b16 %v5049
    %v8051 = vunpack.c.l.b16 %v5050
    %v8052 = vunpack.c.h.b16 %v5050
    %v8053 = vunpack.c.l.b16 %v5051
    %v8054 = vunpack.c.h.b16 %v5051
    %v8055 = vunpack.c.l.b16 %v5052
    %v8056 = vunpack.c.h.b16 %v5052
    %v8057 = vunpack.c.l.b16 %v5053
    %v8058 = vunpack.c.h.b16 %v5053
    %v8059 = vunpack.c.l.b16 %v5054
    %v8060 = vunpack.c.h.b16 %v5054
    %v8061 = vunpack.c.l.b16 %v5055
    %v8062 = vunpack.c.h.b16 %v5055
    %v8063 = vunpack.c.l.b16 %v5056
    %v8064 = vunpack.c.h.b16 %v5056
    %v8065 = vunpack.c.l.b16 %v5057
    %v8066 = vunpack.c.h.b16 %v5057
    %v8067 = vunpack.c.l.b16 %v5058
    %v8068 = vunpack.c.h.b16 %v5058
    %v8069 = vunpack.c.l.b16 %v5059
    %v8070 = vunpack.c.h.b16 %v5059
    %v8071 = vunpack.c.l.b16 %v5060
    %v8072 = vunpack.c.h.b16 %v5060
    %v8073 = vunpack.c.l.b16 %v5061
    %v8074 = vunpack.c.h.b16 %v5061
    %v8075 = vunpack.c.l.b16 %v5062
    %v8076 = vunpack.c.h.b16 %v5062
    %v8077 = vunpack.c.l.b16 %v5063
    %v8078 = vunpack.c.h.b16 %v5063
    %v8079 = vunpack.c.l.b16 %v5064
    %v8080 = vunpack.c.h.b16 %v5064
    %v8081 = vunpack.c.l.b16 %v5065
    %v8082 = vunpack.c.h.b16 %v5065
    %v8083 = vunpack.c.l.b16 %v5066
    %v8084 = vunpack.c.h.b16 %v5066
    %v8085 = vunpack.c.l.b16 %v5067
    %v8086 = vunpack.c.h.b16 %v5067
    %v8087 = vunpack.c.l.b16 %v5068
    %v8088 = vunpack.c.h.b16 %v5068
    %v8089 = vunpack.c.l.b16 %v5069
    %v8090 = vunpack.c.h.b16 %v5069
    %v8091 = vunpack.c.l.b16 %v5070
    %v8092 = vunpack.c.h.b16 %v5070
    %v8093 = vunpack.c.l.b16 %v5071
    %v8094 = vunpack.c.h.b16 %v5071
    %v8095 = vunpack.c.l.b16 %v5072
    %v8096 = vunpack.c.h.b16 %v5072
    %v8097 = vunpack.c.l.b16 %v5073
    %v8098 = vunpack.c.h.b16 %v5073
    %v8099 = vunpack.c.l.b16 %v5074
    %v8100 = vunpack.c.h.b16 %v5074
    %v8101 = vunpack.c.l.b16 %v5075
    %v8102 = vunpack.c.h.b16 %v5075
    %v8103 = vunpack.c.l.b16 %v5076
    %v8104 = vunpack.c.h.b16 %v5076
    %v8105 = vunpack.c.l.b16 %v5077
    %v8106 = vunpack.c.h.b16 %v5077
    %v8107 = vunpack.c.l.b16 %v5078
    %v8108 = vunpack.c.h.b16 %v5078
    %v8109 = vunpack.c.l.b16 %v5079
    %v8110 = vunpack.c.h.b16 %v5079
    %v8111 = vunpack.c.l.b16 %v5080
    %v8112 = vunpack.c.h.b16 %v5080
    %v8113 = vunpack.c.l.b16 %v5081
    %v8114 = vunpack.c.h.b16 %v5081
    %v8115 = vunpack.c.l.b16 %v5082
    %v8116 = vunpack.c.h.b16 %v5082
    %v8117 = vunpack.c.l.b16 %v5083
    %v8118 = vunpack.c.h.b16 %v5083
    %v8119 = vunpack.c.l.b16 %v5084
    %v8120 = vunpack.c.h.b16 %v5084
    %v8121 = vunpack.c.l.b16 %v5085
    %v8122 = vunpack.c.h.b16 %v5085
    %v8123 = vunpack.c.l.b16 %v5086
    %v8124 = vunpack.c.h.b16 %v5086
    %v8125 = vunpack.c.l.b16 %v5087
    %v8126 = vunpack.c.h.b16 %v5087
    %v8127 = vunpack.c.l.b16 %v5088
    %v8128 = vunpack.c.h.b16 %v5088
    %v8129 = vunpack.c.l.b16 %v5089
    %v8130 = vunpack.c.h.b16 %v5089
    %v8131 = vunpack.c.l.b16 %v5090
    %v8132 = vunpack.c.h.b16 %v5090
    %v8133 = vunpack.c.l.b16 %v5091
    %v8134 = vunpack.c.h.b16 %v5091
    %v8135 = vunpack.c.l.b16 %v5092
    %v8136 = vunpack.c.h.b16 %v5092
    %v8137 = vunpack.c.l.b16 %v5093
    %v8138 = vunpack.c.h.b16 %v5093
    %v8139 = vunpack.c.l.b16 %v5094
    %v8140 = vunpack.c.h.b16 %v5094
    %v8141 = vunpack.c.l.b16 %v5095
    %v8142 = vunpack.c.h.b16 %v5095
    %v8143 = vunpack.c.l.b16 %v5096
    %v8144 = vunpack.c.h.b16 %v5096
    %v8145 = vunpack.c.l.b16 %v5097
    %v8146 = vunpack.c.h.b16 %v5097
    %v8147 = vunpack.c.l.b16 %v5098
    %v8148 = vunpack.c.h.b16 %v5098
    %v8149 = vunpack.c.l.b16 %v5099
    %v8150 = vunpack.c.h.b16 %v5099
    %v8151 = vunpack.c.l.b16 %v5100
    %v8152 = vunpack.c.h.b16 %v5100
    %v8153 = vunpack.c.l.b16 %v5101
    %v8154 = vunpack.c.h.b16 %v5101
    %v8155 = vunpack.c.l.b16 %v5102
    %v8156 = vunpack.c.h.b16 %v5102
    %v8157 = vunpack.c.l.b16 %v5103
    %v8158 = vunpack.c.h.b16 %v5103
    %v8159 = vunpack.c.l.b16 %v5104
    %v8160 = vunpack.c.h.b16 %v5104
    %v8161 = vunpack.c.l.b16 %v5105
    %v8162 = vunpack.c.h.b16 %v5105
    %v8163 = vunpack.c.l.b16 %v5106
    %v8164 = vunpack.c.h.b16 %v5106
    %v8165 = vunpack.c.l.b16 %v5107
    %v8166 = vunpack.c.h.b16 %v5107
    %v8167 = vunpack.c.l.b16 %v5108
    %v8168 = vunpack.c.h.b16 %v5108
    %v8169 = vunpack.c.l.b16 %v5109
    %v8170 = vunpack.c.h.b16 %v5109
    %v8171 = vunpack.c.l.b16 %v5110
    %v8172 = vunpack.c.h.b16 %v5110
    %v8173 = vunpack.c.l.b16 %v5111
    %v8174 = vunpack.c.h.b16 %v5111
    %v8175 = vunpack.c.l.b16 %v5112
    %v8176 = vunpack.c.h.b16 %v5112
    %v8177 = vunpack.c.l.b16 %v5113
    %v8178 = vunpack.c.h.b16 %v5113
    %v8179 = vunpack.c.l.b16 %v5114
    %v8180 = vunpack.c.h.b16 %v5114
    %v8181 = vunpack.c.l.b16 %v5115
    %v8182 = vunpack.c.h.b16 %v5115
    %v8183 = vunpack.c.l.b16 %v5116
    %v8184 = vunpack.c.h.b16 %v5116
    %v8185 = vunpack.c.l.b16 %v5117
    %v8186 = vunpack.c.h.b16 %v5117
    %v8187 = vunpack.c.l.b16 %v5118
    %v8188 = vunpack.c.h.b16 %v5118
    %v8189 = vunpack.c.l.b16 %v5119
    %v8190 = vunpack.c.h.b16 %v5119
    %v8191 = vunpack.c.l.b16 %v5120
    %v8192 = vunpack.c.h.b16 %v5120
    %v8193 = vpack.c.b16 %v6161, %v6145
    %v8194 = vpack.c.b16 %v6162, %v6146
    %v8195 = vpack.c.b16 %v6163, %v6147
    %v8196 = vpack.c.b16 %v6164, %v6148
    %v8197 = vpack.c.b16 %v6165, %v6149
    %v8198 = vpack.c.b16 %v6166, %v6150
    %v8199 = vpack.c.b16 %v6167, %v6151
    %v8200 = vpack.c.b16 %v6168, %v6152
    %v8201 = vpack.c.b16 %v6169, %v6153
    %v8202 = vpack.c.b16 %v6170, %v6154
    %v8203 = vpack.c.b16 %v6171, %v6155
    %v8204 = vpack.c.b16 %v6172, %v6156
    %v8205 = vpack.c.b16 %v6173, %v6157
    %v8206 = vpack.c.b16 %v6174, %v6158
    %v8207 = vpack.c.b16 %v6175, %v6159
    %v8208 = vpack.c.b16 %v6176, %v6160
    %v8209 = vpack.c.b16 %v6193, %v6177
    %v8210 = vpack.c.b16 %v6194, %v6178
    %v8211 = vpack.c.b16 %v6195, %v6179
    %v8212 = vpack.c.b16 %v6196, %v6180
    %v8213 = vpack.c.b16 %v6197, %v6181
    %v8214 = vpack.c.b16 %v6198, %v6182
    %v8215 = vpack.c.b16 %v6199, %v6183
    %v8216 = vpack.c.b16 %v6200, %v6184
    %v8217 = vpack.c.b16 %v6201, %v6185
    %v8218 = vpack.c.b16 %v6202, %v6186
    %v8219 = vpack.c.b16 %v6203, %v6187
    %v8220 = vpack.c.b16 %v6204, %v6188
    %v8221 = vpack.c.b16 %v6205, %v6189
    %v8222 = vpack.c.b16 %v6206, %v6190
    %v8223 = vpack.c.b16 %v6207, %v6191
    %v8224 = vpack.c.b16 %v6208, %v6192
    %v8225 = vpack.c.b16 %v6225, %v6209
    %v8226 = vpack.c.b16 %v6226, %v6210
    %v8227 = vpack.c.b16 %v6227, %v6211
    %v8228 = vpack.c.b16 %v6228, %v6212
    %v8229 = vpack.c.b16 %v6229, %v6213
    %v8230 = vpack.c.b16 %v6230, %v6214
    %v8231 = vpack.c.b16 %v6231, %v6215
    %v8232 = vpack.c.b16 %v6232, %v6216
    %v8233 = vpack.c.b16 %v6233, %v6217
    %v8234 = vpack.c.b16 %v6234, %v6218
    %v8235 = vpack.c.b16 %v6235, %v6219
    %v8236 = vpack.c.b16 %v6236, %v6220
    %v8237 = vpack.c.b16 %v6237, %v6221
    %v8238 = vpack.c.b16 %v6238, %v6222
    %v8239 = vpack.c.b16 %v6239, %v6223
    %v8240 = vpack.c.b16 %v6240, %v6224
    %v8241 = vpack.c.b16 %v6257, %v6241
    %v8242 = vpack.c.b16 %v6258, %v6242
    %v8243 = vpack.c.b16 %v6259, %v6243
    %v8244 = vpack.c.b16 %v6260, %v6244
    %v8245 = vpack.c.b16 %v6261, %v6245
    %v8246 = vpack.c.b16 %v6262, %v6246
    %v8247 = vpack.c.b16 %v6263, %v6247
    %v8248 = vpack.c.b16 %v6264, %v6248
    %v8249 = vpack.c.b16 %v6265, %v6249
    %v8250 = vpack.c.b16 %v6266, %v6250
    %v8251 = vpack.c.b16 %v6267, %v6251
    %v8252 = vpack.c.b16 %v6268, %v6252
    %v8253 = vpack.c.b16 %v6269, %v6253
    %v8254 = vpack.c.b16 %v6270, %v6254
    %v8255 = vpack.c.b16 %v6271, %v6255
    %v8256 = vpack.c.b16 %v6272, %v6256
    %v8257 = vpack.c.b16 %v6289, %v6273
    %v8258 = vpack.c.b16 %v6290, %v6274
    %v8259 = vpack.c.b16 %v6291, %v6275
    %v8260 = vpack.c.b16 %v6292, %v6276
    %v8261 = vpack.c.b16 %v6293, %v6277
    %v8262 = vpack.c.b16 %v6294, %v6278
    %v8263 = vpack.c.b16 %v6295, %v6279
    %v8264 = vpack.c.b16 %v6296, %v6280
    %v8265 = vpack.c.b16 %v6297, %v6281
    %v8266 = vpack.c.b16 %v6298, %v6282
    %v8267 = vpack.c.b16 %v6299, %v6283
    %v8268 = vpack.c.b16 %v6300, %v6284
    %v8269 = vpack.c.b16 %v6301, %v6285
    %v8270 = vpack.c.b16 %v6302, %v6286
    %v8271 = vpack.c.b16 %v6303, %v6287
    %v8272 = vpack.c.b16 %v6304, %v6288
    %v8273 = vpack.c.b16 %v6321, %v6305
    %v8274 = vpack.c.b16 %v6322, %v6306
    %v8275 = vpack.c.b16 %v6323, %v6307
    %v8276 = vpack.c.b16 %v6324, %v6308
    %v8277 = vpack.c.b16 %v6325, %v6309
    %v8278 = vpack.c.b16 %v6326, %v6310
    %v8279 = vpack.c.b16 %v6327, %v6311
    %v8280 = vpack.c.b16 %v6328, %v6312
    %v8281 = vpack.c.b16 %v6329, %v6313
    %v8282 = vpack.c.b16 %v6330, %v6314
    %v8283 = vpack.c.b16 %v6331, %v6315
    %v8284 = vpack.c.b16 %v6332, %v6316
    %v8285 = vpack.c.b16 %v6333, %v6317
    %v8286 = vpack.c.b16 %v6334, %v6318
    %v8287 = vpack.c.b16 %v6335, %v6319
    %v8288 = vpack.c.b16 %v6336, %v6320
    %v8289 = vpack.c.b16 %v6353, %v6337
    %v8290 = vpack.c.b16 %v6354, %v6338
    %v8291 = vpack.c.b16 %v6355, %v6339
    %v8292 = vpack.c.b16 %v6356, %v6340
    %v8293 = vpack.c.b16 %v6357, %v6341
    %v8294 = vpack.c.b16 %v6358, %v6342
    %v8295 = vpack.c.b16 %v6359, %v6343
    %v8296 = vpack.c.b16 %v6360, %v6344
    %v8297 = vpack.c.b16 %v6361, %v6345
    %v8298 = vpack.c.b16 %v6362, %v6346
    %v8299 = vpack.c.b16 %v6363, %v6347
    %v8300 = vpack.c.b16 %v6364, %v6348
    %v8301 = vpack.c.b16 %v6365, %v6349
    %v8302 = vpack.c.b16 %v6366, %v6350
    %v8303 = vpack.c.b16 %v6367, %v6351
    %v8304 = vpack.c.b16 %v6368, %v6352
    %v8305 = vpack.c.b16 %v6385, %v6369
    %v8306 = vpack.c.b16 %v6386, %v6370
    %v8307 = vpack.c.b16 %v6387, %v6371
    %v8308 = vpack.c.b16 %v6388, %v6372
    %v8309 = vpack.c.b16 %v6389, %v6373
    %v8310 = vpack.c.b16 %v6390, %v6374
    %v8311 = vpack.c.b16 %v6391, %v6375
    %v8312 = vpack.c.b16 %v6392, %v6376
    %v8313 = vpack.c.b16 %v6393, %v6377
    %v8314 = vpack.c.b16 %v6394, %v6378
    %v8315 = vpack.c.b16 %v6395, %v6379
    %v8316 = vpack.c.b16 %v6396, %v6380
    %v8317 = vpack.c.b16 %v6397, %v6381
    %v8318 = vpack.c.b16 %v6398, %v6382
    %v8319 = vpack.c.b16 %v6399, %v6383
    %v8320 = vpack.c.b16 %v6400, %v6384
    %v8321 = vpack.c.b16 %v6417, %v6401
    %v8322 = vpack.c.b16 %v6418, %v6402
    %v8323 = vpack.c.b16 %v6419, %v6403
    %v8324 = vpack.c.b16 %v6420, %v6404
    %v8325 = vpack.c.b16 %v6421, %v6405
    %v8326 = vpack.c.b16 %v6422, %v6406
    %v8327 = vpack.c.b16 %v6423, %v6407
    %v8328 = vpack.c.b16 %v6424, %v6408
    %v8329 = vpack.c.b16 %v6425, %v6409
    %v8330 = vpack.c.b16 %v6426, %v6410
    %v8331 = vpack.c.b16 %v6427, %v6411
    %v8332 = vpack.c.b16 %v6428, %v6412
    %v8333 = vpack.c.b16 %v6429, %v6413
    %v8334 = vpack.c.b16 %v6430, %v6414
    %v8335 = vpack.c.b16 %v6431, %v6415
    %v8336 = vpack.c.b16 %v6432, %v6416
    %v8337 = vpack.c.b16 %v6449, %v6433
    %v8338 = vpack.c.b16 %v6450, %v6434
    %v8339 = vpack.c.b16 %v6451, %v6435
    %v8340 = vpack.c.b16 %v6452, %v6436
    %v8341 = vpack.c.b16 %v6453, %v6437
    %v8342 = vpack.c.b16 %v6454, %v6438
    %v8343 = vpack.c.b16 %v6455, %v6439
    %v8344 = vpack.c.b16 %v6456, %v6440
    %v8345 = vpack.c.b16 %v6457, %v6441
    %v8346 = vpack.c.b16 %v6458, %v6442
    %v8347 = vpack.c.b16 %v6459, %v6443
    %v8348 = vpack.c.b16 %v6460, %v6444
    %v8349 = vpack.c.b16 %v6461, %v6445
    %v8350 = vpack.c.b16 %v6462, %v6446
    %v8351 = vpack.c.b16 %v6463, %v6447
    %v8352 = vpack.c.b16 %v6464, %v6448
    %v8353 = vpack.c.b16 %v6481, %v6465
    %v8354 = vpack.c.b16 %v6482, %v6466
    %v8355 = vpack.c.b16 %v6483, %v6467
    %v8356 = vpack.c.b16 %v6484, %v6468
    %v8357 = vpack.c.b16 %v6485, %v6469
    %v8358 = vpack.c.b16 %v6486, %v6470
    %v8359 = vpack.c.b16 %v6487, %v6471
    %v8360 = vpack.c.b16 %v6488, %v6472
    %v8361 = vpack.c.b16 %v6489, %v6473
    %v8362 = vpack.c.b16 %v6490, %v6474
    %v8363 = vpack.c.b16 %v6491, %v6475
    %v8364 = vpack.c.b16 %v6492, %v6476
    %v8365 = vpack.c.b16 %v6493, %v6477
    %v8366 = vpack.c.b16 %v6494, %v6478
    %v8367 = vpack.c.b16 %v6495, %v6479
    %v8368 = vpack.c.b16 %v6496, %v6480
    %v8369 = vpack.c.b16 %v6513, %v6497
    %v8370 = vpack.c.b16 %v6514, %v6498
    %v8371 = vpack.c.b16 %v6515, %v6499
    %v8372 = vpack.c.b16 %v6516, %v6500
    %v8373 = vpack.c.b16 %v6517, %v6501
    %v8374 = vpack.c.b16 %v6518, %v6502
    %v8375 = vpack.c.b16 %v6519, %v6503
    %v8376 = vpack.c.b16 %v6520, %v6504
    %v8377 = vpack.c.b16 %v6521, %v6505
    %v8378 = vpack.c.b16 %v6522, %v6506
    %v8379 = vpack.c.b16 %v6523, %v6507
    %v8380 = vpack.c.b16 %v6524, %v6508
    %v8381 = vpack.c.b16 %v6525, %v6509
    %v8382 = vpack.c.b16 %v6526, %v6510
    %v8383 = vpack.c.b16 %v6527, %v6511
    %v8384 = vpack.c.b16 %v6528, %v6512
    %v8385 = vpack.c.b16 %v6545, %v6529
    %v8386 = vpack.c.b16 %v6546, %v6530
    %v8387 = vpack.c.b16 %v6547, %v6531
    %v8388 = vpack.c.b16 %v6548, %v6532
    %v8389 = vpack.c.b16 %v6549, %v6533
    %v8390 = vpack.c.b16 %v6550, %v6534
    %v8391 = vpack.c.b16 %v6551, %v6535
    %v8392 = vpack.c.b16 %v6552, %v6536
    %v8393 = vpack.c.b16 %v6553, %v6537
    %v8394 = vpack.c.b16 %v6554, %v6538
    %v8395 = vpack.c.b16 %v6555, %v6539
    %v8396 = vpack.c.b16 %v6556, %v6540
    %v8397 = vpack.c.b16 %v6557, %v6541
    %v8398 = vpack.c.b16 %v6558, %v6542
    %v8399 = vpack.c.b16 %v6559, %v6543
    %v8400 = vpack.c.b16 %v6560, %v6544
    %v8401 = vpack.c.b16 %v6577, %v6561
    %v8402 = vpack.c.b16 %v6578, %v6562
    %v8403 = vpack.c.b16 %v6579, %v6563
    %v8404 = vpack.c.b16 %v6580, %v6564
    %v8405 = vpack.c.b16 %v6581, %v6565
    %v8406 = vpack.c.b16 %v6582, %v6566
    %v8407 = vpack.c.b16 %v6583, %v6567
    %v8408 = vpack.c.b16 %v6584, %v6568
    %v8409 = vpack.c.b16 %v6585, %v6569
    %v8410 = vpack.c.b16 %v6586, %v6570
    %v8411 = vpack.c.b16 %v6587, %v6571
    %v8412 = vpack.c.b16 %v6588, %v6572
    %v8413 = vpack.c.b16 %v6589, %v6573
    %v8414 = vpack.c.b16 %v6590, %v6574
    %v8415 = vpack.c.b16 %v6591, %v6575
    %v8416 = vpack.c.b16 %v6592, %v6576
    %v8417 = vpack.c.b16 %v6609, %v6593
    %v8418 = vpack.c.b16 %v6610, %v6594
    %v8419 = vpack.c.b16 %v6611, %v6595
    %v8420 = vpack.c.b16 %v6612, %v6596
    %v8421 = vpack.c.b16 %v6613, %v6597
    %v8422 = vpack.c.b16 %v6614, %v6598
    %v8423 = vpack.c.b16 %v6615, %v6599
    %v8424 = vpack.c.b16 %v6616, %v6600
    %v8425 = vpack.c.b16 %v6617, %v6601
    %v8426 = vpack.c.b16 %v6618, %v6602
    %v8427 = vpack.c.b16 %v6619, %v6603
    %v8428 = vpack.c.b16 %v6620, %v6604
    %v8429 = vpack.c.b16 %v6621, %v6605
    %v8430 = vpack.c.b16 %v6622, %v6606
    %v8431 = vpack.c.b16 %v6623, %v6607
    %v8432 = vpack.c.b16 %v6624, %v6608
    %v8433 = vpack.c.b16 %v6641, %v6625
    %v8434 = vpack.c.b16 %v6642, %v6626
    %v8435 = vpack.c.b16 %v6643, %v6627
    %v8436 = vpack.c.b16 %v6644, %v6628
    %v8437 = vpack.c.b16 %v6645, %v6629
    %v8438 = vpack.c.b16 %v6646, %v6630
    %v8439 = vpack.c.b16 %v6647, %v6631
    %v8440 = vpack.c.b16 %v6648, %v6632
    %v8441 = vpack.c.b16 %v6649, %v6633
    %v8442 = vpack.c.b16 %v6650, %v6634
    %v8443 = vpack.c.b16 %v6651, %v6635
    %v8444 = vpack.c.b16 %v6652, %v6636
    %v8445 = vpack.c.b16 %v6653, %v6637
    %v8446 = vpack.c.b16 %v6654, %v6638
    %v8447 = vpack.c.b16 %v6655, %v6639
    %v8448 = vpack.c.b16 %v6656, %v6640
    %v8449 = vpack.c.b16 %v6673, %v6657
    %v8450 = vpack.c.b16 %v6674, %v6658
    %v8451 = vpack.c.b16 %v6675, %v6659
    %v8452 = vpack.c.b16 %v6676, %v6660
    %v8453 = vpack.c.b16 %v6677, %v6661
    %v8454 = vpack.c.b16 %v6678, %v6662
    %v8455 = vpack.c.b16 %v6679, %v6663
    %v8456 = vpack.c.b16 %v6680, %v6664
    %v8457 = vpack.c.b16 %v6681, %v6665
    %v8458 = vpack.c.b16 %v6682, %v6666
    %v8459 = vpack.c.b16 %v6683, %v6667
    %v8460 = vpack.c.b16 %v6684, %v6668
    %v8461 = vpack.c.b16 %v6685, %v6669
    %v8462 = vpack.c.b16 %v6686, %v6670
    %v8463 = vpack.c.b16 %v6687, %v6671
    %v8464 = vpack.c.b16 %v6688, %v6672
    %v8465 = vpack.c.b16 %v6705, %v6689
    %v8466 = vpack.c.b16 %v6706, %v6690
    %v8467 = vpack.c.b16 %v6707, %v6691
    %v8468 = vpack.c.b16 %v6708, %v6692
    %v8469 = vpack.c.b16 %v6709, %v6693
    %v8470 = vpack.c.b16 %v6710, %v6694
    %v8471 = vpack.c.b16 %v6711, %v6695
    %v8472 = vpack.c.b16 %v6712, %v6696
    %v8473 = vpack.c.b16 %v6713, %v6697
    %v8474 = vpack.c.b16 %v6714, %v6698
    %v8475 = vpack.c.b16 %v6715, %v6699
    %v8476 = vpack.c.b16 %v6716, %v6700
    %v8477 = vpack.c.b16 %v6717, %v6701
    %v8478 = vpack.c.b16 %v6718, %v6702
    %v8479 = vpack.c.b16 %v6719, %v6703
    %v8480 = vpack.c.b16 %v6720, %v6704
    %v8481 = vpack.c.b16 %v6737, %v6721
    %v8482 = vpack.c.b16 %v6738, %v6722
    %v8483 = vpack.c.b16 %v6739, %v6723
    %v8484 = vpack.c.b16 %v6740, %v6724
    %v8485 = vpack.c.b16 %v6741, %v6725
    %v8486 = vpack.c.b16 %v6742, %v6726
    %v8487 = vpack.c.b16 %v6743, %v6727
    %v8488 = vpack.c.b16 %v6744, %v6728
    %v8489 = vpack.c.b16 %v6745, %v6729
    %v8490 = vpack.c.b16 %v6746, %v6730
    %v8491 = vpack.c.b16 %v6747, %v6731
    %v8492 = vpack.c.b16 %v6748, %v6732
    %v8493 = vpack.c.b16 %v6749, %v6733
    %v8494 = vpack.c.b16 %v6750, %v6734
    %v8495 = vpack.c.b16 %v6751, %v6735
    %v8496 = vpack.c.b16 %v6752, %v6736
    %v8497 = vpack.c.b16 %v6769, %v6753
    %v8498 = vpack.c.b16 %v6770, %v6754
    %v8499 = vpack.c.b16 %v6771, %v6755
    %v8500 = vpack.c.b16 %v6772, %v6756
    %v8501 = vpack.c.b16 %v6773, %v6757
    %v8502 = vpack.c.b16 %v6774, %v6758
    %v8503 = vpack.c.b16 %v6775, %v6759
    %v8504 = vpack.c.b16 %v6776, %v6760
    %v8505 = vpack.c.b16 %v6777, %v6761
    %v8506 = vpack.c.b16 %v6778, %v6762
    %v8507 = vpack.c.b16 %v6779, %v6763
    %v8508 = vpack.c.b16 %v6780, %v6764
    %v8509 = vpack.c.b16 %v6781, %v6765
    %v8510 = vpack.c.b16 %v6782, %v6766
    %v8511 = vpack.c.b16 %v6783, %v6767
    %v8512 = vpack.c.b16 %v6784, %v6768
    %v8513 = vpack.c.b16 %v6801, %v6785
    %v8514 = vpack.c.b16 %v6802, %v6786
    %v8515 = vpack.c.b16 %v6803, %v6787
    %v8516 = vpack.c.b16 %v6804, %v6788
    %v8517 = vpack.c.b16 %v6805, %v6789
    %v8518 = vpack.c.b16 %v6806, %v6790
    %v8519 = vpack.c.b16 %v6807, %v6791
    %v8520 = vpack.c.b16 %v6808, %v6792
    %v8521 = vpack.c.b16 %v6809, %v6793
    %v8522 = vpack.c.b16 %v6810, %v6794
    %v8523 = vpack.c.b16 %v6811, %v6795
    %v8524 = vpack.c.b16 %v6812, %v6796
    %v8525 = vpack.c.b16 %v6813, %v6797
    %v8526 = vpack.c.b16 %v6814, %v6798
    %v8527 = vpack.c.b16 %v6815, %v6799
    %v8528 = vpack.c.b16 %v6816, %v6800
    %v8529 = vpack.c.b16 %v6833, %v6817
    %v8530 = vpack.c.b16 %v6834, %v6818
    %v8531 = vpack.c.b16 %v6835, %v6819
    %v8532 = vpack.c.b16 %v6836, %v6820
    %v8533 = vpack.c.b16 %v6837, %v6821
    %v8534 = vpack.c.b16 %v6838, %v6822
    %v8535 = vpack.c.b16 %v6839, %v6823
    %v8536 = vpack.c.b16 %v6840, %v6824
    %v8537 = vpack.c.b16 %v6841, %v6825
    %v8538 = vpack.c.b16 %v6842, %v6826
    %v8539 = vpack.c.b16 %v6843, %v6827
    %v8540 = vpack.c.b16 %v6844, %v6828
    %v8541 = vpack.c.b16 %v6845, %v6829
    %v8542 = vpack.c.b16 %v6846, %v6830
    %v8543 = vpack.c.b16 %v6847, %v6831
    %v8544 = vpack.c.b16 %v6848, %v6832
    %v8545 = vpack.c.b16 %v6865, %v6849
    %v8546 = vpack.c.b16 %v6866, %v6850
    %v8547 = vpack.c.b16 %v6867, %v6851
    %v8548 = vpack.c.b16 %v6868, %v6852
    %v8549 = vpack.c.b16 %v6869, %v6853
    %v8550 = vpack.c.b16 %v6870, %v6854
    %v8551 = vpack.c.b16 %v6871, %v6855
    %v8552 = vpack.c.b16 %v6872, %v6856
    %v8553 = vpack.c.b16 %v6873, %v6857
    %v8554 = vpack.c.b16 %v6874, %v6858
    %v8555 = vpack.c.b16 %v6875, %v6859
    %v8556 = vpack.c.b16 %v6876, %v6860
    %v8557 = vpack.c.b16 %v6877, %v6861
    %v8558 = vpack.c.b16 %v6878, %v6862
    %v8559 = vpack.c.b16 %v6879, %v6863
    %v8560 = vpack.c.b16 %v6880, %v6864
    %v8561 = vpack.c.b16 %v6897, %v6881
    %v8562 = vpack.c.b16 %v6898, %v6882
    %v8563 = vpack.c.b16 %v6899, %v6883
    %v8564 = vpack.c.b16 %v6900, %v6884
    %v8565 = vpack.c.b16 %v6901, %v6885
    %v8566 = vpack.c.b16 %v6902, %v6886
    %v8567 = vpack.c.b16 %v6903, %v6887
    %v8568 = vpack.c.b16 %v6904, %v6888
    %v8569 = vpack.c.b16 %v6905, %v6889
    %v8570 = vpack.c.b16 %v6906, %v6890
    %v8571 = vpack.c.b16 %v6907, %v6891
    %v8572 = vpack.c.b16 %v6908, %v6892
    %v8573 = vpack.c.b16 %v6909, %v6893
    %v8574 = vpack.c.b16 %v6910, %v6894
    %v8575 = vpack.c.b16 %v6911, %v6895
    %v8576 = vpack.c.b16 %v6912, %v6896
    %v8577 = vpack.c.b16 %v6929, %v6913
    %v8578 = vpack.c.b16 %v6930, %v6914
    %v8579 = vpack.c.b16 %v6931, %v6915
    %v8580 = vpack.c.b16 %v6932, %v6916
    %v8581 = vpack.c.b16 %v6933, %v6917
    %v8582 = vpack.c.b16 %v6934, %v6918
    %v8583 = vpack.c.b16 %v6935, %v6919
    %v8584 = vpack.c.b16 %v6936, %v6920
    %v8585 = vpack.c.b16 %v6937, %v6921
    %v8586 = vpack.c.b16 %v6938, %v6922
    %v8587 = vpack.c.b16 %v6939, %v6923
    %v8588 = vpack.c.b16 %v6940, %v6924
    %v8589 = vpack.c.b16 %v6941, %v6925
    %v8590 = vpack.c.b16 %v6942, %v6926
    %v8591 = vpack.c.b16 %v6943, %v6927
    %v8592 = vpack.c.b16 %v6944, %v6928
    %v8593 = vpack.c.b16 %v6961, %v6945
    %v8594 = vpack.c.b16 %v6962, %v6946
    %v8595 = vpack.c.b16 %v6963, %v6947
    %v8596 = vpack.c.b16 %v6964, %v6948
    %v8597 = vpack.c.b16 %v6965, %v6949
    %v8598 = vpack.c.b16 %v6966, %v6950
    %v8599 = vpack.c.b16 %v6967, %v6951
    %v8600 = vpack.c.b16 %v6968, %v6952
    %v8601 = vpack.c.b16 %v6969, %v6953
    %v8602 = vpack.c.b16 %v6970, %v6954
    %v8603 = vpack.c.b16 %v6971, %v6955
    %v8604 = vpack.c.b16 %v6972, %v6956
    %v8605 = vpack.c.b16 %v6973, %v6957
    %v8606 = vpack.c.b16 %v6974, %v6958
    %v8607 = vpack.c.b16 %v6975, %v6959
    %v8608 = vpack.c.b16 %v6976, %v6960
    %v8609 = vpack.c.b16 %v6993, %v6977
    %v8610 = vpack.c.b16 %v6994, %v6978
    %v8611 = vpack.c.b16 %v6995, %v6979
    %v8612 = vpack.c.b16 %v6996, %v6980
    %v8613 = vpack.c.b16 %v6997, %v6981
    %v8614 = vpack.c.b16 %v6998, %v6982
    %v8615 = vpack.c.b16 %v6999, %v6983
    %v8616 = vpack.c.b16 %v7000, %v6984
    %v8617 = vpack.c.b16 %v7001, %v6985
    %v8618 = vpack.c.b16 %v7002, %v6986
    %v8619 = vpack.c.b16 %v7003, %v6987
    %v8620 = vpack.c.b16 %v7004, %v6988
    %v8621 = vpack.c.b16 %v7005, %v6989
    %v8622 = vpack.c.b16 %v7006, %v6990
    %v8623 = vpack.c.b16 %v7007, %v6991
    %v8624 = vpack.c.b16 %v7008, %v6992
    %v8625 = vpack.c.b16 %v7025, %v7009
    %v8626 = vpack.c.b16 %v7026, %v7010
    %v8627 = vpack.c.b16 %v7027, %v7011
    %v8628 = vpack.c.b16 %v7028, %v7012
    %v8629 = vpack.c.b16 %v7029, %v7013
    %v8630 = vpack.c.b16 %v7030, %v7014
    %v8631 = vpack.c.b16 %v7031, %v7015
    %v8632 = vpack.c.b16 %v7032, %v7016
    %v8633 = vpack.c.b16 %v7033, %v7017
    %v8634 = vpack.c.b16 %v7034, %v7018
    %v8635 = vpack.c.b16 %v7035, %v7019
    %v8636 = vpack.c.b16 %v7036, %v7020
    %v8637 = vpack.c.b16 %v7037, %v7021
    %v8638 = vpack.c.b16 %v7038, %v7022
    %v8639 = vpack.c.b16 %v7039, %v7023
    %v8640 = vpack.c.b16 %v7040, %v7024
    %v8641 = vpack.c.b16 %v7057, %v7041
    %v8642 = vpack.c.b16 %v7058, %v7042
    %v8643 = vpack.c.b16 %v7059, %v7043
    %v8644 = vpack.c.b16 %v7060, %v7044
    %v8645 = vpack.c.b16 %v7061, %v7045
    %v8646 = vpack.c.b16 %v7062, %v7046
    %v8647 = vpack.c.b16 %v7063, %v7047
    %v8648 = vpack.c.b16 %v7064, %v7048
    %v8649 = vpack.c.b16 %v7065, %v7049
    %v8650 = vpack.c.b16 %v7066, %v7050
    %v8651 = vpack.c.b16 %v7067, %v7051
    %v8652 = vpack.c.b16 %v7068, %v7052
    %v8653 = vpack.c.b16 %v7069, %v7053
    %v8654 = vpack.c.b16 %v7070, %v7054
    %v8655 = vpack.c.b16 %v7071, %v7055
    %v8656 = vpack.c.b16 %v7072, %v7056
    %v8657 = vpack.c.b16 %v7089, %v7073
    %v8658 = vpack.c.b16 %v7090, %v7074
    %v8659 = vpack.c.b16 %v7091, %v7075
    %v8660 = vpack.c.b16 %v7092, %v7076
    %v8661 = vpack.c.b16 %v7093, %v7077
    %v8662 = vpack.c.b16 %v7094, %v7078
    %v8663 = vpack.c.b16 %v7095, %v7079
    %v8664 = vpack.c.b16 %v7096, %v7080
    %v8665 = vpack.c.b16 %v7097, %v7081
    %v8666 = vpack.c.b16 %v7098, %v7082
    %v8667 = vpack.c.b16 %v7099, %v7083
    %v8668 = vpack.c.b16 %v7100, %v7084
    %v8669 = vpack.c.b16 %v7101, %v7085
    %v8670 = vpack.c.b16 %v7102, %v7086
    %v8671 = vpack.c.b16 %v7103, %v7087
    %v8672 = vpack.c.b16 %v7104, %v7088
    %v8673 = vpack.c.b16 %v7121, %v7105
    %v8674 = vpack.c.b16 %v7122, %v7106
    %v8675 = vpack.c.b16 %v7123, %v7107
    %v8676 = vpack.c.b16 %v7124, %v7108
    %v8677 = vpack.c.b16 %v7125, %v7109
    %v8678 = vpack.c.b16 %v7126, %v7110
    %v8679 = vpack.c.b16 %v7127, %v7111
    %v8680 = vpack.c.b16 %v7128, %v7112
    %v8681 = vpack.c.b16 %v7129, %v7113
    %v8682 = vpack.c.b16 %v7130, %v7114
    %v8683 = vpack.c.b16 %v7131, %v7115
    %v8684 = vpack.c.b16 %v7132, %v7116
    %v8685 = vpack.c.b16 %v7133, %v7117
    %v8686 = vpack.c.b16 %v7134, %v7118
    %v8687 = vpack.c.b16 %v7135, %v7119
    %v8688 = vpack.c.b16 %v7136, %v7120
    %v8689 = vpack.c.b16 %v7153, %v7137
    %v8690 = vpack.c.b16 %v7154, %v7138
    %v8691 = vpack.c.b16 %v7155, %v7139
    %v8692 = vpack.c.b16 %v7156, %v7140
    %v8693 = vpack.c.b16 %v7157, %v7141
    %v8694 = vpack.c.b16 %v7158, %v7142
    %v8695 = vpack.c.b16 %v7159, %v7143
    %v8696 = vpack.c.b16 %v7160, %v7144
    %v8697 = vpack.c.b16 %v7161, %v7145
    %v8698 = vpack.c.b16 %v7162, %v7146
    %v8699 = vpack.c.b16 %v7163, %v7147
    %v8700 = vpack.c.b16 %v7164, %v7148
    %v8701 = vpack.c.b16 %v7165, %v7149
    %v8702 = vpack.c.b16 %v7166, %v7150
    %v8703 = vpack.c.b16 %v7167, %v7151
    %v8704 = vpack.c.b16 %v7168, %v7152
    %v8705 = vpack.c.b16 %v7185, %v7169
    %v8706 = vpack.c.b16 %v7186, %v7170
    %v8707 = vpack.c.b16 %v7187, %v7171
    %v8708 = vpack.c.b16 %v7188, %v7172
    %v8709 = vpack.c.b16 %v7189, %v7173
    %v8710 = vpack.c.b16 %v7190, %v7174
    %v8711 = vpack.c.b16 %v7191, %v7175
    %v8712 = vpack.c.b16 %v7192, %v7176
    %v8713 = vpack.c.b16 %v7193, %v7177
    %v8714 = vpack.c.b16 %v7194, %v7178
    %v8715 = vpack.c.b16 %v7195, %v7179
    %v8716 = vpack.c.b16 %v7196, %v7180
    %v8717 = vpack.c.b16 %v7197, %v7181
    %v8718 = vpack.c.b16 %v7198, %v7182
    %v8719 = vpack.c.b16 %v7199, %v7183
    %v8720 = vpack.c.b16 %v7200, %v7184
    %v8721 = vpack.c.b16 %v7217, %v7201
    %v8722 = vpack.c.b16 %v7218, %v7202
    %v8723 = vpack.c.b16 %v7219, %v7203
    %v8724 = vpack.c.b16 %v7220, %v7204
    %v8725 = vpack.c.b16 %v7221, %v7205
    %v8726 = vpack.c.b16 %v7222, %v7206
    %v8727 = vpack.c.b16 %v7223, %v7207
    %v8728 = vpack.c.b16 %v7224, %v7208
    %v8729 = vpack.c.b16 %v7225, %v7209
    %v8730 = vpack.c.b16 %v7226, %v7210
    %v8731 = vpack.c.b16 %v7227, %v7211
    %v8732 = vpack.c.b16 %v7228, %v7212
    %v8733 = vpack.c.b16 %v7229, %v7213
    %v8734 = vpack.c.b16 %v7230, %v7214
    %v8735 = vpack.c.b16 %v7231, %v7215
    %v8736 = vpack.c.b16 %v7232, %v7216
    %v8737 = vpack.c.b16 %v7249, %v7233
    %v8738 = vpack.c.b16 %v7250, %v7234
    %v8739 = vpack.c.b16 %v7251, %v7235
    %v8740 = vpack.c.b16 %v7252, %v7236
    %v8741 = vpack.c.b16 %v7253, %v7237
    %v8742 = vpack.c.b16 %v7254, %v7238
    %v8743 = vpack.c.b16 %v7255, %v7239
    %v8744 = vpack.c.b16 %v7256, %v7240
    %v8745 = vpack.c.b16 %v7257, %v7241
    %v8746 = vpack.c.b16 %v7258, %v7242
    %v8747 = vpack.c.b16 %v7259, %v7243
    %v8748 = vpack.c.b16 %v7260, %v7244
    %v8749 = vpack.c.b16 %v7261, %v7245
    %v8750 = vpack.c.b16 %v7262, %v7246
    %v8751 = vpack.c.b16 %v7263, %v7247
    %v8752 = vpack.c.b16 %v7264, %v7248
    %v8753 = vpack.c.b16 %v7281, %v7265
    %v8754 = vpack.c.b16 %v7282, %v7266
    %v8755 = vpack.c.b16 %v7283, %v7267
    %v8756 = vpack.c.b16 %v7284, %v7268
    %v8757 = vpack.c.b16 %v7285, %v7269
    %v8758 = vpack.c.b16 %v7286, %v7270
    %v8759 = vpack.c.b16 %v7287, %v7271
    %v8760 = vpack.c.b16 %v7288, %v7272
    %v8761 = vpack.c.b16 %v7289, %v7273
    %v8762 = vpack.c.b16 %v7290, %v7274
    %v8763 = vpack.c.b16 %v7291, %v7275
    %v8764 = vpack.c.b16 %v7292, %v7276
    %v8765 = vpack.c.b16 %v7293, %v7277
    %v8766 = vpack.c.b16 %v7294, %v7278
    %v8767 = vpack.c.b16 %v7295, %v7279
    %v8768 = vpack.c.b16 %v7296, %v7280
    %v8769 = vpack.c.b16 %v7313, %v7297
    %v8770 = vpack.c.b16 %v7314, %v7298
    %v8771 = vpack.c.b16 %v7315, %v7299
    %v8772 = vpack.c.b16 %v7316, %v7300
    %v8773 = vpack.c.b16 %v7317, %v7301
    %v8774 = vpack.c.b16 %v7318, %v7302
    %v8775 = vpack.c.b16 %v7319, %v7303
    %v8776 = vpack.c.b16 %v7320, %v7304
    %v8777 = vpack.c.b16 %v7321, %v7305
    %v8778 = vpack.c.b16 %v7322, %v7306
    %v8779 = vpack.c.b16 %v7323, %v7307
    %v8780 = vpack.c.b16 %v7324, %v7308
    %v8781 = vpack.c.b16 %v7325, %v7309
    %v8782 = vpack.c.b16 %v7326, %v7310
    %v8783 = vpack.c.b16 %v7327, %v7311
    %v8784 = vpack.c.b16 %v7328, %v7312
    %v8785 = vpack.c.b16 %v7345, %v7329
    %v8786 = vpack.c.b16 %v7346, %v7330
    %v8787 = vpack.c.b16 %v7347, %v7331
    %v8788 = vpack.c.b16 %v7348, %v7332
    %v8789 = vpack.c.b16 %v7349, %v7333
    %v8790 = vpack.c.b16 %v7350, %v7334
    %v8791 = vpack.c.b16 %v7351, %v7335
    %v8792 = vpack.c.b16 %v7352, %v7336
    %v8793 = vpack.c.b16 %v7353, %v7337
    %v8794 = vpack.c.b16 %v7354, %v7338
    %v8795 = vpack.c.b16 %v7355, %v7339
    %v8796 = vpack.c.b16 %v7356, %v7340
    %v8797 = vpack.c.b16 %v7357, %v7341
    %v8798 = vpack.c.b16 %v7358, %v7342
    %v8799 = vpack.c.b16 %v7359, %v7343
    %v8800 = vpack.c.b16 %v7360, %v7344
    %v8801 = vpack.c.b16 %v7377, %v7361
    %v8802 = vpack.c.b16 %v7378, %v7362
    %v8803 = vpack.c.b16 %v7379, %v7363
    %v8804 = vpack.c.b16 %v7380, %v7364
    %v8805 = vpack.c.b16 %v7381, %v7365
    %v8806 = vpack.c.b16 %v7382, %v7366
    %v8807 = vpack.c.b16 %v7383, %v7367
    %v8808 = vpack.c.b16 %v7384, %v7368
    %v8809 = vpack.c.b16 %v7385, %v7369
    %v8810 = vpack.c.b16 %v7386, %v7370
    %v8811 = vpack.c.b16 %v7387, %v7371
    %v8812 = vpack.c.b16 %v7388, %v7372
    %v8813 = vpack.c.b16 %v7389, %v7373
    %v8814 = vpack.c.b16 %v7390, %v7374
    %v8815 = vpack.c.b16 %v7391, %v7375
    %v8816 = vpack.c.b16 %v7392, %v7376
    %v8817 = vpack.c.b16 %v7409, %v7393
    %v8818 = vpack.c.b16 %v7410, %v7394
    %v8819 = vpack.c.b16 %v7411, %v7395
    %v8820 = vpack.c.b16 %v7412, %v7396
    %v8821 = vpack.c.b16 %v7413, %v7397
    %v8822 = vpack.c.b16 %v7414, %v7398
    %v8823 = vpack.c.b16 %v7415, %v7399
    %v8824 = vpack.c.b16 %v7416, %v7400
    %v8825 = vpack.c.b16 %v7417, %v7401
    %v8826 = vpack.c.b16 %v7418, %v7402
    %v8827 = vpack.c.b16 %v7419, %v7403
    %v8828 = vpack.c.b16 %v7420, %v7404
    %v8829 = vpack.c.b16 %v7421, %v7405
    %v8830 = vpack.c.b16 %v7422, %v7406
    %v8831 = vpack.c.b16 %v7423, %v7407
    %v8832 = vpack.c.b16 %v7424, %v7408
    %v8833 = vpack.c.b16 %v7441, %v7425
    %v8834 = vpack.c.b16 %v7442, %v7426
    %v8835 = vpack.c.b16 %v7443, %v7427
    %v8836 = vpack.c.b16 %v7444, %v7428
    %v8837 = vpack.c.b16 %v7445, %v7429
    %v8838 = vpack.c.b16 %v7446, %v7430
    %v8839 = vpack.c.b16 %v7447, %v7431
    %v8840 = vpack.c.b16 %v7448, %v7432
    %v8841 = vpack.c.b16 %v7449, %v7433
    %v8842 = vpack.c.b16 %v7450, %v7434
    %v8843 = vpack.c.b16 %v7451, %v7435
    %v8844 = vpack.c.b16 %v7452, %v7436
    %v8845 = vpack.c.b16 %v7453, %v7437
    %v8846 = vpack.c.b16 %v7454, %v7438
    %v8847 = vpack.c.b16 %v7455, %v7439
    %v8848 = vpack.c.b16 %v7456, %v7440
    %v8849 = vpack.c.b16 %v7473, %v7457
    %v8850 = vpack.c.b16 %v7474, %v7458
    %v8851 = vpack.c.b16 %v7475, %v7459
    %v8852 = vpack.c.b16 %v7476, %v7460
    %v8853 = vpack.c.b16 %v7477, %v7461
    %v8854 = vpack.c.b16 %v7478, %v7462
    %v8855 = vpack.c.b16 %v7479, %v7463
    %v8856 = vpack.c.b16 %v7480, %v7464
    %v8857 = vpack.c.b16 %v7481, %v7465
    %v8858 = vpack.c.b16 %v7482, %v7466
    %v8859 = vpack.c.b16 %v7483, %v7467
    %v8860 = vpack.c.b16 %v7484, %v7468
    %v8861 = vpack.c.b16 %v7485, %v7469
    %v8862 = vpack.c.b16 %v7486, %v7470
    %v8863 = vpack.c.b16 %v7487, %v7471
    %v8864 = vpack.c.b16 %v7488, %v7472
    %v8865 = vpack.c.b16 %v7505, %v7489
    %v8866 = vpack.c.b16 %v7506, %v7490
    %v8867 = vpack.c.b16 %v7507, %v7491
    %v8868 = vpack.c.b16 %v7508, %v7492
    %v8869 = vpack.c.b16 %v7509, %v7493
    %v8870 = vpack.c.b16 %v7510, %v7494
    %v8871 = vpack.c.b16 %v7511, %v7495
    %v8872 = vpack.c.b16 %v7512, %v7496
    %v8873 = vpack.c.b16 %v7513, %v7497
    %v8874 = vpack.c.b16 %v7514, %v7498
    %v8875 = vpack.c.b16 %v7515, %v7499
    %v8876 = vpack.c.b16 %v7516, %v7500
    %v8877 = vpack.c.b16 %v7517, %v7501
    %v8878 = vpack.c.b16 %v7518, %v7502
    %v8879 = vpack.c.b16 %v7519, %v7503
    %v8880 = vpack.c.b16 %v7520, %v7504
    %v8881 = vpack.c.b16 %v7537, %v7521
    %v8882 = vpack.c.b16 %v7538, %v7522
    %v8883 = vpack.c.b16 %v7539, %v7523
    %v8884 = vpack.c.b16 %v7540, %v7524
    %v8885 = vpack.c.b16 %v7541, %v7525
    %v8886 = vpack.c.b16 %v7542, %v7526
    %v8887 = vpack.c.b16 %v7543, %v7527
    %v8888 = vpack.c.b16 %v7544, %v7528
    %v8889 = vpack.c.b16 %v7545, %v7529
    %v8890 = vpack.c.b16 %v7546, %v7530
    %v8891 = vpack.c.b16 %v7547, %v7531
    %v8892 = vpack.c.b16 %v7548, %v7532
    %v8893 = vpack.c.b16 %v7549, %v7533
    %v8894 = vpack.c.b16 %v7550, %v7534
    %v8895 = vpack.c.b16 %v7551, %v7535
    %v8896 = vpack.c.b16 %v7552, %v7536
    %v8897 = vpack.c.b16 %v7569, %v7553
    %v8898 = vpack.c.b16 %v7570, %v7554
    %v8899 = vpack.c.b16 %v7571, %v7555
    %v8900 = vpack.c.b16 %v7572, %v7556
    %v8901 = vpack.c.b16 %v7573, %v7557
    %v8902 = vpack.c.b16 %v7574, %v7558
    %v8903 = vpack.c.b16 %v7575, %v7559
    %v8904 = vpack.c.b16 %v7576, %v7560
    %v8905 = vpack.c.b16 %v7577, %v7561
    %v8906 = vpack.c.b16 %v7578, %v7562
    %v8907 = vpack.c.b16 %v7579, %v7563
    %v8908 = vpack.c.b16 %v7580, %v7564
    %v8909 = vpack.c.b16 %v7581, %v7565
    %v8910 = vpack.c.b16 %v7582, %v7566
    %v8911 = vpack.c.b16 %v7583, %v7567
    %v8912 = vpack.c.b16 %v7584, %v7568
    %v8913 = vpack.c.b16 %v7601, %v7585
    %v8914 = vpack.c.b16 %v7602, %v7586
    %v8915 = vpack.c.b16 %v7603, %v7587
    %v8916 = vpack.c.b16 %v7604, %v7588
    %v8917 = vpack.c.b16 %v7605, %v7589
    %v8918 = vpack.c.b16 %v7606, %v7590
    %v8919 = vpack.c.b16 %v7607, %v7591
    %v8920 = vpack.c.b16 %v7608, %v7592
    %v8921 = vpack.c.b16 %v7609, %v7593
    %v8922 = vpack.c.b16 %v7610, %v7594
    %v8923 = vpack.c.b16 %v7611, %v7595
    %v8924 = vpack.c.b16 %v7612, %v7596
    %v8925 = vpack.c.b16 %v7613, %v7597
    %v8926 = vpack.c.b16 %v7614, %v7598
    %v8927 = vpack.c.b16 %v7615, %v7599
    %v8928 = vpack.c.b16 %v7616, %v7600
    %v8929 = vpack.c.b16 %v7633, %v7617
    %v8930 = vpack.c.b16 %v7634, %v7618
    %v8931 = vpack.c.b16 %v7635, %v7619
    %v8932 = vpack.c.b16 %v7636, %v7620
    %v8933 = vpack.c.b16 %v7637, %v7621
    %v8934 = vpack.c.b16 %v7638, %v7622
    %v8935 = vpack.c.b16 %v7639, %v7623
    %v8936 = vpack.c.b16 %v7640, %v7624
    %v8937 = vpack.c.b16 %v7641, %v7625
    %v8938 = vpack.c.b16 %v7642, %v7626
    %v8939 = vpack.c.b16 %v7643, %v7627
    %v8940 = vpack.c.b16 %v7644, %v7628
    %v8941 = vpack.c.b16 %v7645, %v7629
    %v8942 = vpack.c.b16 %v7646, %v7630
    %v8943 = vpack.c.b16 %v7647, %v7631
    %v8944 = vpack.c.b16 %v7648, %v7632
    %v8945 = vpack.c.b16 %v7665, %v7649
    %v8946 = vpack.c.b16 %v7666, %v7650
    %v8947 = vpack.c.b16 %v7667, %v7651
    %v8948 = vpack.c.b16 %v7668, %v7652
    %v8949 = vpack.c.b16 %v7669, %v7653
    %v8950 = vpack.c.b16 %v7670, %v7654
    %v8951 = vpack.c.b16 %v7671, %v7655
    %v8952 = vpack.c.b16 %v7672, %v7656
    %v8953 = vpack.c.b16 %v7673, %v7657
    %v8954 = vpack.c.b16 %v7674, %v7658
    %v8955 = vpack.c.b16 %v7675, %v7659
    %v8956 = vpack.c.b16 %v7676, %v7660
    %v8957 = vpack.c.b16 %v7677, %v7661
    %v8958 = vpack.c.b16 %v7678, %v7662
    %v8959 = vpack.c.b16 %v7679, %v7663
    %v8960 = vpack.c.b16 %v7680, %v7664
    %v8961 = vpack.c.b16 %v7697, %v7681
    %v8962 = vpack.c.b16 %v7698, %v7682
    %v8963 = vpack.c.b16 %v7699, %v7683
    %v8964 = vpack.c.b16 %v7700, %v7684
    %v8965 = vpack.c.b16 %v7701, %v7685
    %v8966 = vpack.c.b16 %v7702, %v7686
    %v8967 = vpack.c.b16 %v7703, %v7687
    %v8968 = vpack.c.b16 %v7704, %v7688
    %v8969 = vpack.c.b16 %v7705, %v7689
    %v8970 = vpack.c.b16 %v7706, %v7690
    %v8971 = vpack.c.b16 %v7707, %v7691
    %v8972 = vpack.c.b16 %v7708, %v7692
    %v8973 = vpack.c.b16 %v7709, %v7693
    %v8974 = vpack.c.b16 %v7710, %v7694
    %v8975 = vpack.c.b16 %v7711, %v7695
    %v8976 = vpack.c.b16 %v7712, %v7696
    %v8977 = vpack.c.b16 %v7729, %v7713
    %v8978 = vpack.c.b16 %v7730, %v7714
    %v8979 = vpack.c.b16 %v7731, %v7715
    %v8980 = vpack.c.b16 %v7732, %v7716
    %v8981 = vpack.c.b16 %v7733, %v7717
    %v8982 = vpack.c.b16 %v7734, %v7718
    %v8983 = vpack.c.b16 %v7735, %v7719
    %v8984 = vpack.c.b16 %v7736, %v7720
    %v8985 = vpack.c.b16 %v7737, %v7721
    %v8986 = vpack.c.b16 %v7738, %v7722
    %v8987 = vpack.c.b16 %v7739, %v7723
    %v8988 = vpack.c.b16 %v7740, %v7724
    %v8989 = vpack.c.b16 %v7741, %v7725
    %v8990 = vpack.c.b16 %v7742, %v7726
    %v8991 = vpack.c.b16 %v7743, %v7727
    %v8992 = vpack.c.b16 %v7744, %v7728
    %v8993 = vpack.c.b16 %v7761, %v7745
    %v8994 = vpack.c.b16 %v7762, %v7746
    %v8995 = vpack.c.b16 %v7763, %v7747
    %v8996 = vpack.c.b16 %v7764, %v7748
    %v8997 = vpack.c.b16 %v7765, %v7749
    %v8998 = vpack.c.b16 %v7766, %v7750
    %v8999 = vpack.c.b16 %v7767, %v7751
    %v9000 = vpack.c.b16 %v7768, %v7752
    %v9001 = vpack.c.b16 %v7769, %v7753
    %v9002 = vpack.c.b16 %v7770, %v7754
    %v9003 = vpack.c.b16 %v7771, %v7755
    %v9004 = vpack.c.b16 %v7772, %v7756
    %v9005 = vpack.c.b16 %v7773, %v7757
    %v9006 = vpack.c.b16 %v7774, %v7758
    %v9007 = vpack.c.b16 %v7775, %v7759
    %v9008 = vpack.c.b16 %v7776, %v7760
    %v9009 = vpack.c.b16 %v7793, %v7777
    %v9010 = vpack.c.b16 %v7794, %v7778
    %v9011 = vpack.c.b16 %v7795, %v7779
    %v9012 = vpack.c.b16 %v7796, %v7780
    %v9013 = vpack.c.b16 %v7797, %v7781
    %v9014 = vpack.c.b16 %v7798, %v7782
    %v9015 = vpack.c.b16 %v7799, %v7783
    %v9016 = vpack.c.b16 %v7800, %v7784
    %v9017 = vpack.c.b16 %v7801, %v7785
    %v9018 = vpack.c.b16 %v7802, %v7786
    %v9019 = vpack.c.b16 %v7803, %v7787
    %v9020 = vpack.c.b16 %v7804, %v7788
    %v9021 = vpack.c.b16 %v7805, %v7789
    %v9022 = vpack.c.b16 %v7806, %v7790
    %v9023 = vpack.c.b16 %v7807, %v7791
    %v9024 = vpack.c.b16 %v7808, %v7792
    %v9025 = vpack.c.b16 %v7825, %v7809
    %v9026 = vpack.c.b16 %v7826, %v7810
    %v9027 = vpack.c.b16 %v7827, %v7811
    %v9028 = vpack.c.b16 %v7828, %v7812
    %v9029 = vpack.c.b16 %v7829, %v7813
    %v9030 = vpack.c.b16 %v7830, %v7814
    %v9031 = vpack.c.b16 %v7831, %v7815
    %v9032 = vpack.c.b16 %v7832, %v7816
    %v9033 = vpack.c.b16 %v7833, %v7817
    %v9034 = vpack.c.b16 %v7834, %v7818
    %v9035 = vpack.c.b16 %v7835, %v7819
    %v9036 = vpack.c.b16 %v7836, %v7820
    %v9037 = vpack.c.b16 %v7837, %v7821
    %v9038 = vpack.c.b16 %v7838, %v7822
    %v9039 = vpack.c.b16 %v7839, %v7823
    %v9040 = vpack.c.b16 %v7840, %v7824
    %v9041 = vpack.c.b16 %v7857, %v7841
    %v9042 = vpack.c.b16 %v7858, %v7842
    %v9043 = vpack.c.b16 %v7859, %v7843
    %v9044 = vpack.c.b16 %v7860, %v7844
    %v9045 = vpack.c.b16 %v7861, %v7845
    %v9046 = vpack.c.b16 %v7862, %v7846
    %v9047 = vpack.c.b16 %v7863, %v7847
    %v9048 = vpack.c.b16 %v7864, %v7848
    %v9049 = vpack.c.b16 %v7865, %v7849
    %v9050 = vpack.c.b16 %v7866, %v7850
    %v9051 = vpack.c.b16 %v7867, %v7851
    %v9052 = vpack.c.b16 %v7868, %v7852
    %v9053 = vpack.c.b16 %v7869, %v7853
    %v9054 = vpack.c.b16 %v7870, %v7854
    %v9055 = vpack.c.b16 %v7871, %v7855
    %v9056 = vpack.c.b16 %v7872, %v7856
    %v9057 = vpack.c.b16 %v7889, %v7873
    %v9058 = vpack.c.b16 %v7890, %v7874
    %v9059 = vpack.c.b16 %v7891, %v7875
    %v9060 = vpack.c.b16 %v7892, %v7876
    %v9061 = vpack.c.b16 %v7893, %v7877
    %v9062 = vpack.c.b16 %v7894, %v7878
    %v9063 = vpack.c.b16 %v7895, %v7879
    %v9064 = vpack.c.b16 %v7896, %v7880
    %v9065 = vpack.c.b16 %v7897, %v7881
    %v9066 = vpack.c.b16 %v7898, %v7882
    %v9067 = vpack.c.b16 %v7899, %v7883
    %v9068 = vpack.c.b16 %v7900, %v7884
    %v9069 = vpack.c.b16 %v7901, %v7885
    %v9070 = vpack.c.b16 %v7902, %v7886
    %v9071 = vpack.c.b16 %v7903, %v7887
    %v9072 = vpack.c.b16 %v7904, %v7888
    %v9073 = vpack.c.b16 %v7921, %v7905
    %v9074 = vpack.c.b16 %v7922, %v7906
    %v9075 = vpack.c.b16 %v7923, %v7907
    %v9076 = vpack.c.b16 %v7924, %v7908
    %v9077 = vpack.c.b16 %v7925, %v7909
    %v9078 = vpack.c.b16 %v7926, %v7910
    %v9079 = vpack.c.b16 %v7927, %v7911
    %v9080 = vpack.c.b16 %v7928, %v7912
    %v9081 = vpack.c.b16 %v7929, %v7913
    %v9082 = vpack.c.b16 %v7930, %v7914
    %v9083 = vpack.c.b16 %v7931, %v7915
    %v9084 = vpack.c.b16 %v7932, %v7916
    %v9085 = vpack.c.b16 %v7933, %v7917
    %v9086 = vpack.c.b16 %v7934, %v7918
    %v9087 = vpack.c.b16 %v7935, %v7919
    %v9088 = vpack.c.b16 %v7936, %v7920
    %v9089 = vpack.c.b16 %v7953, %v7937
    %v9090 = vpack.c.b16 %v7954, %v7938
    %v9091 = vpack.c.b16 %v7955, %v7939
    %v9092 = vpack.c.b16 %v7956, %v7940
    %v9093 = vpack.c.b16 %v7957, %v7941
    %v9094 = vpack.c.b16 %v7958, %v7942
    %v9095 = vpack.c.b16 %v7959, %v7943
    %v9096 = vpack.c.b16 %v7960, %v7944
    %v9097 = vpack.c.b16 %v7961, %v7945
    %v9098 = vpack.c.b16 %v7962, %v7946
    %v9099 = vpack.c.b16 %v7963, %v7947
    %v9100 = vpack.c.b16 %v7964, %v7948
    %v9101 = vpack.c.b16 %v7965, %v7949
    %v9102 = vpack.c.b16 %v7966, %v7950
    %v9103 = vpack.c.b16 %v7967, %v7951
    %v9104 = vpack.c.b16 %v7968, %v7952
    %v9105 = vpack.c.b16 %v7985, %v7969
    %v9106 = vpack.c.b16 %v7986, %v7970
    %v9107 = vpack.c.b16 %v7987, %v7971
    %v9108 = vpack.c.b16 %v7988, %v7972
    %v9109 = vpack.c.b16 %v7989, %v7973
    %v9110 = vpack.c.b16 %v7990, %v7974
    %v9111 = vpack.c.b16 %v7991, %v7975
    %v9112 = vpack.c.b16 %v7992, %v7976
    %v9113 = vpack.c.b16 %v7993, %v7977
    %v9114 = vpack.c.b16 %v7994, %v7978
    %v9115 = vpack.c.b16 %v7995, %v7979
    %v9116 = vpack.c.b16 %v7996, %v7980
    %v9117 = vpack.c.b16 %v7997, %v7981
    %v9118 = vpack.c.b16 %v7998, %v7982
    %v9119 = vpack.c.b16 %v7999, %v7983
    %v9120 = vpack.c.b16 %v8000, %v7984
    %v9121 = vpack.c.b16 %v8017, %v8001
    %v9122 = vpack.c.b16 %v8018, %v8002
    %v9123 = vpack.c.b16 %v8019, %v8003
    %v9124 = vpack.c.b16 %v8020, %v8004
    %v9125 = vpack.c.b16 %v8021, %v8005
    %v9126 = vpack.c.b16 %v8022, %v8006
    %v9127 = vpack.c.b16 %v8023, %v8007
    %v9128 = vpack.c.b16 %v8024, %v8008
    %v9129 = vpack.c.b16 %v8025, %v8009
    %v9130 = vpack.c.b16 %v8026, %v8010
    %v9131 = vpack.c.b16 %v8027, %v8011
    %v9132 = vpack.c.b16 %v8028, %v8012
    %v9133 = vpack.c.b16 %v8029, %v8013
    %v9134 = vpack.c.b16 %v8030, %v8014
    %v9135 = vpack.c.b16 %v8031, %v8015
    %v9136 = vpack.c.b16 %v8032, %v8016
    %v9137 = vpack.c.b16 %v8049, %v8033
    %v9138 = vpack.c.b16 %v8050, %v8034
    %v9139 = vpack.c.b16 %v8051, %v8035
    %v9140 = vpack.c.b16 %v8052, %v8036
    %v9141 = vpack.c.b16 %v8053, %v8037
    %v9142 = vpack.c.b16 %v8054, %v8038
    %v9143 = vpack.c.b16 %v8055, %v8039
    %v9144 = vpack.c.b16 %v8056, %v8040
    %v9145 = vpack.c.b16 %v8057, %v8041
    %v9146 = vpack.c.b16 %v8058, %v8042
    %v9147 = vpack.c.b16 %v8059, %v8043
    %v9148 = vpack.c.b16 %v8060, %v8044
    %v9149 = vpack.c.b16 %v8061, %v8045
    %v9150 = vpack.c.b16 %v8062, %v8046
    %v9151 = vpack.c.b16 %v8063, %v8047
    %v9152 = vpack.c.b16 %v8064, %v8048
    %v9153 = vpack.c.b16 %v8081, %v8065
    %v9154 = vpack.c.b16 %v8082, %v8066
    %v9155 = vpack.c.b16 %v8083, %v8067
    %v9156 = vpack.c.b16 %v8084, %v8068
    %v9157 = vpack.c.b16 %v8085, %v8069
    %v9158 = vpack.c.b16 %v8086, %v8070
    %v9159 = vpack.c.b16 %v8087, %v8071
    %v9160 = vpack.c.b16 %v8088, %v8072
    %v9161 = vpack.c.b16 %v8089, %v8073
    %v9162 = vpack.c.b16 %v8090, %v8074
    %v9163 = vpack.c.b16 %v8091, %v8075
    %v9164 = vpack.c.b16 %v8092, %v8076
    %v9165 = vpack.c.b16 %v8093, %v8077
    %v9166 = vpack.c.b16 %v8094, %v8078
    %v9167 = vpack.c.b16 %v8095, %v8079
    %v9168 = vpack.c.b16 %v8096, %v8080
    %v9169 = vpack.c.b16 %v8113, %v8097
    %v9170 = vpack.c.b16 %v8114, %v8098
    %v9171 = vpack.c.b16 %v8115, %v8099
    %v9172 = vpack.c.b16 %v8116, %v8100
    %v9173 = vpack.c.b16 %v8117, %v8101
    %v9174 = vpack.c.b16 %v8118, %v8102
    %v9175 = vpack.c.b16 %v8119, %v8103
    %v9176 = vpack.c.b16 %v8120, %v8104
    %v9177 = vpack.c.b16 %v8121, %v8105
    %v9178 = vpack.c.b16 %v8122, %v8106
    %v9179 = vpack.c.b16 %v8123, %v8107
    %v9180 = vpack.c.b16 %v8124, %v8108
    %v9181 = vpack.c.b16 %v8125, %v8109
    %v9182 = vpack.c.b16 %v8126, %v8110
    %v9183 = vpack.c.b16 %v8127, %v8111
    %v9184 = vpack.c.b16 %v8128, %v8112
    %v9185 = vpack.c.b16 %v8145, %v8129
    %v9186 = vpack.c.b16 %v8146, %v8130
    %v9187 = vpack.c.b16 %v8147, %v8131
    %v9188 = vpack.c.b16 %v8148, %v8132
    %v9189 = vpack.c.b16 %v8149, %v8133
    %v9190 = vpack.c.b16 %v8150, %v8134
    %v9191 = vpack.c.b16 %v8151, %v8135
    %v9192 = vpack.c.b16 %v8152, %v8136
    %v9193 = vpack.c.b16 %v8153, %v8137
    %v9194 = vpack.c.b16 %v8154, %v8138
    %v9195 = vpack.c.b16 %v8155, %v8139
    %v9196 = vpack.c.b16 %v8156, %v8140
    %v9197 = vpack.c.b16 %v8157, %v8141
    %v9198 = vpack.c.b16 %v8158, %v8142
    %v9199 = vpack.c.b16 %v8159, %v8143
    %v9200 = vpack.c.b16 %v8160, %v8144
    %v9201 = vpack.c.b16 %v8177, %v8161
    %v9202 = vpack.c.b16 %v8178, %v8162
    %v9203 = vpack.c.b16 %v8179, %v8163
    %v9204 = vpack.c.b16 %v8180, %v8164
    %v9205 = vpack.c.b16 %v8181, %v8165
    %v9206 = vpack.c.b16 %v8182, %v8166
    %v9207 = vpack.c.b16 %v8183, %v8167
    %v9208 = vpack.c.b16 %v8184, %v8168
    %v9209 = vpack.c.b16 %v8185, %v8169
    %v9210 = vpack.c.b16 %v8186, %v8170
    %v9211 = vpack.c.b16 %v8187, %v8171
    %v9212 = vpack.c.b16 %v8188, %v8172
    %v9213 = vpack.c.b16 %v8189, %v8173
    %v9214 = vpack.c.b16 %v8190, %v8174
    %v9215 = vpack.c.b16 %v8191, %v8175
    %v9216 = vpack.c.b16 %v8192, %v8176
    %10241 = vmatprep.subr.bf16.mxu0 %v8194
    %10242 = vmatpush1.bf16.msra.mxu0 %v8193
    %10243 = vmatprep.subr.bf16.mxu0 %v8210
    %10244 = vmatpush1.bf16.msra.mxu0 %v8209
    %10245 = vmatprep.subr.bf16.mxu0 %v8226
    %10246 = vmatpush1.bf16.msra.mxu0 %v8225
    %10247 = vmatprep.subr.bf16.mxu0 %v8242
    %10248 = vmatpush1.bf16.msra.mxu0 %v8241
    %10249 = vmatprep.subr.bf16.mxu0 %v8258
    %10250 = vmatpush1.bf16.msra.mxu0 %v8257
    %10251 = vmatprep.subr.bf16.mxu0 %v8274
    %10252 = vmatpush1.bf16.msra.mxu0 %v8273
    %10253 = vmatprep.subr.bf16.mxu0 %v8290
    %10254 = vmatpush1.bf16.msra.mxu0 %v8289
    %10255 = vmatprep.subr.bf16.mxu0 %v8306
    %10256 = vmatpush1.bf16.msra.mxu0 %v8305
    %10257 = vmatprep.subr.bf16.mxu0 %v8322
    %10258 = vmatpush1.bf16.msra.mxu0 %v8321
    %10259 = vmatprep.subr.bf16.mxu0 %v8338
    %10260 = vmatpush1.bf16.msra.mxu0 %v8337
    %10261 = vmatprep.subr.bf16.mxu0 %v8354
    %10262 = vmatpush1.bf16.msra.mxu0 %v8353
    %10263 = vmatprep.subr.bf16.mxu0 %v8370
    %10264 = vmatpush1.bf16.msra.mxu0 %v8369
    %10265 = vmatprep.subr.bf16.mxu0 %v8386
    %10266 = vmatpush1.bf16.msra.mxu0 %v8385
    %10267 = vmatprep.subr.bf16.mxu0 %v8402
    %10268 = vmatpush1.bf16.msra.mxu0 %v8401
    %10269 = vmatprep.subr.bf16.mxu0 %v8418
    %10270 = vmatpush1.bf16.msra.mxu0 %v8417
    %10271 = vmatprep.subr.bf16.mxu0 %v8434
    %10272 = vmatpush1.bf16.msra.mxu0 %v8433
    %10273 = vmatprep.mubr.bf16.mxu0 %v4090
    %10274 = vmatmul.mubr.bf16.gmra.mrb[0].mxu0 %v4089
    %v10275 = vpop.f32.mrb[0].mxu0
    %v10276 = vadd.f32 0.0, %v10275
    %v10277 = vpop.f32.mrb[0].mxu0
    %v10278 = vadd.f32 0.0, %v10277
    %v10279 = vpop.f32.mrb[0].mxu0
    %v10280 = vadd.f32 0.0, %v10279
    %v10281 = vpop.f32.mrb[0].mxu0
    %v10282 = vadd.f32 0.0, %v10281
    %10283 = vdwg.mxu0
    %10284 = vmatprep.subr.bf16.mxu0 %v8450
    %10285 = vmatpush1.bf16.msra.mxu0 %v8449
    %10286 = vmatprep.subr.bf16.mxu0 %v8466
    %10287 = vmatpush1.bf16.msra.mxu0 %v8465
    %10288 = vmatprep.subr.bf16.mxu0 %v8482
    %10289 = vmatpush1.bf16.msra.mxu0 %v8481
    %10290 = vmatprep.subr.bf16.mxu0 %v8498
    %10291 = vmatpush1.bf16.msra.mxu0 %v8497
    %10292 = vmatprep.subr.bf16.mxu0 %v8514
    %10293 = vmatpush1.bf16.msra.mxu0 %v8513
    %10294 = vmatprep.subr.bf16.mxu0 %v8530
    %10295 = vmatpush1.bf16.msra.mxu0 %v8529
    %10296 = vmatprep.subr.bf16.mxu0 %v8546
    %10297 = vmatpush1.bf16.msra.mxu0 %v8545
    %10298 = vmatprep.subr.bf16.mxu0 %v8562
    %10299 = vmatpush1.bf16.msra.mxu0 %v8561
    %10300 = vmatprep.subr.bf16.mxu0 %v8578
    %10301 = vmatpush1.bf16.msra.mxu0 %v8577
    %10302 = vmatprep.subr.bf16.mxu0 %v8594
    %10303 = vmatpush1.bf16.msra.mxu0 %v8593
    %10304 = vmatprep.subr.bf16.mxu0 %v8610
    %10305 = vmatpush1.bf16.msra.mxu0 %v8609
    %10306 = vmatprep.subr.bf16.mxu0 %v8626
    %10307 = vmatpush1.bf16.msra.mxu0 %v8625
    %10308 = vmatprep.subr.bf16.mxu0 %v8642
    %10309 = vmatpush1.bf16.msra.mxu0 %v8641
    %10310 = vmatprep.subr.bf16.mxu0 %v8658
    %10311 = vmatpush1.bf16.msra.mxu0 %v8657
    %10312 = vmatprep.subr.bf16.mxu0 %v8674
    %10313 = vmatpush1.bf16.msra.mxu0 %v8673
    %10314 = vmatprep.subr.bf16.mxu0 %v8690
    %10315 = vmatpush1.bf16.msra.mxu0 %v8689
    %10316 = vmatprep.mubr.bf16.mxu0 %v4092
    %10317 = vmatmul.mubr.bf16.gmra.mrb[0].mxu0 %v4091
    %v10318 = vpop.f32.mrb[0].mxu0
    %v10319 = vadd.f32 %v10276, %v10318
    %v10320 = vpop.f32.mrb[0].mxu0
    %v10321 = vadd.f32 %v10278, %v10320
    %v10322 = vpop.f32.mrb[0].mxu0
    %v10323 = vadd.f32 %v10280, %v10322
    %v10324 = vpop.f32.mrb[0].mxu0
    %v10325 = vadd.f32 %v10282, %v10324
    %10326 = vdwg.mxu0
    %10327 = vmatprep.subr.bf16.mxu0 %v8706
    %10328 = vmatpush1.bf16.msra.mxu0 %v8705
    %10329 = vmatprep.subr.bf16.mxu0 %v8722
    %10330 = vmatpush1.bf16.msra.mxu0 %v8721
    %10331 = vmatprep.subr.bf16.mxu0 %v8738
    %10332 = vmatpush1.bf16.msra.mxu0 %v8737
    %10333 = vmatprep.subr.bf16.mxu0 %v8754
    %10334 = vmatpush1.bf16.msra.mxu0 %v8753
    %10335 = vmatprep.subr.bf16.mxu0 %v8770
    %10336 = vmatpush1.bf16.msra.mxu0 %v8769
    %10337 = vmatprep.subr.bf16.mxu0 %v8786
    %10338 = vmatpush1.bf16.msra.mxu0 %v8785
    %10339 = vmatprep.subr.bf16.mxu0 %v8802
    %10340 = vmatpush1.bf16.msra.mxu0 %v8801
    %10341 = vmatprep.subr.bf16.mxu0 %v8818
    %10342 = vmatpush1.bf16.msra.mxu0 %v8817
    %10343 = vmatprep.subr.bf16.mxu0 %v8834
    %10344 = vmatpush1.bf16.msra.mxu0 %v8833
    %10345 = vmatprep.subr.bf16.mxu0 %v8850
    %10346 = vmatpush1.bf16.msra.mxu0 %v8849
    %10347 = vmatprep.subr.bf16.mxu0 %v8866
    %10348 = vmatpush1.bf16.msra.mxu0 %v8865
    %10349 = vmatprep.subr.bf16.mxu0 %v8882
    %10350 = vmatpush1.bf16.msra.mxu0 %v8881
    %10351 = vmatprep.subr.bf16.mxu0 %v8898
    %10352 = vmatpush1.bf16.msra.mxu0 %v8897
    %10353 = vmatprep.subr.bf16.mxu0 %v8914
    %10354 = vmatpush1.bf16.msra.mxu0 %v8913
    %10355 = vmatprep.subr.bf16.mxu0 %v8930
    %10356 = vmatpush1.bf16.msra.mxu0 %v8929
    %10357 = vmatprep.subr.bf16.mxu0 %v8946
    %10358 = vmatpush1.bf16.msra.mxu0 %v8945
    %10359 = vmatprep.mubr.bf16.mxu0 %v4094
    %10360 = vmatmul.mubr.bf16.gmra.mrb[0].mxu0 %v4093
    %v10361 = vpop.f32.mrb[0].mxu0
    %v10362 = vadd.f32 %v10319, %v10361
    %v10363 = vpop.f32.mrb[0].mxu0
    %v10364 = vadd.f32 %v10321, %v10363
    %v10365 = vpop.f32.mrb[0].mxu0
    %v10366 = vadd.f32 %v10323, %v10365
    %v10367 = vpop.f32.mrb[0].mxu0
    %v10368 = vadd.f32 %v10325, %v10367
    %10369 = vdwg.mxu0
    %10370 = vmatprep.subr.bf16.mxu0 %v8962
    %10371 = vmatpush1.bf16.msra.mxu0 %v8961
    %10372 = vmatprep.subr.bf16.mxu0 %v8978
    %10373 = vmatpush1.bf16.msra.mxu0 %v8977
    %10374 = vmatprep.subr.bf16.mxu0 %v8994
    %10375 = vmatpush1.bf16.msra.mxu0 %v8993
    %10376 = vmatprep.subr.bf16.mxu0 %v9010
    %10377 = vmatpush1.bf16.msra.mxu0 %v9009
    %10378 = vmatprep.subr.bf16.mxu0 %v9026
    %10379 = vmatpush1.bf16.msra.mxu0 %v9025
    %10380 = vmatprep.subr.bf16.mxu0 %v9042
    %10381 = vmatpush1.bf16.msra.mxu0 %v9041
    %10382 = vmatprep.subr.bf16.mxu0 %v9058
    %10383 = vmatpush1.bf16.msra.mxu0 %v9057
    %10384 = vmatprep.subr.bf16.mxu0 %v9074
    %10385 = vmatpush1.bf16.msra.mxu0 %v9073
    %10386 = vmatprep.subr.bf16.mxu0 %v9090
    %10387 = vmatpush1.bf16.msra.mxu0 %v9089
    %10388 = vmatprep.subr.bf16.mxu0 %v9106
    %10389 = vmatpush1.bf16.msra.mxu0 %v9105
    %10390 = vmatprep.subr.bf16.mxu0 %v9122
    %10391 = vmatpush1.bf16.msra.mxu0 %v9121
    %10392 = vmatprep.subr.bf16.mxu0 %v9138
    %10393 = vmatpush1.bf16.msra.mxu0 %v9137
    %10394 = vmatprep.subr.bf16.mxu0 %v9154
    %10395 = vmatpush1.bf16.msra.mxu0 %v9153
    %10396 = vmatprep.subr.bf16.mxu0 %v9170
    %10397 = vmatpush1.bf16.msra.mxu0 %v9169
    %10398 = vmatprep.subr.bf16.mxu0 %v9186
    %10399 = vmatpush1.bf16.msra.mxu0 %v9185
    %10400 = vmatprep.subr.bf16.mxu0 %v9202
    %10401 = vmatpush1.bf16.msra.mxu0 %v9201
    %10402 = vmatprep.mubr.bf16.mxu0 %v4096
    %10403 = vmatmul.mubr.bf16.gmra.mrb[0].mxu0 %v4095
    %v10404 = vpop.f32.mrb[0].mxu0
    %v10405 = vadd.f32 %v10362, %v10404
    %v10406 = vpop.f32.mrb[0].mxu0
    %v10407 = vadd.f32 %v10364, %v10406
    %v10408 = vpop.f32.mrb[0].mxu0
    %v10409 = vadd.f32 %v10366, %v10408
    %v10410 = vpop.f32.mrb[0].mxu0
    %v10411 = vadd.f32 %v10368, %v10410
    %10412 = vdwg.mxu0
    %10413 = vmatprep.subr.bf16.mxu0 %v8196
    %10414 = vmatpush1.bf16.msra.mxu0 %v8195
    %10415 = vmatprep.subr.bf16.mxu0 %v8212
    %10416 = vmatpush1.bf16.msra.mxu0 %v8211
    %10417 = vmatprep.subr.bf16.mxu0 %v8228
    %10418 = vmatpush1.bf16.msra.mxu0 %v8227
    %10419 = vmatprep.subr.bf16.mxu0 %v8244
    %10420 = vmatpush1.bf16.msra.mxu0 %v8243
    %10421 = vmatprep.subr.bf16.mxu0 %v8260
    %10422 = vmatpush1.bf16.msra.mxu0 %v8259
    %10423 = vmatprep.subr.bf16.mxu0 %v8276
    %10424 = vmatpush1.bf16.msra.mxu0 %v8275
    %10425 = vmatprep.subr.bf16.mxu0 %v8292
    %10426 = vmatpush1.bf16.msra.mxu0 %v8291
    %10427 = vmatprep.subr.bf16.mxu0 %v8308
    %10428 = vmatpush1.bf16.msra.mxu0 %v8307
    %10429 = vmatprep.subr.bf16.mxu0 %v8324
    %10430 = vmatpush1.bf16.msra.mxu0 %v8323
    %10431 = vmatprep.subr.bf16.mxu0 %v8340
    %10432 = vmatpush1.bf16.msra.mxu0 %v8339
    %10433 = vmatprep.subr.bf16.mxu0 %v8356
    %10434 = vmatpush1.bf16.msra.mxu0 %v8355
    %10435 = vmatprep.subr.bf16.mxu0 %v8372
    %10436 = vmatpush1.bf16.msra.mxu0 %v8371
    %10437 = vmatprep.subr.bf16.mxu0 %v8388
    %10438 = vmatpush1.bf16.msra.mxu0 %v8387
    %10439 = vmatprep.subr.bf16.mxu0 %v8404
    %10440 = vmatpush1.bf16.msra.mxu0 %v8403
    %10441 = vmatprep.subr.bf16.mxu0 %v8420
    %10442 = vmatpush1.bf16.msra.mxu0 %v8419
    %10443 = vmatprep.subr.bf16.mxu0 %v8436
    %10444 = vmatpush1.bf16.msra.mxu0 %v8435
    %10445 = vmatprep.mubr.bf16.mxu0 %v4090
    %10446 = vmatmul.mubr.bf16.gmra.mrb[0].mxu0 %v4089
    %v10447 = vpop.f32.mrb[0].mxu0
    %v10448 = vadd.f32 0.0, %v10447
    %v10449 = vpop.f32.mrb[0].mxu0
    %v10450 = vadd.f32 0.0, %v10449
    %v10451 = vpop.f32.mrb[0].mxu0
    %v10452 = vadd.f32 0.0, %v10451
    %v10453 = vpop.f32.mrb[0].mxu0
    %v10454 = vadd.f32 0.0, %v10453
    %10455 = vdwg.mxu0
    %10456 = vmatprep.subr.bf16.mxu0 %v8452
    %10457 = vmatpush1.bf16.msra.mxu0 %v8451
    %10458 = vmatprep.subr.bf16.mxu0 %v8468
    %10459 = vmatpush1.bf16.msra.mxu0 %v8467
    %10460 = vmatprep.subr.bf16.mxu0 %v8484
    %10461 = vmatpush1.bf16.msra.mxu0 %v8483
    %10462 = vmatprep.subr.bf16.mxu0 %v8500
    %10463 = vmatpush1.bf16.msra.mxu0 %v8499
    %10464 = vmatprep.subr.bf16.mxu0 %v8516
    %10465 = vmatpush1.bf16.msra.mxu0 %v8515
    %10466 = vmatprep.subr.bf16.mxu0 %v8532
    %10467 = vmatpush1.bf16.msra.mxu0 %v8531
    %10468 = vmatprep.subr.bf16.mxu0 %v8548
    %10469 = vmatpush1.bf16.msra.mxu0 %v8547
    %10470 = vmatprep.subr.bf16.mxu0 %v8564
    %10471 = vmatpush1.bf16.msra.mxu0 %v8563
    %10472 = vmatprep.subr.bf16.mxu0 %v8580
    %10473 = vmatpush1.bf16.msra.mxu0 %v8579
    %10474 = vmatprep.subr.bf16.mxu0 %v8596
    %10475 = vmatpush1.bf16.msra.mxu0 %v8595
    %10476 = vmatprep.subr.bf16.mxu0 %v8612
    %10477 = vmatpush1.bf16.msra.mxu0 %v8611
    %10478 = vmatprep.subr.bf16.mxu0 %v8628
    %10479 = vmatpush1.bf16.msra.mxu0 %v8627
    %10480 = vmatprep.subr.bf16.mxu0 %v8644
    %10481 = vmatpush1.bf16.msra.mxu0 %v8643
    %10482 = vmatprep.subr.bf16.mxu0 %v8660
    %10483 = vmatpush1.bf16.msra.mxu0 %v8659
    %10484 = vmatprep.subr.bf16.mxu0 %v8676
    %10485 = vmatpush1.bf16.msra.mxu0 %v8675
    %10486 = vmatprep.subr.bf16.mxu0 %v8692
    %10487 = vmatpush1.bf16.msra.mxu0 %v8691
    %10488 = vmatprep.mubr.bf16.mxu0 %v4092
    %10489 = vmatmul.mubr.bf16.gmra.mrb[0].mxu0 %v4091
    %v10490 = vpop.f32.mrb[0].mxu0
    %v10491 = vadd.f32 %v10448, %v10490
    %v10492 = vpop.f32.mrb[0].mxu0
    %v10493 = vadd.f32 %v10450, %v10492
    %v10494 = vpop.f32.mrb[0].mxu0
    %v10495 = vadd.f32 %v10452, %v10494
    %v10496 = vpop.f32.mrb[0].mxu0
    %v10497 = vadd.f32 %v10454, %v10496
    %10498 = vdwg.mxu0
    %10499 = vmatprep.subr.bf16.mxu0 %v8708
    %10500 = vmatpush1.bf16.msra.mxu0 %v8707
    %10501 = vmatprep.subr.bf16.mxu0 %v8724
    %10502 = vmatpush1.bf16.msra.mxu0 %v8723
    %10503 = vmatprep.subr.bf16.mxu0 %v8740
    %10504 = vmatpush1.bf16.msra.mxu0 %v8739
    %10505 = vmatprep.subr.bf16.mxu0 %v8756
    %10506 = vmatpush1.bf16.msra.mxu0 %v8755
    %10507 = vmatprep.subr.bf16.mxu0 %v8772
    %10508 = vmatpush1.bf16.msra.mxu0 %v8771
    %10509 = vmatprep.subr.bf16.mxu0 %v8788
    %10510 = vmatpush1.bf16.msra.mxu0 %v8787
    %10511 = vmatprep.subr.bf16.mxu0 %v8804
    %10512 = vmatpush1.bf16.msra.mxu0 %v8803
    %10513 = vmatprep.subr.bf16.mxu0 %v8820
    %10514 = vmatpush1.bf16.msra.mxu0 %v8819
    %10515 = vmatprep.subr.bf16.mxu0 %v8836
    %10516 = vmatpush1.bf16.msra.mxu0 %v8835
    %10517 = vmatprep.subr.bf16.mxu0 %v8852
    %10518 = vmatpush1.bf16.msra.mxu0 %v8851
    %10519 = vmatprep.subr.bf16.mxu0 %v8868
    %10520 = vmatpush1.bf16.msra.mxu0 %v8867
    %10521 = vmatprep.subr.bf16.mxu0 %v8884
    %10522 = vmatpush1.bf16.msra.mxu0 %v8883
    %10523 = vmatprep.subr.bf16.mxu0 %v8900
    %10524 = vmatpush1.bf16.msra.mxu0 %v8899
    %10525 = vmatprep.subr.bf16.mxu0 %v8916
    %10526 = vmatpush1.bf16.msra.mxu0 %v8915
    %10527 = vmatprep.subr.bf16.mxu0 %v8932
    %10528 = vmatpush1.bf16.msra.mxu0 %v8931
    %10529 = vmatprep.subr.bf16.mxu0 %v8948
    %10530 = vmatpush1.bf16.msra.mxu0 %v8947
    %10531 = vmatprep.mubr.bf16.mxu0 %v4094
    %10532 = vmatmul.mubr.bf16.gmra.mrb[0].mxu0 %v4093
    %v10533 = vpop.f32.mrb[0].mxu0
    %v10534 = vadd.f32 %v10491, %v10533
    %v10535 = vpop.f32.mrb[0].mxu0
    %v10536 = vadd.f32 %v10493, %v10535
    %v10537 = vpop.f32.mrb[0].mxu0
    %v10538 = vadd.f32 %v10495, %v10537
    %v10539 = vpop.f32.mrb[0].mxu0
    %v10540 = vadd.f32 %v10497, %v10539
    %10541 = vdwg.mxu0
    %10542 = vmatprep.subr.bf16.mxu0 %v8964
    %10543 = vmatpush1.bf16.msra.mxu0 %v8963
    %10544 = vmatprep.subr.bf16.mxu0 %v8980
    %10545 = vmatpush1.bf16.msra.mxu0 %v8979
    %10546 = vmatprep.subr.bf16.mxu0 %v8996
    %10547 = vmatpush1.bf16.msra.mxu0 %v8995
    %10548 = vmatprep.subr.bf16.mxu0 %v9012
    %10549 = vmatpush1.bf16.msra.mxu0 %v9011
    %10550 = vmatprep.subr.bf16.mxu0 %v9028
    %10551 = vmatpush1.bf16.msra.mxu0 %v9027
    %10552 = vmatprep.subr.bf16.mxu0 %v9044
    %10553 = vmatpush1.bf16.msra.mxu0 %v9043
    %10554 = vmatprep.subr.bf16.mxu0 %v9060
    %10555 = vmatpush1.bf16.msra.mxu0 %v9059
    %10556 = vmatprep.subr.bf16.mxu0 %v9076
    %10557 = vmatpush1.bf16.msra.mxu0 %v9075
    %10558 = vmatprep.subr.bf16.mxu0 %v9092
    %10559 = vmatpush1.bf16.msra.mxu0 %v9091
    %10560 = vmatprep.subr.bf16.mxu0 %v9108
    %10561 = vmatpush1.bf16.msra.mxu0 %v9107
    %10562 = vmatprep.subr.bf16.mxu0 %v9124
    %10563 = vmatpush1.bf16.msra.mxu0 %v9123
    %10564 = vmatprep.subr.bf16.mxu0 %v9140
    %10565 = vmatpush1.bf16.msra.mxu0 %v9139
    %10566 = vmatprep.subr.bf16.mxu0 %v9156
    %10567 = vmatpush1.bf16.msra.mxu0 %v9155
    %10568 = vmatprep.subr.bf16.mxu0 %v9172
    %10569 = vmatpush1.bf16.msra.mxu0 %v9171
    %10570 = vmatprep.subr.bf16.mxu0 %v9188
    %10571 = vmatpush1.bf16.msra.mxu0 %v9187
    %10572 = vmatprep.subr.bf16.mxu0 %v9204
    %10573 = vmatpush1.bf16.msra.mxu0 %v9203
    %10574 = vmatprep.mubr.bf16.mxu0 %v4096
    %10575 = vmatmul.mubr.bf16.gmra.mrb[0].mxu0 %v4095
    %v10576 = vpop.f32.mrb[0].mxu0
    %v10577 = vadd.f32 %v10534, %v10576
    %v10578 = vpop.f32.mrb[0].mxu0
    %v10579 = vadd.f32 %v10536, %v10578
    %v10580 = vpop.f32.mrb[0].mxu0
    %v10581 = vadd.f32 %v10538, %v10580
    %v10582 = vpop.f32.mrb[0].mxu0
    %v10583 = vadd.f32 %v10540, %v10582
    %10584 = vdwg.mxu0
    %10585 = vmatprep.subr.bf16.mxu0 %v8198
    %10586 = vmatpush1.bf16.msra.mxu0 %v8197
    %10587 = vmatprep.subr.bf16.mxu0 %v8214
    %10588 = vmatpush1.bf16.msra.mxu0 %v8213
    %10589 = vmatprep.subr.bf16.mxu0 %v8230
    %10590 = vmatpush1.bf16.msra.mxu0 %v8229
    %10591 = vmatprep.subr.bf16.mxu0 %v8246
    %10592 = vmatpush1.bf16.msra.mxu0 %v8245
    %10593 = vmatprep.subr.bf16.mxu0 %v8262
    %10594 = vmatpush1.bf16.msra.mxu0 %v8261
    %10595 = vmatprep.subr.bf16.mxu0 %v8278
    %10596 = vmatpush1.bf16.msra.mxu0 %v8277
    %10597 = vmatprep.subr.bf16.mxu0 %v8294
    %10598 = vmatpush1.bf16.msra.mxu0 %v8293
    %10599 = vmatprep.subr.bf16.mxu0 %v8310
    %10600 = vmatpush1.bf16.msra.mxu0 %v8309
    %10601 = vmatprep.subr.bf16.mxu0 %v8326
    %10602 = vmatpush1.bf16.msra.mxu0 %v8325
    %10603 = vmatprep.subr.bf16.mxu0 %v8342
    %10604 = vmatpush1.bf16.msra.mxu0 %v8341
    %10605 = vmatprep.subr.bf16.mxu0 %v8358
    %10606 = vmatpush1.bf16.msra.mxu0 %v8357
    %10607 = vmatprep.subr.bf16.mxu0 %v8374
    %10608 = vmatpush1.bf16.msra.mxu0 %v8373
    %10609 = vmatprep.subr.bf16.mxu0 %v8390
    %10610 = vmatpush1.bf16.msra.mxu0 %v8389
    %10611 = vmatprep.subr.bf16.mxu0 %v8406
    %10612 = vmatpush1.bf16.msra.mxu0 %v8405
    %10613 = vmatprep.subr.bf16.mxu0 %v8422
    %10614 = vmatpush1.bf16.msra.mxu0 %v8421
    %10615 = vmatprep.subr.bf16.mxu0 %v8438
    %10616 = vmatpush1.bf16.msra.mxu0 %v8437
    %10617 = vmatprep.mubr.bf16.mxu0 %v4090
    %10618 = vmatmul.mubr.bf16.gmra.mrb[0].mxu0 %v4089
    %v10619 = vpop.f32.mrb[0].mxu0
    %v10620 = vadd.f32 0.0, %v10619
    %v10621 = vpop.f32.mrb[0].mxu0
    %v10622 = vadd.f32 0.0, %v10621
    %v10623 = vpop.f32.mrb[0].mxu0
    %v10624 = vadd.f32 0.0, %v10623
    %v10625 = vpop.f32.mrb[0].mxu0
    %v10626 = vadd.f32 0.0, %v10625
    %10627 = vdwg.mxu0
    %10628 = vmatprep.subr.bf16.mxu0 %v8454
    %10629 = vmatpush1.bf16.msra.mxu0 %v8453
    %10630 = vmatprep.subr.bf16.mxu0 %v8470
    %10631 = vmatpush1.bf16.msra.mxu0 %v8469
    %10632 = vmatprep.subr.bf16.mxu0 %v8486
    %10633 = vmatpush1.bf16.msra.mxu0 %v8485
    %10634 = vmatprep.subr.bf16.mxu0 %v8502
    %10635 = vmatpush1.bf16.msra.mxu0 %v8501
    %10636 = vmatprep.subr.bf16.mxu0 %v8518
    %10637 = vmatpush1.bf16.msra.mxu0 %v8517
    %10638 = vmatprep.subr.bf16.mxu0 %v8534
    %10639 = vmatpush1.bf16.msra.mxu0 %v8533
    %10640 = vmatprep.subr.bf16.mxu0 %v8550
    %10641 = vmatpush1.bf16.msra.mxu0 %v8549
    %10642 = vmatprep.subr.bf16.mxu0 %v8566
    %10643 = vmatpush1.bf16.msra.mxu0 %v8565
    %10644 = vmatprep.subr.bf16.mxu0 %v8582
    %10645 = vmatpush1.bf16.msra.mxu0 %v8581
    %10646 = vmatprep.subr.bf16.mxu0 %v8598
    %10647 = vmatpush1.bf16.msra.mxu0 %v8597
    %10648 = vmatprep.subr.bf16.mxu0 %v8614
    %10649 = vmatpush1.bf16.msra.mxu0 %v8613
    %10650 = vmatprep.subr.bf16.mxu0 %v8630
    %10651 = vmatpush1.bf16.msra.mxu0 %v8629
    %10652 = vmatprep.subr.bf16.mxu0 %v8646
    %10653 = vmatpush1.bf16.msra.mxu0 %v8645
    %10654 = vmatprep.subr.bf16.mxu0 %v8662
    %10655 = vmatpush1.bf16.msra.mxu0 %v8661
    %10656 = vmatprep.subr.bf16.mxu0 %v8678
    %10657 = vmatpush1.bf16.msra.mxu0 %v8677
    %10658 = vmatprep.subr.bf16.mxu0 %v8694
    %10659 = vmatpush1.bf16.msra.mxu0 %v8693
    %10660 = vmatprep.mubr.bf16.mxu0 %v4092
    %10661 = vmatmul.mubr.bf16.gmra.mrb[0].mxu0 %v4091
    %v10662 = vpop.f32.mrb[0].mxu0
    %v10663 = vadd.f32 %v10620, %v10662
    %v10664 = vpop.f32.mrb[0].mxu0
    %v10665 = vadd.f32 %v10622, %v10664
    %v10666 = vpop.f32.mrb[0].mxu0
    %v10667 = vadd.f32 %v10624, %v10666
    %v10668 = vpop.f32.mrb[0].mxu0
    %v10669 = vadd.f32 %v10626, %v10668
    %10670 = vdwg.mxu0
    %10671 = vmatprep.subr.bf16.mxu0 %v8710
    %10672 = vmatpush1.bf16.msra.mxu0 %v8709
    %10673 = vmatprep.subr.bf16.mxu0 %v8726
    %10674 = vmatpush1.bf16.msra.mxu0 %v8725
    %10675 = vmatprep.subr.bf16.mxu0 %v8742
    %10676 = vmatpush1.bf16.msra.mxu0 %v8741
    %10677 = vmatprep.subr.bf16.mxu0 %v8758
    %10678 = vmatpush1.bf16.msra.mxu0 %v8757
    %10679 = vmatprep.subr.bf16.mxu0 %v8774
    %10680 = vmatpush1.bf16.msra.mxu0 %v8773
    %10681 = vmatprep.subr.bf16.mxu0 %v8790
    %10682 = vmatpush1.bf16.msra.mxu0 %v8789
    %10683 = vmatprep.subr.bf16.mxu0 %v8806
    %10684 = vmatpush1.bf16.msra.mxu0 %v8805
    %10685 = vmatprep.subr.bf16.mxu0 %v8822
    %10686 = vmatpush1.bf16.msra.mxu0 %v8821
    %10687 = vmatprep.subr.bf16.mxu0 %v8838
    %10688 = vmatpush1.bf16.msra.mxu0 %v8837
    %10689 = vmatprep.subr.bf16.mxu0 %v8854
    %10690 = vmatpush1.bf16.msra.mxu0 %v8853
    %10691 = vmatprep.subr.bf16.mxu0 %v8870
    %10692 = vmatpush1.bf16.msra.mxu0 %v8869
    %10693 = vmatprep.subr.bf16.mxu0 %v8886
    %10694 = vmatpush1.bf16.msra.mxu0 %v8885
    %10695 = vmatprep.subr.bf16.mxu0 %v8902
    %10696 = vmatpush1.bf16.msra.mxu0 %v8901
    %10697 = vmatprep.subr.bf16.mxu0 %v8918
    %10698 = vmatpush1.bf16.msra.mxu0 %v8917
    %10699 = vmatprep.subr.bf16.mxu0 %v8934
    %10700 = vmatpush1.bf16.msra.mxu0 %v8933
    %10701 = vmatprep.subr.bf16.mxu0 %v8950
    %10702 = vmatpush1.bf16.msra.mxu0 %v8949
    %10703 = vmatprep.mubr.bf16.mxu0 %v4094
    %10704 = vmatmul.mubr.bf16.gmra.mrb[0].mxu0 %v4093
    %v10705 = vpop.f32.mrb[0].mxu0
    %v10706 = vadd.f32 %v10663, %v10705
    %v10707 = vpop.f32.mrb[0].mxu0
    %v10708 = vadd.f32 %v10665, %v10707
    %v10709 = vpop.f32.mrb[0].mxu0
    %v10710 = vadd.f32 %v10667, %v10709
    %v10711 = vpop.f32.mrb[0].mxu0
    %v10712 = vadd.f32 %v10669, %v10711
    %10713 = vdwg.mxu0
    %10714 = vmatprep.subr.bf16.mxu0 %v8966
    %10715 = vmatpush1.bf16.msra.mxu0 %v8965
    %10716 = vmatprep.subr.bf16.mxu0 %v8982
    %10717 = vmatpush1.bf16.msra.mxu0 %v8981
    %10718 = vmatprep.subr.bf16.mxu0 %v8998
    %10719 = vmatpush1.bf16.msra.mxu0 %v8997
    %10720 = vmatprep.subr.bf16.mxu0 %v9014
    %10721 = vmatpush1.bf16.msra.mxu0 %v9013
    %10722 = vmatprep.subr.bf16.mxu0 %v9030
    %10723 = vmatpush1.bf16.msra.mxu0 %v9029
    %10724 = vmatprep.subr.bf16.mxu0 %v9046
    %10725 = vmatpush1.bf16.msra.mxu0 %v9045
    %10726 = vmatprep.subr.bf16.mxu0 %v9062
    %10727 = vmatpush1.bf16.msra.mxu0 %v9061
    %10728 = vmatprep.subr.bf16.mxu0 %v9078
    %10729 = vmatpush1.bf16.msra.mxu0 %v9077
    %10730 = vmatprep.subr.bf16.mxu0 %v9094
    %10731 = vmatpush1.bf16.msra.mxu0 %v9093
    %10732 = vmatprep.subr.bf16.mxu0 %v9110
    %10733 = vmatpush1.bf16.msra.mxu0 %v9109
    %10734 = vmatprep.subr.bf16.mxu0 %v9126
    %10735 = vmatpush1.bf16.msra.mxu0 %v9125
    %10736 = vmatprep.subr.bf16.mxu0 %v9142
    %10737 = vmatpush1.bf16.msra.mxu0 %v9141
    %10738 = vmatprep.subr.bf16.mxu0 %v9158
    %10739 = vmatpush1.bf16.msra.mxu0 %v9157
    %10740 = vmatprep.subr.bf16.mxu0 %v9174
    %10741 = vmatpush1.bf16.msra.mxu0 %v9173
    %10742 = vmatprep.subr.bf16.mxu0 %v9190
    %10743 = vmatpush1.bf16.msra.mxu0 %v9189
    %10744 = vmatprep.subr.bf16.mxu0 %v9206
    %10745 = vmatpush1.bf16.msra.mxu0 %v9205
    %10746 = vmatprep.mubr.bf16.mxu0 %v4096
    %10747 = vmatmul.mubr.bf16.gmra.mrb[0].mxu0 %v4095
    %v10748 = vpop.f32.mrb[0].mxu0
    %v10749 = vadd.f32 %v10706, %v10748
    %v10750 = vpop.f32.mrb[0].mxu0
    %v10751 = vadd.f32 %v10708, %v10750
    %v10752 = vpop.f32.mrb[0].mxu0
    %v10753 = vadd.f32 %v10710, %v10752
    %v10754 = vpop.f32.mrb[0].mxu0
    %v10755 = vadd.f32 %v10712, %v10754
    %10756 = vdwg.mxu0
    %10757 = vmatprep.subr.bf16.mxu0 %v8200
    %10758 = vmatpush1.bf16.msra.mxu0 %v8199
    %10759 = vmatprep.subr.bf16.mxu0 %v8216
    %10760 = vmatpush1.bf16.msra.mxu0 %v8215
    %10761 = vmatprep.subr.bf16.mxu0 %v8232
    %10762 = vmatpush1.bf16.msra.mxu0 %v8231
    %10763 = vmatprep.subr.bf16.mxu0 %v8248
    %10764 = vmatpush1.bf16.msra.mxu0 %v8247
    %10765 = vmatprep.subr.bf16.mxu0 %v8264
    %10766 = vmatpush1.bf16.msra.mxu0 %v8263
    %10767 = vmatprep.subr.bf16.mxu0 %v8280
    %10768 = vmatpush1.bf16.msra.mxu0 %v8279
    %10769 = vmatprep.subr.bf16.mxu0 %v8296
    %10770 = vmatpush1.bf16.msra.mxu0 %v8295
    %10771 = vmatprep.subr.bf16.mxu0 %v8312
    %10772 = vmatpush1.bf16.msra.mxu0 %v8311
    %10773 = vmatprep.subr.bf16.mxu0 %v8328
    %10774 = vmatpush1.bf16.msra.mxu0 %v8327
    %10775 = vmatprep.subr.bf16.mxu0 %v8344
    %10776 = vmatpush1.bf16.msra.mxu0 %v8343
    %10777 = vmatprep.subr.bf16.mxu0 %v8360
    %10778 = vmatpush1.bf16.msra.mxu0 %v8359
    %10779 = vmatprep.subr.bf16.mxu0 %v8376
    %10780 = vmatpush1.bf16.msra.mxu0 %v8375
    %10781 = vmatprep.subr.bf16.mxu0 %v8392
    %10782 = vmatpush1.bf16.msra.mxu0 %v8391
    %10783 = vmatprep.subr.bf16.mxu0 %v8408
    %10784 = vmatpush1.bf16.msra.mxu0 %v8407
    %10785 = vmatprep.subr.bf16.mxu0 %v8424
    %10786 = vmatpush1.bf16.msra.mxu0 %v8423
    %10787 = vmatprep.subr.bf16.mxu0 %v8440
    %10788 = vmatpush1.bf16.msra.mxu0 %v8439
    %10789 = vmatprep.mubr.bf16.mxu0 %v4090
    %10790 = vmatmul.mubr.bf16.gmra.mrb[0].mxu0 %v4089
    %v10791 = vpop.f32.mrb[0].mxu0
    %v10792 = vadd.f32 0.0, %v10791
    %v10793 = vpop.f32.mrb[0].mxu0
    %v10794 = vadd.f32 0.0, %v10793
    %v10795 = vpop.f32.mrb[0].mxu0
    %v10796 = vadd.f32 0.0, %v10795
    %v10797 = vpop.f32.mrb[0].mxu0
    %v10798 = vadd.f32 0.0, %v10797
    %10799 = vdwg.mxu0
    %10800 = vmatprep.subr.bf16.mxu0 %v8456
    %10801 = vmatpush1.bf16.msra.mxu0 %v8455
    %10802 = vmatprep.subr.bf16.mxu0 %v8472
    %10803 = vmatpush1.bf16.msra.mxu0 %v8471
    %10804 = vmatprep.subr.bf16.mxu0 %v8488
    %10805 = vmatpush1.bf16.msra.mxu0 %v8487
    %10806 = vmatprep.subr.bf16.mxu0 %v8504
    %10807 = vmatpush1.bf16.msra.mxu0 %v8503
    %10808 = vmatprep.subr.bf16.mxu0 %v8520
    %10809 = vmatpush1.bf16.msra.mxu0 %v8519
    %10810 = vmatprep.subr.bf16.mxu0 %v8536
    %10811 = vmatpush1.bf16.msra.mxu0 %v8535
    %10812 = vmatprep.subr.bf16.mxu0 %v8552
    %10813 = vmatpush1.bf16.msra.mxu0 %v8551
    %10814 = vmatprep.subr.bf16.mxu0 %v8568
    %10815 = vmatpush1.bf16.msra.mxu0 %v8567
    %10816 = vmatprep.subr.bf16.mxu0 %v8584
    %10817 = vmatpush1.bf16.msra.mxu0 %v8583
    %10818 = vmatprep.subr.bf16.mxu0 %v8600
    %10819 = vmatpush1.bf16.msra.mxu0 %v8599
    %10820 = vmatprep.subr.bf16.mxu0 %v8616
    %10821 = vmatpush1.bf16.msra.mxu0 %v8615
    %10822 = vmatprep.subr.bf16.mxu0 %v8632
    %10823 = vmatpush1.bf16.msra.mxu0 %v8631
    %10824 = vmatprep.subr.bf16.mxu0 %v8648
    %10825 = vmatpush1.bf16.msra.mxu0 %v8647
    %10826 = vmatprep.subr.bf16.mxu0 %v8664
    %10827 = vmatpush1.bf16.msra.mxu0 %v8663
    %10828 = vmatprep.subr.bf16.mxu0 %v8680
    %10829 = vmatpush1.bf16.msra.mxu0 %v8679
    %10830 = vmatprep.subr.bf16.mxu0 %v8696
    %10831 = vmatpush1.bf16.msra.mxu0 %v8695
    %10832 = vmatprep.mubr.bf16.mxu0 %v4092
    %10833 = vmatmul.mubr.bf16.gmra.mrb[0].mxu0 %v4091
    %v10834 = vpop.f32.mrb[0].mxu0
    %v10835 = vadd.f32 %v10792, %v10834
    %v10836 = vpop.f32.mrb[0].mxu0
    %v10837 = vadd.f32 %v10794, %v10836
    %v10838 = vpop.f32.mrb[0].mxu0
    %v10839 = vadd.f32 %v10796, %v10838
    %v10840 = vpop.f32.mrb[0].mxu0
    %v10841 = vadd.f32 %v10798, %v10840
    %10842 = vdwg.mxu0
    %10843 = vmatprep.subr.bf16.mxu0 %v8712
    %10844 = vmatpush1.bf16.msra.mxu0 %v8711
    %10845 = vmatprep.subr.bf16.mxu0 %v8728
    %10846 = vmatpush1.bf16.msra.mxu0 %v8727
    %10847 = vmatprep.subr.bf16.mxu0 %v8744
    %10848 = vmatpush1.bf16.msra.mxu0 %v8743
    %10849 = vmatprep.subr.bf16.mxu0 %v8760
    %10850 = vmatpush1.bf16.msra.mxu0 %v8759
    %10851 = vmatprep.subr.bf16.mxu0 %v8776
    %10852 = vmatpush1.bf16.msra.mxu0 %v8775
    %10853 = vmatprep.subr.bf16.mxu0 %v8792
    %10854 = vmatpush1.bf16.msra.mxu0 %v8791
    %10855 = vmatprep.subr.bf16.mxu0 %v8808
    %10856 = vmatpush1.bf16.msra.mxu0 %v8807
    %10857 = vmatprep.subr.bf16.mxu0 %v8824
    %10858 = vmatpush1.bf16.msra.mxu0 %v8823
    %10859 = vmatprep.subr.bf16.mxu0 %v8840
    %10860 = vmatpush1.bf16.msra.mxu0 %v8839
    %10861 = vmatprep.subr.bf16.mxu0 %v8856
    %10862 = vmatpush1.bf16.msra.mxu0 %v8855
    %10863 = vmatprep.subr.bf16.mxu0 %v8872
    %10864 = vmatpush1.bf16.msra.mxu0 %v8871
    %10865 = vmatprep.subr.bf16.mxu0 %v8888
    %10866 = vmatpush1.bf16.msra.mxu0 %v8887
    %10867 = vmatprep.subr.bf16.mxu0 %v8904
    %10868 = vmatpush1.bf16.msra.mxu0 %v8903
    %10869 = vmatprep.subr.bf16.mxu0 %v8920
    %10870 = vmatpush1.bf16.msra.mxu0 %v8919
    %10871 = vmatprep.subr.bf16.mxu0 %v8936
    %10872 = vmatpush1.bf16.msra.mxu0 %v8935
    %10873 = vmatprep.subr.bf16.mxu0 %v8952
    %10874 = vmatpush1.bf16.msra.mxu0 %v8951
    %10875 = vmatprep.mubr.bf16.mxu0 %v4094
    %10876 = vmatmul.mubr.bf16.gmra.mrb[0].mxu0 %v4093
    %v10877 = vpop.f32.mrb[0].mxu0
    %v10878 = vadd.f32 %v10835, %v10877
    %v10879 = vpop.f32.mrb[0].mxu0
    %v10880 = vadd.f32 %v10837, %v10879
    %v10881 = vpop.f32.mrb[0].mxu0
    %v10882 = vadd.f32 %v10839, %v10881
    %v10883 = vpop.f32.mrb[0].mxu0
    %v10884 = vadd.f32 %v10841, %v10883
    %10885 = vdwg.mxu0
    %10886 = vmatprep.subr.bf16.mxu0 %v8968
    %10887 = vmatpush1.bf16.msra.mxu0 %v8967
    %10888 = vmatprep.subr.bf16.mxu0 %v8984
    %10889 = vmatpush1.bf16.msra.mxu0 %v8983
    %10890 = vmatprep.subr.bf16.mxu0 %v9000
    %10891 = vmatpush1.bf16.msra.mxu0 %v8999
    %10892 = vmatprep.subr.bf16.mxu0 %v9016
    %10893 = vmatpush1.bf16.msra.mxu0 %v9015
    %10894 = vmatprep.subr.bf16.mxu0 %v9032
    %10895 = vmatpush1.bf16.msra.mxu0 %v9031
    %10896 = vmatprep.subr.bf16.mxu0 %v9048
    %10897 = vmatpush1.bf16.msra.mxu0 %v9047
    %10898 = vmatprep.subr.bf16.mxu0 %v9064
    %10899 = vmatpush1.bf16.msra.mxu0 %v9063
    %10900 = vmatprep.subr.bf16.mxu0 %v9080
    %10901 = vmatpush1.bf16.msra.mxu0 %v9079
    %10902 = vmatprep.subr.bf16.mxu0 %v9096
    %10903 = vmatpush1.bf16.msra.mxu0 %v9095
    %10904 = vmatprep.subr.bf16.mxu0 %v9112
    %10905 = vmatpush1.bf16.msra.mxu0 %v9111
    %10906 = vmatprep.subr.bf16.mxu0 %v9128
    %10907 = vmatpush1.bf16.msra.mxu0 %v9127
    %10908 = vmatprep.subr.bf16.mxu0 %v9144
    %10909 = vmatpush1.bf16.msra.mxu0 %v9143
    %10910 = vmatprep.subr.bf16.mxu0 %v9160
    %10911 = vmatpush1.bf16.msra.mxu0 %v9159
    %10912 = vmatprep.subr.bf16.mxu0 %v9176
    %10913 = vmatpush1.bf16.msra.mxu0 %v9175
    %10914 = vmatprep.subr.bf16.mxu0 %v9192
    %10915 = vmatpush1.bf16.msra.mxu0 %v9191
    %10916 = vmatprep.subr.bf16.mxu0 %v9208
    %10917 = vmatpush1.bf16.msra.mxu0 %v9207
    %10918 = vmatprep.mubr.bf16.mxu0 %v4096
    %10919 = vmatmul.mubr.bf16.gmra.mrb[0].mxu0 %v4095
    %v10920 = vpop.f32.mrb[0].mxu0
    %v10921 = vadd.f32 %v10878, %v10920
    %v10922 = vpop.f32.mrb[0].mxu0
    %v10923 = vadd.f32 %v10880, %v10922
    %v10924 = vpop.f32.mrb[0].mxu0
    %v10925 = vadd.f32 %v10882, %v10924
    %v10926 = vpop.f32.mrb[0].mxu0
    %v10927 = vadd.f32 %v10884, %v10926
    %10928 = vdwg.mxu0
    %10929 = vmatprep.subr.bf16.mxu0 %v8202
    %10930 = vmatpush1.bf16.msra.mxu0 %v8201
    %10931 = vmatprep.subr.bf16.mxu0 %v8218
    %10932 = vmatpush1.bf16.msra.mxu0 %v8217
    %10933 = vmatprep.subr.bf16.mxu0 %v8234
    %10934 = vmatpush1.bf16.msra.mxu0 %v8233
    %10935 = vmatprep.subr.bf16.mxu0 %v8250
    %10936 = vmatpush1.bf16.msra.mxu0 %v8249
    %10937 = vmatprep.subr.bf16.mxu0 %v8266
    %10938 = vmatpush1.bf16.msra.mxu0 %v8265
    %10939 = vmatprep.subr.bf16.mxu0 %v8282
    %10940 = vmatpush1.bf16.msra.mxu0 %v8281
    %10941 = vmatprep.subr.bf16.mxu0 %v8298
    %10942 = vmatpush1.bf16.msra.mxu0 %v8297
    %10943 = vmatprep.subr.bf16.mxu0 %v8314
    %10944 = vmatpush1.bf16.msra.mxu0 %v8313
    %10945 = vmatprep.subr.bf16.mxu0 %v8330
    %10946 = vmatpush1.bf16.msra.mxu0 %v8329
    %10947 = vmatprep.subr.bf16.mxu0 %v8346
    %10948 = vmatpush1.bf16.msra.mxu0 %v8345
    %10949 = vmatprep.subr.bf16.mxu0 %v8362
    %10950 = vmatpush1.bf16.msra.mxu0 %v8361
    %10951 = vmatprep.subr.bf16.mxu0 %v8378
    %10952 = vmatpush1.bf16.msra.mxu0 %v8377
    %10953 = vmatprep.subr.bf16.mxu0 %v8394
    %10954 = vmatpush1.bf16.msra.mxu0 %v8393
    %10955 = vmatprep.subr.bf16.mxu0 %v8410
    %10956 = vmatpush1.bf16.msra.mxu0 %v8409
    %10957 = vmatprep.subr.bf16.mxu0 %v8426
    %10958 = vmatpush1.bf16.msra.mxu0 %v8425
    %10959 = vmatprep.subr.bf16.mxu0 %v8442
    %10960 = vmatpush1.bf16.msra.mxu0 %v8441
    %10961 = vmatprep.mubr.bf16.mxu0 %v4090
    %10962 = vmatmul.mubr.bf16.gmra.mrb[0].mxu0 %v4089
    %v10963 = vpop.f32.mrb[0].mxu0
    %v10964 = vadd.f32 0.0, %v10963
    %v10965 = vpop.f32.mrb[0].mxu0
    %v10966 = vadd.f32 0.0, %v10965
    %v10967 = vpop.f32.mrb[0].mxu0
    %v10968 = vadd.f32 0.0, %v10967
    %v10969 = vpop.f32.mrb[0].mxu0
    %v10970 = vadd.f32 0.0, %v10969
    %10971 = vdwg.mxu0
    %10972 = vmatprep.subr.bf16.mxu0 %v8458
    %10973 = vmatpush1.bf16.msra.mxu0 %v8457
    %10974 = vmatprep.subr.bf16.mxu0 %v8474
    %10975 = vmatpush1.bf16.msra.mxu0 %v8473
    %10976 = vmatprep.subr.bf16.mxu0 %v8490
    %10977 = vmatpush1.bf16.msra.mxu0 %v8489
    %10978 = vmatprep.subr.bf16.mxu0 %v8506
    %10979 = vmatpush1.bf16.msra.mxu0 %v8505
    %10980 = vmatprep.subr.bf16.mxu0 %v8522
    %10981 = vmatpush1.bf16.msra.mxu0 %v8521
    %10982 = vmatprep.subr.bf16.mxu0 %v8538
    %10983 = vmatpush1.bf16.msra.mxu0 %v8537
    %10984 = vmatprep.subr.bf16.mxu0 %v8554
    %10985 = vmatpush1.bf16.msra.mxu0 %v8553
    %10986 = vmatprep.subr.bf16.mxu0 %v8570
    %10987 = vmatpush1.bf16.msra.mxu0 %v8569
    %10988 = vmatprep.subr.bf16.mxu0 %v8586
    %10989 = vmatpush1.bf16.msra.mxu0 %v8585
    %10990 = vmatprep.subr.bf16.mxu0 %v8602
    %10991 = vmatpush1.bf16.msra.mxu0 %v8601
    %10992 = vmatprep.subr.bf16.mxu0 %v8618
    %10993 = vmatpush1.bf16.msra.mxu0 %v8617
    %10994 = vmatprep.subr.bf16.mxu0 %v8634
    %10995 = vmatpush1.bf16.msra.mxu0 %v8633
    %10996 = vmatprep.subr.bf16.mxu0 %v8650
    %10997 = vmatpush1.bf16.msra.mxu0 %v8649
    %10998 = vmatprep.subr.bf16.mxu0 %v8666
    %10999 = vmatpush1.bf16.msra.mxu0 %v8665
    %11000 = vmatprep.subr.bf16.mxu0 %v8682
    %11001 = vmatpush1.bf16.msra.mxu0 %v8681
    %11002 = vmatprep.subr.bf16.mxu0 %v8698
    %11003 = vmatpush1.bf16.msra.mxu0 %v8697
    %11004 = vmatprep.mubr.bf16.mxu0 %v4092
    %11005 = vmatmul.mubr.bf16.gmra.mrb[0].mxu0 %v4091
    %v11006 = vpop.f32.mrb[0].mxu0
    %v11007 = vadd.f32 %v10964, %v11006
    %v11008 = vpop.f32.mrb[0].mxu0
    %v11009 = vadd.f32 %v10966, %v11008
    %v11010 = vpop.f32.mrb[0].mxu0
    %v11011 = vadd.f32 %v10968, %v11010
    %v11012 = vpop.f32.mrb[0].mxu0
    %v11013 = vadd.f32 %v10970, %v11012
    %11014 = vdwg.mxu0
    %11015 = vmatprep.subr.bf16.mxu0 %v8714
    %11016 = vmatpush1.bf16.msra.mxu0 %v8713
    %11017 = vmatprep.subr.bf16.mxu0 %v8730
    %11018 = vmatpush1.bf16.msra.mxu0 %v8729
    %11019 = vmatprep.subr.bf16.mxu0 %v8746
    %11020 = vmatpush1.bf16.msra.mxu0 %v8745
    %11021 = vmatprep.subr.bf16.mxu0 %v8762
    %11022 = vmatpush1.bf16.msra.mxu0 %v8761
    %11023 = vmatprep.subr.bf16.mxu0 %v8778
    %11024 = vmatpush1.bf16.msra.mxu0 %v8777
    %11025 = vmatprep.subr.bf16.mxu0 %v8794
    %11026 = vmatpush1.bf16.msra.mxu0 %v8793
    %11027 = vmatprep.subr.bf16.mxu0 %v8810
    %11028 = vmatpush1.bf16.msra.mxu0 %v8809
    %11029 = vmatprep.subr.bf16.mxu0 %v8826
    %11030 = vmatpush1.bf16.msra.mxu0 %v8825
    %11031 = vmatprep.subr.bf16.mxu0 %v8842
    %11032 = vmatpush1.bf16.msra.mxu0 %v8841
    %11033 = vmatprep.subr.bf16.mxu0 %v8858
    %11034 = vmatpush1.bf16.msra.mxu0 %v8857
    %11035 = vmatprep.subr.bf16.mxu0 %v8874
    %11036 = vmatpush1.bf16.msra.mxu0 %v8873
    %11037 = vmatprep.subr.bf16.mxu0 %v8890
    %11038 = vmatpush1.bf16.msra.mxu0 %v8889
    %11039 = vmatprep.subr.bf16.mxu0 %v8906
    %11040 = vmatpush1.bf16.msra.mxu0 %v8905
    %11041 = vmatprep.subr.bf16.mxu0 %v8922
    %11042 = vmatpush1.bf16.msra.mxu0 %v8921
    %11043 = vmatprep.subr.bf16.mxu0 %v8938
    %11044 = vmatpush1.bf16.msra.mxu0 %v8937
    %11045 = vmatprep.subr.bf16.mxu0 %v8954
    %11046 = vmatpush1.bf16.msra.mxu0 %v8953
    %11047 = vmatprep.mubr.bf16.mxu0 %v4094
    %11048 = vmatmul.mubr.bf16.gmra.mrb[0].mxu0 %v4093
    %v11049 = vpop.f32.mrb[0].mxu0
    %v11050 = vadd.f32 %v11007, %v11049
    %v11051 = vpop.f32.mrb[0].mxu0
    %v11052 = vadd.f32 %v11009, %v11051
    %v11053 = vpop.f32.mrb[0].mxu0
    %v11054 = vadd.f32 %v11011, %v11053
    %v11055 = vpop.f32.mrb[0].mxu0
    %v11056 = vadd.f32 %v11013, %v11055
    %11057 = vdwg.mxu0
    %11058 = vmatprep.subr.bf16.mxu0 %v8970
    %11059 = vmatpush1.bf16.msra.mxu0 %v8969
    %11060 = vmatprep.subr.bf16.mxu0 %v8986
    %11061 = vmatpush1.bf16.msra.mxu0 %v8985
    %11062 = vmatprep.subr.bf16.mxu0 %v9002
    %11063 = vmatpush1.bf16.msra.mxu0 %v9001
    %11064 = vmatprep.subr.bf16.mxu0 %v9018
    %11065 = vmatpush1.bf16.msra.mxu0 %v9017
    %11066 = vmatprep.subr.bf16.mxu0 %v9034
    %11067 = vmatpush1.bf16.msra.mxu0 %v9033
    %11068 = vmatprep.subr.bf16.mxu0 %v9050
    %11069 = vmatpush1.bf16.msra.mxu0 %v9049
    %11070 = vmatprep.subr.bf16.mxu0 %v9066
    %11071 = vmatpush1.bf16.msra.mxu0 %v9065
    %11072 = vmatprep.subr.bf16.mxu0 %v9082
    %11073 = vmatpush1.bf16.msra.mxu0 %v9081
    %11074 = vmatprep.subr.bf16.mxu0 %v9098
    %11075 = vmatpush1.bf16.msra.mxu0 %v9097
    %11076 = vmatprep.subr.bf16.mxu0 %v9114
    %11077 = vmatpush1.bf16.msra.mxu0 %v9113
    %11078 = vmatprep.subr.bf16.mxu0 %v9130
    %11079 = vmatpush1.bf16.msra.mxu0 %v9129
    %11080 = vmatprep.subr.bf16.mxu0 %v9146
    %11081 = vmatpush1.bf16.msra.mxu0 %v9145
    %11082 = vmatprep.subr.bf16.mxu0 %v9162
    %11083 = vmatpush1.bf16.msra.mxu0 %v9161
    %11084 = vmatprep.subr.bf16.mxu0 %v9178
    %11085 = vmatpush1.bf16.msra.mxu0 %v9177
    %11086 = vmatprep.subr.bf16.mxu0 %v9194
    %11087 = vmatpush1.bf16.msra.mxu0 %v9193
    %11088 = vmatprep.subr.bf16.mxu0 %v9210
    %11089 = vmatpush1.bf16.msra.mxu0 %v9209
    %11090 = vmatprep.mubr.bf16.mxu0 %v4096
    %11091 = vmatmul.mubr.bf16.gmra.mrb[0].mxu0 %v4095
    %v11092 = vpop.f32.mrb[0].mxu0
    %v11093 = vadd.f32 %v11050, %v11092
    %v11094 = vpop.f32.mrb[0].mxu0
    %v11095 = vadd.f32 %v11052, %v11094
    %v11096 = vpop.f32.mrb[0].mxu0
    %v11097 = vadd.f32 %v11054, %v11096
    %v11098 = vpop.f32.mrb[0].mxu0
    %v11099 = vadd.f32 %v11056, %v11098
    %11100 = vdwg.mxu0
    %11101 = vmatprep.subr.bf16.mxu0 %v8204
    %11102 = vmatpush1.bf16.msra.mxu0 %v8203
    %11103 = vmatprep.subr.bf16.mxu0 %v8220
    %11104 = vmatpush1.bf16.msra.mxu0 %v8219
    %11105 = vmatprep.subr.bf16.mxu0 %v8236
    %11106 = vmatpush1.bf16.msra.mxu0 %v8235
    %11107 = vmatprep.subr.bf16.mxu0 %v8252
    %11108 = vmatpush1.bf16.msra.mxu0 %v8251
    %11109 = vmatprep.subr.bf16.mxu0 %v8268
    %11110 = vmatpush1.bf16.msra.mxu0 %v8267
    %11111 = vmatprep.subr.bf16.mxu0 %v8284
    %11112 = vmatpush1.bf16.msra.mxu0 %v8283
    %11113 = vmatprep.subr.bf16.mxu0 %v8300
    %11114 = vmatpush1.bf16.msra.mxu0 %v8299
    %11115 = vmatprep.subr.bf16.mxu0 %v8316
    %11116 = vmatpush1.bf16.msra.mxu0 %v8315
    %11117 = vmatprep.subr.bf16.mxu0 %v8332
    %11118 = vmatpush1.bf16.msra.mxu0 %v8331
    %11119 = vmatprep.subr.bf16.mxu0 %v8348
    %11120 = vmatpush1.bf16.msra.mxu0 %v8347
    %11121 = vmatprep.subr.bf16.mxu0 %v8364
    %11122 = vmatpush1.bf16.msra.mxu0 %v8363
    %11123 = vmatprep.subr.bf16.mxu0 %v8380
    %11124 = vmatpush1.bf16.msra.mxu0 %v8379
    %11125 = vmatprep.subr.bf16.mxu0 %v8396
    %11126 = vmatpush1.bf16.msra.mxu0 %v8395
    %11127 = vmatprep.subr.bf16.mxu0 %v8412
    %11128 = vmatpush1.bf16.msra.mxu0 %v8411
    %11129 = vmatprep.subr.bf16.mxu0 %v8428
    %11130 = vmatpush1.bf16.msra.mxu0 %v8427
    %11131 = vmatprep.subr.bf16.mxu0 %v8444
    %11132 = vmatpush1.bf16.msra.mxu0 %v8443
    %11133 = vmatprep.mubr.bf16.mxu0 %v4090
    %11134 = vmatmul.mubr.bf16.gmra.mrb[0].mxu0 %v4089
    %v11135 = vpop.f32.mrb[0].mxu0
    %v11136 = vadd.f32 0.0, %v11135
    %v11137 = vpop.f32.mrb[0].mxu0
    %v11138 = vadd.f32 0.0, %v11137
    %v11139 = vpop.f32.mrb[0].mxu0
    %v11140 = vadd.f32 0.0, %v11139
    %v11141 = vpop.f32.mrb[0].mxu0
    %v11142 = vadd.f32 0.0, %v11141
    %11143 = vdwg.mxu0
    %11144 = vmatprep.subr.bf16.mxu0 %v8460
    %11145 = vmatpush1.bf16.msra.mxu0 %v8459
    %11146 = vmatprep.subr.bf16.mxu0 %v8476
    %11147 = vmatpush1.bf16.msra.mxu0 %v8475
    %11148 = vmatprep.subr.bf16.mxu0 %v8492
    %11149 = vmatpush1.bf16.msra.mxu0 %v8491
    %11150 = vmatprep.subr.bf16.mxu0 %v8508
    %11151 = vmatpush1.bf16.msra.mxu0 %v8507
    %11152 = vmatprep.subr.bf16.mxu0 %v8524
    %11153 = vmatpush1.bf16.msra.mxu0 %v8523
    %11154 = vmatprep.subr.bf16.mxu0 %v8540
    %11155 = vmatpush1.bf16.msra.mxu0 %v8539
    %11156 = vmatprep.subr.bf16.mxu0 %v8556
    %11157 = vmatpush1.bf16.msra.mxu0 %v8555
    %11158 = vmatprep.subr.bf16.mxu0 %v8572
    %11159 = vmatpush1.bf16.msra.mxu0 %v8571
    %11160 = vmatprep.subr.bf16.mxu0 %v8588
    %11161 = vmatpush1.bf16.msra.mxu0 %v8587
    %11162 = vmatprep.subr.bf16.mxu0 %v8604
    %11163 = vmatpush1.bf16.msra.mxu0 %v8603
    %11164 = vmatprep.subr.bf16.mxu0 %v8620
    %11165 = vmatpush1.bf16.msra.mxu0 %v8619
    %11166 = vmatprep.subr.bf16.mxu0 %v8636
    %11167 = vmatpush1.bf16.msra.mxu0 %v8635
    %11168 = vmatprep.subr.bf16.mxu0 %v8652
    %11169 = vmatpush1.bf16.msra.mxu0 %v8651
    %11170 = vmatprep.subr.bf16.mxu0 %v8668
    %11171 = vmatpush1.bf16.msra.mxu0 %v8667
    %11172 = vmatprep.subr.bf16.mxu0 %v8684
    %11173 = vmatpush1.bf16.msra.mxu0 %v8683
    %11174 = vmatprep.subr.bf16.mxu0 %v8700
    %11175 = vmatpush1.bf16.msra.mxu0 %v8699
    %11176 = vmatprep.mubr.bf16.mxu0 %v4092
    %11177 = vmatmul.mubr.bf16.gmra.mrb[0].mxu0 %v4091
    %v11178 = vpop.f32.mrb[0].mxu0
    %v11179 = vadd.f32 %v11136, %v11178
    %v11180 = vpop.f32.mrb[0].mxu0
    %v11181 = vadd.f32 %v11138, %v11180
    %v11182 = vpop.f32.mrb[0].mxu0
    %v11183 = vadd.f32 %v11140, %v11182
    %v11184 = vpop.f32.mrb[0].mxu0
    %v11185 = vadd.f32 %v11142, %v11184
    %11186 = vdwg.mxu0
    %11187 = vmatprep.subr.bf16.mxu0 %v8716
    %11188 = vmatpush1.bf16.msra.mxu0 %v8715
    %11189 = vmatprep.subr.bf16.mxu0 %v8732
    %11190 = vmatpush1.bf16.msra.mxu0 %v8731
    %11191 = vmatprep.subr.bf16.mxu0 %v8748
    %11192 = vmatpush1.bf16.msra.mxu0 %v8747
    %11193 = vmatprep.subr.bf16.mxu0 %v8764
    %11194 = vmatpush1.bf16.msra.mxu0 %v8763
    %11195 = vmatprep.subr.bf16.mxu0 %v8780
    %11196 = vmatpush1.bf16.msra.mxu0 %v8779
    %11197 = vmatprep.subr.bf16.mxu0 %v8796
    %11198 = vmatpush1.bf16.msra.mxu0 %v8795
    %11199 = vmatprep.subr.bf16.mxu0 %v8812
    %11200 = vmatpush1.bf16.msra.mxu0 %v8811
    %11201 = vmatprep.subr.bf16.mxu0 %v8828
    %11202 = vmatpush1.bf16.msra.mxu0 %v8827
    %11203 = vmatprep.subr.bf16.mxu0 %v8844
    %11204 = vmatpush1.bf16.msra.mxu0 %v8843
    %11205 = vmatprep.subr.bf16.mxu0 %v8860
    %11206 = vmatpush1.bf16.msra.mxu0 %v8859
    %11207 = vmatprep.subr.bf16.mxu0 %v8876
    %11208 = vmatpush1.bf16.msra.mxu0 %v8875
    %11209 = vmatprep.subr.bf16.mxu0 %v8892
    %11210 = vmatpush1.bf16.msra.mxu0 %v8891
    %11211 = vmatprep.subr.bf16.mxu0 %v8908
    %11212 = vmatpush1.bf16.msra.mxu0 %v8907
    %11213 = vmatprep.subr.bf16.mxu0 %v8924
    %11214 = vmatpush1.bf16.msra.mxu0 %v8923
    %11215 = vmatprep.subr.bf16.mxu0 %v8940
    %11216 = vmatpush1.bf16.msra.mxu0 %v8939
    %11217 = vmatprep.subr.bf16.mxu0 %v8956
    %11218 = vmatpush1.bf16.msra.mxu0 %v8955
    %11219 = vmatprep.mubr.bf16.mxu0 %v4094
    %11220 = vmatmul.mubr.bf16.gmra.mrb[0].mxu0 %v4093
    %v11221 = vpop.f32.mrb[0].mxu0
    %v11222 = vadd.f32 %v11179, %v11221
    %v11223 = vpop.f32.mrb[0].mxu0
    %v11224 = vadd.f32 %v11181, %v11223
    %v11225 = vpop.f32.mrb[0].mxu0
    %v11226 = vadd.f32 %v11183, %v11225
    %v11227 = vpop.f32.mrb[0].mxu0
    %v11228 = vadd.f32 %v11185, %v11227
    %11229 = vdwg.mxu0
    %11230 = vmatprep.subr.bf16.mxu0 %v8972
    %11231 = vmatpush1.bf16.msra.mxu0 %v8971
    %11232 = vmatprep.subr.bf16.mxu0 %v8988
    %11233 = vmatpush1.bf16.msra.mxu0 %v8987
    %11234 = vmatprep.subr.bf16.mxu0 %v9004
    %11235 = vmatpush1.bf16.msra.mxu0 %v9003
    %11236 = vmatprep.subr.bf16.mxu0 %v9020
    %11237 = vmatpush1.bf16.msra.mxu0 %v9019
    %11238 = vmatprep.subr.bf16.mxu0 %v9036
    %11239 = vmatpush1.bf16.msra.mxu0 %v9035
    %11240 = vmatprep.subr.bf16.mxu0 %v9052
    %11241 = vmatpush1.bf16.msra.mxu0 %v9051
    %11242 = vmatprep.subr.bf16.mxu0 %v9068
    %11243 = vmatpush1.bf16.msra.mxu0 %v9067
    %11244 = vmatprep.subr.bf16.mxu0 %v9084
    %11245 = vmatpush1.bf16.msra.mxu0 %v9083
    %11246 = vmatprep.subr.bf16.mxu0 %v9100
    %11247 = vmatpush1.bf16.msra.mxu0 %v9099
    %11248 = vmatprep.subr.bf16.mxu0 %v9116
    %11249 = vmatpush1.bf16.msra.mxu0 %v9115
    %11250 = vmatprep.subr.bf16.mxu0 %v9132
    %11251 = vmatpush1.bf16.msra.mxu0 %v9131
    %11252 = vmatprep.subr.bf16.mxu0 %v9148
    %11253 = vmatpush1.bf16.msra.mxu0 %v9147
    %11254 = vmatprep.subr.bf16.mxu0 %v9164
    %11255 = vmatpush1.bf16.msra.mxu0 %v9163
    %11256 = vmatprep.subr.bf16.mxu0 %v9180
    %11257 = vmatpush1.bf16.msra.mxu0 %v9179
    %11258 = vmatprep.subr.bf16.mxu0 %v9196
    %11259 = vmatpush1.bf16.msra.mxu0 %v9195
    %11260 = vmatprep.subr.bf16.mxu0 %v9212
    %11261 = vmatpush1.bf16.msra.mxu0 %v9211
    %11262 = vmatprep.mubr.bf16.mxu0 %v4096
    %11263 = vmatmul.mubr.bf16.gmra.mrb[0].mxu0 %v4095
    %v11264 = vpop.f32.mrb[0].mxu0
    %v11265 = vadd.f32 %v11222, %v11264
    %v11266 = vpop.f32.mrb[0].mxu0
    %v11267 = vadd.f32 %v11224, %v11266
    %v11268 = vpop.f32.mrb[0].mxu0
    %v11269 = vadd.f32 %v11226, %v11268
    %v11270 = vpop.f32.mrb[0].mxu0
    %v11271 = vadd.f32 %v11228, %v11270
    %11272 = vdwg.mxu0
    %11273 = vmatprep.subr.bf16.mxu0 %v8206
    %11274 = vmatpush1.bf16.msra.mxu0 %v8205
    %11275 = vmatprep.subr.bf16.mxu0 %v8222
    %11276 = vmatpush1.bf16.msra.mxu0 %v8221
    %11277 = vmatprep.subr.bf16.mxu0 %v8238
    %11278 = vmatpush1.bf16.msra.mxu0 %v8237
    %11279 = vmatprep.subr.bf16.mxu0 %v8254
    %11280 = vmatpush1.bf16.msra.mxu0 %v8253
    %11281 = vmatprep.subr.bf16.mxu0 %v8270
    %11282 = vmatpush1.bf16.msra.mxu0 %v8269
    %11283 = vmatprep.subr.bf16.mxu0 %v8286
    %11284 = vmatpush1.bf16.msra.mxu0 %v8285
    %11285 = vmatprep.subr.bf16.mxu0 %v8302
    %11286 = vmatpush1.bf16.msra.mxu0 %v8301
    %11287 = vmatprep.subr.bf16.mxu0 %v8318
    %11288 = vmatpush1.bf16.msra.mxu0 %v8317
    %11289 = vmatprep.subr.bf16.mxu0 %v8334
    %11290 = vmatpush1.bf16.msra.mxu0 %v8333
    %11291 = vmatprep.subr.bf16.mxu0 %v8350
    %11292 = vmatpush1.bf16.msra.mxu0 %v8349
    %11293 = vmatprep.subr.bf16.mxu0 %v8366
    %11294 = vmatpush1.bf16.msra.mxu0 %v8365
    %11295 = vmatprep.subr.bf16.mxu0 %v8382
    %11296 = vmatpush1.bf16.msra.mxu0 %v8381
    %11297 = vmatprep.subr.bf16.mxu0 %v8398
    %11298 = vmatpush1.bf16.msra.mxu0 %v8397
    %11299 = vmatprep.subr.bf16.mxu0 %v8414
    %11300 = vmatpush1.bf16.msra.mxu0 %v8413
    %11301 = vmatprep.subr.bf16.mxu0 %v8430
    %11302 = vmatpush1.bf16.msra.mxu0 %v8429
    %11303 = vmatprep.subr.bf16.mxu0 %v8446
    %11304 = vmatpush1.bf16.msra.mxu0 %v8445
    %11305 = vmatprep.mubr.bf16.mxu0 %v4090
    %11306 = vmatmul.mubr.bf16.gmra.mrb[0].mxu0 %v4089
    %v11307 = vpop.f32.mrb[0].mxu0
    %v11308 = vadd.f32 0.0, %v11307
    %v11309 = vpop.f32.mrb[0].mxu0
    %v11310 = vadd.f32 0.0, %v11309
    %v11311 = vpop.f32.mrb[0].mxu0
    %v11312 = vadd.f32 0.0, %v11311
    %v11313 = vpop.f32.mrb[0].mxu0
    %v11314 = vadd.f32 0.0, %v11313
    %11315 = vdwg.mxu0
    %11316 = vmatprep.subr.bf16.mxu0 %v8462
    %11317 = vmatpush1.bf16.msra.mxu0 %v8461
    %11318 = vmatprep.subr.bf16.mxu0 %v8478
    %11319 = vmatpush1.bf16.msra.mxu0 %v8477
    %11320 = vmatprep.subr.bf16.mxu0 %v8494
    %11321 = vmatpush1.bf16.msra.mxu0 %v8493
    %11322 = vmatprep.subr.bf16.mxu0 %v8510
    %11323 = vmatpush1.bf16.msra.mxu0 %v8509
    %11324 = vmatprep.subr.bf16.mxu0 %v8526
    %11325 = vmatpush1.bf16.msra.mxu0 %v8525
    %11326 = vmatprep.subr.bf16.mxu0 %v8542
    %11327 = vmatpush1.bf16.msra.mxu0 %v8541
    %11328 = vmatprep.subr.bf16.mxu0 %v8558
    %11329 = vmatpush1.bf16.msra.mxu0 %v8557
    %11330 = vmatprep.subr.bf16.mxu0 %v8574
    %11331 = vmatpush1.bf16.msra.mxu0 %v8573
    %11332 = vmatprep.subr.bf16.mxu0 %v8590
    %11333 = vmatpush1.bf16.msra.mxu0 %v8589
    %11334 = vmatprep.subr.bf16.mxu0 %v8606
    %11335 = vmatpush1.bf16.msra.mxu0 %v8605
    %11336 = vmatprep.subr.bf16.mxu0 %v8622
    %11337 = vmatpush1.bf16.msra.mxu0 %v8621
    %11338 = vmatprep.subr.bf16.mxu0 %v8638
    %11339 = vmatpush1.bf16.msra.mxu0 %v8637
    %11340 = vmatprep.subr.bf16.mxu0 %v8654
    %11341 = vmatpush1.bf16.msra.mxu0 %v8653
    %11342 = vmatprep.subr.bf16.mxu0 %v8670
    %11343 = vmatpush1.bf16.msra.mxu0 %v8669
    %11344 = vmatprep.subr.bf16.mxu0 %v8686
    %11345 = vmatpush1.bf16.msra.mxu0 %v8685
    %11346 = vmatprep.subr.bf16.mxu0 %v8702
    %11347 = vmatpush1.bf16.msra.mxu0 %v8701
    %11348 = vmatprep.mubr.bf16.mxu0 %v4092
    %11349 = vmatmul.mubr.bf16.gmra.mrb[0].mxu0 %v4091
    %v11350 = vpop.f32.mrb[0].mxu0
    %v11351 = vadd.f32 %v11308, %v11350
    %v11352 = vpop.f32.mrb[0].mxu0
    %v11353 = vadd.f32 %v11310, %v11352
    %v11354 = vpop.f32.mrb[0].mxu0
    %v11355 = vadd.f32 %v11312, %v11354
    %v11356 = vpop.f32.mrb[0].mxu0
    %v11357 = vadd.f32 %v11314, %v11356
    %11358 = vdwg.mxu0
    %11359 = vmatprep.subr.bf16.mxu0 %v8718
    %11360 = vmatpush1.bf16.msra.mxu0 %v8717
    %11361 = vmatprep.subr.bf16.mxu0 %v8734
    %11362 = vmatpush1.bf16.msra.mxu0 %v8733
    %11363 = vmatprep.subr.bf16.mxu0 %v8750
    %11364 = vmatpush1.bf16.msra.mxu0 %v8749
    %11365 = vmatprep.subr.bf16.mxu0 %v8766
    %11366 = vmatpush1.bf16.msra.mxu0 %v8765
    %11367 = vmatprep.subr.bf16.mxu0 %v8782
    %11368 = vmatpush1.bf16.msra.mxu0 %v8781
    %11369 = vmatprep.subr.bf16.mxu0 %v8798
    %11370 = vmatpush1.bf16.msra.mxu0 %v8797
    %11371 = vmatprep.subr.bf16.mxu0 %v8814
    %11372 = vmatpush1.bf16.msra.mxu0 %v8813
    %11373 = vmatprep.subr.bf16.mxu0 %v8830
    %11374 = vmatpush1.bf16.msra.mxu0 %v8829
    %11375 = vmatprep.subr.bf16.mxu0 %v8846
    %11376 = vmatpush1.bf16.msra.mxu0 %v8845
    %11377 = vmatprep.subr.bf16.mxu0 %v8862
    %11378 = vmatpush1.bf16.msra.mxu0 %v8861
    %11379 = vmatprep.subr.bf16.mxu0 %v8878
    %11380 = vmatpush1.bf16.msra.mxu0 %v8877
    %11381 = vmatprep.subr.bf16.mxu0 %v8894
    %11382 = vmatpush1.bf16.msra.mxu0 %v8893
    %11383 = vmatprep.subr.bf16.mxu0 %v8910
    %11384 = vmatpush1.bf16.msra.mxu0 %v8909
    %11385 = vmatprep.subr.bf16.mxu0 %v8926
    %11386 = vmatpush1.bf16.msra.mxu0 %v8925
    %11387 = vmatprep.subr.bf16.mxu0 %v8942
    %11388 = vmatpush1.bf16.msra.mxu0 %v8941
    %11389 = vmatprep.subr.bf16.mxu0 %v8958
    %11390 = vmatpush1.bf16.msra.mxu0 %v8957
    %11391 = vmatprep.mubr.bf16.mxu0 %v4094
    %11392 = vmatmul.mubr.bf16.gmra.mrb[0].mxu0 %v4093
    %v11393 = vpop.f32.mrb[0].mxu0
    %v11394 = vadd.f32 %v11351, %v11393
    %v11395 = vpop.f32.mrb[0].mxu0
    %v11396 = vadd.f32 %v11353, %v11395
    %v11397 = vpop.f32.mrb[0].mxu0
    %v11398 = vadd.f32 %v11355, %v11397
    %v11399 = vpop.f32.mrb[0].mxu0
    %v11400 = vadd.f32 %v11357, %v11399
    %11401 = vdwg.mxu0
    %11402 = vmatprep.subr.bf16.mxu0 %v8974
    %11403 = vmatpush1.bf16.msra.mxu0 %v8973
    %11404 = vmatprep.subr.bf16.mxu0 %v8990
    %11405 = vmatpush1.bf16.msra.mxu0 %v8989
    %11406 = vmatprep.subr.bf16.mxu0 %v9006
    %11407 = vmatpush1.bf16.msra.mxu0 %v9005
    %11408 = vmatprep.subr.bf16.mxu0 %v9022
    %11409 = vmatpush1.bf16.msra.mxu0 %v9021
    %11410 = vmatprep.subr.bf16.mxu0 %v9038
    %11411 = vmatpush1.bf16.msra.mxu0 %v9037
    %11412 = vmatprep.subr.bf16.mxu0 %v9054
    %11413 = vmatpush1.bf16.msra.mxu0 %v9053
    %11414 = vmatprep.subr.bf16.mxu0 %v9070
    %11415 = vmatpush1.bf16.msra.mxu0 %v9069
    %11416 = vmatprep.subr.bf16.mxu0 %v9086
    %11417 = vmatpush1.bf16.msra.mxu0 %v9085
    %11418 = vmatprep.subr.bf16.mxu0 %v9102
    %11419 = vmatpush1.bf16.msra.mxu0 %v9101
    %11420 = vmatprep.subr.bf16.mxu0 %v9118
    %11421 = vmatpush1.bf16.msra.mxu0 %v9117
    %11422 = vmatprep.subr.bf16.mxu0 %v9134
    %11423 = vmatpush1.bf16.msra.mxu0 %v9133
    %11424 = vmatprep.subr.bf16.mxu0 %v9150
    %11425 = vmatpush1.bf16.msra.mxu0 %v9149
    %11426 = vmatprep.subr.bf16.mxu0 %v9166
    %11427 = vmatpush1.bf16.msra.mxu0 %v9165
    %11428 = vmatprep.subr.bf16.mxu0 %v9182
    %11429 = vmatpush1.bf16.msra.mxu0 %v9181
    %11430 = vmatprep.subr.bf16.mxu0 %v9198
    %11431 = vmatpush1.bf16.msra.mxu0 %v9197
    %11432 = vmatprep.subr.bf16.mxu0 %v9214
    %11433 = vmatpush1.bf16.msra.mxu0 %v9213
    %11434 = vmatprep.mubr.bf16.mxu0 %v4096
    %11435 = vmatmul.mubr.bf16.gmra.mrb[0].mxu0 %v4095
    %v11436 = vpop.f32.mrb[0].mxu0
    %v11437 = vadd.f32 %v11394, %v11436
    %v11438 = vpop.f32.mrb[0].mxu0
    %v11439 = vadd.f32 %v11396, %v11438
    %v11440 = vpop.f32.mrb[0].mxu0
    %v11441 = vadd.f32 %v11398, %v11440
    %v11442 = vpop.f32.mrb[0].mxu0
    %v11443 = vadd.f32 %v11400, %v11442
    %11444 = vdwg.mxu0
    %11445 = vmatprep.subr.bf16.mxu0 %v8208
    %11446 = vmatpush1.bf16.msra.mxu0 %v8207
    %11447 = vmatprep.subr.bf16.mxu0 %v8224
    %11448 = vmatpush1.bf16.msra.mxu0 %v8223
    %11449 = vmatprep.subr.bf16.mxu0 %v8240
    %11450 = vmatpush1.bf16.msra.mxu0 %v8239
    %11451 = vmatprep.subr.bf16.mxu0 %v8256
    %11452 = vmatpush1.bf16.msra.mxu0 %v8255
    %11453 = vmatprep.subr.bf16.mxu0 %v8272
    %11454 = vmatpush1.bf16.msra.mxu0 %v8271
    %11455 = vmatprep.subr.bf16.mxu0 %v8288
    %11456 = vmatpush1.bf16.msra.mxu0 %v8287
    %11457 = vmatprep.subr.bf16.mxu0 %v8304
    %11458 = vmatpush1.bf16.msra.mxu0 %v8303
    %11459 = vmatprep.subr.bf16.mxu0 %v8320
    %11460 = vmatpush1.bf16.msra.mxu0 %v8319
    %11461 = vmatprep.subr.bf16.mxu0 %v8336
    %11462 = vmatpush1.bf16.msra.mxu0 %v8335
    %11463 = vmatprep.subr.bf16.mxu0 %v8352
    %11464 = vmatpush1.bf16.msra.mxu0 %v8351
    %11465 = vmatprep.subr.bf16.mxu0 %v8368
    %11466 = vmatpush1.bf16.msra.mxu0 %v8367
    %11467 = vmatprep.subr.bf16.mxu0 %v8384
    %11468 = vmatpush1.bf16.msra.mxu0 %v8383
    %11469 = vmatprep.subr.bf16.mxu0 %v8400
    %11470 = vmatpush1.bf16.msra.mxu0 %v8399
    %11471 = vmatprep.subr.bf16.mxu0 %v8416
    %11472 = vmatpush1.bf16.msra.mxu0 %v8415
    %11473 = vmatprep.subr.bf16.mxu0 %v8432
    %11474 = vmatpush1.bf16.msra.mxu0 %v8431
    %11475 = vmatprep.subr.bf16.mxu0 %v8448
    %11476 = vmatpush1.bf16.msra.mxu0 %v8447
    %11477 = vmatprep.mubr.bf16.mxu0 %v4090
    %11478 = vmatmul.mubr.bf16.gmra.mrb[0].mxu0 %v4089
    %v11479 = vpop.f32.mrb[0].mxu0
    %v11480 = vadd.f32 0.0, %v11479
    %v11481 = vpop.f32.mrb[0].mxu0
    %v11482 = vadd.f32 0.0, %v11481
    %v11483 = vpop.f32.mrb[0].mxu0
    %v11484 = vadd.f32 0.0, %v11483
    %v11485 = vpop.f32.mrb[0].mxu0
    %v11486 = vadd.f32 0.0, %v11485
    %11487 = vdwg.mxu0
    %11488 = vmatprep.subr.bf16.mxu0 %v8464
    %11489 = vmatpush1.bf16.msra.mxu0 %v8463
    %11490 = vmatprep.subr.bf16.mxu0 %v8480
    %11491 = vmatpush1.bf16.msra.mxu0 %v8479
    %11492 = vmatprep.subr.bf16.mxu0 %v8496
    %11493 = vmatpush1.bf16.msra.mxu0 %v8495
    %11494 = vmatprep.subr.bf16.mxu0 %v8512
    %11495 = vmatpush1.bf16.msra.mxu0 %v8511
    %11496 = vmatprep.subr.bf16.mxu0 %v8528
    %11497 = vmatpush1.bf16.msra.mxu0 %v8527
    %11498 = vmatprep.subr.bf16.mxu0 %v8544
    %11499 = vmatpush1.bf16.msra.mxu0 %v8543
    %11500 = vmatprep.subr.bf16.mxu0 %v8560
    %11501 = vmatpush1.bf16.msra.mxu0 %v8559
    %11502 = vmatprep.subr.bf16.mxu0 %v8576
    %11503 = vmatpush1.bf16.msra.mxu0 %v8575
    %11504 = vmatprep.subr.bf16.mxu0 %v8592
    %11505 = vmatpush1.bf16.msra.mxu0 %v8591
    %11506 = vmatprep.subr.bf16.mxu0 %v8608
    %11507 = vmatpush1.bf16.msra.mxu0 %v8607
    %11508 = vmatprep.subr.bf16.mxu0 %v8624
    %11509 = vmatpush1.bf16.msra.mxu0 %v8623
    %11510 = vmatprep.subr.bf16.mxu0 %v8640
    %11511 = vmatpush1.bf16.msra.mxu0 %v8639
    %11512 = vmatprep.subr.bf16.mxu0 %v8656
    %11513 = vmatpush1.bf16.msra.mxu0 %v8655
    %11514 = vmatprep.subr.bf16.mxu0 %v8672
    %11515 = vmatpush1.bf16.msra.mxu0 %v8671
    %11516 = vmatprep.subr.bf16.mxu0 %v8688
    %11517 = vmatpush1.bf16.msra.mxu0 %v8687
    %11518 = vmatprep.subr.bf16.mxu0 %v8704
    %11519 = vmatpush1.bf16.msra.mxu0 %v8703
    %11520 = vmatprep.mubr.bf16.mxu0 %v4092
    %11521 = vmatmul.mubr.bf16.gmra.mrb[0].mxu0 %v4091
    %v11522 = vpop.f32.mrb[0].mxu0
    %v11523 = vadd.f32 %v11480, %v11522
    %v11524 = vpop.f32.mrb[0].mxu0
    %v11525 = vadd.f32 %v11482, %v11524
    %v11526 = vpop.f32.mrb[0].mxu0
    %v11527 = vadd.f32 %v11484, %v11526
    %v11528 = vpop.f32.mrb[0].mxu0
    %v11529 = vadd.f32 %v11486, %v11528
    %11530 = vdwg.mxu0
    %11531 = vmatprep.subr.bf16.mxu0 %v8720
    %11532 = vmatpush1.bf16.msra.mxu0 %v8719
    %11533 = vmatprep.subr.bf16.mxu0 %v8736
    %11534 = vmatpush1.bf16.msra.mxu0 %v8735
    %11535 = vmatprep.subr.bf16.mxu0 %v8752
    %11536 = vmatpush1.bf16.msra.mxu0 %v8751
    %11537 = vmatprep.subr.bf16.mxu0 %v8768
    %11538 = vmatpush1.bf16.msra.mxu0 %v8767
    %11539 = vmatprep.subr.bf16.mxu0 %v8784
    %11540 = vmatpush1.bf16.msra.mxu0 %v8783
    %11541 = vmatprep.subr.bf16.mxu0 %v8800
    %11542 = vmatpush1.bf16.msra.mxu0 %v8799
    %11543 = vmatprep.subr.bf16.mxu0 %v8816
    %11544 = vmatpush1.bf16.msra.mxu0 %v8815
    %11545 = vmatprep.subr.bf16.mxu0 %v8832
    %11546 = vmatpush1.bf16.msra.mxu0 %v8831
    %11547 = vmatprep.subr.bf16.mxu0 %v8848
    %11548 = vmatpush1.bf16.msra.mxu0 %v8847
    %11549 = vmatprep.subr.bf16.mxu0 %v8864
    %11550 = vmatpush1.bf16.msra.mxu0 %v8863
    %11551 = vmatprep.subr.bf16.mxu0 %v8880
    %11552 = vmatpush1.bf16.msra.mxu0 %v8879
    %11553 = vmatprep.subr.bf16.mxu0 %v8896
    %11554 = vmatpush1.bf16.msra.mxu0 %v8895
    %11555 = vmatprep.subr.bf16.mxu0 %v8912
    %11556 = vmatpush1.bf16.msra.mxu0 %v8911
    %11557 = vmatprep.subr.bf16.mxu0 %v8928
    %11558 = vmatpush1.bf16.msra.mxu0 %v8927
    %11559 = vmatprep.subr.bf16.mxu0 %v8944
    %11560 = vmatpush1.bf16.msra.mxu0 %v8943
    %11561 = vmatprep.subr.bf16.mxu0 %v8960
    %11562 = vmatpush1.bf16.msra.mxu0 %v8959
    %11563 = vmatprep.mubr.bf16.mxu0 %v4094
    %11564 = vmatmul.mubr.bf16.gmra.mrb[0].mxu0 %v4093
    %v11565 = vpop.f32.mrb[0].mxu0
    %v11566 = vadd.f32 %v11523, %v11565
    %v11567 = vpop.f32.mrb[0].mxu0
    %v11568 = vadd.f32 %v11525, %v11567
    %v11569 = vpop.f32.mrb[0].mxu0
    %v11570 = vadd.f32 %v11527, %v11569
    %v11571 = vpop.f32.mrb[0].mxu0
    %v11572 = vadd.f32 %v11529, %v11571
    %11573 = vdwg.mxu0
    %11574 = vmatprep.subr.bf16.mxu0 %v8976
    %11575 = vmatpush1.bf16.msra.mxu0 %v8975
    %11576 = vmatprep.subr.bf16.mxu0 %v8992
    %11577 = vmatpush1.bf16.msra.mxu0 %v8991
    %11578 = vmatprep.subr.bf16.mxu0 %v9008
    %11579 = vmatpush1.bf16.msra.mxu0 %v9007
    %11580 = vmatprep.subr.bf16.mxu0 %v9024
    %11581 = vmatpush1.bf16.msra.mxu0 %v9023
    %11582 = vmatprep.subr.bf16.mxu0 %v9040
    %11583 = vmatpush1.bf16.msra.mxu0 %v9039
    %11584 = vmatprep.subr.bf16.mxu0 %v9056
    %11585 = vmatpush1.bf16.msra.mxu0 %v9055
    %11586 = vmatprep.subr.bf16.mxu0 %v9072
    %11587 = vmatpush1.bf16.msra.mxu0 %v9071
    %11588 = vmatprep.subr.bf16.mxu0 %v9088
    %11589 = vmatpush1.bf16.msra.mxu0 %v9087
    %11590 = vmatprep.subr.bf16.mxu0 %v9104
    %11591 = vmatpush1.bf16.msra.mxu0 %v9103
    %11592 = vmatprep.subr.bf16.mxu0 %v9120
    %11593 = vmatpush1.bf16.msra.mxu0 %v9119
    %11594 = vmatprep.subr.bf16.mxu0 %v9136
    %11595 = vmatpush1.bf16.msra.mxu0 %v9135
    %11596 = vmatprep.subr.bf16.mxu0 %v9152
    %11597 = vmatpush1.bf16.msra.mxu0 %v9151
    %11598 = vmatprep.subr.bf16.mxu0 %v9168
    %11599 = vmatpush1.bf16.msra.mxu0 %v9167
    %11600 = vmatprep.subr.bf16.mxu0 %v9184
    %11601 = vmatpush1.bf16.msra.mxu0 %v9183
    %11602 = vmatprep.subr.bf16.mxu0 %v9200
    %11603 = vmatpush1.bf16.msra.mxu0 %v9199
    %11604 = vmatprep.subr.bf16.mxu0 %v9216
    %11605 = vmatpush1.bf16.msra.mxu0 %v9215
    %11606 = vmatprep.mubr.bf16.mxu0 %v4096
    %11607 = vmatmul.mubr.bf16.gmra.mrb[0].mxu0 %v4095
    %v11608 = vpop.f32.mrb[0].mxu0
    %v11609 = vadd.f32 %v11566, %v11608
    %v11610 = vpop.f32.mrb[0].mxu0
    %v11611 = vadd.f32 %v11568, %v11610
    %v11612 = vpop.f32.mrb[0].mxu0
    %v11613 = vadd.f32 %v11570, %v11612
    %v11614 = vpop.f32.mrb[0].mxu0
    %v11615 = vadd.f32 %v11572, %v11614
    %11616 = vdwg.mxu0
    %v11617 = vmax.f32 %v10405, %v10749
    %v11618 = vmax.f32 %v10407, %v10751
    %v11619 = vmax.f32 %v10577, %v10921
    %v11620 = vmax.f32 %v10579, %v10923
    %v11621 = vmax.f32 %v10409, %v10753
    %v11622 = vmax.f32 %v10411, %v10755
    %v11623 = vmax.f32 %v10581, %v10925
    %v11624 = vmax.f32 %v10583, %v10927
    %v11625 = vmax.f32 %v11617, %v11093
    %v11626 = vmax.f32 %v11618, %v11095
    %v11627 = vmax.f32 %v11619, %v11265
    %v11628 = vmax.f32 %v11620, %v11267
    %v11629 = vmax.f32 %v11621, %v11097
    %v11630 = vmax.f32 %v11622, %v11099
    %v11631 = vmax.f32 %v11623, %v11269
    %v11632 = vmax.f32 %v11624, %v11271
    %v11633 = vmax.f32 %v11625, %v11437
    %v11634 = vmax.f32 %v11626, %v11439
    %v11635 = vmax.f32 %v11627, %v11609
    %v11636 = vmax.f32 %v11628, %v11611
    %v11637 = vmax.f32 %v11629, %v11441
    %v11638 = vmax.f32 %v11630, %v11443
    %v11639 = vmax.f32 %v11631, %v11613
    %v11640 = vmax.f32 %v11632, %v11615
    %v11641 = vld [vmem:[#allocation7] sm:$0xf]
    %v11643 = vlaneseq
    %v11644 = vshrl.u32 %v11643, 7
    %v11645 = vsub.s32 0, %v11644
    %v11646 = vrot.slane %v11641, %v11645
    %v11647 = vlaneseq
    %v11648 = vshrl.u32 %v11647, 7
    %v11649 = vsub.s32 1, %v11648
    %v11650 = vrot.slane %v11641, %v11649
    %v11651 = vlaneseq
    %v11652 = vshrl.u32 %v11651, 7
    %v11653 = vsub.s32 2, %v11652
    %v11654 = vrot.slane %v11641, %v11653
    %v11655 = vlaneseq
    %v11656 = vshrl.u32 %v11655, 7
    %v11657 = vsub.s32 3, %v11656
    %v11658 = vrot.slane %v11641, %v11657
    %v11663 = vadd.f32 %v11633, %v11646
    %v11664 = vadd.f32 %v11634, %v11650
    %v11665 = vadd.f32 %v11635, %v11654
    %v11666 = vadd.f32 %v11636, %v11658
    %v11667 = vadd.f32 %v11637, %v11646
    %v11668 = vadd.f32 %v11638, %v11650
    %v11669 = vadd.f32 %v11639, %v11654
    %v11670 = vadd.f32 %v11640, %v11658
    %v11671 = vmax.f32 %v11663, 0.0
    %v11672 = vmax.f32 %v11664, 0.0
    %v11673 = vmax.f32 %v11665, 0.0
    %v11674 = vmax.f32 %v11666, 0.0
    %v11675 = vmax.f32 %v11667, 0.0
    %v11676 = vmax.f32 %v11668, 0.0
    %v11677 = vmax.f32 %v11669, 0.0
    %v11678 = vmax.f32 %v11670, 0.0
    %v11679 = vpack.c.bf16 %v11675, %v11671
    %v11680 = vpack.c.bf16 %v11676, %v11672
    %v11681 = vpack.c.bf16 %v11677, %v11673
    %v11682 = vpack.c.bf16 %v11678, %v11674
    %v11683 = vld [vmem:[#allocation9] sm:$0xff]
    %v11684 = vld [vmem:[#allocation9 + $0x8] sm:$0xff]
    %v11685 = vld [vmem:[#allocation9 + $0x10] sm:$0xff]
    %v11686 = vld [vmem:[#allocation9 + $0x18] sm:$0xff]
    %v11687 = vld [vmem:[#allocation9 + $0x20] sm:$0xff]
    %v11688 = vld [vmem:[#allocation9 + $0x28] sm:$0xff]
    %v11689 = vld [vmem:[#allocation9 + $0x30] sm:$0xff]
    %v11690 = vld [vmem:[#allocation9 + $0x38] sm:$0xff]
    %v11691 = vld [vmem:[#allocation9 + $0x40] sm:$0xff]
    %v11692 = vld [vmem:[#allocation9 + $0x48] sm:$0xff]
    %v11693 = vld [vmem:[#allocation9 + $0x50] sm:$0xff]
    %v11694 = vld [vmem:[#allocation9 + $0x58] sm:$0xff]
    %v11695 = vld [vmem:[#allocation9 + $0x60] sm:$0xff]
    %v11696 = vld [vmem:[#allocation9 + $0x68] sm:$0xff]
    %v11697 = vld [vmem:[#allocation9 + $0x70] sm:$0xff]
    %v11698 = vld [vmem:[#allocation9 + $0x78] sm:$0xff]
    %v11699 = vld [vmem:[#allocation9 + $0x80] sm:$0xff]
    %v11700 = vld [vmem:[#allocation9 + $0x88] sm:$0xff]
    %v11701 = vld [vmem:[#allocation9 + $0x90] sm:$0xff]
    %v11702 = vld [vmem:[#allocation9 + $0x98] sm:$0xff]
    %v11703 = vld [vmem:[#allocation9 + $0xa0] sm:$0xff]
    %v11704 = vld [vmem:[#allocation9 + $0xa8] sm:$0xff]
    %v11705 = vld [vmem:[#allocation9 + $0xb0] sm:$0xff]
    %v11706 = vld [vmem:[#allocation9 + $0xb8] sm:$0xff]
    %v11707 = vld [vmem:[#allocation9 + $0xc0] sm:$0xff]
    %v11708 = vld [vmem:[#allocation9 + $0xc8] sm:$0xff]
    %v11709 = vld [vmem:[#allocation9 + $0xd0] sm:$0xff]
    %v11710 = vld [vmem:[#allocation9 + $0xd8] sm:$0xff]
    %v11711 = vld [vmem:[#allocation9 + $0xe0] sm:$0xff]
    %v11712 = vld [vmem:[#allocation9 + $0xe8] sm:$0xff]
    %v11713 = vld [vmem:[#allocation9 + $0xf0] sm:$0xff]
    %v11714 = vld [vmem:[#allocation9 + $0xf8] sm:$0xff]
    %v11715 = vld [vmem:[#allocation9 + $0x100] sm:$0xff]
    %v11716 = vld [vmem:[#allocation9 + $0x108] sm:$0xff]
    %v11717 = vld [vmem:[#allocation9 + $0x110] sm:$0xff]
    %v11718 = vld [vmem:[#allocation9 + $0x118] sm:$0xff]
    %v11719 = vld [vmem:[#allocation9 + $0x120] sm:$0xff]
    %v11720 = vld [vmem:[#allocation9 + $0x128] sm:$0xff]
    %v11721 = vld [vmem:[#allocation9 + $0x130] sm:$0xff]
    %v11722 = vld [vmem:[#allocation9 + $0x138] sm:$0xff]
    %v11723 = vld [vmem:[#allocation9 + $0x140] sm:$0xff]
    %v11724 = vld [vmem:[#allocation9 + $0x148] sm:$0xff]
    %v11725 = vld [vmem:[#allocation9 + $0x150] sm:$0xff]
    %v11726 = vld [vmem:[#allocation9 + $0x158] sm:$0xff]
    %v11727 = vld [vmem:[#allocation9 + $0x160] sm:$0xff]
    %v11728 = vld [vmem:[#allocation9 + $0x168] sm:$0xff]
    %v11729 = vld [vmem:[#allocation9 + $0x170] sm:$0xff]
    %v11730 = vld [vmem:[#allocation9 + $0x178] sm:$0xff]
    %v11731 = vld [vmem:[#allocation9 + $0x180] sm:$0xff]
    %v11732 = vld [vmem:[#allocation9 + $0x188] sm:$0xff]
    %v11733 = vld [vmem:[#allocation9 + $0x190] sm:$0xff]
    %v11734 = vld [vmem:[#allocation9 + $0x198] sm:$0xff]
    %v11735 = vld [vmem:[#allocation9 + $0x1a0] sm:$0xff]
    %v11736 = vld [vmem:[#allocation9 + $0x1a8] sm:$0xff]
    %v11737 = vld [vmem:[#allocation9 + $0x1b0] sm:$0xff]
    %v11738 = vld [vmem:[#allocation9 + $0x1b8] sm:$0xff]
    %v11739 = vld [vmem:[#allocation9 + $0x1c0] sm:$0xff]
    %v11740 = vld [vmem:[#allocation9 + $0x1c8] sm:$0xff]
    %v11741 = vld [vmem:[#allocation9 + $0x1d0] sm:$0xff]
    %v11742 = vld [vmem:[#allocation9 + $0x1d8] sm:$0xff]
    %v11743 = vld [vmem:[#allocation9 + $0x1e0] sm:$0xff]
    %v11744 = vld [vmem:[#allocation9 + $0x1e8] sm:$0xff]
    %v11745 = vld [vmem:[#allocation9 + $0x1f0] sm:$0xff]
    %v11746 = vld [vmem:[#allocation9 + $0x1f8] sm:$0xff]
    %v11747 = vld [vmem:[#allocation9 + $0x200] sm:$0xff]
    %v11748 = vld [vmem:[#allocation9 + $0x208] sm:$0xff]
    %v11749 = vld [vmem:[#allocation9 + $0x210] sm:$0xff]
    %v11750 = vld [vmem:[#allocation9 + $0x218] sm:$0xff]
    %v11751 = vld [vmem:[#allocation9 + $0x220] sm:$0xff]
    %v11752 = vld [vmem:[#allocation9 + $0x228] sm:$0xff]
    %v11753 = vld [vmem:[#allocation9 + $0x230] sm:$0xff]
    %v11754 = vld [vmem:[#allocation9 + $0x238] sm:$0xff]
    %v11755 = vld [vmem:[#allocation9 + $0x240] sm:$0xff]
    %v11756 = vld [vmem:[#allocation9 + $0x248] sm:$0xff]
    %v11757 = vld [vmem:[#allocation9 + $0x250] sm:$0xff]
    %v11758 = vld [vmem:[#allocation9 + $0x258] sm:$0xff]
    %v11759 = vld [vmem:[#allocation9 + $0x260] sm:$0xff]
    %v11760 = vld [vmem:[#allocation9 + $0x268] sm:$0xff]
    %v11761 = vld [vmem:[#allocation9 + $0x270] sm:$0xff]
    %v11762 = vld [vmem:[#allocation9 + $0x278] sm:$0xff]
    %v11763 = vld [vmem:[#allocation9 + $0x280] sm:$0xff]
    %v11764 = vld [vmem:[#allocation9 + $0x288] sm:$0xff]
    %v11765 = vld [vmem:[#allocation9 + $0x290] sm:$0xff]
    %v11766 = vld [vmem:[#allocation9 + $0x298] sm:$0xff]
    %v11767 = vld [vmem:[#allocation9 + $0x2a0] sm:$0xff]
    %v11768 = vld [vmem:[#allocation9 + $0x2a8] sm:$0xff]
    %v11769 = vld [vmem:[#allocation9 + $0x2b0] sm:$0xff]
    %v11770 = vld [vmem:[#allocation9 + $0x2b8] sm:$0xff]
    %v11771 = vld [vmem:[#allocation9 + $0x2c0] sm:$0xff]
    %v11772 = vld [vmem:[#allocation9 + $0x2c8] sm:$0xff]
    %v11773 = vld [vmem:[#allocation9 + $0x2d0] sm:$0xff]
    %v11774 = vld [vmem:[#allocation9 + $0x2d8] sm:$0xff]
    %v11775 = vld [vmem:[#allocation9 + $0x2e0] sm:$0xff]
    %v11776 = vld [vmem:[#allocation9 + $0x2e8] sm:$0xff]
    %v11777 = vld [vmem:[#allocation9 + $0x2f0] sm:$0xff]
    %v11778 = vld [vmem:[#allocation9 + $0x2f8] sm:$0xff]
    %v11779 = vld [vmem:[#allocation9 + $0x300] sm:$0xff]
    %v11780 = vld [vmem:[#allocation9 + $0x308] sm:$0xff]
    %v11781 = vld [vmem:[#allocation9 + $0x310] sm:$0xff]
    %v11782 = vld [vmem:[#allocation9 + $0x318] sm:$0xff]
    %v11783 = vld [vmem:[#allocation9 + $0x320] sm:$0xff]
    %v11784 = vld [vmem:[#allocation9 + $0x328] sm:$0xff]
    %v11785 = vld [vmem:[#allocation9 + $0x330] sm:$0xff]
    %v11786 = vld [vmem:[#allocation9 + $0x338] sm:$0xff]
    %v11787 = vld [vmem:[#allocation9 + $0x340] sm:$0xff]
    %v11788 = vld [vmem:[#allocation9 + $0x348] sm:$0xff]
    %v11789 = vld [vmem:[#allocation9 + $0x350] sm:$0xff]
    %v11790 = vld [vmem:[#allocation9 + $0x358] sm:$0xff]
    %v11791 = vld [vmem:[#allocation9 + $0x360] sm:$0xff]
    %v11792 = vld [vmem:[#allocation9 + $0x368] sm:$0xff]
    %v11793 = vld [vmem:[#allocation9 + $0x370] sm:$0xff]
    %v11794 = vld [vmem:[#allocation9 + $0x378] sm:$0xff]
    %v11795 = vld [vmem:[#allocation9 + $0x380] sm:$0xff]
    %v11796 = vld [vmem:[#allocation9 + $0x388] sm:$0xff]
    %v11797 = vld [vmem:[#allocation9 + $0x390] sm:$0xff]
    %v11798 = vld [vmem:[#allocation9 + $0x398] sm:$0xff]
    %v11799 = vld [vmem:[#allocation9 + $0x3a0] sm:$0xff]
    %v11800 = vld [vmem:[#allocation9 + $0x3a8] sm:$0xff]
    %v11801 = vld [vmem:[#allocation9 + $0x3b0] sm:$0xff]
    %v11802 = vld [vmem:[#allocation9 + $0x3b8] sm:$0xff]
    %v11803 = vld [vmem:[#allocation9 + $0x3c0] sm:$0xff]
    %v11804 = vld [vmem:[#allocation9 + $0x3c8] sm:$0xff]
    %v11805 = vld [vmem:[#allocation9 + $0x3d0] sm:$0xff]
    %v11806 = vld [vmem:[#allocation9 + $0x3d8] sm:$0xff]
    %v11807 = vld [vmem:[#allocation9 + $0x3e0] sm:$0xff]
    %v11808 = vld [vmem:[#allocation9 + $0x3e8] sm:$0xff]
    %v11809 = vld [vmem:[#allocation9 + $0x3f0] sm:$0xff]
    %v11810 = vld [vmem:[#allocation9 + $0x3f8] sm:$0xff]
    %v11811 = vld [vmem:[#allocation9 + $0x400] sm:$0xff]
    %v11812 = vld [vmem:[#allocation9 + $0x408] sm:$0xff]
    %v11813 = vld [vmem:[#allocation9 + $0x410] sm:$0xff]
    %v11814 = vld [vmem:[#allocation9 + $0x418] sm:$0xff]
    %v11815 = vld [vmem:[#allocation9 + $0x420] sm:$0xff]
    %v11816 = vld [vmem:[#allocation9 + $0x428] sm:$0xff]
    %v11817 = vld [vmem:[#allocation9 + $0x430] sm:$0xff]
    %v11818 = vld [vmem:[#allocation9 + $0x438] sm:$0xff]
    %v11819 = vld [vmem:[#allocation9 + $0x440] sm:$0xff]
    %v11820 = vld [vmem:[#allocation9 + $0x448] sm:$0xff]
    %v11821 = vld [vmem:[#allocation9 + $0x450] sm:$0xff]
    %v11822 = vld [vmem:[#allocation9 + $0x458] sm:$0xff]
    %v11823 = vld [vmem:[#allocation9 + $0x460] sm:$0xff]
    %v11824 = vld [vmem:[#allocation9 + $0x468] sm:$0xff]
    %v11825 = vld [vmem:[#allocation9 + $0x470] sm:$0xff]
    %v11826 = vld [vmem:[#allocation9 + $0x478] sm:$0xff]
    %v11827 = vld [vmem:[#allocation9 + $0x480] sm:$0xff]
    %v11828 = vld [vmem:[#allocation9 + $0x488] sm:$0xff]
    %v11829 = vld [vmem:[#allocation9 + $0x490] sm:$0xff]
    %v11830 = vld [vmem:[#allocation9 + $0x498] sm:$0xff]
    %v11831 = vld [vmem:[#allocation9 + $0x4a0] sm:$0xff]
    %v11832 = vld [vmem:[#allocation9 + $0x4a8] sm:$0xff]
    %v11833 = vld [vmem:[#allocation9 + $0x4b0] sm:$0xff]
    %v11834 = vld [vmem:[#allocation9 + $0x4b8] sm:$0xff]
    %v11835 = vld [vmem:[#allocation9 + $0x4c0] sm:$0xff]
    %v11836 = vld [vmem:[#allocation9 + $0x4c8] sm:$0xff]
    %v11837 = vld [vmem:[#allocation9 + $0x4d0] sm:$0xff]
    %v11838 = vld [vmem:[#allocation9 + $0x4d8] sm:$0xff]
    %v11839 = vld [vmem:[#allocation9 + $0x4e0] sm:$0xff]
    %v11840 = vld [vmem:[#allocation9 + $0x4e8] sm:$0xff]
    %v11841 = vld [vmem:[#allocation9 + $0x4f0] sm:$0xff]
    %v11842 = vld [vmem:[#allocation9 + $0x4f8] sm:$0xff]
    %v11843 = vld [vmem:[#allocation9 + $0x500] sm:$0xff]
    %v11844 = vld [vmem:[#allocation9 + $0x508] sm:$0xff]
    %v11845 = vld [vmem:[#allocation9 + $0x510] sm:$0xff]
    %v11846 = vld [vmem:[#allocation9 + $0x518] sm:$0xff]
    %v11847 = vld [vmem:[#allocation9 + $0x520] sm:$0xff]
    %v11848 = vld [vmem:[#allocation9 + $0x528] sm:$0xff]
    %v11849 = vld [vmem:[#allocation9 + $0x530] sm:$0xff]
    %v11850 = vld [vmem:[#allocation9 + $0x538] sm:$0xff]
    %v11851 = vld [vmem:[#allocation9 + $0x540] sm:$0xff]
    %v11852 = vld [vmem:[#allocation9 + $0x548] sm:$0xff]
    %v11853 = vld [vmem:[#allocation9 + $0x550] sm:$0xff]
    %v11854 = vld [vmem:[#allocation9 + $0x558] sm:$0xff]
    %v11855 = vld [vmem:[#allocation9 + $0x560] sm:$0xff]
    %v11856 = vld [vmem:[#allocation9 + $0x568] sm:$0xff]
    %v11857 = vld [vmem:[#allocation9 + $0x570] sm:$0xff]
    %v11858 = vld [vmem:[#allocation9 + $0x578] sm:$0xff]
    %v11859 = vld [vmem:[#allocation9 + $0x580] sm:$0xff]
    %v11860 = vld [vmem:[#allocation9 + $0x588] sm:$0xff]
    %v11861 = vld [vmem:[#allocation9 + $0x590] sm:$0xff]
    %v11862 = vld [vmem:[#allocation9 + $0x598] sm:$0xff]
    %v11863 = vld [vmem:[#allocation9 + $0x5a0] sm:$0xff]
    %v11864 = vld [vmem:[#allocation9 + $0x5a8] sm:$0xff]
    %v11865 = vld [vmem:[#allocation9 + $0x5b0] sm:$0xff]
    %v11866 = vld [vmem:[#allocation9 + $0x5b8] sm:$0xff]
    %v11867 = vld [vmem:[#allocation9 + $0x5c0] sm:$0xff]
    %v11868 = vld [vmem:[#allocation9 + $0x5c8] sm:$0xff]
    %v11869 = vld [vmem:[#allocation9 + $0x5d0] sm:$0xff]
    %v11870 = vld [vmem:[#allocation9 + $0x5d8] sm:$0xff]
    %v11871 = vld [vmem:[#allocation9 + $0x5e0] sm:$0xff]
    %v11872 = vld [vmem:[#allocation9 + $0x5e8] sm:$0xff]
    %v11873 = vld [vmem:[#allocation9 + $0x5f0] sm:$0xff]
    %v11874 = vld [vmem:[#allocation9 + $0x5f8] sm:$0xff]
    %v11875 = vld [vmem:[#allocation9 + $0x600] sm:$0xff]
    %v11876 = vld [vmem:[#allocation9 + $0x608] sm:$0xff]
    %v11877 = vld [vmem:[#allocation9 + $0x610] sm:$0xff]
    %v11878 = vld [vmem:[#allocation9 + $0x618] sm:$0xff]
    %v11879 = vld [vmem:[#allocation9 + $0x620] sm:$0xff]
    %v11880 = vld [vmem:[#allocation9 + $0x628] sm:$0xff]
    %v11881 = vld [vmem:[#allocation9 + $0x630] sm:$0xff]
    %v11882 = vld [vmem:[#allocation9 + $0x638] sm:$0xff]
    %v11883 = vld [vmem:[#allocation9 + $0x640] sm:$0xff]
    %v11884 = vld [vmem:[#allocation9 + $0x648] sm:$0xff]
    %v11885 = vld [vmem:[#allocation9 + $0x650] sm:$0xff]
    %v11886 = vld [vmem:[#allocation9 + $0x658] sm:$0xff]
    %v11887 = vld [vmem:[#allocation9 + $0x660] sm:$0xff]
    %v11888 = vld [vmem:[#allocation9 + $0x668] sm:$0xff]
    %v11889 = vld [vmem:[#allocation9 + $0x670] sm:$0xff]
    %v11890 = vld [vmem:[#allocation9 + $0x678] sm:$0xff]
    %v11891 = vld [vmem:[#allocation9 + $0x680] sm:$0xff]
    %v11892 = vld [vmem:[#allocation9 + $0x688] sm:$0xff]
    %v11893 = vld [vmem:[#allocation9 + $0x690] sm:$0xff]
    %v11894 = vld [vmem:[#allocation9 + $0x698] sm:$0xff]
    %v11895 = vld [vmem:[#allocation9 + $0x6a0] sm:$0xff]
    %v11896 = vld [vmem:[#allocation9 + $0x6a8] sm:$0xff]
    %v11897 = vld [vmem:[#allocation9 + $0x6b0] sm:$0xff]
    %v11898 = vld [vmem:[#allocation9 + $0x6b8] sm:$0xff]
    %v11899 = vld [vmem:[#allocation9 + $0x6c0] sm:$0xff]
    %v11900 = vld [vmem:[#allocation9 + $0x6c8] sm:$0xff]
    %v11901 = vld [vmem:[#allocation9 + $0x6d0] sm:$0xff]
    %v11902 = vld [vmem:[#allocation9 + $0x6d8] sm:$0xff]
    %v11903 = vld [vmem:[#allocation9 + $0x6e0] sm:$0xff]
    %v11904 = vld [vmem:[#allocation9 + $0x6e8] sm:$0xff]
    %v11905 = vld [vmem:[#allocation9 + $0x6f0] sm:$0xff]
    %v11906 = vld [vmem:[#allocation9 + $0x6f8] sm:$0xff]
    %v11907 = vld [vmem:[#allocation9 + $0x700] sm:$0xff]
    %v11908 = vld [vmem:[#allocation9 + $0x708] sm:$0xff]
    %v11909 = vld [vmem:[#allocation9 + $0x710] sm:$0xff]
    %v11910 = vld [vmem:[#allocation9 + $0x718] sm:$0xff]
    %v11911 = vld [vmem:[#allocation9 + $0x720] sm:$0xff]
    %v11912 = vld [vmem:[#allocation9 + $0x728] sm:$0xff]
    %v11913 = vld [vmem:[#allocation9 + $0x730] sm:$0xff]
    %v11914 = vld [vmem:[#allocation9 + $0x738] sm:$0xff]
    %v11915 = vld [vmem:[#allocation9 + $0x740] sm:$0xff]
    %v11916 = vld [vmem:[#allocation9 + $0x748] sm:$0xff]
    %v11917 = vld [vmem:[#allocation9 + $0x750] sm:$0xff]
    %v11918 = vld [vmem:[#allocation9 + $0x758] sm:$0xff]
    %v11919 = vld [vmem:[#allocation9 + $0x760] sm:$0xff]
    %v11920 = vld [vmem:[#allocation9 + $0x768] sm:$0xff]
    %v11921 = vld [vmem:[#allocation9 + $0x770] sm:$0xff]
    %v11922 = vld [vmem:[#allocation9 + $0x778] sm:$0xff]
    %v11923 = vld [vmem:[#allocation9 + $0x780] sm:$0xff]
    %v11924 = vld [vmem:[#allocation9 + $0x788] sm:$0xff]
    %v11925 = vld [vmem:[#allocation9 + $0x790] sm:$0xff]
    %v11926 = vld [vmem:[#allocation9 + $0x798] sm:$0xff]
    %v11927 = vld [vmem:[#allocation9 + $0x7a0] sm:$0xff]
    %v11928 = vld [vmem:[#allocation9 + $0x7a8] sm:$0xff]
    %v11929 = vld [vmem:[#allocation9 + $0x7b0] sm:$0xff]
    %v11930 = vld [vmem:[#allocation9 + $0x7b8] sm:$0xff]
    %v11931 = vld [vmem:[#allocation9 + $0x7c0] sm:$0xff]
    %v11932 = vld [vmem:[#allocation9 + $0x7c8] sm:$0xff]
    %v11933 = vld [vmem:[#allocation9 + $0x7d0] sm:$0xff]
    %v11934 = vld [vmem:[#allocation9 + $0x7d8] sm:$0xff]
    %v11935 = vld [vmem:[#allocation9 + $0x7e0] sm:$0xff]
    %v11936 = vld [vmem:[#allocation9 + $0x7e8] sm:$0xff]
    %v11937 = vld [vmem:[#allocation9 + $0x7f0] sm:$0xff]
    %v11938 = vld [vmem:[#allocation9 + $0x7f8] sm:$0xff]
    %v12195 = vunpack.c.l.b16 %v11683
    %v12196 = vunpack.c.h.b16 %v11683
    %v12197 = vunpack.c.l.b16 %v11684
    %v12198 = vunpack.c.h.b16 %v11684
    %v12199 = vunpack.c.l.b16 %v11685
    %v12200 = vunpack.c.h.b16 %v11685
    %v12201 = vunpack.c.l.b16 %v11686
    %v12202 = vunpack.c.h.b16 %v11686
    %v12203 = vunpack.c.l.b16 %v11687
    %v12204 = vunpack.c.h.b16 %v11687
    %v12205 = vunpack.c.l.b16 %v11688
    %v12206 = vunpack.c.h.b16 %v11688
    %v12207 = vunpack.c.l.b16 %v11689
    %v12208 = vunpack.c.h.b16 %v11689
    %v12209 = vunpack.c.l.b16 %v11690
    %v12210 = vunpack.c.h.b16 %v11690
    %v12211 = vunpack.c.l.b16 %v11691
    %v12212 = vunpack.c.h.b16 %v11691
    %v12213 = vunpack.c.l.b16 %v11692
    %v12214 = vunpack.c.h.b16 %v11692
    %v12215 = vunpack.c.l.b16 %v11693
    %v12216 = vunpack.c.h.b16 %v11693
    %v12217 = vunpack.c.l.b16 %v11694
    %v12218 = vunpack.c.h.b16 %v11694
    %v12219 = vunpack.c.l.b16 %v11695
    %v12220 = vunpack.c.h.b16 %v11695
    %v12221 = vunpack.c.l.b16 %v11696
    %v12222 = vunpack.c.h.b16 %v11696
    %v12223 = vunpack.c.l.b16 %v11697
    %v12224 = vunpack.c.h.b16 %v11697
    %v12225 = vunpack.c.l.b16 %v11698
    %v12226 = vunpack.c.h.b16 %v11698
    %v12227 = vunpack.c.l.b16 %v11699
    %v12228 = vunpack.c.h.b16 %v11699
    %v12229 = vunpack.c.l.b16 %v11700
    %v12230 = vunpack.c.h.b16 %v11700
    %v12231 = vunpack.c.l.b16 %v11701
    %v12232 = vunpack.c.h.b16 %v11701
    %v12233 = vunpack.c.l.b16 %v11702
    %v12234 = vunpack.c.h.b16 %v11702
    %v12235 = vunpack.c.l.b16 %v11703
    %v12236 = vunpack.c.h.b16 %v11703
    %v12237 = vunpack.c.l.b16 %v11704
    %v12238 = vunpack.c.h.b16 %v11704
    %v12239 = vunpack.c.l.b16 %v11705
    %v12240 = vunpack.c.h.b16 %v11705
    %v12241 = vunpack.c.l.b16 %v11706
    %v12242 = vunpack.c.h.b16 %v11706
    %v12243 = vunpack.c.l.b16 %v11707
    %v12244 = vunpack.c.h.b16 %v11707
    %v12245 = vunpack.c.l.b16 %v11708
    %v12246 = vunpack.c.h.b16 %v11708
    %v12247 = vunpack.c.l.b16 %v11709
    %v12248 = vunpack.c.h.b16 %v11709
    %v12249 = vunpack.c.l.b16 %v11710
    %v12250 = vunpack.c.h.b16 %v11710
    %v12251 = vunpack.c.l.b16 %v11711
    %v12252 = vunpack.c.h.b16 %v11711
    %v12253 = vunpack.c.l.b16 %v11712
    %v12254 = vunpack.c.h.b16 %v11712
    %v12255 = vunpack.c.l.b16 %v11713
    %v12256 = vunpack.c.h.b16 %v11713
    %v12257 = vunpack.c.l.b16 %v11714
    %v12258 = vunpack.c.h.b16 %v11714
    %v12259 = vunpack.c.l.b16 %v11715
    %v12260 = vunpack.c.h.b16 %v11715
    %v12261 = vunpack.c.l.b16 %v11716
    %v12262 = vunpack.c.h.b16 %v11716
    %v12263 = vunpack.c.l.b16 %v11717
    %v12264 = vunpack.c.h.b16 %v11717
    %v12265 = vunpack.c.l.b16 %v11718
    %v12266 = vunpack.c.h.b16 %v11718
    %v12267 = vunpack.c.l.b16 %v11719
    %v12268 = vunpack.c.h.b16 %v11719
    %v12269 = vunpack.c.l.b16 %v11720
    %v12270 = vunpack.c.h.b16 %v11720
    %v12271 = vunpack.c.l.b16 %v11721
    %v12272 = vunpack.c.h.b16 %v11721
    %v12273 = vunpack.c.l.b16 %v11722
    %v12274 = vunpack.c.h.b16 %v11722
    %v12275 = vunpack.c.l.b16 %v11723
    %v12276 = vunpack.c.h.b16 %v11723
    %v12277 = vunpack.c.l.b16 %v11724
    %v12278 = vunpack.c.h.b16 %v11724
    %v12279 = vunpack.c.l.b16 %v11725
    %v12280 = vunpack.c.h.b16 %v11725
    %v12281 = vunpack.c.l.b16 %v11726
    %v12282 = vunpack.c.h.b16 %v11726
    %v12283 = vunpack.c.l.b16 %v11727
    %v12284 = vunpack.c.h.b16 %v11727
    %v12285 = vunpack.c.l.b16 %v11728
    %v12286 = vunpack.c.h.b16 %v11728
    %v12287 = vunpack.c.l.b16 %v11729
    %v12288 = vunpack.c.h.b16 %v11729
    %v12289 = vunpack.c.l.b16 %v11730
    %v12290 = vunpack.c.h.b16 %v11730
    %v12291 = vunpack.c.l.b16 %v11731
    %v12292 = vunpack.c.h.b16 %v11731
    %v12293 = vunpack.c.l.b16 %v11732
    %v12294 = vunpack.c.h.b16 %v11732
    %v12295 = vunpack.c.l.b16 %v11733
    %v12296 = vunpack.c.h.b16 %v11733
    %v12297 = vunpack.c.l.b16 %v11734
    %v12298 = vunpack.c.h.b16 %v11734
    %v12299 = vunpack.c.l.b16 %v11735
    %v12300 = vunpack.c.h.b16 %v11735
    %v12301 = vunpack.c.l.b16 %v11736
    %v12302 = vunpack.c.h.b16 %v11736
    %v12303 = vunpack.c.l.b16 %v11737
    %v12304 = vunpack.c.h.b16 %v11737
    %v12305 = vunpack.c.l.b16 %v11738
    %v12306 = vunpack.c.h.b16 %v11738
    %v12307 = vunpack.c.l.b16 %v11739
    %v12308 = vunpack.c.h.b16 %v11739
    %v12309 = vunpack.c.l.b16 %v11740
    %v12310 = vunpack.c.h.b16 %v11740
    %v12311 = vunpack.c.l.b16 %v11741
    %v12312 = vunpack.c.h.b16 %v11741
    %v12313 = vunpack.c.l.b16 %v11742
    %v12314 = vunpack.c.h.b16 %v11742
    %v12315 = vunpack.c.l.b16 %v11743
    %v12316 = vunpack.c.h.b16 %v11743
    %v12317 = vunpack.c.l.b16 %v11744
    %v12318 = vunpack.c.h.b16 %v11744
    %v12319 = vunpack.c.l.b16 %v11745
    %v12320 = vunpack.c.h.b16 %v11745
    %v12321 = vunpack.c.l.b16 %v11746
    %v12322 = vunpack.c.h.b16 %v11746
    %v12323 = vunpack.c.l.b16 %v11747
    %v12324 = vunpack.c.h.b16 %v11747
    %v12325 = vunpack.c.l.b16 %v11748
    %v12326 = vunpack.c.h.b16 %v11748
    %v12327 = vunpack.c.l.b16 %v11749
    %v12328 = vunpack.c.h.b16 %v11749
    %v12329 = vunpack.c.l.b16 %v11750
    %v12330 = vunpack.c.h.b16 %v11750
    %v12331 = vunpack.c.l.b16 %v11751
    %v12332 = vunpack.c.h.b16 %v11751
    %v12333 = vunpack.c.l.b16 %v11752
    %v12334 = vunpack.c.h.b16 %v11752
    %v12335 = vunpack.c.l.b16 %v11753
    %v12336 = vunpack.c.h.b16 %v11753
    %v12337 = vunpack.c.l.b16 %v11754
    %v12338 = vunpack.c.h.b16 %v11754
    %v12339 = vunpack.c.l.b16 %v11755
    %v12340 = vunpack.c.h.b16 %v11755
    %v12341 = vunpack.c.l.b16 %v11756
    %v12342 = vunpack.c.h.b16 %v11756
    %v12343 = vunpack.c.l.b16 %v11757
    %v12344 = vunpack.c.h.b16 %v11757
    %v12345 = vunpack.c.l.b16 %v11758
    %v12346 = vunpack.c.h.b16 %v11758
    %v12347 = vunpack.c.l.b16 %v11759
    %v12348 = vunpack.c.h.b16 %v11759
    %v12349 = vunpack.c.l.b16 %v11760
    %v12350 = vunpack.c.h.b16 %v11760
    %v12351 = vunpack.c.l.b16 %v11761
    %v12352 = vunpack.c.h.b16 %v11761
    %v12353 = vunpack.c.l.b16 %v11762
    %v12354 = vunpack.c.h.b16 %v11762
    %v12355 = vunpack.c.l.b16 %v11763
    %v12356 = vunpack.c.h.b16 %v11763
    %v12357 = vunpack.c.l.b16 %v11764
    %v12358 = vunpack.c.h.b16 %v11764
    %v12359 = vunpack.c.l.b16 %v11765
    %v12360 = vunpack.c.h.b16 %v11765
    %v12361 = vunpack.c.l.b16 %v11766
    %v12362 = vunpack.c.h.b16 %v11766
    %v12363 = vunpack.c.l.b16 %v11767
    %v12364 = vunpack.c.h.b16 %v11767
    %v12365 = vunpack.c.l.b16 %v11768
    %v12366 = vunpack.c.h.b16 %v11768
    %v12367 = vunpack.c.l.b16 %v11769
    %v12368 = vunpack.c.h.b16 %v11769
    %v12369 = vunpack.c.l.b16 %v11770
    %v12370 = vunpack.c.h.b16 %v11770
    %v12371 = vunpack.c.l.b16 %v11771
    %v12372 = vunpack.c.h.b16 %v11771
    %v12373 = vunpack.c.l.b16 %v11772
    %v12374 = vunpack.c.h.b16 %v11772
    %v12375 = vunpack.c.l.b16 %v11773
    %v12376 = vunpack.c.h.b16 %v11773
    %v12377 = vunpack.c.l.b16 %v11774
    %v12378 = vunpack.c.h.b16 %v11774
    %v12379 = vunpack.c.l.b16 %v11775
    %v12380 = vunpack.c.h.b16 %v11775
    %v12381 = vunpack.c.l.b16 %v11776
    %v12382 = vunpack.c.h.b16 %v11776
    %v12383 = vunpack.c.l.b16 %v11777
    %v12384 = vunpack.c.h.b16 %v11777
    %v12385 = vunpack.c.l.b16 %v11778
    %v12386 = vunpack.c.h.b16 %v11778
    %v12387 = vunpack.c.l.b16 %v11779
    %v12388 = vunpack.c.h.b16 %v11779
    %v12389 = vunpack.c.l.b16 %v11780
    %v12390 = vunpack.c.h.b16 %v11780
    %v12391 = vunpack.c.l.b16 %v11781
    %v12392 = vunpack.c.h.b16 %v11781
    %v12393 = vunpack.c.l.b16 %v11782
    %v12394 = vunpack.c.h.b16 %v11782
    %v12395 = vunpack.c.l.b16 %v11783
    %v12396 = vunpack.c.h.b16 %v11783
    %v12397 = vunpack.c.l.b16 %v11784
    %v12398 = vunpack.c.h.b16 %v11784
    %v12399 = vunpack.c.l.b16 %v11785
    %v12400 = vunpack.c.h.b16 %v11785
    %v12401 = vunpack.c.l.b16 %v11786
    %v12402 = vunpack.c.h.b16 %v11786
    %v12403 = vunpack.c.l.b16 %v11787
    %v12404 = vunpack.c.h.b16 %v11787
    %v12405 = vunpack.c.l.b16 %v11788
    %v12406 = vunpack.c.h.b16 %v11788
    %v12407 = vunpack.c.l.b16 %v11789
    %v12408 = vunpack.c.h.b16 %v11789
    %v12409 = vunpack.c.l.b16 %v11790
    %v12410 = vunpack.c.h.b16 %v11790
    %v12411 = vunpack.c.l.b16 %v11791
    %v12412 = vunpack.c.h.b16 %v11791
    %v12413 = vunpack.c.l.b16 %v11792
    %v12414 = vunpack.c.h.b16 %v11792
    %v12415 = vunpack.c.l.b16 %v11793
    %v12416 = vunpack.c.h.b16 %v11793
    %v12417 = vunpack.c.l.b16 %v11794
    %v12418 = vunpack.c.h.b16 %v11794
    %v12419 = vunpack.c.l.b16 %v11795
    %v12420 = vunpack.c.h.b16 %v11795
    %v12421 = vunpack.c.l.b16 %v11796
    %v12422 = vunpack.c.h.b16 %v11796
    %v12423 = vunpack.c.l.b16 %v11797
    %v12424 = vunpack.c.h.b16 %v11797
    %v12425 = vunpack.c.l.b16 %v11798
    %v12426 = vunpack.c.h.b16 %v11798
    %v12427 = vunpack.c.l.b16 %v11799
    %v12428 = vunpack.c.h.b16 %v11799
    %v12429 = vunpack.c.l.b16 %v11800
    %v12430 = vunpack.c.h.b16 %v11800
    %v12431 = vunpack.c.l.b16 %v11801
    %v12432 = vunpack.c.h.b16 %v11801
    %v12433 = vunpack.c.l.b16 %v11802
    %v12434 = vunpack.c.h.b16 %v11802
    %v12435 = vunpack.c.l.b16 %v11803
    %v12436 = vunpack.c.h.b16 %v11803
    %v12437 = vunpack.c.l.b16 %v11804
    %v12438 = vunpack.c.h.b16 %v11804
    %v12439 = vunpack.c.l.b16 %v11805
    %v12440 = vunpack.c.h.b16 %v11805
    %v12441 = vunpack.c.l.b16 %v11806
    %v12442 = vunpack.c.h.b16 %v11806
    %v12443 = vunpack.c.l.b16 %v11807
    %v12444 = vunpack.c.h.b16 %v11807
    %v12445 = vunpack.c.l.b16 %v11808
    %v12446 = vunpack.c.h.b16 %v11808
    %v12447 = vunpack.c.l.b16 %v11809
    %v12448 = vunpack.c.h.b16 %v11809
    %v12449 = vunpack.c.l.b16 %v11810
    %v12450 = vunpack.c.h.b16 %v11810
    %v12451 = vunpack.c.l.b16 %v11811
    %v12452 = vunpack.c.h.b16 %v11811
    %v12453 = vunpack.c.l.b16 %v11812
    %v12454 = vunpack.c.h.b16 %v11812
    %v12455 = vunpack.c.l.b16 %v11813
    %v12456 = vunpack.c.h.b16 %v11813
    %v12457 = vunpack.c.l.b16 %v11814
    %v12458 = vunpack.c.h.b16 %v11814
    %v12459 = vunpack.c.l.b16 %v11815
    %v12460 = vunpack.c.h.b16 %v11815
    %v12461 = vunpack.c.l.b16 %v11816
    %v12462 = vunpack.c.h.b16 %v11816
    %v12463 = vunpack.c.l.b16 %v11817
    %v12464 = vunpack.c.h.b16 %v11817
    %v12465 = vunpack.c.l.b16 %v11818
    %v12466 = vunpack.c.h.b16 %v11818
    %v12467 = vunpack.c.l.b16 %v11819
    %v12468 = vunpack.c.h.b16 %v11819
    %v12469 = vunpack.c.l.b16 %v11820
    %v12470 = vunpack.c.h.b16 %v11820
    %v12471 = vunpack.c.l.b16 %v11821
    %v12472 = vunpack.c.h.b16 %v11821
    %v12473 = vunpack.c.l.b16 %v11822
    %v12474 = vunpack.c.h.b16 %v11822
    %v12475 = vunpack.c.l.b16 %v11823
    %v12476 = vunpack.c.h.b16 %v11823
    %v12477 = vunpack.c.l.b16 %v11824
    %v12478 = vunpack.c.h.b16 %v11824
    %v12479 = vunpack.c.l.b16 %v11825
    %v12480 = vunpack.c.h.b16 %v11825
    %v12481 = vunpack.c.l.b16 %v11826
    %v12482 = vunpack.c.h.b16 %v11826
    %v12483 = vunpack.c.l.b16 %v11827
    %v12484 = vunpack.c.h.b16 %v11827
    %v12485 = vunpack.c.l.b16 %v11828
    %v12486 = vunpack.c.h.b16 %v11828
    %v12487 = vunpack.c.l.b16 %v11829
    %v12488 = vunpack.c.h.b16 %v11829
    %v12489 = vunpack.c.l.b16 %v11830
    %v12490 = vunpack.c.h.b16 %v11830
    %v12491 = vunpack.c.l.b16 %v11831
    %v12492 = vunpack.c.h.b16 %v11831
    %v12493 = vunpack.c.l.b16 %v11832
    %v12494 = vunpack.c.h.b16 %v11832
    %v12495 = vunpack.c.l.b16 %v11833
    %v12496 = vunpack.c.h.b16 %v11833
    %v12497 = vunpack.c.l.b16 %v11834
    %v12498 = vunpack.c.h.b16 %v11834
    %v12499 = vunpack.c.l.b16 %v11835
    %v12500 = vunpack.c.h.b16 %v11835
    %v12501 = vunpack.c.l.b16 %v11836
    %v12502 = vunpack.c.h.b16 %v11836
    %v12503 = vunpack.c.l.b16 %v11837
    %v12504 = vunpack.c.h.b16 %v11837
    %v12505 = vunpack.c.l.b16 %v11838
    %v12506 = vunpack.c.h.b16 %v11838
    %v12507 = vunpack.c.l.b16 %v11839
    %v12508 = vunpack.c.h.b16 %v11839
    %v12509 = vunpack.c.l.b16 %v11840
    %v12510 = vunpack.c.h.b16 %v11840
    %v12511 = vunpack.c.l.b16 %v11841
    %v12512 = vunpack.c.h.b16 %v11841
    %v12513 = vunpack.c.l.b16 %v11842
    %v12514 = vunpack.c.h.b16 %v11842
    %v12515 = vunpack.c.l.b16 %v11843
    %v12516 = vunpack.c.h.b16 %v11843
    %v12517 = vunpack.c.l.b16 %v11844
    %v12518 = vunpack.c.h.b16 %v11844
    %v12519 = vunpack.c.l.b16 %v11845
    %v12520 = vunpack.c.h.b16 %v11845
    %v12521 = vunpack.c.l.b16 %v11846
    %v12522 = vunpack.c.h.b16 %v11846
    %v12523 = vunpack.c.l.b16 %v11847
    %v12524 = vunpack.c.h.b16 %v11847
    %v12525 = vunpack.c.l.b16 %v11848
    %v12526 = vunpack.c.h.b16 %v11848
    %v12527 = vunpack.c.l.b16 %v11849
    %v12528 = vunpack.c.h.b16 %v11849
    %v12529 = vunpack.c.l.b16 %v11850
    %v12530 = vunpack.c.h.b16 %v11850
    %v12531 = vunpack.c.l.b16 %v11851
    %v12532 = vunpack.c.h.b16 %v11851
    %v12533 = vunpack.c.l.b16 %v11852
    %v12534 = vunpack.c.h.b16 %v11852
    %v12535 = vunpack.c.l.b16 %v11853
    %v12536 = vunpack.c.h.b16 %v11853
    %v12537 = vunpack.c.l.b16 %v11854
    %v12538 = vunpack.c.h.b16 %v11854
    %v12539 = vunpack.c.l.b16 %v11855
    %v12540 = vunpack.c.h.b16 %v11855
    %v12541 = vunpack.c.l.b16 %v11856
    %v12542 = vunpack.c.h.b16 %v11856
    %v12543 = vunpack.c.l.b16 %v11857
    %v12544 = vunpack.c.h.b16 %v11857
    %v12545 = vunpack.c.l.b16 %v11858
    %v12546 = vunpack.c.h.b16 %v11858
    %v12547 = vunpack.c.l.b16 %v11859
    %v12548 = vunpack.c.h.b16 %v11859
    %v12549 = vunpack.c.l.b16 %v11860
    %v12550 = vunpack.c.h.b16 %v11860
    %v12551 = vunpack.c.l.b16 %v11861
    %v12552 = vunpack.c.h.b16 %v11861
    %v12553 = vunpack.c.l.b16 %v11862
    %v12554 = vunpack.c.h.b16 %v11862
    %v12555 = vunpack.c.l.b16 %v11863
    %v12556 = vunpack.c.h.b16 %v11863
    %v12557 = vunpack.c.l.b16 %v11864
    %v12558 = vunpack.c.h.b16 %v11864
    %v12559 = vunpack.c.l.b16 %v11865
    %v12560 = vunpack.c.h.b16 %v11865
    %v12561 = vunpack.c.l.b16 %v11866
    %v12562 = vunpack.c.h.b16 %v11866
    %v12563 = vunpack.c.l.b16 %v11867
    %v12564 = vunpack.c.h.b16 %v11867
    %v12565 = vunpack.c.l.b16 %v11868
    %v12566 = vunpack.c.h.b16 %v11868
    %v12567 = vunpack.c.l.b16 %v11869
    %v12568 = vunpack.c.h.b16 %v11869
    %v12569 = vunpack.c.l.b16 %v11870
    %v12570 = vunpack.c.h.b16 %v11870
    %v12571 = vunpack.c.l.b16 %v11871
    %v12572 = vunpack.c.h.b16 %v11871
    %v12573 = vunpack.c.l.b16 %v11872
    %v12574 = vunpack.c.h.b16 %v11872
    %v12575 = vunpack.c.l.b16 %v11873
    %v12576 = vunpack.c.h.b16 %v11873
    %v12577 = vunpack.c.l.b16 %v11874
    %v12578 = vunpack.c.h.b16 %v11874
    %v12579 = vunpack.c.l.b16 %v11875
    %v12580 = vunpack.c.h.b16 %v11875
    %v12581 = vunpack.c.l.b16 %v11876
    %v12582 = vunpack.c.h.b16 %v11876
    %v12583 = vunpack.c.l.b16 %v11877
    %v12584 = vunpack.c.h.b16 %v11877
    %v12585 = vunpack.c.l.b16 %v11878
    %v12586 = vunpack.c.h.b16 %v11878
    %v12587 = vunpack.c.l.b16 %v11879
    %v12588 = vunpack.c.h.b16 %v11879
    %v12589 = vunpack.c.l.b16 %v11880
    %v12590 = vunpack.c.h.b16 %v11880
    %v12591 = vunpack.c.l.b16 %v11881
    %v12592 = vunpack.c.h.b16 %v11881
    %v12593 = vunpack.c.l.b16 %v11882
    %v12594 = vunpack.c.h.b16 %v11882
    %v12595 = vunpack.c.l.b16 %v11883
    %v12596 = vunpack.c.h.b16 %v11883
    %v12597 = vunpack.c.l.b16 %v11884
    %v12598 = vunpack.c.h.b16 %v11884
    %v12599 = vunpack.c.l.b16 %v11885
    %v12600 = vunpack.c.h.b16 %v11885
    %v12601 = vunpack.c.l.b16 %v11886
    %v12602 = vunpack.c.h.b16 %v11886
    %v12603 = vunpack.c.l.b16 %v11887
    %v12604 = vunpack.c.h.b16 %v11887
    %v12605 = vunpack.c.l.b16 %v11888
    %v12606 = vunpack.c.h.b16 %v11888
    %v12607 = vunpack.c.l.b16 %v11889
    %v12608 = vunpack.c.h.b16 %v11889
    %v12609 = vunpack.c.l.b16 %v11890
    %v12610 = vunpack.c.h.b16 %v11890
    %v12611 = vunpack.c.l.b16 %v11891
    %v12612 = vunpack.c.h.b16 %v11891
    %v12613 = vunpack.c.l.b16 %v11892
    %v12614 = vunpack.c.h.b16 %v11892
    %v12615 = vunpack.c.l.b16 %v11893
    %v12616 = vunpack.c.h.b16 %v11893
    %v12617 = vunpack.c.l.b16 %v11894
    %v12618 = vunpack.c.h.b16 %v11894
    %v12619 = vunpack.c.l.b16 %v11895
    %v12620 = vunpack.c.h.b16 %v11895
    %v12621 = vunpack.c.l.b16 %v11896
    %v12622 = vunpack.c.h.b16 %v11896
    %v12623 = vunpack.c.l.b16 %v11897
    %v12624 = vunpack.c.h.b16 %v11897
    %v12625 = vunpack.c.l.b16 %v11898
    %v12626 = vunpack.c.h.b16 %v11898
    %v12627 = vunpack.c.l.b16 %v11899
    %v12628 = vunpack.c.h.b16 %v11899
    %v12629 = vunpack.c.l.b16 %v11900
    %v12630 = vunpack.c.h.b16 %v11900
    %v12631 = vunpack.c.l.b16 %v11901
    %v12632 = vunpack.c.h.b16 %v11901
    %v12633 = vunpack.c.l.b16 %v11902
    %v12634 = vunpack.c.h.b16 %v11902
    %v12635 = vunpack.c.l.b16 %v11903
    %v12636 = vunpack.c.h.b16 %v11903
    %v12637 = vunpack.c.l.b16 %v11904
    %v12638 = vunpack.c.h.b16 %v11904
    %v12639 = vunpack.c.l.b16 %v11905
    %v12640 = vunpack.c.h.b16 %v11905
    %v12641 = vunpack.c.l.b16 %v11906
    %v12642 = vunpack.c.h.b16 %v11906
    %v12643 = vunpack.c.l.b16 %v11907
    %v12644 = vunpack.c.h.b16 %v11907
    %v12645 = vunpack.c.l.b16 %v11908
    %v12646 = vunpack.c.h.b16 %v11908
    %v12647 = vunpack.c.l.b16 %v11909
    %v12648 = vunpack.c.h.b16 %v11909
    %v12649 = vunpack.c.l.b16 %v11910
    %v12650 = vunpack.c.h.b16 %v11910
    %v12651 = vunpack.c.l.b16 %v11911
    %v12652 = vunpack.c.h.b16 %v11911
    %v12653 = vunpack.c.l.b16 %v11912
    %v12654 = vunpack.c.h.b16 %v11912
    %v12655 = vunpack.c.l.b16 %v11913
    %v12656 = vunpack.c.h.b16 %v11913
    %v12657 = vunpack.c.l.b16 %v11914
    %v12658 = vunpack.c.h.b16 %v11914
    %v12659 = vunpack.c.l.b16 %v11915
    %v12660 = vunpack.c.h.b16 %v11915
    %v12661 = vunpack.c.l.b16 %v11916
    %v12662 = vunpack.c.h.b16 %v11916
    %v12663 = vunpack.c.l.b16 %v11917
    %v12664 = vunpack.c.h.b16 %v11917
    %v12665 = vunpack.c.l.b16 %v11918
    %v12666 = vunpack.c.h.b16 %v11918
    %v12667 = vunpack.c.l.b16 %v11919
    %v12668 = vunpack.c.h.b16 %v11919
    %v12669 = vunpack.c.l.b16 %v11920
    %v12670 = vunpack.c.h.b16 %v11920
    %v12671 = vunpack.c.l.b16 %v11921
    %v12672 = vunpack.c.h.b16 %v11921
    %v12673 = vunpack.c.l.b16 %v11922
    %v12674 = vunpack.c.h.b16 %v11922
    %v12675 = vunpack.c.l.b16 %v11923
    %v12676 = vunpack.c.h.b16 %v11923
    %v12677 = vunpack.c.l.b16 %v11924
    %v12678 = vunpack.c.h.b16 %v11924
    %v12679 = vunpack.c.l.b16 %v11925
    %v12680 = vunpack.c.h.b16 %v11925
    %v12681 = vunpack.c.l.b16 %v11926
    %v12682 = vunpack.c.h.b16 %v11926
    %v12683 = vunpack.c.l.b16 %v11927
    %v12684 = vunpack.c.h.b16 %v11927
    %v12685 = vunpack.c.l.b16 %v11928
    %v12686 = vunpack.c.h.b16 %v11928
    %v12687 = vunpack.c.l.b16 %v11929
    %v12688 = vunpack.c.h.b16 %v11929
    %v12689 = vunpack.c.l.b16 %v11930
    %v12690 = vunpack.c.h.b16 %v11930
    %v12691 = vunpack.c.l.b16 %v11931
    %v12692 = vunpack.c.h.b16 %v11931
    %v12693 = vunpack.c.l.b16 %v11932
    %v12694 = vunpack.c.h.b16 %v11932
    %v12695 = vunpack.c.l.b16 %v11933
    %v12696 = vunpack.c.h.b16 %v11933
    %v12697 = vunpack.c.l.b16 %v11934
    %v12698 = vunpack.c.h.b16 %v11934
    %v12699 = vunpack.c.l.b16 %v11935
    %v12700 = vunpack.c.h.b16 %v11935
    %v12701 = vunpack.c.l.b16 %v11936
    %v12702 = vunpack.c.h.b16 %v11936
    %v12703 = vunpack.c.l.b16 %v11937
    %v12704 = vunpack.c.h.b16 %v11937
    %v12705 = vunpack.c.l.b16 %v11938
    %v12706 = vunpack.c.h.b16 %v11938
    %v12707 = vpack.c.b16 %v12203, %v12195
    %v12708 = vpack.c.b16 %v12204, %v12196
    %v12709 = vpack.c.b16 %v12205, %v12197
    %v12710 = vpack.c.b16 %v12206, %v12198
    %v12711 = vpack.c.b16 %v12207, %v12199
    %v12712 = vpack.c.b16 %v12208, %v12200
    %v12713 = vpack.c.b16 %v12209, %v12201
    %v12714 = vpack.c.b16 %v12210, %v12202
    %v12715 = vpack.c.b16 %v12219, %v12211
    %v12716 = vpack.c.b16 %v12220, %v12212
    %v12717 = vpack.c.b16 %v12221, %v12213
    %v12718 = vpack.c.b16 %v12222, %v12214
    %v12719 = vpack.c.b16 %v12223, %v12215
    %v12720 = vpack.c.b16 %v12224, %v12216
    %v12721 = vpack.c.b16 %v12225, %v12217
    %v12722 = vpack.c.b16 %v12226, %v12218
    %v12723 = vpack.c.b16 %v12235, %v12227
    %v12724 = vpack.c.b16 %v12236, %v12228
    %v12725 = vpack.c.b16 %v12237, %v12229
    %v12726 = vpack.c.b16 %v12238, %v12230
    %v12727 = vpack.c.b16 %v12239, %v12231
    %v12728 = vpack.c.b16 %v12240, %v12232
    %v12729 = vpack.c.b16 %v12241, %v12233
    %v12730 = vpack.c.b16 %v12242, %v12234
    %v12731 = vpack.c.b16 %v12251, %v12243
    %v12732 = vpack.c.b16 %v12252, %v12244
    %v12733 = vpack.c.b16 %v12253, %v12245
    %v12734 = vpack.c.b16 %v12254, %v12246
    %v12735 = vpack.c.b16 %v12255, %v12247
    %v12736 = vpack.c.b16 %v12256, %v12248
    %v12737 = vpack.c.b16 %v12257, %v12249
    %v12738 = vpack.c.b16 %v12258, %v12250
    %v12739 = vpack.c.b16 %v12267, %v12259
    %v12740 = vpack.c.b16 %v12268, %v12260
    %v12741 = vpack.c.b16 %v12269, %v12261
    %v12742 = vpack.c.b16 %v12270, %v12262
    %v12743 = vpack.c.b16 %v12271, %v12263
    %v12744 = vpack.c.b16 %v12272, %v12264
    %v12745 = vpack.c.b16 %v12273, %v12265
    %v12746 = vpack.c.b16 %v12274, %v12266
    %v12747 = vpack.c.b16 %v12283, %v12275
    %v12748 = vpack.c.b16 %v12284, %v12276
    %v12749 = vpack.c.b16 %v12285, %v12277
    %v12750 = vpack.c.b16 %v12286, %v12278
    %v12751 = vpack.c.b16 %v12287, %v12279
    %v12752 = vpack.c.b16 %v12288, %v12280
    %v12753 = vpack.c.b16 %v12289, %v12281
    %v12754 = vpack.c.b16 %v12290, %v12282
    %v12755 = vpack.c.b16 %v12299, %v12291
    %v12756 = vpack.c.b16 %v12300, %v12292
    %v12757 = vpack.c.b16 %v12301, %v12293
    %v12758 = vpack.c.b16 %v12302, %v12294
    %v12759 = vpack.c.b16 %v12303, %v12295
    %v12760 = vpack.c.b16 %v12304, %v12296
    %v12761 = vpack.c.b16 %v12305, %v12297
    %v12762 = vpack.c.b16 %v12306, %v12298
    %v12763 = vpack.c.b16 %v12315, %v12307
    %v12764 = vpack.c.b16 %v12316, %v12308
    %v12765 = vpack.c.b16 %v12317, %v12309
    %v12766 = vpack.c.b16 %v12318, %v12310
    %v12767 = vpack.c.b16 %v12319, %v12311
    %v12768 = vpack.c.b16 %v12320, %v12312
    %v12769 = vpack.c.b16 %v12321, %v12313
    %v12770 = vpack.c.b16 %v12322, %v12314
    %v12771 = vpack.c.b16 %v12331, %v12323
    %v12772 = vpack.c.b16 %v12332, %v12324
    %v12773 = vpack.c.b16 %v12333, %v12325
    %v12774 = vpack.c.b16 %v12334, %v12326
    %v12775 = vpack.c.b16 %v12335, %v12327
    %v12776 = vpack.c.b16 %v12336, %v12328
    %v12777 = vpack.c.b16 %v12337, %v12329
    %v12778 = vpack.c.b16 %v12338, %v12330
    %v12779 = vpack.c.b16 %v12347, %v12339
    %v12780 = vpack.c.b16 %v12348, %v12340
    %v12781 = vpack.c.b16 %v12349, %v12341
    %v12782 = vpack.c.b16 %v12350, %v12342
    %v12783 = vpack.c.b16 %v12351, %v12343
    %v12784 = vpack.c.b16 %v12352, %v12344
    %v12785 = vpack.c.b16 %v12353, %v12345
    %v12786 = vpack.c.b16 %v12354, %v12346
    %v12787 = vpack.c.b16 %v12363, %v12355
    %v12788 = vpack.c.b16 %v12364, %v12356
    %v12789 = vpack.c.b16 %v12365, %v12357
    %v12790 = vpack.c.b16 %v12366, %v12358
    %v12791 = vpack.c.b16 %v12367, %v12359
    %v12792 = vpack.c.b16 %v12368, %v12360
    %v12793 = vpack.c.b16 %v12369, %v12361
    %v12794 = vpack.c.b16 %v12370, %v12362
    %v12795 = vpack.c.b16 %v12379, %v12371
    %v12796 = vpack.c.b16 %v12380, %v12372
    %v12797 = vpack.c.b16 %v12381, %v12373
    %v12798 = vpack.c.b16 %v12382, %v12374
    %v12799 = vpack.c.b16 %v12383, %v12375
    %v12800 = vpack.c.b16 %v12384, %v12376
    %v12801 = vpack.c.b16 %v12385, %v12377
    %v12802 = vpack.c.b16 %v12386, %v12378
    %v12803 = vpack.c.b16 %v12395, %v12387
    %v12804 = vpack.c.b16 %v12396, %v12388
    %v12805 = vpack.c.b16 %v12397, %v12389
    %v12806 = vpack.c.b16 %v12398, %v12390
    %v12807 = vpack.c.b16 %v12399, %v12391
    %v12808 = vpack.c.b16 %v12400, %v12392
    %v12809 = vpack.c.b16 %v12401, %v12393
    %v12810 = vpack.c.b16 %v12402, %v12394
    %v12811 = vpack.c.b16 %v12411, %v12403
    %v12812 = vpack.c.b16 %v12412, %v12404
    %v12813 = vpack.c.b16 %v12413, %v12405
    %v12814 = vpack.c.b16 %v12414, %v12406
    %v12815 = vpack.c.b16 %v12415, %v12407
    %v12816 = vpack.c.b16 %v12416, %v12408
    %v12817 = vpack.c.b16 %v12417, %v12409
    %v12818 = vpack.c.b16 %v12418, %v12410
    %v12819 = vpack.c.b16 %v12427, %v12419
    %v12820 = vpack.c.b16 %v12428, %v12420
    %v12821 = vpack.c.b16 %v12429, %v12421
    %v12822 = vpack.c.b16 %v12430, %v12422
    %v12823 = vpack.c.b16 %v12431, %v12423
    %v12824 = vpack.c.b16 %v12432, %v12424
    %v12825 = vpack.c.b16 %v12433, %v12425
    %v12826 = vpack.c.b16 %v12434, %v12426
    %v12827 = vpack.c.b16 %v12443, %v12435
    %v12828 = vpack.c.b16 %v12444, %v12436
    %v12829 = vpack.c.b16 %v12445, %v12437
    %v12830 = vpack.c.b16 %v12446, %v12438
    %v12831 = vpack.c.b16 %v12447, %v12439
    %v12832 = vpack.c.b16 %v12448, %v12440
    %v12833 = vpack.c.b16 %v12449, %v12441
    %v12834 = vpack.c.b16 %v12450, %v12442
    %v12835 = vpack.c.b16 %v12459, %v12451
    %v12836 = vpack.c.b16 %v12460, %v12452
    %v12837 = vpack.c.b16 %v12461, %v12453
    %v12838 = vpack.c.b16 %v12462, %v12454
    %v12839 = vpack.c.b16 %v12463, %v12455
    %v12840 = vpack.c.b16 %v12464, %v12456
    %v12841 = vpack.c.b16 %v12465, %v12457
    %v12842 = vpack.c.b16 %v12466, %v12458
    %v12843 = vpack.c.b16 %v12475, %v12467
    %v12844 = vpack.c.b16 %v12476, %v12468
    %v12845 = vpack.c.b16 %v12477, %v12469
    %v12846 = vpack.c.b16 %v12478, %v12470
    %v12847 = vpack.c.b16 %v12479, %v12471
    %v12848 = vpack.c.b16 %v12480, %v12472
    %v12849 = vpack.c.b16 %v12481, %v12473
    %v12850 = vpack.c.b16 %v12482, %v12474
    %v12851 = vpack.c.b16 %v12491, %v12483
    %v12852 = vpack.c.b16 %v12492, %v12484
    %v12853 = vpack.c.b16 %v12493, %v12485
    %v12854 = vpack.c.b16 %v12494, %v12486
    %v12855 = vpack.c.b16 %v12495, %v12487
    %v12856 = vpack.c.b16 %v12496, %v12488
    %v12857 = vpack.c.b16 %v12497, %v12489
    %v12858 = vpack.c.b16 %v12498, %v12490
    %v12859 = vpack.c.b16 %v12507, %v12499
    %v12860 = vpack.c.b16 %v12508, %v12500
    %v12861 = vpack.c.b16 %v12509, %v12501
    %v12862 = vpack.c.b16 %v12510, %v12502
    %v12863 = vpack.c.b16 %v12511, %v12503
    %v12864 = vpack.c.b16 %v12512, %v12504
    %v12865 = vpack.c.b16 %v12513, %v12505
    %v12866 = vpack.c.b16 %v12514, %v12506
    %v12867 = vpack.c.b16 %v12523, %v12515
    %v12868 = vpack.c.b16 %v12524, %v12516
    %v12869 = vpack.c.b16 %v12525, %v12517
    %v12870 = vpack.c.b16 %v12526, %v12518
    %v12871 = vpack.c.b16 %v12527, %v12519
    %v12872 = vpack.c.b16 %v12528, %v12520
    %v12873 = vpack.c.b16 %v12529, %v12521
    %v12874 = vpack.c.b16 %v12530, %v12522
    %v12875 = vpack.c.b16 %v12539, %v12531
    %v12876 = vpack.c.b16 %v12540, %v12532
    %v12877 = vpack.c.b16 %v12541, %v12533
    %v12878 = vpack.c.b16 %v12542, %v12534
    %v12879 = vpack.c.b16 %v12543, %v12535
    %v12880 = vpack.c.b16 %v12544, %v12536
    %v12881 = vpack.c.b16 %v12545, %v12537
    %v12882 = vpack.c.b16 %v12546, %v12538
    %v12883 = vpack.c.b16 %v12555, %v12547
    %v12884 = vpack.c.b16 %v12556, %v12548
    %v12885 = vpack.c.b16 %v12557, %v12549
    %v12886 = vpack.c.b16 %v12558, %v12550
    %v12887 = vpack.c.b16 %v12559, %v12551
    %v12888 = vpack.c.b16 %v12560, %v12552
    %v12889 = vpack.c.b16 %v12561, %v12553
    %v12890 = vpack.c.b16 %v12562, %v12554
    %v12891 = vpack.c.b16 %v12571, %v12563
    %v12892 = vpack.c.b16 %v12572, %v12564
    %v12893 = vpack.c.b16 %v12573, %v12565
    %v12894 = vpack.c.b16 %v12574, %v12566
    %v12895 = vpack.c.b16 %v12575, %v12567
    %v12896 = vpack.c.b16 %v12576, %v12568
    %v12897 = vpack.c.b16 %v12577, %v12569
    %v12898 = vpack.c.b16 %v12578, %v12570
    %v12899 = vpack.c.b16 %v12587, %v12579
    %v12900 = vpack.c.b16 %v12588, %v12580
    %v12901 = vpack.c.b16 %v12589, %v12581
    %v12902 = vpack.c.b16 %v12590, %v12582
    %v12903 = vpack.c.b16 %v12591, %v12583
    %v12904 = vpack.c.b16 %v12592, %v12584
    %v12905 = vpack.c.b16 %v12593, %v12585
    %v12906 = vpack.c.b16 %v12594, %v12586
    %v12907 = vpack.c.b16 %v12603, %v12595
    %v12908 = vpack.c.b16 %v12604, %v12596
    %v12909 = vpack.c.b16 %v12605, %v12597
    %v12910 = vpack.c.b16 %v12606, %v12598
    %v12911 = vpack.c.b16 %v12607, %v12599
    %v12912 = vpack.c.b16 %v12608, %v12600
    %v12913 = vpack.c.b16 %v12609, %v12601
    %v12914 = vpack.c.b16 %v12610, %v12602
    %v12915 = vpack.c.b16 %v12619, %v12611
    %v12916 = vpack.c.b16 %v12620, %v12612
    %v12917 = vpack.c.b16 %v12621, %v12613
    %v12918 = vpack.c.b16 %v12622, %v12614
    %v12919 = vpack.c.b16 %v12623, %v12615
    %v12920 = vpack.c.b16 %v12624, %v12616
    %v12921 = vpack.c.b16 %v12625, %v12617
    %v12922 = vpack.c.b16 %v12626, %v12618
    %v12923 = vpack.c.b16 %v12635, %v12627
    %v12924 = vpack.c.b16 %v12636, %v12628
    %v12925 = vpack.c.b16 %v12637, %v12629
    %v12926 = vpack.c.b16 %v12638, %v12630
    %v12927 = vpack.c.b16 %v12639, %v12631
    %v12928 = vpack.c.b16 %v12640, %v12632
    %v12929 = vpack.c.b16 %v12641, %v12633
    %v12930 = vpack.c.b16 %v12642, %v12634
    %v12931 = vpack.c.b16 %v12651, %v12643
    %v12932 = vpack.c.b16 %v12652, %v12644
    %v12933 = vpack.c.b16 %v12653, %v12645
    %v12934 = vpack.c.b16 %v12654, %v12646
    %v12935 = vpack.c.b16 %v12655, %v12647
    %v12936 = vpack.c.b16 %v12656, %v12648
    %v12937 = vpack.c.b16 %v12657, %v12649
    %v12938 = vpack.c.b16 %v12658, %v12650
    %v12939 = vpack.c.b16 %v12667, %v12659
    %v12940 = vpack.c.b16 %v12668, %v12660
    %v12941 = vpack.c.b16 %v12669, %v12661
    %v12942 = vpack.c.b16 %v12670, %v12662
    %v12943 = vpack.c.b16 %v12671, %v12663
    %v12944 = vpack.c.b16 %v12672, %v12664
    %v12945 = vpack.c.b16 %v12673, %v12665
    %v12946 = vpack.c.b16 %v12674, %v12666
    %v12947 = vpack.c.b16 %v12683, %v12675
    %v12948 = vpack.c.b16 %v12684, %v12676
    %v12949 = vpack.c.b16 %v12685, %v12677
    %v12950 = vpack.c.b16 %v12686, %v12678
    %v12951 = vpack.c.b16 %v12687, %v12679
    %v12952 = vpack.c.b16 %v12688, %v12680
    %v12953 = vpack.c.b16 %v12689, %v12681
    %v12954 = vpack.c.b16 %v12690, %v12682
    %v12955 = vpack.c.b16 %v12699, %v12691
    %v12956 = vpack.c.b16 %v12700, %v12692
    %v12957 = vpack.c.b16 %v12701, %v12693
    %v12958 = vpack.c.b16 %v12702, %v12694
    %v12959 = vpack.c.b16 %v12703, %v12695
    %v12960 = vpack.c.b16 %v12704, %v12696
    %v12961 = vpack.c.b16 %v12705, %v12697
    %v12962 = vpack.c.b16 %v12706, %v12698
    %13219 = vmatprep.subr.bf16.mxu0 %v12708
    %13220 = vmatpush1.bf16.msra.mxu0 %v12707
    %13221 = vmatprep.subr.bf16.mxu0 %v12716
    %13222 = vmatpush1.bf16.msra.mxu0 %v12715
    %13223 = vmatprep.subr.bf16.mxu0 %v12724
    %13224 = vmatpush1.bf16.msra.mxu0 %v12723
    %13225 = vmatprep.subr.bf16.mxu0 %v12732
    %13226 = vmatpush1.bf16.msra.mxu0 %v12731
    %13227 = vmatprep.subr.bf16.mxu0 %v12740
    %13228 = vmatpush1.bf16.msra.mxu0 %v12739
    %13229 = vmatprep.subr.bf16.mxu0 %v12748
    %13230 = vmatpush1.bf16.msra.mxu0 %v12747
    %13231 = vmatprep.subr.bf16.mxu0 %v12756
    %13232 = vmatpush1.bf16.msra.mxu0 %v12755
    %13233 = vmatprep.subr.bf16.mxu0 %v12764
    %13234 = vmatpush1.bf16.msra.mxu0 %v12763
    %13235 = vmatprep.subr.bf16.mxu0 %v12772
    %13236 = vmatpush1.bf16.msra.mxu0 %v12771
    %13237 = vmatprep.subr.bf16.mxu0 %v12780
    %13238 = vmatpush1.bf16.msra.mxu0 %v12779
    %13239 = vmatprep.subr.bf16.mxu0 %v12788
    %13240 = vmatpush1.bf16.msra.mxu0 %v12787
    %13241 = vmatprep.subr.bf16.mxu0 %v12796
    %13242 = vmatpush1.bf16.msra.mxu0 %v12795
    %13243 = vmatprep.subr.bf16.mxu0 %v12804
    %13244 = vmatpush1.bf16.msra.mxu0 %v12803
    %13245 = vmatprep.subr.bf16.mxu0 %v12812
    %13246 = vmatpush1.bf16.msra.mxu0 %v12811
    %13247 = vmatprep.subr.bf16.mxu0 %v12820
    %13248 = vmatpush1.bf16.msra.mxu0 %v12819
    %13249 = vmatprep.subr.bf16.mxu0 %v12828
    %13250 = vmatpush1.bf16.msra.mxu0 %v12827
    %13251 = vmatprep.mubr.bf16.mxu0 %v11680
    %13252 = vmatmul.mubr.bf16.gmra.mrb[0].mxu0 %v11679
    %v13253 = vpop.f32.mrb[0].mxu0
    %v13254 = vadd.f32 0.0, %v13253
    %v13255 = vpop.f32.mrb[0].mxu0
    %v13256 = vadd.f32 0.0, %v13255
    %v13257 = vpop.f32.mrb[0].mxu0
    %v13258 = vadd.f32 0.0, %v13257
    %v13259 = vpop.f32.mrb[0].mxu0
    %v13260 = vadd.f32 0.0, %v13259
    %13261 = vdwg.mxu0
    %13262 = vmatprep.subr.bf16.mxu0 %v12836
    %13263 = vmatpush1.bf16.msra.mxu0 %v12835
    %13264 = vmatprep.subr.bf16.mxu0 %v12844
    %13265 = vmatpush1.bf16.msra.mxu0 %v12843
    %13266 = vmatprep.subr.bf16.mxu0 %v12852
    %13267 = vmatpush1.bf16.msra.mxu0 %v12851
    %13268 = vmatprep.subr.bf16.mxu0 %v12860
    %13269 = vmatpush1.bf16.msra.mxu0 %v12859
    %13270 = vmatprep.subr.bf16.mxu0 %v12868
    %13271 = vmatpush1.bf16.msra.mxu0 %v12867
    %13272 = vmatprep.subr.bf16.mxu0 %v12876
    %13273 = vmatpush1.bf16.msra.mxu0 %v12875
    %13274 = vmatprep.subr.bf16.mxu0 %v12884
    %13275 = vmatpush1.bf16.msra.mxu0 %v12883
    %13276 = vmatprep.subr.bf16.mxu0 %v12892
    %13277 = vmatpush1.bf16.msra.mxu0 %v12891
    %13278 = vmatprep.subr.bf16.mxu0 %v12900
    %13279 = vmatpush1.bf16.msra.mxu0 %v12899
    %13280 = vmatprep.subr.bf16.mxu0 %v12908
    %13281 = vmatpush1.bf16.msra.mxu0 %v12907
    %13282 = vmatprep.subr.bf16.mxu0 %v12916
    %13283 = vmatpush1.bf16.msra.mxu0 %v12915
    %13284 = vmatprep.subr.bf16.mxu0 %v12924
    %13285 = vmatpush1.bf16.msra.mxu0 %v12923
    %13286 = vmatprep.subr.bf16.mxu0 %v12932
    %13287 = vmatpush1.bf16.msra.mxu0 %v12931
    %13288 = vmatprep.subr.bf16.mxu0 %v12940
    %13289 = vmatpush1.bf16.msra.mxu0 %v12939
    %13290 = vmatprep.subr.bf16.mxu0 %v12948
    %13291 = vmatpush1.bf16.msra.mxu0 %v12947
    %13292 = vmatprep.subr.bf16.mxu0 %v12956
    %13293 = vmatpush1.bf16.msra.mxu0 %v12955
    %13294 = vmatprep.mubr.bf16.mxu0 %v11682
    %13295 = vmatmul.mubr.bf16.gmra.mrb[0].mxu0 %v11681
    %v13296 = vpop.f32.mrb[0].mxu0
    %v13297 = vadd.f32 %v13254, %v13296
    %v13298 = vpop.f32.mrb[0].mxu0
    %v13299 = vadd.f32 %v13256, %v13298
    %v13300 = vpop.f32.mrb[0].mxu0
    %v13301 = vadd.f32 %v13258, %v13300
    %v13302 = vpop.f32.mrb[0].mxu0
    %v13303 = vadd.f32 %v13260, %v13302
    %13304 = vdwg.mxu0
    %13305 = vmatprep.subr.bf16.mxu0 %v12710
    %13306 = vmatpush1.bf16.msra.mxu0 %v12709
    %13307 = vmatprep.subr.bf16.mxu0 %v12718
    %13308 = vmatpush1.bf16.msra.mxu0 %v12717
    %13309 = vmatprep.subr.bf16.mxu0 %v12726
    %13310 = vmatpush1.bf16.msra.mxu0 %v12725
    %13311 = vmatprep.subr.bf16.mxu0 %v12734
    %13312 = vmatpush1.bf16.msra.mxu0 %v12733
    %13313 = vmatprep.subr.bf16.mxu0 %v12742
    %13314 = vmatpush1.bf16.msra.mxu0 %v12741
    %13315 = vmatprep.subr.bf16.mxu0 %v12750
    %13316 = vmatpush1.bf16.msra.mxu0 %v12749
    %13317 = vmatprep.subr.bf16.mxu0 %v12758
    %13318 = vmatpush1.bf16.msra.mxu0 %v12757
    %13319 = vmatprep.subr.bf16.mxu0 %v12766
    %13320 = vmatpush1.bf16.msra.mxu0 %v12765
    %13321 = vmatprep.subr.bf16.mxu0 %v12774
    %13322 = vmatpush1.bf16.msra.mxu0 %v12773
    %13323 = vmatprep.subr.bf16.mxu0 %v12782
    %13324 = vmatpush1.bf16.msra.mxu0 %v12781
    %13325 = vmatprep.subr.bf16.mxu0 %v12790
    %13326 = vmatpush1.bf16.msra.mxu0 %v12789
    %13327 = vmatprep.subr.bf16.mxu0 %v12798
    %13328 = vmatpush1.bf16.msra.mxu0 %v12797
    %13329 = vmatprep.subr.bf16.mxu0 %v12806
    %13330 = vmatpush1.bf16.msra.mxu0 %v12805
    %13331 = vmatprep.subr.bf16.mxu0 %v12814
    %13332 = vmatpush1.bf16.msra.mxu0 %v12813
    %13333 = vmatprep.subr.bf16.mxu0 %v12822
    %13334 = vmatpush1.bf16.msra.mxu0 %v12821
    %13335 = vmatprep.subr.bf16.mxu0 %v12830
    %13336 = vmatpush1.bf16.msra.mxu0 %v12829
    %13337 = vmatprep.mubr.bf16.mxu0 %v11680
    %13338 = vmatmul.mubr.bf16.gmra.mrb[0].mxu0 %v11679
    %v13339 = vpop.f32.mrb[0].mxu0
    %v13340 = vadd.f32 0.0, %v13339
    %v13341 = vpop.f32.mrb[0].mxu0
    %v13342 = vadd.f32 0.0, %v13341
    %v13343 = vpop.f32.mrb[0].mxu0
    %v13344 = vadd.f32 0.0, %v13343
    %v13345 = vpop.f32.mrb[0].mxu0
    %v13346 = vadd.f32 0.0, %v13345
    %13347 = vdwg.mxu0
    %13348 = vmatprep.subr.bf16.mxu0 %v12838
    %13349 = vmatpush1.bf16.msra.mxu0 %v12837
    %13350 = vmatprep.subr.bf16.mxu0 %v12846
    %13351 = vmatpush1.bf16.msra.mxu0 %v12845
    %13352 = vmatprep.subr.bf16.mxu0 %v12854
    %13353 = vmatpush1.bf16.msra.mxu0 %v12853
    %13354 = vmatprep.subr.bf16.mxu0 %v12862
    %13355 = vmatpush1.bf16.msra.mxu0 %v12861
    %13356 = vmatprep.subr.bf16.mxu0 %v12870
    %13357 = vmatpush1.bf16.msra.mxu0 %v12869
    %13358 = vmatprep.subr.bf16.mxu0 %v12878
    %13359 = vmatpush1.bf16.msra.mxu0 %v12877
    %13360 = vmatprep.subr.bf16.mxu0 %v12886
    %13361 = vmatpush1.bf16.msra.mxu0 %v12885
    %13362 = vmatprep.subr.bf16.mxu0 %v12894
    %13363 = vmatpush1.bf16.msra.mxu0 %v12893
    %13364 = vmatprep.subr.bf16.mxu0 %v12902
    %13365 = vmatpush1.bf16.msra.mxu0 %v12901
    %13366 = vmatprep.subr.bf16.mxu0 %v12910
    %13367 = vmatpush1.bf16.msra.mxu0 %v12909
    %13368 = vmatprep.subr.bf16.mxu0 %v12918
    %13369 = vmatpush1.bf16.msra.mxu0 %v12917
    %13370 = vmatprep.subr.bf16.mxu0 %v12926
    %13371 = vmatpush1.bf16.msra.mxu0 %v12925
    %13372 = vmatprep.subr.bf16.mxu0 %v12934
    %13373 = vmatpush1.bf16.msra.mxu0 %v12933
    %13374 = vmatprep.subr.bf16.mxu0 %v12942
    %13375 = vmatpush1.bf16.msra.mxu0 %v12941
    %13376 = vmatprep.subr.bf16.mxu0 %v12950
    %13377 = vmatpush1.bf16.msra.mxu0 %v12949
    %13378 = vmatprep.subr.bf16.mxu0 %v12958
    %13379 = vmatpush1.bf16.msra.mxu0 %v12957
    %13380 = vmatprep.mubr.bf16.mxu0 %v11682
    %13381 = vmatmul.mubr.bf16.gmra.mrb[0].mxu0 %v11681
    %v13382 = vpop.f32.mrb[0].mxu0
    %v13383 = vadd.f32 %v13340, %v13382
    %v13384 = vpop.f32.mrb[0].mxu0
    %v13385 = vadd.f32 %v13342, %v13384
    %v13386 = vpop.f32.mrb[0].mxu0
    %v13387 = vadd.f32 %v13344, %v13386
    %v13388 = vpop.f32.mrb[0].mxu0
    %v13389 = vadd.f32 %v13346, %v13388
    %13390 = vdwg.mxu0
    %13391 = vmatprep.subr.bf16.mxu0 %v12712
    %13392 = vmatpush1.bf16.msra.mxu0 %v12711
    %13393 = vmatprep.subr.bf16.mxu0 %v12720
    %13394 = vmatpush1.bf16.msra.mxu0 %v12719
    %13395 = vmatprep.subr.bf16.mxu0 %v12728
    %13396 = vmatpush1.bf16.msra.mxu0 %v12727
    %13397 = vmatprep.subr.bf16.mxu0 %v12736
    %13398 = vmatpush1.bf16.msra.mxu0 %v12735
    %13399 = vmatprep.subr.bf16.mxu0 %v12744
    %13400 = vmatpush1.bf16.msra.mxu0 %v12743
    %13401 = vmatprep.subr.bf16.mxu0 %v12752
    %13402 = vmatpush1.bf16.msra.mxu0 %v12751
    %13403 = vmatprep.subr.bf16.mxu0 %v12760
    %13404 = vmatpush1.bf16.msra.mxu0 %v12759
    %13405 = vmatprep.subr.bf16.mxu0 %v12768
    %13406 = vmatpush1.bf16.msra.mxu0 %v12767
    %13407 = vmatprep.subr.bf16.mxu0 %v12776
    %13408 = vmatpush1.bf16.msra.mxu0 %v12775
    %13409 = vmatprep.subr.bf16.mxu0 %v12784
    %13410 = vmatpush1.bf16.msra.mxu0 %v12783
    %13411 = vmatprep.subr.bf16.mxu0 %v12792
    %13412 = vmatpush1.bf16.msra.mxu0 %v12791
    %13413 = vmatprep.subr.bf16.mxu0 %v12800
    %13414 = vmatpush1.bf16.msra.mxu0 %v12799
    %13415 = vmatprep.subr.bf16.mxu0 %v12808
    %13416 = vmatpush1.bf16.msra.mxu0 %v12807
    %13417 = vmatprep.subr.bf16.mxu0 %v12816
    %13418 = vmatpush1.bf16.msra.mxu0 %v12815
    %13419 = vmatprep.subr.bf16.mxu0 %v12824
    %13420 = vmatpush1.bf16.msra.mxu0 %v12823
    %13421 = vmatprep.subr.bf16.mxu0 %v12832
    %13422 = vmatpush1.bf16.msra.mxu0 %v12831
    %13423 = vmatprep.mubr.bf16.mxu0 %v11680
    %13424 = vmatmul.mubr.bf16.gmra.mrb[0].mxu0 %v11679
    %v13425 = vpop.f32.mrb[0].mxu0
    %v13426 = vadd.f32 0.0, %v13425
    %v13427 = vpop.f32.mrb[0].mxu0
    %v13428 = vadd.f32 0.0, %v13427
    %v13429 = vpop.f32.mrb[0].mxu0
    %v13430 = vadd.f32 0.0, %v13429
    %v13431 = vpop.f32.mrb[0].mxu0
    %v13432 = vadd.f32 0.0, %v13431
    %13433 = vdwg.mxu0
    %13434 = vmatprep.subr.bf16.mxu0 %v12840
    %13435 = vmatpush1.bf16.msra.mxu0 %v12839
    %13436 = vmatprep.subr.bf16.mxu0 %v12848
    %13437 = vmatpush1.bf16.msra.mxu0 %v12847
    %13438 = vmatprep.subr.bf16.mxu0 %v12856
    %13439 = vmatpush1.bf16.msra.mxu0 %v12855
    %13440 = vmatprep.subr.bf16.mxu0 %v12864
    %13441 = vmatpush1.bf16.msra.mxu0 %v12863
    %13442 = vmatprep.subr.bf16.mxu0 %v12872
    %13443 = vmatpush1.bf16.msra.mxu0 %v12871
    %13444 = vmatprep.subr.bf16.mxu0 %v12880
    %13445 = vmatpush1.bf16.msra.mxu0 %v12879
    %13446 = vmatprep.subr.bf16.mxu0 %v12888
    %13447 = vmatpush1.bf16.msra.mxu0 %v12887
    %13448 = vmatprep.subr.bf16.mxu0 %v12896
    %13449 = vmatpush1.bf16.msra.mxu0 %v12895
    %13450 = vmatprep.subr.bf16.mxu0 %v12904
    %13451 = vmatpush1.bf16.msra.mxu0 %v12903
    %13452 = vmatprep.subr.bf16.mxu0 %v12912
    %13453 = vmatpush1.bf16.msra.mxu0 %v12911
    %13454 = vmatprep.subr.bf16.mxu0 %v12920
    %13455 = vmatpush1.bf16.msra.mxu0 %v12919
    %13456 = vmatprep.subr.bf16.mxu0 %v12928
    %13457 = vmatpush1.bf16.msra.mxu0 %v12927
    %13458 = vmatprep.subr.bf16.mxu0 %v12936
    %13459 = vmatpush1.bf16.msra.mxu0 %v12935
    %13460 = vmatprep.subr.bf16.mxu0 %v12944
    %13461 = vmatpush1.bf16.msra.mxu0 %v12943
    %13462 = vmatprep.subr.bf16.mxu0 %v12952
    %13463 = vmatpush1.bf16.msra.mxu0 %v12951
    %13464 = vmatprep.subr.bf16.mxu0 %v12960
    %13465 = vmatpush1.bf16.msra.mxu0 %v12959
    %13466 = vmatprep.mubr.bf16.mxu0 %v11682
    %13467 = vmatmul.mubr.bf16.gmra.mrb[0].mxu0 %v11681
    %v13468 = vpop.f32.mrb[0].mxu0
    %v13469 = vadd.f32 %v13426, %v13468
    %v13470 = vpop.f32.mrb[0].mxu0
    %v13471 = vadd.f32 %v13428, %v13470
    %v13472 = vpop.f32.mrb[0].mxu0
    %v13473 = vadd.f32 %v13430, %v13472
    %v13474 = vpop.f32.mrb[0].mxu0
    %v13475 = vadd.f32 %v13432, %v13474
    %13476 = vdwg.mxu0
    %13477 = vmatprep.subr.bf16.mxu0 %v12714
    %13478 = vmatpush1.bf16.msra.mxu0 %v12713
    %13479 = vmatprep.subr.bf16.mxu0 %v12722
    %13480 = vmatpush1.bf16.msra.mxu0 %v12721
    %13481 = vmatprep.subr.bf16.mxu0 %v12730
    %13482 = vmatpush1.bf16.msra.mxu0 %v12729
    %13483 = vmatprep.subr.bf16.mxu0 %v12738
    %13484 = vmatpush1.bf16.msra.mxu0 %v12737
    %13485 = vmatprep.subr.bf16.mxu0 %v12746
    %13486 = vmatpush1.bf16.msra.mxu0 %v12745
    %13487 = vmatprep.subr.bf16.mxu0 %v12754
    %13488 = vmatpush1.bf16.msra.mxu0 %v12753
    %13489 = vmatprep.subr.bf16.mxu0 %v12762
    %13490 = vmatpush1.bf16.msra.mxu0 %v12761
    %13491 = vmatprep.subr.bf16.mxu0 %v12770
    %13492 = vmatpush1.bf16.msra.mxu0 %v12769
    %13493 = vmatprep.subr.bf16.mxu0 %v12778
    %13494 = vmatpush1.bf16.msra.mxu0 %v12777
    %13495 = vmatprep.subr.bf16.mxu0 %v12786
    %13496 = vmatpush1.bf16.msra.mxu0 %v12785
    %13497 = vmatprep.subr.bf16.mxu0 %v12794
    %13498 = vmatpush1.bf16.msra.mxu0 %v12793
    %13499 = vmatprep.subr.bf16.mxu0 %v12802
    %13500 = vmatpush1.bf16.msra.mxu0 %v12801
    %13501 = vmatprep.subr.bf16.mxu0 %v12810
    %13502 = vmatpush1.bf16.msra.mxu0 %v12809
    %13503 = vmatprep.subr.bf16.mxu0 %v12818
    %13504 = vmatpush1.bf16.msra.mxu0 %v12817
    %13505 = vmatprep.subr.bf16.mxu0 %v12826
    %13506 = vmatpush1.bf16.msra.mxu0 %v12825
    %13507 = vmatprep.subr.bf16.mxu0 %v12834
    %13508 = vmatpush1.bf16.msra.mxu0 %v12833
    %13509 = vmatprep.mubr.bf16.mxu0 %v11680
    %13510 = vmatmul.mubr.bf16.gmra.mrb[0].mxu0 %v11679
    %v13511 = vpop.f32.mrb[0].mxu0
    %v13512 = vadd.f32 0.0, %v13511
    %v13513 = vpop.f32.mrb[0].mxu0
    %v13514 = vadd.f32 0.0, %v13513
    %v13515 = vpop.f32.mrb[0].mxu0
    %v13516 = vadd.f32 0.0, %v13515
    %v13517 = vpop.f32.mrb[0].mxu0
    %v13518 = vadd.f32 0.0, %v13517
    %13519 = vdwg.mxu0
    %13520 = vmatprep.subr.bf16.mxu0 %v12842
    %13521 = vmatpush1.bf16.msra.mxu0 %v12841
    %13522 = vmatprep.subr.bf16.mxu0 %v12850
    %13523 = vmatpush1.bf16.msra.mxu0 %v12849
    %13524 = vmatprep.subr.bf16.mxu0 %v12858
    %13525 = vmatpush1.bf16.msra.mxu0 %v12857
    %13526 = vmatprep.subr.bf16.mxu0 %v12866
    %13527 = vmatpush1.bf16.msra.mxu0 %v12865
    %13528 = vmatprep.subr.bf16.mxu0 %v12874
    %13529 = vmatpush1.bf16.msra.mxu0 %v12873
    %13530 = vmatprep.subr.bf16.mxu0 %v12882
    %13531 = vmatpush1.bf16.msra.mxu0 %v12881
    %13532 = vmatprep.subr.bf16.mxu0 %v12890
    %13533 = vmatpush1.bf16.msra.mxu0 %v12889
    %13534 = vmatprep.subr.bf16.mxu0 %v12898
    %13535 = vmatpush1.bf16.msra.mxu0 %v12897
    %13536 = vmatprep.subr.bf16.mxu0 %v12906
    %13537 = vmatpush1.bf16.msra.mxu0 %v12905
    %13538 = vmatprep.subr.bf16.mxu0 %v12914
    %13539 = vmatpush1.bf16.msra.mxu0 %v12913
    %13540 = vmatprep.subr.bf16.mxu0 %v12922
    %13541 = vmatpush1.bf16.msra.mxu0 %v12921
    %13542 = vmatprep.subr.bf16.mxu0 %v12930
    %13543 = vmatpush1.bf16.msra.mxu0 %v12929
    %13544 = vmatprep.subr.bf16.mxu0 %v12938
    %13545 = vmatpush1.bf16.msra.mxu0 %v12937
    %13546 = vmatprep.subr.bf16.mxu0 %v12946
    %13547 = vmatpush1.bf16.msra.mxu0 %v12945
    %13548 = vmatprep.subr.bf16.mxu0 %v12954
    %13549 = vmatpush1.bf16.msra.mxu0 %v12953
    %13550 = vmatprep.subr.bf16.mxu0 %v12962
    %13551 = vmatpush1.bf16.msra.mxu0 %v12961
    %13552 = vmatprep.mubr.bf16.mxu0 %v11682
    %13553 = vmatmul.mubr.bf16.gmra.mrb[0].mxu0 %v11681
    %v13554 = vpop.f32.mrb[0].mxu0
    %v13555 = vadd.f32 %v13512, %v13554
    %v13556 = vpop.f32.mrb[0].mxu0
    %v13557 = vadd.f32 %v13514, %v13556
    %v13558 = vpop.f32.mrb[0].mxu0
    %v13559 = vadd.f32 %v13516, %v13558
    %v13560 = vpop.f32.mrb[0].mxu0
    %v13561 = vadd.f32 %v13518, %v13560
    %13562 = vdwg.mxu0
    %v13563 = vmax.f32 %v13297, %v13383
    %v13564 = vmax.f32 %v13299, %v13385
    %v13565 = vmax.f32 %v13301, %v13387
    %v13566 = vmax.f32 %v13303, %v13389
    %v13567 = vmax.f32 %v13563, %v13469
    %v13568 = vmax.f32 %v13564, %v13471
    %v13569 = vmax.f32 %v13565, %v13473
    %v13570 = vmax.f32 %v13566, %v13475
    %v13571 = vmax.f32 %v13567, %v13555
    %v13572 = vmax.f32 %v13568, %v13557
    %v13573 = vmax.f32 %v13569, %v13559
    %v13574 = vmax.f32 %v13570, %v13561
    %v13575 = vld [vmem:[#allocation10] sm:$0x3]
    %v13577 = vlaneseq
    %v13578 = vshrl.u32 %v13577, 7
    %v13579 = vsub.s32 0, %v13578
    %v13580 = vrot.slane %v13575, %v13579
    %v13581 = vlaneseq
    %v13582 = vshrl.u32 %v13581, 7
    %v13583 = vsub.s32 1, %v13582
    %v13584 = vrot.slane %v13575, %v13583
    %v13587 = vadd.f32 %v13571, %v13580
    %v13588 = vadd.f32 %v13572, %v13584
    %v13589 = vadd.f32 %v13573, %v13580
    %v13590 = vadd.f32 %v13574, %v13584
    %v13591 = vmax.f32 %v13587, 0.0
    %v13592 = vmax.f32 %v13588, 0.0
    %v13593 = vmax.f32 %v13589, 0.0
    %v13594 = vmax.f32 %v13590, 0.0
    %v13595 = vld [vmem:[#allocation12] sm:$0xff]
    %v13596 = vld [vmem:[#allocation12 + $0x8] sm:$0xff]
    %v13597 = vld [vmem:[#allocation12 + $0x10] sm:$0xff]
    %v13598 = vld [vmem:[#allocation12 + $0x18] sm:$0xff]
    %v13599 = vld [vmem:[#allocation12 + $0x20] sm:$0xff]
    %v13600 = vld [vmem:[#allocation12 + $0x28] sm:$0xff]
    %v13601 = vld [vmem:[#allocation12 + $0x30] sm:$0xff]
    %v13602 = vld [vmem:[#allocation12 + $0x38] sm:$0xff]
    %v13603 = vld [vmem:[#allocation12 + $0x40] sm:$0xff]
    %v13604 = vld [vmem:[#allocation12 + $0x48] sm:$0xff]
    %v13605 = vld [vmem:[#allocation12 + $0x50] sm:$0xff]
    %v13606 = vld [vmem:[#allocation12 + $0x58] sm:$0xff]
    %v13607 = vld [vmem:[#allocation12 + $0x60] sm:$0xff]
    %v13608 = vld [vmem:[#allocation12 + $0x68] sm:$0xff]
    %v13609 = vld [vmem:[#allocation12 + $0x70] sm:$0xff]
    %v13610 = vld [vmem:[#allocation12 + $0x78] sm:$0xff]
    %v13611 = vld [vmem:[#allocation12 + $0x80] sm:$0xff]
    %v13612 = vld [vmem:[#allocation12 + $0x88] sm:$0xff]
    %v13613 = vld [vmem:[#allocation12 + $0x90] sm:$0xff]
    %v13614 = vld [vmem:[#allocation12 + $0x98] sm:$0xff]
    %v13615 = vld [vmem:[#allocation12 + $0xa0] sm:$0xff]
    %v13616 = vld [vmem:[#allocation12 + $0xa8] sm:$0xff]
    %v13617 = vld [vmem:[#allocation12 + $0xb0] sm:$0xff]
    %v13618 = vld [vmem:[#allocation12 + $0xb8] sm:$0xff]
    %v13619 = vld [vmem:[#allocation12 + $0xc0] sm:$0xff]
    %v13620 = vld [vmem:[#allocation12 + $0xc8] sm:$0xff]
    %v13621 = vld [vmem:[#allocation12 + $0xd0] sm:$0xff]
    %v13622 = vld [vmem:[#allocation12 + $0xd8] sm:$0xff]
    %v13623 = vld [vmem:[#allocation12 + $0xe0] sm:$0xff]
    %v13624 = vld [vmem:[#allocation12 + $0xe8] sm:$0xff]
    %v13625 = vld [vmem:[#allocation12 + $0xf0] sm:$0xff]
    %v13626 = vld [vmem:[#allocation12 + $0xf8] sm:$0xff]
    %v13627 = vld [vmem:[#allocation13] sm:$0x1]
    %v13629 = vlaneseq
    %v13630 = vshrl.u32 %v13629, 7
    %v13631 = vsub.s32 0, %v13630
    %v13632 = vrot.slane %v13627, %v13631
    %13634 = vmatprep.subr.mxu0 0.0
    %13635 = vmatpush1.msra.mxu0 %v13595
    %13636 = vmatprep.subr.mxu0 0.0
    %13637 = vmatpush1.msra.mxu0 %v13596
    %13638 = vmatprep.subr.mxu0 0.0
    %13639 = vmatpush1.msra.mxu0 %v13597
    %13640 = vmatprep.subr.mxu0 0.0
    %13641 = vmatpush1.msra.mxu0 %v13598
    %13642 = vmatprep.subr.mxu0 0.0
    %13643 = vmatpush1.msra.mxu0 %v13599
    %13644 = vmatprep.subr.mxu0 0.0
    %13645 = vmatpush1.msra.mxu0 %v13600
    %13646 = vmatprep.subr.mxu0 0.0
    %13647 = vmatpush1.msra.mxu0 %v13601
    %13648 = vmatprep.subr.mxu0 0.0
    %13649 = vmatpush1.msra.mxu0 %v13602
    %13650 = vmatprep.subr.mxu0 0.0
    %13651 = vmatpush1.msra.mxu0 %v13603
    %13652 = vmatprep.subr.mxu0 0.0
    %13653 = vmatpush1.msra.mxu0 %v13604
    %13654 = vmatprep.subr.mxu0 0.0
    %13655 = vmatpush1.msra.mxu0 %v13605
    %13656 = vmatprep.subr.mxu0 0.0
    %13657 = vmatpush1.msra.mxu0 %v13606
    %13658 = vmatprep.subr.mxu0 0.0
    %13659 = vmatpush1.msra.mxu0 %v13607
    %13660 = vmatprep.subr.mxu0 0.0
    %13661 = vmatpush1.msra.mxu0 %v13608
    %13662 = vmatprep.subr.mxu0 0.0
    %13663 = vmatpush1.msra.mxu0 %v13609
    %13664 = vmatprep.subr.mxu0 0.0
    %13665 = vmatpush1.msra.mxu0 %v13610
    %13666 = vmatprep.subr.mxu0 0.0
    %13667 = vmatpush1.msra.mxu0 %v13611
    %13668 = vmatprep.subr.mxu0 0.0
    %13669 = vmatpush1.msra.mxu0 %v13612
    %13670 = vmatprep.subr.mxu0 0.0
    %13671 = vmatpush1.msra.mxu0 %v13613
    %13672 = vmatprep.subr.mxu0 0.0
    %13673 = vmatpush1.msra.mxu0 %v13614
    %13674 = vmatprep.subr.mxu0 0.0
    %13675 = vmatpush1.msra.mxu0 %v13615
    %13676 = vmatprep.subr.mxu0 0.0
    %13677 = vmatpush1.msra.mxu0 %v13616
    %13678 = vmatprep.subr.mxu0 0.0
    %13679 = vmatpush1.msra.mxu0 %v13617
    %13680 = vmatprep.subr.mxu0 0.0
    %13681 = vmatpush1.msra.mxu0 %v13618
    %13682 = vmatprep.subr.mxu0 0.0
    %13683 = vmatpush1.msra.mxu0 %v13619
    %13684 = vmatprep.subr.mxu0 0.0
    %13685 = vmatpush1.msra.mxu0 %v13620
    %13686 = vmatprep.subr.mxu0 0.0
    %13687 = vmatpush1.msra.mxu0 %v13621
    %13688 = vmatprep.subr.mxu0 0.0
    %13689 = vmatpush1.msra.mxu0 %v13622
    %13690 = vmatprep.subr.mxu0 0.0
    %13691 = vmatpush1.msra.mxu0 %v13623
    %13692 = vmatprep.subr.mxu0 0.0
    %13693 = vmatpush1.msra.mxu0 %v13624
    %13694 = vmatprep.subr.mxu0 0.0
    %13695 = vmatpush1.msra.mxu0 %v13625
    %13696 = vmatprep.subr.mxu0 0.0
    %13697 = vmatpush1.msra.mxu0 %v13626
    %13698 = vmatprep.mubr.f32.mxu0 %v13592
    %13699 = vmatmul.mubr.f32.gmra.mrb[0].mxu0 %v13591
    %v13700 = vpop.f32.mrb[0].mxu0
    %v13701 = vadd.f32 %v13632, %v13700
    %v13702 = vpop.f32.mrb[0].mxu0
    %13703 = vmatprep.mubr.f32.mxu0 %v13594
    %13704 = vmatmul.mubr.f32.gmra.mrb[0].mxu0 %v13593
    %v13705 = vpop.f32.mrb[0].mxu0
    %v13706 = vadd.f32 %v13632, %v13705
    %v13707 = vpop.f32.mrb[0].mxu0
    %13708 = vdwg.mxu0
    %v13709 = vmax.f32 %v13701, 0.0
    %v13710 = vmax.f32 %v13706, 0.0
    %v13711 = vld [vmem:[#allocation15] sm:$0xff]
    %v13712 = vld [vmem:[#allocation15 + $0x8] sm:$0xff]
    %v13713 = vld [vmem:[#allocation15 + $0x10] sm:$0xff]
    %v13714 = vld [vmem:[#allocation15 + $0x18] sm:$0xff]
    %v13715 = vld [vmem:[#allocation15 + $0x20] sm:$0xff]
    %v13716 = vld [vmem:[#allocation15 + $0x28] sm:$0xff]
    %v13717 = vld [vmem:[#allocation15 + $0x30] sm:$0xff]
    %v13718 = vld [vmem:[#allocation15 + $0x38] sm:$0xff]
    %v13719 = vld [vmem:[#allocation15 + $0x40] sm:$0xff]
    %v13720 = vld [vmem:[#allocation15 + $0x48] sm:$0xff]
    %v13721 = vld [vmem:[#allocation15 + $0x50] sm:$0xff]
    %v13722 = vld [vmem:[#allocation15 + $0x58] sm:$0xff]
    %v13723 = vld [vmem:[#allocation15 + $0x60] sm:$0xff]
    %v13724 = vld [vmem:[#allocation15 + $0x68] sm:$0xff]
    %v13725 = vld [vmem:[#allocation15 + $0x70] sm:$0xff]
    %v13726 = vld [vmem:[#allocation15 + $0x78] sm:$0xff]
    %v13727 = vld [vmem:[#allocation16] sm:$0x1]
    %v13729 = vlaneseq
    %v13730 = vshrl.u32 %v13729, 7
    %v13731 = vsub.s32 0, %v13730
    %v13732 = vrot.slane %v13727, %v13731
    %13734 = vmatprep.subr.mxu0 0.0
    %13735 = vmatpush1.msra.mxu0 %v13711
    %13736 = vmatprep.subr.mxu0 0.0
    %13737 = vmatpush1.msra.mxu0 %v13712
    %13738 = vmatprep.subr.mxu0 0.0
    %13739 = vmatpush1.msra.mxu0 %v13713
    %13740 = vmatprep.subr.mxu0 0.0
    %13741 = vmatpush1.msra.mxu0 %v13714
    %13742 = vmatprep.subr.mxu0 0.0
    %13743 = vmatpush1.msra.mxu0 %v13715
    %13744 = vmatprep.subr.mxu0 0.0
    %13745 = vmatpush1.msra.mxu0 %v13716
    %13746 = vmatprep.subr.mxu0 0.0
    %13747 = vmatpush1.msra.mxu0 %v13717
    %13748 = vmatprep.subr.mxu0 0.0
    %13749 = vmatpush1.msra.mxu0 %v13718
    %13750 = vmatprep.subr.mxu0 0.0
    %13751 = vmatpush1.msra.mxu0 %v13719
    %13752 = vmatprep.subr.mxu0 0.0
    %13753 = vmatpush1.msra.mxu0 %v13720
    %13754 = vmatprep.subr.mxu0 0.0
    %13755 = vmatpush1.msra.mxu0 %v13721
    %13756 = vmatprep.subr.mxu0 0.0
    %13757 = vmatpush1.msra.mxu0 %v13722
    %13758 = vmatprep.subr.mxu0 0.0
    %13759 = vmatpush1.msra.mxu0 %v13723
    %13760 = vmatprep.subr.mxu0 0.0
    %13761 = vmatpush1.msra.mxu0 %v13724
    %13762 = vmatprep.subr.mxu0 0.0
    %13763 = vmatpush1.msra.mxu0 %v13725
    %13764 = vmatprep.subr.mxu0 0.0
    %13765 = vmatpush1.msra.mxu0 %v13726
    %13766 = vmatprep.subr.mxu0 0.0
    %13767 = vmatpush1.msra.mxu0 0.0
    %13768 = vmatprep.subr.mxu0 0.0
    %13769 = vmatpush1.msra.mxu0 0.0
    %13770 = vmatprep.subr.mxu0 0.0
    %13771 = vmatpush1.msra.mxu0 0.0
    %13772 = vmatprep.subr.mxu0 0.0
    %13773 = vmatpush1.msra.mxu0 0.0
    %13774 = vmatprep.subr.mxu0 0.0
    %13775 = vmatpush1.msra.mxu0 0.0
    %13776 = vmatprep.subr.mxu0 0.0
    %13777 = vmatpush1.msra.mxu0 0.0
    %13778 = vmatprep.subr.mxu0 0.0
    %13779 = vmatpush1.msra.mxu0 0.0
    %13780 = vmatprep.subr.mxu0 0.0
    %13781 = vmatpush1.msra.mxu0 0.0
    %13782 = vmatprep.subr.mxu0 0.0
    %13783 = vmatpush1.msra.mxu0 0.0
    %13784 = vmatprep.subr.mxu0 0.0
    %13785 = vmatpush1.msra.mxu0 0.0
    %13786 = vmatprep.subr.mxu0 0.0
    %13787 = vmatpush1.msra.mxu0 0.0
    %13788 = vmatprep.subr.mxu0 0.0
    %13789 = vmatpush1.msra.mxu0 0.0
    %13790 = vmatprep.subr.mxu0 0.0
    %13791 = vmatpush1.msra.mxu0 0.0
    %13792 = vmatprep.subr.mxu0 0.0
    %13793 = vmatpush1.msra.mxu0 0.0
    %13794 = vmatprep.subr.mxu0 0.0
    %13795 = vmatpush1.msra.mxu0 0.0
    %13796 = vmatprep.subr.mxu0 0.0
    %13797 = vmatpush1.msra.mxu0 0.0
    %13798 = vmatprep.mubr.f32.mxu0 0.0
    %13799 = vmatmul.mubr.f32.gmra.mrb[0].mxu0 %v13709
    %v13800 = vpop.f32.mrb[0].mxu0
    %v13801 = vadd.f32 %v13732, %v13800
    %v13802 = vpop.f32.mrb[0].mxu0
    %13803 = vmatprep.mubr.f32.mxu0 0.0
    %13804 = vmatmul.mubr.f32.gmra.mrb[0].mxu0 %v13710
    %v13805 = vpop.f32.mrb[0].mxu0
    %v13806 = vadd.f32 %v13732, %v13805
    %v13807 = vpop.f32.mrb[0].mxu0
    %13808 = vdwg.mxu0
    %v13809 = vmax.f32 %v13801, 0.0
    %v13810 = vmax.f32 %v13806, 0.0
    %v13811 = vld [vmem:[#allocation18] sm:$0xff]
    %v13812 = vld [vmem:[#allocation18 + $0x8] sm:$0xff]
    %v13813 = vld [vmem:[#allocation18 + $0x10] sm:$0xff]
    %v13814 = vld [vmem:[#allocation18 + $0x18] sm:$0xff]
    %v13815 = vld [vmem:[#allocation18 + $0x20] sm:$0xff]
    %v13816 = vld [vmem:[#allocation18 + $0x28] sm:$0xff]
    %v13817 = vld [vmem:[#allocation18 + $0x30] sm:$0xff]
    %v13818 = vld [vmem:[#allocation18 + $0x38] sm:$0xff]
    %v13819 = vld [vmem:[#allocation18 + $0x40] sm:$0xff]
    %v13820 = vld [vmem:[#allocation18 + $0x48] sm:$0xff]
    %v13821 = vld [vmem:[#allocation18 + $0x50] sm:$0xff]
    %v13822 = vld [vmem:[#allocation18 + $0x58] sm:$0xff]
    %v13823 = vld [vmem:[#allocation18 + $0x60] sm:$0xff]
    %v13824 = vld [vmem:[#allocation18 + $0x68] sm:$0xff]
    %v13825 = vld [vmem:[#allocation18 + $0x70] sm:$0xff]
    %v13826 = vld [vmem:[#allocation18 + $0x78] sm:$0xff]
    %v13827 = vld [vmem:[#allocation19] sm:$0x1]
    %v13829 = vlaneseq
    %v13830 = vshrl.u32 %v13829, 7
    %v13831 = vsub.s32 0, %v13830
    %v13832 = vrot.slane %v13827, %v13831
    %13834 = vmatprep.subr.mxu0 0.0
    %13835 = vmatpush1.msra.mxu0 %v13811
    %13836 = vmatprep.subr.mxu0 0.0
    %13837 = vmatpush1.msra.mxu0 %v13812
    %13838 = vmatprep.subr.mxu0 0.0
    %13839 = vmatpush1.msra.mxu0 %v13813
    %13840 = vmatprep.subr.mxu0 0.0
    %13841 = vmatpush1.msra.mxu0 %v13814
    %13842 = vmatprep.subr.mxu0 0.0
    %13843 = vmatpush1.msra.mxu0 %v13815
    %13844 = vmatprep.subr.mxu0 0.0
    %13845 = vmatpush1.msra.mxu0 %v13816
    %13846 = vmatprep.subr.mxu0 0.0
    %13847 = vmatpush1.msra.mxu0 %v13817
    %13848 = vmatprep.subr.mxu0 0.0
    %13849 = vmatpush1.msra.mxu0 %v13818
    %13850 = vmatprep.subr.mxu0 0.0
    %13851 = vmatpush1.msra.mxu0 %v13819
    %13852 = vmatprep.subr.mxu0 0.0
    %13853 = vmatpush1.msra.mxu0 %v13820
    %13854 = vmatprep.subr.mxu0 0.0
    %13855 = vmatpush1.msra.mxu0 %v13821
    %13856 = vmatprep.subr.mxu0 0.0
    %13857 = vmatpush1.msra.mxu0 %v13822
    %13858 = vmatprep.subr.mxu0 0.0
    %13859 = vmatpush1.msra.mxu0 %v13823
    %13860 = vmatprep.subr.mxu0 0.0
    %13861 = vmatpush1.msra.mxu0 %v13824
    %13862 = vmatprep.subr.mxu0 0.0
    %13863 = vmatpush1.msra.mxu0 %v13825
    %13864 = vmatprep.subr.mxu0 0.0
    %13865 = vmatpush1.msra.mxu0 %v13826
    %13866 = vmatprep.subr.mxu0 0.0
    %13867 = vmatpush1.msra.mxu0 0.0
    %13868 = vmatprep.subr.mxu0 0.0
    %13869 = vmatpush1.msra.mxu0 0.0
    %13870 = vmatprep.subr.mxu0 0.0
    %13871 = vmatpush1.msra.mxu0 0.0
    %13872 = vmatprep.subr.mxu0 0.0
    %13873 = vmatpush1.msra.mxu0 0.0
    %13874 = vmatprep.subr.mxu0 0.0
    %13875 = vmatpush1.msra.mxu0 0.0
    %13876 = vmatprep.subr.mxu0 0.0
    %13877 = vmatpush1.msra.mxu0 0.0
    %13878 = vmatprep.subr.mxu0 0.0
    %13879 = vmatpush1.msra.mxu0 0.0
    %13880 = vmatprep.subr.mxu0 0.0
    %13881 = vmatpush1.msra.mxu0 0.0
    %13882 = vmatprep.subr.mxu0 0.0
    %13883 = vmatpush1.msra.mxu0 0.0
    %13884 = vmatprep.subr.mxu0 0.0
    %13885 = vmatpush1.msra.mxu0 0.0
    %13886 = vmatprep.subr.mxu0 0.0
    %13887 = vmatpush1.msra.mxu0 0.0
    %13888 = vmatprep.subr.mxu0 0.0
    %13889 = vmatpush1.msra.mxu0 0.0
    %13890 = vmatprep.subr.mxu0 0.0
    %13891 = vmatpush1.msra.mxu0 0.0
    %13892 = vmatprep.subr.mxu0 0.0
    %13893 = vmatpush1.msra.mxu0 0.0
    %13894 = vmatprep.subr.mxu0 0.0
    %13895 = vmatpush1.msra.mxu0 0.0
    %13896 = vmatprep.subr.mxu0 0.0
    %13897 = vmatpush1.msra.mxu0 0.0
    %13898 = vmatprep.mubr.f32.mxu0 0.0
    %13899 = vmatmul.mubr.f32.gmra.mrb[0].mxu0 %v13809
    %v13900 = vpop.f32.mrb[0].mxu0
    %v13901 = vadd.f32 %v13832, %v13900
    %v13902 = vpop.f32.mrb[0].mxu0
    %13903 = vmatprep.mubr.f32.mxu0 0.0
    %13904 = vmatmul.mubr.f32.gmra.mrb[0].mxu0 %v13810
    %v13905 = vpop.f32.mrb[0].mxu0
    %v13906 = vadd.f32 %v13832, %v13905
    %v13907 = vpop.f32.mrb[0].mxu0
    %13908 = vdwg.mxu0
    %13909 = vst [vmem:[%s13] sm:$0xff] %v13901
    %13910 = vst [vmem:[%s13 + $0x8] sm:$0xff] %v13906
    // Predicated region
    $region102: #{ipcnn_forward.1} parent=1 // pred_check
      _
    $region103: #{ipcnn_forward.1} parent=1 // pred_check_branch
      %13912 = sbr.rel (0) target = $region105
    $region104: #{ipcnn_forward.1} parent=1 // pred_region
      _
    $region105: #{ipcnn_forward.1} parent=1 // pred_fallthru
      _
    // Predicated region
    $region106: #{ipcnn_forward.1} parent=1 // pred_check
      _
    $region107: #{ipcnn_forward.1} parent=1 // pred_check_branch
      %13914 = sbr.rel (0) target = $region109
    $region108: #{ipcnn_forward.1} parent=1 // pred_region
      _
    $region109: #{ipcnn_forward.1} parent=1 // pred_fallthru
      _
    %13915 = vsyncpa [#allocation3], 1
    %13916 = vsyncpa [#allocation5], 1
    %13917 = vsyncpa [#allocation8], 1
    %13918 = vsyncpa [#allocation11], 1
    %13919 = vsyncpa [#allocation14], 1
    %13920 = vsyncpa [#allocation17], 1
    %13921 = vsyncpa [#allocation20], 1

</llo_original>
